<compile_context>
chip_gen: v6e
topology: v6e:2x2x1
jax: 0.10.0
libtpu: 0.0.40
codegen_flags: <defaults>
</compile_context>

<pallas_src>
import functools

import jax
import jax.numpy as jnp
from jax import lax
from jax.experimental import pallas as pl
from jax.experimental.pallas import tpu as pltpu

EPS = 1e-5
LANE = 128


def _round_up(x, m):
    return (x + m - 1) // m * m


def _vmem_limit_bytes():
    # Per-generation VMEM budget: 3/4 of physical, capped at 96 MiB (v5e/v6e: 96 MiB, v7x: 48 MiB).
    try:
        info = pltpu.get_tpu_info()
        cap = getattr(info, "vmem_capacity_bytes", 128 * 1024 * 1024)
    except Exception:  # pragma: no cover - conservative fallback
        cap = 128 * 1024 * 1024
    return int(min(96 * 1024 * 1024, cap * 3 // 4))


def _cparams(channel_parallel):
    # Channel-tile axis must be "arbitrary" (sequential) wherever the pl.when(j==0) prologue
    # builds scratch that later channel tiles of the same batch element reuse.
    sems = ("parallel", "parallel" if channel_parallel else "arbitrary")
    return pltpu.CompilerParams(
        dimension_semantics=sems,
        vmem_limit_bytes=_vmem_limit_bytes(),
    )


# ----------------------------------------------------------------------------- kernels


def _conv1_kernel(xp_ref, w_ref, y_ref, psum_ref, psq_ref, pack_ref, *, H, W):
    # xp_ref : (1, H+2, W+2, Cin)   bf16 zero-padded input (one batch element; Cin lane-padded)
    # w_ref  : (9*Cin, TC)          bf16 tap-major weight slab (row = 3*dy+dx tap, channel minor)
    # y_ref  : (1, H*W, TC)         bf16 raw conv output (no bias: cancelled by batch-BN mean)
    # psum/psq: (1, 1, TC)          f32 per-(batch, channel-tile) partial sum / sum of squares
    # pack_ref: VMEM (H*W, 9*Cin)   bf16 tap-packed activation, built once per batch element
    Cin = xp_ref.shape[3]
    HW = H * W
    j = pl.program_id(1)

    @pl.when(j == 0)
    def _():
        # Build the tap-packed activation once; reused by every output-channel tile of this n.
        for k in range(9):
            dy, dx = divmod(k, 3)
            pack_ref[:, k * Cin:(k + 1) * Cin] = (
                xp_ref[0, dy:dy + H, dx:dx + W, :].reshape(HW, Cin))

    acc = jnp.dot(pack_ref[...], w_ref[...], preferred_element_type=jnp.float32)
    y_ref[0] = acc.astype(y_ref.dtype)
    psum_ref[0] = jnp.sum(acc, axis=0, keepdims=True)
    psq_ref[0] = jnp.sum(acc * acc, axis=0, keepdims=True)


def _bn_relu_conv2_kernel(y1_ref, sc_ref, sh_ref, w_ref,
                          y2_ref, psum_ref, psq_ref, pad_ref, pack_ref, *, H, W):
    # Fused: BN1 (folded scale/shift) + ReLU on raw conv1 output, then conv2 as one wide-K dot.
    # y1_ref : (1, H*W, C1) bf16 ; sc/sh: (1, C1) f32 ; w_ref: (9*C1, TC) bf16
    # y2_ref : (1, H*W, TC) bf16 ; psum/psq: (1, 1, TC) f32
    # pad_ref : VMEM (H+2, W+2, C1) bf16 halo-padded activation
    # pack_ref: VMEM (H*W, 9*C1)    bf16 tap-packed activation
    C1 = y1_ref.shape[2]
    HW = H * W
    j = pl.program_id(1)

    @pl.when(j == 0)
    def _():
        # Prologue amortized across all output-channel tiles of this batch element.
        a = jnp.maximum(
            y1_ref[0].astype(jnp.float32) * sc_ref[...] + sh_ref[...], 0.0)  # BN1 + ReLU
        pad_ref[...] = jnp.zeros_like(pad_ref)          # zeroed once per batch element only
        pad_ref[1:H + 1, 1:W + 1, :] = a.astype(jnp.bfloat16).reshape(H, W, C1)
        for k in range(9):
            dy, dx = divmod(k, 3)
            pack_ref[:, k * C1:(k + 1) * C1] = (
                pad_ref[dy:dy + H, dx:dx + W, :].reshape(HW, C1))

    acc = jnp.dot(pack_ref[...], w_ref[...], preferred_element_type=jnp.float32)
    y2_ref[0] = acc.astype(y2_ref.dtype)
    psum_ref[0] = jnp.sum(acc, axis=0, keepdims=True)
    psq_ref[0] = jnp.sum(acc * acc, axis=0, keepdims=True)


def _bn_relu_t_kernel(y_ref, sc_ref, sh_ref, out_ref):
    # Folded BN2 + ReLU, emitted channel-major (TC, HW) so the wrapper needs no XLA transpose.
    a = jnp.maximum(y_ref[0].astype(jnp.float32) * sc_ref[...] + sh_ref[...], 0.0)
    out_ref[0] = jnp.transpose(a)


# ------------------------------------------------------------------------ pallas wrappers


def _conv1(xp, w, H, W, tc):
    N, _, _, Cin = xp.shape
    Cpad = w.shape[1]
    HW = H * W
    kern = functools.partial(_conv1_kernel, H=H, W=W)
    return pl.pallas_call(
        kern,
        out_shape=(
            jax.ShapeDtypeStruct((N, HW, Cpad), jnp.bfloat16),
            jax.ShapeDtypeStruct((N, 1, Cpad), jnp.float32),
            jax.ShapeDtypeStruct((N, 1, Cpad), jnp.float32),
        ),
        grid=(N, Cpad // tc),
        in_specs=[
            pl.BlockSpec((1, H + 2, W + 2, Cin), lambda n, j: (n, 0, 0, 0)),
            pl.BlockSpec((9 * Cin, tc), lambda n, j: (0, j)),
        ],
        out_specs=(
            pl.BlockSpec((1, HW, tc), lambda n, j: (n, 0, j)),
            pl.BlockSpec((1, 1, tc), lambda n, j: (n, 0, j)),
            pl.BlockSpec((1, 1, tc), lambda n, j: (n, 0, j)),
        ),
        scratch_shapes=[pltpu.VMEM((HW, 9 * Cin), jnp.bfloat16)],
        compiler_params=_cparams(channel_parallel=False),
    )(xp, w)


def _bn_relu_conv2(y1, sc1, sh1, w, H, W, tc):
    N, HW, C1 = y1.shape
    Cpad = w.shape[1]
    kern = functools.partial(_bn_relu_conv2_kernel, H=H, W=W)
    return pl.pallas_call(
        kern,
        out_shape=(
            jax.ShapeDtypeStruct((N, HW, Cpad), jnp.bfloat16),
            jax.ShapeDtypeStruct((N, 1, Cpad), jnp.float32),
            jax.ShapeDtypeStruct((N, 1, Cpad), jnp.float32),
        ),
        grid=(N, Cpad // tc),
        in_specs=[
            pl.BlockSpec((1, HW, C1), lambda n, j: (n, 0, 0)),
            pl.BlockSpec((1, C1), lambda n, j: (0, 0)),
            pl.BlockSpec((1, C1), lambda n, j: (0, 0)),
            pl.BlockSpec((9 * C1, tc), lambda n, j: (0, j)),
        ],
        out_specs=(
            pl.BlockSpec((1, HW, tc), lambda n, j: (n, 0, j)),
            pl.BlockSpec((1, 1, tc), lambda n, j: (n, 0, j)),
            pl.BlockSpec((1, 1, tc), lambda n, j: (n, 0, j)),
        ),
        scratch_shapes=[
            pltpu.VMEM((H + 2, W + 2, C1), jnp.bfloat16),
            pltpu.VMEM((HW, 9 * C1), jnp.bfloat16),
        ],
        compiler_params=_cparams(channel_parallel=False),
    )(y1, sc1, sh1, w)


def _bn_relu_cmajor(y, sc, sh, tc):
    N, HW, Cpad = y.shape
    return pl.pallas_call(
        _bn_relu_t_kernel,
        out_shape=jax.ShapeDtypeStruct((N, Cpad, HW), jnp.float32),
        grid=(N, Cpad // tc),
        in_specs=[
            pl.BlockSpec((1, HW, tc), lambda n, j: (n, 0, j)),
            pl.BlockSpec((1, tc), lambda n, j: (0, j)),
            pl.BlockSpec((1, tc), lambda n, j: (0, j)),
        ],
        out_specs=pl.BlockSpec((1, tc, HW), lambda n, j: (n, j, 0)),
        compiler_params=_cparams(channel_parallel=True),
    )(y, sc, sh)


def _fold_bn(psum, psq, gamma_pad, beta_pad, count):
    # Tiny global reduction over the per-(batch, tile) f32 partial sums (plain JAX glue).
    # NOTE: E[x^2]-E[x]^2 in f32 is cancellation-prone for huge N*H*W with |mean| >> std;
    # acceptable here, documented as an intentional trade (Welford merge would fix it).
    s = jnp.sum(psum, axis=(0, 1))
    sq = jnp.sum(psq, axis=(0, 1))
    mean = s / count
    var = jnp.maximum(sq / count - mean * mean, 0.0)          # biased (training-mode) variance
    scale = gamma_pad * lax.rsqrt(var + EPS)
    shift = beta_pad - mean * scale
    return scale.reshape(1, -1), shift.reshape(1, -1)


# ------------------------------------------------------------------------------ forward


def bottleneck_forward(x_nchw, params):
    """params = (w1, b1, g1, be1, w2, b2, g2, be2); conv weights are HWIO (3,3,Cin,Cout).

    Conv biases b1/b2 are intentionally NOT used in the kernels: under training-mode
    BatchNorm they are exactly cancelled by the mean subtraction.
    """
    w1, _b1, g1, be1, w2, _b2, g2, be2 = params
    N, Cin, H, W = x_nchw.shape
    Cout = w1.shape[-1]
    Cpad = _round_up(Cout, LANE)
    Cin_pad = _round_up(Cin, LANE)                 # lane-aligned tap-pack stores
    count = N * H * W
    tc = 256 if Cpad % 256 == 0 else 128           # conv output-channel tile (MXU width)
    tc_c = 512 if Cpad % 512 == 0 else (256 if Cpad % 256 == 0 else 128)   # pass-C tile

    # ---- wrapper glue: NCHW->NHWC, bf16, spatial halo pad + input-channel lane pad ----
    x = jnp.transpose(x_nchw, (0, 2, 3, 1)).astype(jnp.bfloat16)
    xp = jnp.pad(x, ((0, 0), (1, 1), (1, 1), (0, Cin_pad - Cin)))

    # Tap-major weight slabs: (3,3,I,O) -> (9*I, O), tap k = 3*dy + dx, channel minor.
    w1p = jnp.pad(w1, ((0, 0), (0, 0), (0, Cin_pad - Cin), (0, Cpad - Cout)))
    w1p = w1p.reshape(9 * Cin_pad, Cpad).astype(jnp.bfloat16)
    w2p = jnp.pad(w2, ((0, 0), (0, 0), (0, Cpad - Cout), (0, Cpad - Cout)))
    w2p = w2p.reshape(9 * Cpad, Cpad).astype(jnp.bfloat16)
    g1p, be1p = jnp.pad(g1, (0, Cpad - Cout)), jnp.pad(be1, (0, Cpad - Cout))
    g2p, be2p = jnp.pad(g2, (0, Cpad - Cout)), jnp.pad(be2, (0, Cpad - Cout))

    # ---- pass A: conv1 (wide-K tap-packed matmul) + BN1 partial stats ----
    y1, s1, q1 = _conv1(xp, w1p, H, W, tc)
    sc1, sh1 = _fold_bn(s1, q1, g1p, be1p, count)

    # ---- pass B: (BN1+ReLU fused, amortized across channel tiles) conv2 + BN2 stats ----
    y2, s2, q2 = _bn_relu_conv2(y1, sc1, sh1, w2p, H, W, tc)
    sc2, sh2 = _fold_bn(s2, q2, g2p, be2p, count)

    # ---- pass C: BN2 + ReLU, channel-major output (no XLA transpose afterwards) ----
    out_t = _bn_relu_cmajor(y2, sc2, sh2, tc_c)            # (N, Cpad, H*W) f32

    return out_t.reshape(N, Cpad, H, W)[:, :Cout]          # NCHW


# ------------------------------------------------------------------------- test harness


def init_params(key, in_channels, out_channels):
    ks = jax.random.split(key, 8)
    w1 = 0.1 * jax.random.normal(ks[0], (3, 3, in_channels, out_channels), jnp.float32)
    b1 = 0.05 * jax.random.normal(ks[1], (out_channels,), jnp.float32)
    g1 = 1.0 + 0.1 * jax.random.normal(ks[2], (out_channels,), jnp.float32)
    be1 = 0.05 * jax.random.normal(ks[3], (out_channels,), jnp.float32)
    w2 = 0.1 * jax.random.normal(ks[4], (3, 3, out_channels, out_channels), jnp.float32)
    b2 = 0.05 * jax.random.normal(ks[5], (out_channels,), jnp.float32)
    g2 = 1.0 + 0.1 * jax.random.normal(ks[6], (out_channels,), jnp.float32)
    be2 = 0.05 * jax.random.normal(ks[7], (out_channels,), jnp.float32)
    return (w1, b1, g1, be1, w2, b2, g2, be2)


def _reference(x_nchw, params):
    # Pure-JAX reference matching the PyTorch Bottleneck forward (training-mode BN).
    w1, b1, g1, be1, w2, b2, g2, be2 = params

    def block(x, w, b, g, be):
        y = lax.conv_general_dilated(
            x, w, (1, 1), "SAME",
            dimension_numbers=("NCHW", "HWIO", "NCHW"),
            precision=lax.Precision.HIGHEST,
        ) + b[None, :, None, None]
        mean = y.mean(axis=(0, 2, 3), keepdims=True)
        var = jnp.square(y - mean).mean(axis=(0, 2, 3), keepdims=True)
        y = (y - mean) * lax.rsqrt(var + EPS)
        y = g[None, :, None, None] * y + be[None, :, None, None]
        return jnp.maximum(y, 0.0)

    return block(block(x_nchw, w1, b1, g1, be1), w2, b2, g2, be2)


if __name__ == "__main__":
    key = jax.random.PRNGKey(0)
    k_x, k_p = jax.random.split(key)

    N, Cin, Cout, H, W = 2, 4, 8, 16, 16
    x = jax.random.normal(k_x, (N, Cin, H, W), jnp.float32)        # NCHW, like PyTorch
    params = init_params(k_p, Cin, Cout)

    fwd = jax.jit(bottleneck_forward)
    out = jax.block_until_ready(fwd(x, params))
    ref = jax.block_until_ready(_reference(x, params))

    assert out.shape == (N, Cout, H, W), out.shape
    max_err = float(jnp.max(jnp.abs(out - ref)))
    # bf16 MXU inputs + bf16 y1/y2 intermediates (vs. the f32 HIGHEST-precision reference)
    # -> intentionally loose tolerance; this is a documented precision trade, not a bug.
    assert jnp.allclose(out, ref, atol=1e-1, rtol=1e-1), max_err

    print("KERNEL_OK")
</pallas_src>

<mosaic_0001>
module attributes {stable_mosaic.version = 11 : i64} {
  func.func @_conv1_kernel(%arg0: i32, %arg1: i32, %arg2: memref<1x18x18x128xbf16, #tpu.memory_space<vmem>>, %arg3: memref<1152x128xbf16, #tpu.memory_space<vmem>>, %arg4: memref<1x256x128xbf16, #tpu.memory_space<vmem>>, %arg5: memref<1x1x128xf32, #tpu.memory_space<vmem>>, %arg6: memref<1x1x128xf32, #tpu.memory_space<vmem>>, %arg7: memref<256x1152xbf16, #tpu.memory_space<vmem>>) attributes {dimension_semantics = [#tpu.dimension_semantics<parallel>, #tpu.dimension_semantics<arbitrary>], iteration_bounds = array<i64: 2, 1>, scalar_prefetch = 0 : i64, scratch_operands = 1 : i64, tpu.core_type = #tpu.core_type<tc>, window_params = [{transform_indices = @transform_0, window_bounds = array<i64: 1, 18, 18, 128>}, {transform_indices = @transform_1, window_bounds = array<i64: 1152, 128>}, {transform_indices = @transform_2, window_bounds = array<i64: 1, 256, 128>}, {transform_indices = @transform_3, window_bounds = array<i64: 1, 1, 128>}, {transform_indices = @transform_4, window_bounds = array<i64: 1, 1, 128>}]} {
    %c0_i32 = arith.constant 0 : i32
    %0 = arith.cmpi eq, %arg1, %c0_i32 : i32
    %1 = arith.extui %0 : i1 to i32
    %c0_i32_0 = arith.constant 0 : i32
    %2 = arith.cmpi ne, %1, %c0_i32_0 : i32
    scf.if %2 {
      %c0_15 = arith.constant 0 : index
      %c0_16 = arith.constant 0 : index
      %c0_17 = arith.constant 0 : index
      %c0_18 = arith.constant 0 : index
      %21 = vector.load %arg2[%c0_15, %c0_16, %c0_17, %c0_18] : memref<1x18x18x128xbf16, #tpu.memory_space<vmem>>, vector<1x16x16x128xbf16>
      %22 = vector.shape_cast %21 : vector<1x16x16x128xbf16> to vector<16x16x128xbf16>
      %23 = vector.shape_cast %22 : vector<16x16x128xbf16> to vector<256x128xbf16>
      %c0_19 = arith.constant 0 : index
      %c0_20 = arith.constant 0 : index
      %24 = vector.load %arg7[%c0_19, %c0_20] : memref<256x1152xbf16, #tpu.memory_space<vmem>>, vector<256x128xbf16>
      tpu.vector_store %arg7[%c0_19, %c0_20], %23 {strides = array<i32>} : memref<256x1152xbf16, #tpu.memory_space<vmem>>, vector<256x128xbf16>,
      %c0_21 = arith.constant 0 : index
      %c0_22 = arith.constant 0 : index
      %c1 = arith.constant 1 : index
      %c0_23 = arith.constant 0 : index
      %25 = vector.load %arg2[%c0_21, %c0_22, %c1, %c0_23] : memref<1x18x18x128xbf16, #tpu.memory_space<vmem>>, vector<1x16x16x128xbf16>
      %26 = vector.shape_cast %25 : vector<1x16x16x128xbf16> to vector<16x16x128xbf16>
      %27 = vector.shape_cast %26 : vector<16x16x128xbf16> to vector<256x128xbf16>
      %c0_24 = arith.constant 0 : index
      %c128 = arith.constant 128 : index
      %28 = vector.load %arg7[%c0_24, %c128] : memref<256x1152xbf16, #tpu.memory_space<vmem>>, vector<256x128xbf16>
      tpu.vector_store %arg7[%c0_24, %c128], %27 {strides = array<i32>} : memref<256x1152xbf16, #tpu.memory_space<vmem>>, vector<256x128xbf16>,
      %c0_25 = arith.constant 0 : index
      %c0_26 = arith.constant 0 : index
      %c2 = arith.constant 2 : index
      %c0_27 = arith.constant 0 : index
      %29 = vector.load %arg2[%c0_25, %c0_26, %c2, %c0_27] : memref<1x18x18x128xbf16, #tpu.memory_space<vmem>>, vector<1x16x16x128xbf16>
      %30 = vector.shape_cast %29 : vector<1x16x16x128xbf16> to vector<16x16x128xbf16>
      %31 = vector.shape_cast %30 : vector<16x16x128xbf16> to vector<256x128xbf16>
      %c0_28 = arith.constant 0 : index
      %c256 = arith.constant 256 : index
      %32 = vector.load %arg7[%c0_28, %c256] : memref<256x1152xbf16, #tpu.memory_space<vmem>>, vector<256x128xbf16>
      tpu.vector_store %arg7[%c0_28, %c256], %31 {strides = array<i32>} : memref<256x1152xbf16, #tpu.memory_space<vmem>>, vector<256x128xbf16>,
      %c0_29 = arith.constant 0 : index
      %c1_30 = arith.constant 1 : index
      %c0_31 = arith.constant 0 : index
      %c0_32 = arith.constant 0 : index
      %33 = vector.load %arg2[%c0_29, %c1_30, %c0_31, %c0_32] : memref<1x18x18x128xbf16, #tpu.memory_space<vmem>>, vector<1x16x16x128xbf16>
      %34 = vector.shape_cast %33 : vector<1x16x16x128xbf16> to vector<16x16x128xbf16>
      %35 = vector.shape_cast %34 : vector<16x16x128xbf16> to vector<256x128xbf16>
      %c0_33 = arith.constant 0 : index
      %c384 = arith.constant 384 : index
      %36 = vector.load %arg7[%c0_33, %c384] : memref<256x1152xbf16, #tpu.memory_space<vmem>>, vector<256x128xbf16>
      tpu.vector_store %arg7[%c0_33, %c384], %35 {strides = array<i32>} : memref<256x1152xbf16, #tpu.memory_space<vmem>>, vector<256x128xbf16>,
      %c0_34 = arith.constant 0 : index
      %c1_35 = arith.constant 1 : index
      %c1_36 = arith.constant 1 : index
      %c0_37 = arith.constant 0 : index
      %37 = vector.load %arg2[%c0_34, %c1_35, %c1_36, %c0_37] : memref<1x18x18x128xbf16, #tpu.memory_space<vmem>>, vector<1x16x16x128xbf16>
      %38 = vector.shape_cast %37 : vector<1x16x16x128xbf16> to vector<16x16x128xbf16>
      %39 = vector.shape_cast %38 : vector<16x16x128xbf16> to vector<256x128xbf16>
      %c0_38 = arith.constant 0 : index
      %c512 = arith.constant 512 : index
      %40 = vector.load %arg7[%c0_38, %c512] : memref<256x1152xbf16, #tpu.memory_space<vmem>>, vector<256x128xbf16>
      tpu.vector_store %arg7[%c0_38, %c512], %39 {strides = array<i32>} : memref<256x1152xbf16, #tpu.memory_space<vmem>>, vector<256x128xbf16>,
      %c0_39 = arith.constant 0 : index
      %c1_40 = arith.constant 1 : index
      %c2_41 = arith.constant 2 : index
      %c0_42 = arith.constant 0 : index
      %41 = vector.load %arg2[%c0_39, %c1_40, %c2_41, %c0_42] : memref<1x18x18x128xbf16, #tpu.memory_space<vmem>>, vector<1x16x16x128xbf16>
      %42 = vector.shape_cast %41 : vector<1x16x16x128xbf16> to vector<16x16x128xbf16>
      %43 = vector.shape_cast %42 : vector<16x16x128xbf16> to vector<256x128xbf16>
      %c0_43 = arith.constant 0 : index
      %c640 = arith.constant 640 : index
      %44 = vector.load %arg7[%c0_43, %c640] : memref<256x1152xbf16, #tpu.memory_space<vmem>>, vector<256x128xbf16>
      tpu.vector_store %arg7[%c0_43, %c640], %43 {strides = array<i32>} : memref<256x1152xbf16, #tpu.memory_space<vmem>>, vector<256x128xbf16>,
      %c0_44 = arith.constant 0 : index
      %c2_45 = arith.constant 2 : index
      %c0_46 = arith.constant 0 : index
      %c0_47 = arith.constant 0 : index
      %45 = vector.load %arg2[%c0_44, %c2_45, %c0_46, %c0_47] : memref<1x18x18x128xbf16, #tpu.memory_space<vmem>>, vector<1x16x16x128xbf16>
      %46 = vector.shape_cast %45 : vector<1x16x16x128xbf16> to vector<16x16x128xbf16>
      %47 = vector.shape_cast %46 : vector<16x16x128xbf16> to vector<256x128xbf16>
      %c0_48 = arith.constant 0 : index
      %c768 = arith.constant 768 : index
      %48 = vector.load %arg7[%c0_48, %c768] : memref<256x1152xbf16, #tpu.memory_space<vmem>>, vector<256x128xbf16>
      tpu.vector_store %arg7[%c0_48, %c768], %47 {strides = array<i32>} : memref<256x1152xbf16, #tpu.memory_space<vmem>>, vector<256x128xbf16>,
      %c0_49 = arith.constant 0 : index
      %c2_50 = arith.constant 2 : index
      %c1_51 = arith.constant 1 : index
      %c0_52 = arith.constant 0 : index
      %49 = vector.load %arg2[%c0_49, %c2_50, %c1_51, %c0_52] : memref<1x18x18x128xbf16, #tpu.memory_space<vmem>>, vector<1x16x16x128xbf16>
      %50 = vector.shape_cast %49 : vector<1x16x16x128xbf16> to vector<16x16x128xbf16>
      %51 = vector.shape_cast %50 : vector<16x16x128xbf16> to vector<256x128xbf16>
      %c0_53 = arith.constant 0 : index
      %c896 = arith.constant 896 : index
      %52 = vector.load %arg7[%c0_53, %c896] : memref<256x1152xbf16, #tpu.memory_space<vmem>>, vector<256x128xbf16>
      tpu.vector_store %arg7[%c0_53, %c896], %51 {strides = array<i32>} : memref<256x1152xbf16, #tpu.memory_space<vmem>>, vector<256x128xbf16>,
      %c0_54 = arith.constant 0 : index
      %c2_55 = arith.constant 2 : index
      %c2_56 = arith.constant 2 : index
      %c0_57 = arith.constant 0 : index
      %53 = vector.load %arg2[%c0_54, %c2_55, %c2_56, %c0_57] : memref<1x18x18x128xbf16, #tpu.memory_space<vmem>>, vector<1x16x16x128xbf16>
      %54 = vector.shape_cast %53 : vector<1x16x16x128xbf16> to vector<16x16x128xbf16>
      %55 = vector.shape_cast %54 : vector<16x16x128xbf16> to vector<256x128xbf16>
      %c0_58 = arith.constant 0 : index
      %c1024 = arith.constant 1024 : index
      %56 = vector.load %arg7[%c0_58, %c1024] : memref<256x1152xbf16, #tpu.memory_space<vmem>>, vector<256x128xbf16>
      tpu.vector_store %arg7[%c0_58, %c1024], %55 {strides = array<i32>} : memref<256x1152xbf16, #tpu.memory_space<vmem>>, vector<256x128xbf16>,
    } else {
    }
    %c0 = arith.constant 0 : index
    %c0_1 = arith.constant 0 : index
    %3 = vector.load %arg7[%c0, %c0_1] : memref<256x1152xbf16, #tpu.memory_space<vmem>>, vector<256x1152xbf16>
    %c0_2 = arith.constant 0 : index
    %c0_3 = arith.constant 0 : index
    %4 = vector.load %arg3[%c0_2, %c0_3] : memref<1152x128xbf16, #tpu.memory_space<vmem>>, vector<1152x128xbf16>
    %cst = arith.constant dense<0.000000e+00> : vector<256x128xf32>
    %5 = tpu.matmul %3, %4, %cst {dimension_numbers = #tpu.dot_dimension_numbers<[1], [0], [0], [1], [0, 0, 1, 1], [], []>} : vector<256x1152xbf16>, vector<1152x128xbf16>, vector<256x128xf32> -> vector<256x128xf32>
    %6 = arith.truncf %5 : vector<256x128xf32> to vector<256x128xbf16>
    %c0_4 = arith.constant 0 : index
    %c0_5 = arith.constant 0 : index
    %c0_6 = arith.constant 0 : index
    %7 = vector.load %arg4[%c0_4, %c0_5, %c0_6] : memref<1x256x128xbf16, #tpu.memory_space<vmem>>, vector<1x256x128xbf16>
    %8 = vector.shape_cast %7 : vector<1x256x128xbf16> to vector<256x128xbf16>
    %9 = vector.shape_cast %6 : vector<256x128xbf16> to vector<1x256x128xbf16>
    tpu.vector_store %arg4[%c0_4, %c0_5, %c0_6], %9 {strides = array<i32>} : memref<1x256x128xbf16, #tpu.memory_space<vmem>>, vector<1x256x128xbf16>,
    %cst_7 = arith.constant dense<0.000000e+00> : vector<128xf32>
    %10 = vector.multi_reduction <add>, %5, %cst_7 [0] : vector<256x128xf32> to vector<128xf32>
    %11 = vector.shape_cast %10 : vector<128xf32> to vector<1x128xf32>
    %c0_8 = arith.constant 0 : index
    %c0_9 = arith.constant 0 : index
    %c0_10 = arith.constant 0 : index
    %12 = vector.load %arg5[%c0_8, %c0_9, %c0_10] : memref<1x1x128xf32, #tpu.memory_space<vmem>>, vector<1x1x128xf32>
    %13 = vector.shape_cast %12 : vector<1x1x128xf32> to vector<1x128xf32>
    %14 = vector.shape_cast %11 : vector<1x128xf32> to vector<1x1x128xf32>
    tpu.vector_store %arg5[%c0_8, %c0_9, %c0_10], %14 {strides = array<i32>} : memref<1x1x128xf32, #tpu.memory_space<vmem>>, vector<1x1x128xf32>,
    %15 = arith.mulf %5, %5 : vector<256x128xf32>
    %cst_11 = arith.constant dense<0.000000e+00> : vector<128xf32>
    %16 = vector.multi_reduction <add>, %15, %cst_11 [0] : vector<256x128xf32> to vector<128xf32>
    %17 = vector.shape_cast %16 : vector<128xf32> to vector<1x128xf32>
    %c0_12 = arith.constant 0 : index
    %c0_13 = arith.constant 0 : index
    %c0_14 = arith.constant 0 : index
    %18 = vector.load %arg6[%c0_12, %c0_13, %c0_14] : memref<1x1x128xf32, #tpu.memory_space<vmem>>, vector<1x1x128xf32>
    %19 = vector.shape_cast %18 : vector<1x1x128xf32> to vector<1x128xf32>
    %20 = vector.shape_cast %17 : vector<1x128xf32> to vector<1x1x128xf32>
    tpu.vector_store %arg6[%c0_12, %c0_13, %c0_14], %20 {strides = array<i32>} : memref<1x1x128xf32, #tpu.memory_space<vmem>>, vector<1x1x128xf32>,
    return
  }
  func.func @transform_0(%arg0: i32, %arg1: i32) -> (i32, i32, i32, i32) {
    %c0_i32 = arith.constant 0 : i32
    %c0_i32_0 = arith.constant 0 : i32
    %c0_i32_1 = arith.constant 0 : i32
    %c0_i32_2 = arith.constant 0 : i32
    return %arg0, %c0_i32, %c0_i32_0, %c0_i32_1 : i32, i32, i32, i32
  }
  func.func @transform_1(%arg0: i32, %arg1: i32) -> (i32, i32) {
    %c0_i32 = arith.constant 0 : i32
    %c0_i32_0 = arith.constant 0 : i32
    return %c0_i32, %arg1 : i32, i32
  }
  func.func @transform_2(%arg0: i32, %arg1: i32) -> (i32, i32, i32) {
    %c0_i32 = arith.constant 0 : i32
    %c0_i32_0 = arith.constant 0 : i32
    return %arg0, %c0_i32, %arg1 : i32, i32, i32
  }
  func.func @transform_3(%arg0: i32, %arg1: i32) -> (i32, i32, i32) {
    %c0_i32 = arith.constant 0 : i32
    %c0_i32_0 = arith.constant 0 : i32
    return %arg0, %c0_i32, %arg1 : i32, i32, i32
  }
  func.func @transform_4(%arg0: i32, %arg1: i32) -> (i32, i32, i32) {
    %c0_i32 = arith.constant 0 : i32
    %c0_i32_0 = arith.constant 0 : i32
    return %arg0, %c0_i32, %arg1 : i32, i32, i32
  }
}

module attributes {stable_mosaic.version = 11 : i64} {
  func.func @_bn_relu_conv2_kernel(%arg0: i32, %arg1: i32, %arg2: memref<1x256x128xbf16, #tpu.memory_space<vmem>>, %arg3: memref<1x128xf32, #tpu.memory_space<vmem>>, %arg4: memref<1x128xf32, #tpu.memory_space<vmem>>, %arg5: memref<1152x128xbf16, #tpu.memory_space<vmem>>, %arg6: memref<1x256x128xbf16, #tpu.memory_space<vmem>>, %arg7: memref<1x1x128xf32, #tpu.memory_space<vmem>>, %arg8: memref<1x1x128xf32, #tpu.memory_space<vmem>>, %arg9: memref<18x18x128xbf16, #tpu.memory_space<vmem>>, %arg10: memref<256x1152xbf16, #tpu.memory_space<vmem>>) attributes {dimension_semantics = [#tpu.dimension_semantics<parallel>, #tpu.dimension_semantics<arbitrary>], iteration_bounds = array<i64: 2, 1>, scalar_prefetch = 0 : i64, scratch_operands = 2 : i64, tpu.core_type = #tpu.core_type<tc>, window_params = [{transform_indices = @transform_0, window_bounds = array<i64: 1, 256, 128>}, {pipeline_mode = #tpu.pipeline_mode<synchronous>, transform_indices = @transform_1, window_bounds = array<i64: 1, 128>}, {pipeline_mode = #tpu.pipeline_mode<synchronous>, transform_indices = @transform_2, window_bounds = array<i64: 1, 128>}, {transform_indices = @transform_3, window_bounds = array<i64: 1152, 128>}, {transform_indices = @transform_4, window_bounds = array<i64: 1, 256, 128>}, {transform_indices = @transform_5, window_bounds = array<i64: 1, 1, 128>}, {transform_indices = @transform_6, window_bounds = array<i64: 1, 1, 128>}]} {
    %c0_i32 = arith.constant 0 : i32
    %0 = arith.cmpi eq, %arg1, %c0_i32 : i32
    %1 = arith.extui %0 : i1 to i32
    %c0_i32_0 = arith.constant 0 : i32
    %2 = arith.cmpi ne, %1, %c0_i32_0 : i32
    scf.if %2 {
      %c0_15 = arith.constant 0 : index
      %c0_16 = arith.constant 0 : index
      %c0_17 = arith.constant 0 : index
      %21 = vector.load %arg2[%c0_15, %c0_16, %c0_17] : memref<1x256x128xbf16, #tpu.memory_space<vmem>>, vector<1x256x128xbf16>
      %22 = vector.shape_cast %21 : vector<1x256x128xbf16> to vector<256x128xbf16>
      %23 = arith.extf %22 : vector<256x128xbf16> to vector<256x128xf32>
      %c0_18 = arith.constant 0 : index
      %c0_19 = arith.constant 0 : index
      %24 = vector.load %arg3[%c0_18, %c0_19] : memref<1x128xf32, #tpu.memory_space<vmem>>, vector<1x128xf32>
      %25 = vector.broadcast %24 : vector<1x128xf32> to vector<256x128xf32>
      %26 = arith.mulf %23, %25 : vector<256x128xf32>
      %c0_20 = arith.constant 0 : index
      %c0_21 = arith.constant 0 : index
      %27 = vector.load %arg4[%c0_20, %c0_21] : memref<1x128xf32, #tpu.memory_space<vmem>>, vector<1x128xf32>
      %28 = vector.broadcast %27 : vector<1x128xf32> to vector<256x128xf32>
      %29 = arith.addf %26, %28 : vector<256x128xf32>
      %cst_22 = arith.constant 0.000000e+00 : f32
      %30 = vector.broadcast %cst_22 : f32 to vector<256x128xf32>
      %31 = arith.maximumf %29, %30 : vector<256x128xf32>
      %cst_23 = arith.constant 0.000000e+00 : bf16
      %32 = vector.broadcast %cst_23 : bf16 to vector<18x18x128xbf16>
      %c0_24 = arith.constant 0 : index
      %c0_25 = arith.constant 0 : index
      %c0_26 = arith.constant 0 : index
      %33 = vector.load %arg9[%c0_24, %c0_25, %c0_26] : memref<18x18x128xbf16, #tpu.memory_space<vmem>>, vector<18x18x128xbf16>
      tpu.vector_store %arg9[%c0_24, %c0_25, %c0_26], %32 {strides = array<i32>} : memref<18x18x128xbf16, #tpu.memory_space<vmem>>, vector<18x18x128xbf16>,
      %34 = arith.truncf %31 : vector<256x128xf32> to vector<256x128xbf16>
      %35 = vector.shape_cast %34 : vector<256x128xbf16> to vector<16x16x128xbf16>
      %c1 = arith.constant 1 : index
      %c1_27 = arith.constant 1 : index
      %c0_28 = arith.constant 0 : index
      %36 = vector.load %arg9[%c1, %c1_27, %c0_28] : memref<18x18x128xbf16, #tpu.memory_space<vmem>>, vector<16x16x128xbf16>
      tpu.vector_store %arg9[%c1, %c1_27, %c0_28], %35 {strides = array<i32>} : memref<18x18x128xbf16, #tpu.memory_space<vmem>>, vector<16x16x128xbf16>,
      %c0_29 = arith.constant 0 : index
      %c0_30 = arith.constant 0 : index
      %c0_31 = arith.constant 0 : index
      %37 = vector.load %arg9[%c0_29, %c0_30, %c0_31] : memref<18x18x128xbf16, #tpu.memory_space<vmem>>, vector<16x16x128xbf16>
      %38 = vector.shape_cast %37 : vector<16x16x128xbf16> to vector<256x128xbf16>
      %c0_32 = arith.constant 0 : index
      %c0_33 = arith.constant 0 : index
      %39 = vector.load %arg10[%c0_32, %c0_33] : memref<256x1152xbf16, #tpu.memory_space<vmem>>, vector<256x128xbf16>
      tpu.vector_store %arg10[%c0_32, %c0_33], %38 {strides = array<i32>} : memref<256x1152xbf16, #tpu.memory_space<vmem>>, vector<256x128xbf16>,
      %c0_34 = arith.constant 0 : index
      %c1_35 = arith.constant 1 : index
      %c0_36 = arith.constant 0 : index
      %40 = vector.load %arg9[%c0_34, %c1_35, %c0_36] : memref<18x18x128xbf16, #tpu.memory_space<vmem>>, vector<16x16x128xbf16>
      %41 = vector.shape_cast %40 : vector<16x16x128xbf16> to vector<256x128xbf16>
      %c0_37 = arith.constant 0 : index
      %c128 = arith.constant 128 : index
      %42 = vector.load %arg10[%c0_37, %c128] : memref<256x1152xbf16, #tpu.memory_space<vmem>>, vector<256x128xbf16>
      tpu.vector_store %arg10[%c0_37, %c128], %41 {strides = array<i32>} : memref<256x1152xbf16, #tpu.memory_space<vmem>>, vector<256x128xbf16>,
      %c0_38 = arith.constant 0 : index
      %c2 = arith.constant 2 : index
      %c0_39 = arith.constant 0 : index
      %43 = vector.load %arg9[%c0_38, %c2, %c0_39] : memref<18x18x128xbf16, #tpu.memory_space<vmem>>, vector<16x16x128xbf16>
      %44 = vector.shape_cast %43 : vector<16x16x128xbf16> to vector<256x128xbf16>
      %c0_40 = arith.constant 0 : index
      %c256 = arith.constant 256 : index
      %45 = vector.load %arg10[%c0_40, %c256] : memref<256x1152xbf16, #tpu.memory_space<vmem>>, vector<256x128xbf16>
      tpu.vector_store %arg10[%c0_40, %c256], %44 {strides = array<i32>} : memref<256x1152xbf16, #tpu.memory_space<vmem>>, vector<256x128xbf16>,
      %c1_41 = arith.constant 1 : index
      %c0_42 = arith.constant 0 : index
      %c0_43 = arith.constant 0 : index
      %46 = vector.load %arg9[%c1_41, %c0_42, %c0_43] : memref<18x18x128xbf16, #tpu.memory_space<vmem>>, vector<16x16x128xbf16>
      %47 = vector.shape_cast %46 : vector<16x16x128xbf16> to vector<256x128xbf16>
      %c0_44 = arith.constant 0 : index
      %c384 = arith.constant 384 : index
      %48 = vector.load %arg10[%c0_44, %c384] : memref<256x1152xbf16, #tpu.memory_space<vmem>>, vector<256x128xbf16>
      tpu.vector_store %arg10[%c0_44, %c384], %47 {strides = array<i32>} : memref<256x1152xbf16, #tpu.memory_space<vmem>>, vector<256x128xbf16>,
      %c1_45 = arith.constant 1 : index
      %c1_46 = arith.constant 1 : index
      %c0_47 = arith.constant 0 : index
      %49 = vector.load %arg9[%c1_45, %c1_46, %c0_47] : memref<18x18x128xbf16, #tpu.memory_space<vmem>>, vector<16x16x128xbf16>
      %50 = vector.shape_cast %49 : vector<16x16x128xbf16> to vector<256x128xbf16>
      %c0_48 = arith.constant 0 : index
      %c512 = arith.constant 512 : index
      %51 = vector.load %arg10[%c0_48, %c512] : memref<256x1152xbf16, #tpu.memory_space<vmem>>, vector<256x128xbf16>
      tpu.vector_store %arg10[%c0_48, %c512], %50 {strides = array<i32>} : memref<256x1152xbf16, #tpu.memory_space<vmem>>, vector<256x128xbf16>,
      %c1_49 = arith.constant 1 : index
      %c2_50 = arith.constant 2 : index
      %c0_51 = arith.constant 0 : index
      %52 = vector.load %arg9[%c1_49, %c2_50, %c0_51] : memref<18x18x128xbf16, #tpu.memory_space<vmem>>, vector<16x16x128xbf16>
      %53 = vector.shape_cast %52 : vector<16x16x128xbf16> to vector<256x128xbf16>
      %c0_52 = arith.constant 0 : index
      %c640 = arith.constant 640 : index
      %54 = vector.load %arg10[%c0_52, %c640] : memref<256x1152xbf16, #tpu.memory_space<vmem>>, vector<256x128xbf16>
      tpu.vector_store %arg10[%c0_52, %c640], %53 {strides = array<i32>} : memref<256x1152xbf16, #tpu.memory_space<vmem>>, vector<256x128xbf16>,
      %c2_53 = arith.constant 2 : index
      %c0_54 = arith.constant 0 : index
      %c0_55 = arith.constant 0 : index
      %55 = vector.load %arg9[%c2_53, %c0_54, %c0_55] : memref<18x18x128xbf16, #tpu.memory_space<vmem>>, vector<16x16x128xbf16>
      %56 = vector.shape_cast %55 : vector<16x16x128xbf16> to vector<256x128xbf16>
      %c0_56 = arith.constant 0 : index
      %c768 = arith.constant 768 : index
      %57 = vector.load %arg10[%c0_56, %c768] : memref<256x1152xbf16, #tpu.memory_space<vmem>>, vector<256x128xbf16>
      tpu.vector_store %arg10[%c0_56, %c768], %56 {strides = array<i32>} : memref<256x1152xbf16, #tpu.memory_space<vmem>>, vector<256x128xbf16>,
      %c2_57 = arith.constant 2 : index
      %c1_58 = arith.constant 1 : index
      %c0_59 = arith.constant 0 : index
      %58 = vector.load %arg9[%c2_57, %c1_58, %c0_59] : memref<18x18x128xbf16, #tpu.memory_space<vmem>>, vector<16x16x128xbf16>
      %59 = vector.shape_cast %58 : vector<16x16x128xbf16> to vector<256x128xbf16>
      %c0_60 = arith.constant 0 : index
      %c896 = arith.constant 896 : index
      %60 = vector.load %arg10[%c0_60, %c896] : memref<256x1152xbf16, #tpu.memory_space<vmem>>, vector<256x128xbf16>
      tpu.vector_store %arg10[%c0_60, %c896], %59 {strides = array<i32>} : memref<256x1152xbf16, #tpu.memory_space<vmem>>, vector<256x128xbf16>,
      %c2_61 = arith.constant 2 : index
      %c2_62 = arith.constant 2 : index
      %c0_63 = arith.constant 0 : index
      %61 = vector.load %arg9[%c2_61, %c2_62, %c0_63] : memref<18x18x128xbf16, #tpu.memory_space<vmem>>, vector<16x16x128xbf16>
      %62 = vector.shape_cast %61 : vector<16x16x128xbf16> to vector<256x128xbf16>
      %c0_64 = arith.constant 0 : index
      %c1024 = arith.constant 1024 : index
      %63 = vector.load %arg10[%c0_64, %c1024] : memref<256x1152xbf16, #tpu.memory_space<vmem>>, vector<256x128xbf16>
      tpu.vector_store %arg10[%c0_64, %c1024], %62 {strides = array<i32>} : memref<256x1152xbf16, #tpu.memory_space<vmem>>, vector<256x128xbf16>,
    } else {
    }
    %c0 = arith.constant 0 : index
    %c0_1 = arith.constant 0 : index
    %3 = vector.load %arg10[%c0, %c0_1] : memref<256x1152xbf16, #tpu.memory_space<vmem>>, vector<256x1152xbf16>
    %c0_2 = arith.constant 0 : index
    %c0_3 = arith.constant 0 : index
    %4 = vector.load %arg5[%c0_2, %c0_3] : memref<1152x128xbf16, #tpu.memory_space<vmem>>, vector<1152x128xbf16>
    %cst = arith.constant dense<0.000000e+00> : vector<256x128xf32>
    %5 = tpu.matmul %3, %4, %cst {dimension_numbers = #tpu.dot_dimension_numbers<[1], [0], [0], [1], [0, 0, 1, 1], [], []>} : vector<256x1152xbf16>, vector<1152x128xbf16>, vector<256x128xf32> -> vector<256x128xf32>
    %6 = arith.truncf %5 : vector<256x128xf32> to vector<256x128xbf16>
    %c0_4 = arith.constant 0 : index
    %c0_5 = arith.constant 0 : index
    %c0_6 = arith.constant 0 : index
    %7 = vector.load %arg6[%c0_4, %c0_5, %c0_6] : memref<1x256x128xbf16, #tpu.memory_space<vmem>>, vector<1x256x128xbf16>
    %8 = vector.shape_cast %7 : vector<1x256x128xbf16> to vector<256x128xbf16>
    %9 = vector.shape_cast %6 : vector<256x128xbf16> to vector<1x256x128xbf16>
    tpu.vector_store %arg6[%c0_4, %c0_5, %c0_6], %9 {strides = array<i32>} : memref<1x256x128xbf16, #tpu.memory_space<vmem>>, vector<1x256x128xbf16>,
    %cst_7 = arith.constant dense<0.000000e+00> : vector<128xf32>
    %10 = vector.multi_reduction <add>, %5, %cst_7 [0] : vector<256x128xf32> to vector<128xf32>
    %11 = vector.shape_cast %10 : vector<128xf32> to vector<1x128xf32>
    %c0_8 = arith.constant 0 : index
    %c0_9 = arith.constant 0 : index
    %c0_10 = arith.constant 0 : index
    %12 = vector.load %arg7[%c0_8, %c0_9, %c0_10] : memref<1x1x128xf32, #tpu.memory_space<vmem>>, vector<1x1x128xf32>
    %13 = vector.shape_cast %12 : vector<1x1x128xf32> to vector<1x128xf32>
    %14 = vector.shape_cast %11 : vector<1x128xf32> to vector<1x1x128xf32>
    tpu.vector_store %arg7[%c0_8, %c0_9, %c0_10], %14 {strides = array<i32>} : memref<1x1x128xf32, #tpu.memory_space<vmem>>, vector<1x1x128xf32>,
    %15 = arith.mulf %5, %5 : vector<256x128xf32>
    %cst_11 = arith.constant dense<0.000000e+00> : vector<128xf32>
    %16 = vector.multi_reduction <add>, %15, %cst_11 [0] : vector<256x128xf32> to vector<128xf32>
    %17 = vector.shape_cast %16 : vector<128xf32> to vector<1x128xf32>
    %c0_12 = arith.constant 0 : index
    %c0_13 = arith.constant 0 : index
    %c0_14 = arith.constant 0 : index
    %18 = vector.load %arg8[%c0_12, %c0_13, %c0_14] : memref<1x1x128xf32, #tpu.memory_space<vmem>>, vector<1x1x128xf32>
    %19 = vector.shape_cast %18 : vector<1x1x128xf32> to vector<1x128xf32>
    %20 = vector.shape_cast %17 : vector<1x128xf32> to vector<1x1x128xf32>
    tpu.vector_store %arg8[%c0_12, %c0_13, %c0_14], %20 {strides = array<i32>} : memref<1x1x128xf32, #tpu.memory_space<vmem>>, vector<1x1x128xf32>,
    return
  }
  func.func @transform_0(%arg0: i32, %arg1: i32) -> (i32, i32, i32) {
    %c0_i32 = arith.constant 0 : i32
    %c0_i32_0 = arith.constant 0 : i32
    %c0_i32_1 = arith.constant 0 : i32
    return %arg0, %c0_i32, %c0_i32_0 : i32, i32, i32
  }
  func.func @transform_1(%arg0: i32, %arg1: i32) -> (i32, i32) {
    %c0_i32 = arith.constant 0 : i32
    %c0_i32_0 = arith.constant 0 : i32
    %c0_i32_1 = arith.constant 0 : i32
    return %c0_i32, %c0_i32_0 : i32, i32
  }
  func.func @transform_2(%arg0: i32, %arg1: i32) -> (i32, i32) {
    %c0_i32 = arith.constant 0 : i32
    %c0_i32_0 = arith.constant 0 : i32
    %c0_i32_1 = arith.constant 0 : i32
    return %c0_i32, %c0_i32_0 : i32, i32
  }
  func.func @transform_3(%arg0: i32, %arg1: i32) -> (i32, i32) {
    %c0_i32 = arith.constant 0 : i32
    %c0_i32_0 = arith.constant 0 : i32
    return %c0_i32, %arg1 : i32, i32
  }
  func.func @transform_4(%arg0: i32, %arg1: i32) -> (i32, i32, i32) {
    %c0_i32 = arith.constant 0 : i32
    %c0_i32_0 = arith.constant 0 : i32
    return %arg0, %c0_i32, %arg1 : i32, i32, i32
  }
  func.func @transform_5(%arg0: i32, %arg1: i32) -> (i32, i32, i32) {
    %c0_i32 = arith.constant 0 : i32
    %c0_i32_0 = arith.constant 0 : i32
    return %arg0, %c0_i32, %arg1 : i32, i32, i32
  }
  func.func @transform_6(%arg0: i32, %arg1: i32) -> (i32, i32, i32) {
    %c0_i32 = arith.constant 0 : i32
    %c0_i32_0 = arith.constant 0 : i32
    return %arg0, %c0_i32, %arg1 : i32, i32, i32
  }
}

module attributes {stable_mosaic.version = 11 : i64} {
  func.func @_bn_relu_t_kernel(%arg0: i32, %arg1: i32, %arg2: memref<1x256x128xbf16, #tpu.memory_space<vmem>>, %arg3: memref<1x128xf32, #tpu.memory_space<vmem>>, %arg4: memref<1x128xf32, #tpu.memory_space<vmem>>, %arg5: memref<1x128x256xf32, #tpu.memory_space<vmem>>) attributes {dimension_semantics = [#tpu.dimension_semantics<parallel>, #tpu.dimension_semantics<parallel>], iteration_bounds = array<i64: 2, 1>, scalar_prefetch = 0 : i64, scratch_operands = 0 : i64, tpu.core_type = #tpu.core_type<tc>, window_params = [{transform_indices = @transform_0, window_bounds = array<i64: 1, 256, 128>}, {transform_indices = @transform_1, window_bounds = array<i64: 1, 128>}, {transform_indices = @transform_2, window_bounds = array<i64: 1, 128>}, {transform_indices = @transform_3, window_bounds = array<i64: 1, 128, 256>}]} {
    %c0 = arith.constant 0 : index
    %c0_0 = arith.constant 0 : index
    %c0_1 = arith.constant 0 : index
    %0 = vector.load %arg2[%c0, %c0_0, %c0_1] : memref<1x256x128xbf16, #tpu.memory_space<vmem>>, vector<1x256x128xbf16>
    %1 = vector.shape_cast %0 : vector<1x256x128xbf16> to vector<256x128xbf16>
    %2 = arith.extf %1 : vector<256x128xbf16> to vector<256x128xf32>
    %c0_2 = arith.constant 0 : index
    %c0_3 = arith.constant 0 : index
    %3 = vector.load %arg3[%c0_2, %c0_3] : memref<1x128xf32, #tpu.memory_space<vmem>>, vector<1x128xf32>
    %4 = vector.broadcast %3 : vector<1x128xf32> to vector<256x128xf32>
    %5 = arith.mulf %2, %4 : vector<256x128xf32>
    %c0_4 = arith.constant 0 : index
    %c0_5 = arith.constant 0 : index
    %6 = vector.load %arg4[%c0_4, %c0_5] : memref<1x128xf32, #tpu.memory_space<vmem>>, vector<1x128xf32>
    %7 = vector.broadcast %6 : vector<1x128xf32> to vector<256x128xf32>
    %8 = arith.addf %5, %7 : vector<256x128xf32>
    %cst = arith.constant 0.000000e+00 : f32
    %9 = vector.broadcast %cst : f32 to vector<256x128xf32>
    %10 = arith.maximumf %8, %9 : vector<256x128xf32>
    %11 = tpu.transpose %10, [1, 0] : vector<256x128xf32> -> vector<128x256xf32>
    %c0_6 = arith.constant 0 : index
    %c0_7 = arith.constant 0 : index
    %c0_8 = arith.constant 0 : index
    %12 = vector.load %arg5[%c0_6, %c0_7, %c0_8] : memref<1x128x256xf32, #tpu.memory_space<vmem>>, vector<1x128x256xf32>
    %13 = vector.shape_cast %12 : vector<1x128x256xf32> to vector<128x256xf32>
    %14 = vector.shape_cast %11 : vector<128x256xf32> to vector<1x128x256xf32>
    tpu.vector_store %arg5[%c0_6, %c0_7, %c0_8], %14 {strides = array<i32>} : memref<1x128x256xf32, #tpu.memory_space<vmem>>, vector<1x128x256xf32>,
    return
  }
  func.func @transform_0(%arg0: i32, %arg1: i32) -> (i32, i32, i32) {
    %c0_i32 = arith.constant 0 : i32
    %c0_i32_0 = arith.constant 0 : i32
    return %arg0, %c0_i32, %arg1 : i32, i32, i32
  }
  func.func @transform_1(%arg0: i32, %arg1: i32) -> (i32, i32) {
    %c0_i32 = arith.constant 0 : i32
    %c0_i32_0 = arith.constant 0 : i32
    return %c0_i32, %arg1 : i32, i32
  }
  func.func @transform_2(%arg0: i32, %arg1: i32) -> (i32, i32) {
    %c0_i32 = arith.constant 0 : i32
    %c0_i32_0 = arith.constant 0 : i32
    return %c0_i32, %arg1 : i32, i32
  }
  func.func @transform_3(%arg0: i32, %arg1: i32) -> (i32, i32, i32) {
    %c0_i32 = arith.constant 0 : i32
    %c0_i32_0 = arith.constant 0 : i32
    return %arg0, %arg1, %c0_i32 : i32, i32, i32
  }
}

</mosaic_0001>

<llo_original>
// kernel: bottleneck_forward.5
$region0: #{bottleneck_forward.5}
  #allocation0 [shape = 'u32[]', space=smem, size = 0x4, offset = 0x4, fixed_abs, tag = 'smem constant byte address 0x4 - core index']
  #allocation1 [shape = 'u32[144,128]{1,0:T(1,128)}', space=vmem, size = 0x12000, scoped, tag = 'internal scratch']
  %s0 = inlined_call_operand.vmem [shape: bf16[2,256,128], index: 0, kind: input, shape index: {}]
  %s1 = inlined_call_operand.vmem [shape: f32[1,128], index: 1, kind: input, shape index: {}]
  %s2 = inlined_call_operand.vmem [shape: f32[1,128], index: 2, kind: input, shape index: {}]
  %s3 = inlined_call_operand.vmem [shape: f32[2,128,256], index: 3, kind: output, shape index: {}]
  %s4 = sld [smem:[#allocation0]]
  $region45: #{bottleneck_forward.5} parent=0
    _
  %s6 = ssub.s32 1, %s4
  %s7 = scalar_select 0, %s6, %s4
  loop: start=0, step=1, limit=4
  $region2: #{bottleneck_forward.5} parent=0 // loop_pre_header
    _
  $region3: #{bottleneck_forward.5} parent=0 // loop_header
    %s9 = sphi 0, %s13
    %p10 = scmp.ge.s32.totalorder %s9, 4
    %s16 = sphi 0, %s28
    %s17 = sphi 0, %s24
    %s18 = sphi 0, %s16
    %s19 = sphi 0, %s17
    %s20 = sphi 0, %s18
    %s21 = sphi 0, %s19
    %s33 = sphi 0, %s35
    %s36 = sphi 0, %s33
    %s37 = sphi 0, %s36
    %s53 = sphi 0, %s37
    %s59 = sphi 0, %s61
    %s62 = sphi 0, %s59
    %s63 = sphi 0, %s62
    %s79 = sphi 0, %s63
    %s85 = sphi 0, %s87
    %s88 = sphi 0, %s85
    %s89 = sphi 0, %s88
    %s105 = sphi 0, %s89
    %s113 = sphi 0, %s115
    %s116 = sphi 0, %s113
    %s117 = sphi 0, %s116
    %s133 = sphi 0, %s117
  $region4: #{bottleneck_forward.5} parent=0 // loop_header_branch
    %12 = sbr.rel (%p10) target = $region8
  $region5: #{bottleneck_forward.5} parent=0 // loop_body
    %s14 = ssub.s32 %s9, 1
    %s15 = ssub.s32 %s9, 2
    %s22 = sadd.s32 1, %s17
    %p23 = scmp.ge.s32.totalorder %s22, 1
    %s24 = scalar_select %p23, 0, %s22
    %s25 = sadd.s32 1, %s16
    %s26 = scalar_select %p23, %s25, %s16
    %p27 = scmp.ge.s32.totalorder %s26, 2
    %s28 = scalar_select %p27, 0, %s26
    %s29 = ssub.s32 %s16, %s28
    %s30 = ssub.s32 %s17, %s24
    %s31 = sor.u32 %s29, %s30
    %p32 = scmp.eq.s32.totalorder %s31, 0
    %s34 = sadd.s32 %s33, 1
    %s35 = scalar_select %p32, %s33, %s34
    %p38 = pneg %p32
    %p39 = scmp.eq.s32.totalorder %s9, 1
    %p40 = por %p38, %p39
    %p41 = scmp.ne.s32.totalorder %s33, %s36
    %p42 = scmp.eq.s32.totalorder %s9, 0
    %p43 = por %p41, %p42
    %p44 = scmp.ne.s32.totalorder %s33, %s36
    %p45 = scmp.eq.s32.totalorder %s14, 1
    %p46 = por %p44, %p45
    %p47 = scmp.ne.s32.totalorder %s36, %s37
    %p48 = scmp.eq.s32.totalorder %s14, 0
    %p49 = por %p47, %p48
    %p50 = scmp.ne.s32.totalorder %s36, %s37
    %p51 = scmp.eq.s32.totalorder %s15, 1
    %p52 = por %p50, %p51
    %p54 = scmp.ne.s32.totalorder %s37, %s53
    %p55 = scmp.eq.s32.totalorder %s15, 0
    %p56 = por %p54, %p55
    %s57 = ssub.s32 %s17, %s24
    %p58 = scmp.eq.s32.totalorder %s57, 0
    %s60 = sadd.s32 %s59, 1
    %s61 = scalar_select %p58, %s59, %s60
    %p64 = pneg %p58
    %p65 = scmp.eq.s32.totalorder %s9, 1
    %p66 = por %p64, %p65
    %p67 = scmp.ne.s32.totalorder %s59, %s62
    %p68 = scmp.eq.s32.totalorder %s9, 0
    %p69 = por %p67, %p68
    %p70 = scmp.ne.s32.totalorder %s59, %s62
    %p71 = scmp.eq.s32.totalorder %s14, 1
    %p72 = por %p70, %p71
    %p73 = scmp.ne.s32.totalorder %s62, %s63
    %p74 = scmp.eq.s32.totalorder %s14, 0
    %p75 = por %p73, %p74
    %p76 = scmp.ne.s32.totalorder %s62, %s63
    %p77 = scmp.eq.s32.totalorder %s15, 1
    %p78 = por %p76, %p77
    %p80 = scmp.ne.s32.totalorder %s63, %s79
    %p81 = scmp.eq.s32.totalorder %s15, 0
    %p82 = por %p80, %p81
    %s83 = ssub.s32 %s17, %s24
    %p84 = scmp.eq.s32.totalorder %s83, 0
    %s86 = sadd.s32 %s85, 1
    %s87 = scalar_select %p84, %s85, %s86
    %p90 = pneg %p84
    %p91 = scmp.eq.s32.totalorder %s9, 1
    %p92 = por %p90, %p91
    %p93 = scmp.ne.s32.totalorder %s85, %s88
    %p94 = scmp.eq.s32.totalorder %s9, 0
    %p95 = por %p93, %p94
    %p96 = scmp.ne.s32.totalorder %s85, %s88
    %p97 = scmp.eq.s32.totalorder %s14, 1
    %p98 = por %p96, %p97
    %p99 = scmp.ne.s32.totalorder %s88, %s89
    %p100 = scmp.eq.s32.totalorder %s14, 0
    %p101 = por %p99, %p100
    %p102 = scmp.ne.s32.totalorder %s88, %s89
    %p103 = scmp.eq.s32.totalorder %s15, 1
    %p104 = por %p102, %p103
    %p106 = scmp.ne.s32.totalorder %s89, %s105
    %p107 = scmp.eq.s32.totalorder %s15, 0
    %p108 = por %p106, %p107
    %s109 = ssub.s32 %s16, %s28
    %s110 = ssub.s32 %s17, %s24
    %s111 = sor.u32 %s109, %s110
    %p112 = scmp.eq.s32.totalorder %s111, 0
    %s114 = sadd.s32 %s113, 1
    %s115 = scalar_select %p112, %s113, %s114
    %p118 = pneg %p112
    %p119 = scmp.eq.s32.totalorder %s9, 1
    %p120 = por %p118, %p119
    %p121 = scmp.ne.s32.totalorder %s113, %s116
    %p122 = scmp.eq.s32.totalorder %s9, 0
    %p123 = por %p121, %p122
    %p124 = scmp.ne.s32.totalorder %s113, %s116
    %p125 = scmp.eq.s32.totalorder %s14, 1
    %p126 = por %p124, %p125
    %p127 = scmp.ne.s32.totalorder %s116, %s117
    %p128 = scmp.eq.s32.totalorder %s14, 0
    %p129 = por %p127, %p128
    %p130 = scmp.ne.s32.totalorder %s116, %s117
    %p131 = scmp.eq.s32.totalorder %s15, 1
    %p132 = por %p130, %p131
    %p134 = scmp.ne.s32.totalorder %s117, %s133
    %p135 = scmp.eq.s32.totalorder %s15, 0
    %p136 = por %p134, %p135
    %p137 = scmp.le.s32.totalorder 1, %s9
    %p138 = scmp.lt.s32.totalorder %s9, 3
    %p139 = pnand %p137, %p138
    %p140 = pneg %p139
    // Predicated region
    $region9: #{bottleneck_forward.5} parent=5 // pred_check
      _
    $region10: #{bottleneck_forward.5} parent=5 // pred_check_branch
      %142 = sbr.rel (%p139) target = $region12
    $region11: #{bottleneck_forward.5} parent=5 // pred_region
      %s143 = ssub.s32 %s9, 1
      // Predicated region
      $region13: #{bottleneck_forward.5} parent=11 // pred_check
        %p144 = pneg %p75
      $region14: #{bottleneck_forward.5} parent=11 // pred_check_branch
        %146 = sbr.rel (%p144) target = $region16
      $region15: #{bottleneck_forward.5} parent=11 // pred_region
        %p147 = scmp.lt.s32.totalorder %s19, 0
        %s148 = scalar_select %p147, %s19, 0
        %s149 = scalar_lea.vmem %s1, %s148
      $region16: #{bottleneck_forward.5} parent=11 // pred_fallthru
        _
      // Predicated region
      $region17: #{bottleneck_forward.5} parent=11 // pred_check
        %p150 = pneg %p101
      $region18: #{bottleneck_forward.5} parent=11 // pred_check_branch
        %152 = sbr.rel (%p150) target = $region20
      $region19: #{bottleneck_forward.5} parent=11 // pred_region
        %p153 = scmp.lt.s32.totalorder %s19, 0
        %s154 = scalar_select %p153, %s19, 0
        %s155 = scalar_lea.vmem %s2, %s154
      $region20: #{bottleneck_forward.5} parent=11 // pred_fallthru
        _
    $region12: #{bottleneck_forward.5} parent=5 // pred_fallthru
      _
    %p156 = scmp.lt.s32.totalorder %s9, 2
    // Predicated region
    $region21: #{bottleneck_forward.5} parent=5 // pred_check
      %p157 = pneg %p156
    $region22: #{bottleneck_forward.5} parent=5 // pred_check_branch
      %159 = sbr.rel (%p157) target = $region24
    $region23: #{bottleneck_forward.5} parent=5 // pred_region
      // Predicated region
      $region25: #{bottleneck_forward.5} parent=23 // pred_check
        %p160 = pneg %p43
      $region26: #{bottleneck_forward.5} parent=23 // pred_check_branch
        %162 = sbr.rel (%p160) target = $region28
      $region27: #{bottleneck_forward.5} parent=23 // pred_region
        %p163 = scmp.lt.s32.totalorder %s16, 1
        %s164 = scalar_select %p163, %s16, 1
        %p165 = scmp.lt.s32.totalorder %s17, 0
        %s166 = scalar_select %p165, %s17, 0
        %s167 = smul.addr %s164, 32
        %s168 = sadd.s32 %s166, %s167
        %s169 = smul.addr %s168, 4
        %s170 = scalar_lea.vmem %s0, %s169
      $region28: #{bottleneck_forward.5} parent=23 // pred_fallthru
        _
    $region24: #{bottleneck_forward.5} parent=5 // pred_fallthru
      _
    %p171 = scmp.le.s32.totalorder 1, %s9
    %p172 = scmp.lt.s32.totalorder %s9, 3
    %p173 = pnand %p171, %p172
    %p174 = pneg %p173
    // Predicated region
    $region29: #{bottleneck_forward.5} parent=5 // pred_check
      _
    $region30: #{bottleneck_forward.5} parent=5 // pred_check_branch
      %176 = sbr.rel (%p173) target = $region32
    $region31: #{bottleneck_forward.5} parent=5 // pred_region
      %s177 = ssub.s32 %s9, 1
      %p178 = scmp.lt.s32.totalorder %s18, 1
      %s179 = scalar_select %p178, %s18, 1
      %p180 = scmp.lt.s32.totalorder %s19, 0
      %s181 = scalar_select %p180, %s19, 0
      %s182 = smul.addr %s179, 32
      %s183 = sadd.s32 %s181, %s182
      %s184 = smul.addr %s183, 4
      %s185 = scalar_lea.vmem %s0, %s184
      %p186 = pneg %p49
      %p187 = pneg %p46
      %p188 = scmp.lt.s32.totalorder %s19, 0
      %s189 = scalar_select %p188, %s19, 0
      %s190 = scalar_lea.vmem %s1, %s189
      %p191 = pneg %p75
      %p192 = pneg %p72
      %p193 = scmp.lt.s32.totalorder %s19, 0
      %s194 = scalar_select %p193, %s19, 0
      %s195 = scalar_lea.vmem %s2, %s194
      %p196 = pneg %p101
      %p197 = pneg %p98
      %p198 = pneg %p129
      %p199 = pneg %p126
      %s200 = smul.u32 16, %s19
      %p201 = scmp.lt.s32.totalorder %s18, 1
      %s202 = scalar_select %p201, %s18, 1
      %p203 = scmp.lt.s32.totalorder %s200, 15
      %s204 = scalar_select %p203, %s200, 15
      %s205 = smul.addr %s204, 2
      %s206 = smul.addr %s202, 32
      %s207 = sadd.s32 %s205, %s206
      %s208 = smul.addr %s207, 8
      %s209 = scalar_lea.vmem %s3, %s208
      %p210 = scmp.lt.s32.totalorder %s18, 1
      %s211 = scalar_select %p210, %s18, 1
      %p212 = scmp.lt.s32.totalorder %s19, 0
      %s213 = scalar_select %p212, %s19, 0
      %s214 = smul.addr %s211, 32
      %s215 = sadd.s32 %s213, %s214
      %s216 = smul.addr %s215, 4
      %s217 = scalar_lea.vmem %s0, %s216
      %p218 = scmp.lt.s32.totalorder %s19, 0
      %s219 = scalar_select %p218, %s19, 0
      %s220 = scalar_lea.vmem %s1, %s219
      %p221 = scmp.lt.s32.totalorder %s19, 0
      %s222 = scalar_select %p221, %s19, 0
      %s223 = scalar_lea.vmem %s2, %s222
      %s224 = smul.u32 16, %s19
      %p225 = scmp.lt.s32.totalorder %s18, 1
      %s226 = scalar_select %p225, %s18, 1
      %p227 = scmp.lt.s32.totalorder %s224, 15
      %s228 = scalar_select %p227, %s224, 15
      %s229 = smul.addr %s228, 2
      %s230 = smul.addr %s226, 32
      %s231 = sadd.s32 %s229, %s230
      %s232 = smul.addr %s231, 8
      %s233 = scalar_lea.vmem %s3, %s232
      %s234 = smul.u32 16, %s19
      %v235 = vld [vmem:[%s217] sm:$0xf]
      %v236 = vld [vmem:[%s217 + $0x4] sm:$0xf]
      %v237 = vld [vmem:[%s217 + $0x8] sm:$0xf]
      %v238 = vld [vmem:[%s217 + $0xc] sm:$0xf]
      %v239 = vld [vmem:[%s217 + $0x10] sm:$0xf]
      %v240 = vld [vmem:[%s217 + $0x14] sm:$0xf]
      %v241 = vld [vmem:[%s217 + $0x18] sm:$0xf]
      %v242 = vld [vmem:[%s217 + $0x1c] sm:$0xf]
      %v243 = vld [vmem:[%s217 + $0x20] sm:$0xf]
      %v244 = vld [vmem:[%s217 + $0x24] sm:$0xf]
      %v245 = vld [vmem:[%s217 + $0x28] sm:$0xf]
      %v246 = vld [vmem:[%s217 + $0x2c] sm:$0xf]
      %v247 = vld [vmem:[%s217 + $0x30] sm:$0xf]
      %v248 = vld [vmem:[%s217 + $0x34] sm:$0xf]
      %v249 = vld [vmem:[%s217 + $0x38] sm:$0xf]
      %v250 = vld [vmem:[%s217 + $0x3c] sm:$0xf]
      %v251 = vld [vmem:[%s217 + $0x40] sm:$0xf]
      %v252 = vld [vmem:[%s217 + $0x44] sm:$0xf]
      %v253 = vld [vmem:[%s217 + $0x48] sm:$0xf]
      %v254 = vld [vmem:[%s217 + $0x4c] sm:$0xf]
      %v255 = vld [vmem:[%s217 + $0x50] sm:$0xf]
      %v256 = vld [vmem:[%s217 + $0x54] sm:$0xf]
      %v257 = vld [vmem:[%s217 + $0x58] sm:$0xf]
      %v258 = vld [vmem:[%s217 + $0x5c] sm:$0xf]
      %v259 = vld [vmem:[%s217 + $0x60] sm:$0xf]
      %v260 = vld [vmem:[%s217 + $0x64] sm:$0xf]
      %v261 = vld [vmem:[%s217 + $0x68] sm:$0xf]
      %v262 = vld [vmem:[%s217 + $0x6c] sm:$0xf]
      %v263 = vld [vmem:[%s217 + $0x70] sm:$0xf]
      %v264 = vld [vmem:[%s217 + $0x74] sm:$0xf]
      %v265 = vld [vmem:[%s217 + $0x78] sm:$0xf]
      %v266 = vld [vmem:[%s217 + $0x7c] sm:$0xf]
      %v267 = vunpack.c.l.bf16 %v235
      %v268 = vunpack.c.l.bf16 %v236
      %v269 = vunpack.c.l.bf16 %v237
      %v270 = vunpack.c.l.bf16 %v238
      %v271 = vunpack.c.l.bf16 %v239
      %v272 = vunpack.c.l.bf16 %v240
      %v273 = vunpack.c.l.bf16 %v241
      %v274 = vunpack.c.l.bf16 %v242
      %v275 = vunpack.c.l.bf16 %v243
      %v276 = vunpack.c.l.bf16 %v244
      %v277 = vunpack.c.l.bf16 %v245
      %v278 = vunpack.c.l.bf16 %v246
      %v279 = vunpack.c.l.bf16 %v247
      %v280 = vunpack.c.l.bf16 %v248
      %v281 = vunpack.c.l.bf16 %v249
      %v282 = vunpack.c.l.bf16 %v250
      %v283 = vunpack.c.l.bf16 %v251
      %v284 = vunpack.c.l.bf16 %v252
      %v285 = vunpack.c.l.bf16 %v253
      %v286 = vunpack.c.l.bf16 %v254
      %v287 = vunpack.c.l.bf16 %v255
      %v288 = vunpack.c.l.bf16 %v256
      %v289 = vunpack.c.l.bf16 %v257
      %v290 = vunpack.c.l.bf16 %v258
      %v291 = vunpack.c.l.bf16 %v259
      %v292 = vunpack.c.l.bf16 %v260
      %v293 = vunpack.c.l.bf16 %v261
      %v294 = vunpack.c.l.bf16 %v262
      %v295 = vunpack.c.l.bf16 %v263
      %v296 = vunpack.c.l.bf16 %v264
      %v297 = vunpack.c.l.bf16 %v265
      %v298 = vunpack.c.l.bf16 %v266
      %v299 = vld [vmem:[%s220] sm:$0x1]
      %v301 = vlaneseq
      %v302 = vshrl.u32 %v301, 7
      %v303 = vsub.s32 0, %v302
      %v304 = vrot.slane %v299, %v303
      %v306 = vmul.f32 %v267, %v304
      %v307 = vmul.f32 %v268, %v304
      %v308 = vmul.f32 %v269, %v304
      %v309 = vmul.f32 %v270, %v304
      %v310 = vmul.f32 %v271, %v304
      %v311 = vmul.f32 %v272, %v304
      %v312 = vmul.f32 %v273, %v304
      %v313 = vmul.f32 %v274, %v304
      %v314 = vmul.f32 %v275, %v304
      %v315 = vmul.f32 %v276, %v304
      %v316 = vmul.f32 %v277, %v304
      %v317 = vmul.f32 %v278, %v304
      %v318 = vmul.f32 %v279, %v304
      %v319 = vmul.f32 %v280, %v304
      %v320 = vmul.f32 %v281, %v304
      %v321 = vmul.f32 %v282, %v304
      %v322 = vmul.f32 %v283, %v304
      %v323 = vmul.f32 %v284, %v304
      %v324 = vmul.f32 %v285, %v304
      %v325 = vmul.f32 %v286, %v304
      %v326 = vmul.f32 %v287, %v304
      %v327 = vmul.f32 %v288, %v304
      %v328 = vmul.f32 %v289, %v304
      %v329 = vmul.f32 %v290, %v304
      %v330 = vmul.f32 %v291, %v304
      %v331 = vmul.f32 %v292, %v304
      %v332 = vmul.f32 %v293, %v304
      %v333 = vmul.f32 %v294, %v304
      %v334 = vmul.f32 %v295, %v304
      %v335 = vmul.f32 %v296, %v304
      %v336 = vmul.f32 %v297, %v304
      %v337 = vmul.f32 %v298, %v304
      %v338 = vld [vmem:[%s223] sm:$0x1]
      %v340 = vlaneseq
      %v341 = vshrl.u32 %v340, 7
      %v342 = vsub.s32 0, %v341
      %v343 = vrot.slane %v338, %v342
      %v345 = vadd.f32 %v306, %v343
      %v346 = vadd.f32 %v307, %v343
      %v347 = vadd.f32 %v308, %v343
      %v348 = vadd.f32 %v309, %v343
      %v349 = vadd.f32 %v310, %v343
      %v350 = vadd.f32 %v311, %v343
      %v351 = vadd.f32 %v312, %v343
      %v352 = vadd.f32 %v313, %v343
      %v353 = vadd.f32 %v314, %v343
      %v354 = vadd.f32 %v315, %v343
      %v355 = vadd.f32 %v316, %v343
      %v356 = vadd.f32 %v317, %v343
      %v357 = vadd.f32 %v318, %v343
      %v358 = vadd.f32 %v319, %v343
      %v359 = vadd.f32 %v320, %v343
      %v360 = vadd.f32 %v321, %v343
      %v361 = vadd.f32 %v322, %v343
      %v362 = vadd.f32 %v323, %v343
      %v363 = vadd.f32 %v324, %v343
      %v364 = vadd.f32 %v325, %v343
      %v365 = vadd.f32 %v326, %v343
      %v366 = vadd.f32 %v327, %v343
      %v367 = vadd.f32 %v328, %v343
      %v368 = vadd.f32 %v329, %v343
      %v369 = vadd.f32 %v330, %v343
      %v370 = vadd.f32 %v331, %v343
      %v371 = vadd.f32 %v332, %v343
      %v372 = vadd.f32 %v333, %v343
      %v373 = vadd.f32 %v334, %v343
      %v374 = vadd.f32 %v335, %v343
      %v375 = vadd.f32 %v336, %v343
      %v376 = vadd.f32 %v337, %v343
      %v377 = vmax.f32 %v345, 0.0
      %v378 = vmax.f32 %v346, 0.0
      %v379 = vmax.f32 %v347, 0.0
      %v380 = vmax.f32 %v348, 0.0
      %v381 = vmax.f32 %v349, 0.0
      %v382 = vmax.f32 %v350, 0.0
      %v383 = vmax.f32 %v351, 0.0
      %v384 = vmax.f32 %v352, 0.0
      %v385 = vmax.f32 %v353, 0.0
      %v386 = vmax.f32 %v354, 0.0
      %v387 = vmax.f32 %v355, 0.0
      %v388 = vmax.f32 %v356, 0.0
      %v389 = vmax.f32 %v357, 0.0
      %v390 = vmax.f32 %v358, 0.0
      %v391 = vmax.f32 %v359, 0.0
      %v392 = vmax.f32 %v360, 0.0
      %v393 = vmax.f32 %v361, 0.0
      %v394 = vmax.f32 %v362, 0.0
      %v395 = vmax.f32 %v363, 0.0
      %v396 = vmax.f32 %v364, 0.0
      %v397 = vmax.f32 %v365, 0.0
      %v398 = vmax.f32 %v366, 0.0
      %v399 = vmax.f32 %v367, 0.0
      %v400 = vmax.f32 %v368, 0.0
      %v401 = vmax.f32 %v369, 0.0
      %v402 = vmax.f32 %v370, 0.0
      %v403 = vmax.f32 %v371, 0.0
      %v404 = vmax.f32 %v372, 0.0
      %v405 = vmax.f32 %v373, 0.0
      %v406 = vmax.f32 %v374, 0.0
      %v407 = vmax.f32 %v375, 0.0
      %v408 = vmax.f32 %v376, 0.0
      %409 = vxpose.xlu0.b32.start [1/16] %v377, 128
      %410 = vxpose.xlu0.b32.cont [2/16] %v378, 128
      %411 = vxpose.xlu0.b32.cont [3/16] %v379, 128
      %412 = vxpose.xlu0.b32.cont [4/16] %v380, 128
      %413 = vxpose.xlu0.b32.cont [5/16] %v381, 128
      %414 = vxpose.xlu0.b32.cont [6/16] %v382, 128
      %415 = vxpose.xlu0.b32.cont [7/16] %v383, 128
      %416 = vxpose.xlu0.b32.cont [8/16] %v384, 128
      %417 = vxpose.xlu0.b32.cont [9/16] %v385, 128
      %418 = vxpose.xlu0.b32.cont [10/16] %v386, 128
      %419 = vxpose.xlu0.b32.cont [11/16] %v387, 128
      %420 = vxpose.xlu0.b32.cont [12/16] %v388, 128
      %421 = vxpose.xlu0.b32.cont [13/16] %v389, 128
      %422 = vxpose.xlu0.b32.cont [14/16] %v390, 128
      %423 = vxpose.xlu0.b32.cont [15/16] %v391, 128
      %424 = vxpose.xlu0.b32.end [16/16] %v392, 128
      %v425 = vpop.trf.xlu0
      %v426 = vpop.trf.xlu0
      %v427 = vpop.trf.xlu0
      %v428 = vpop.trf.xlu0
      %v429 = vpop.trf.xlu0
      %v430 = vpop.trf.xlu0
      %v431 = vpop.trf.xlu0
      %v432 = vpop.trf.xlu0
      %v433 = vpop.trf.xlu0
      %v434 = vpop.trf.xlu0
      %v435 = vpop.trf.xlu0
      %v436 = vpop.trf.xlu0
      %v437 = vpop.trf.xlu0
      %v438 = vpop.trf.xlu0
      %v439 = vpop.trf.xlu0
      %v440 = vpop.trf.xlu0
      %441 = vxpose.xlu0.b32.start [1/16] %v393, 128
      %442 = vxpose.xlu0.b32.cont [2/16] %v394, 128
      %443 = vxpose.xlu0.b32.cont [3/16] %v395, 128
      %444 = vxpose.xlu0.b32.cont [4/16] %v396, 128
      %445 = vxpose.xlu0.b32.cont [5/16] %v397, 128
      %446 = vxpose.xlu0.b32.cont [6/16] %v398, 128
      %447 = vxpose.xlu0.b32.cont [7/16] %v399, 128
      %448 = vxpose.xlu0.b32.cont [8/16] %v400, 128
      %449 = vxpose.xlu0.b32.cont [9/16] %v401, 128
      %450 = vxpose.xlu0.b32.cont [10/16] %v402, 128
      %451 = vxpose.xlu0.b32.cont [11/16] %v403, 128
      %452 = vxpose.xlu0.b32.cont [12/16] %v404, 128
      %453 = vxpose.xlu0.b32.cont [13/16] %v405, 128
      %454 = vxpose.xlu0.b32.cont [14/16] %v406, 128
      %455 = vxpose.xlu0.b32.cont [15/16] %v407, 128
      %456 = vxpose.xlu0.b32.end [16/16] %v408, 128
      %v457 = vpop.trf.xlu0
      %v458 = vpop.trf.xlu0
      %v459 = vpop.trf.xlu0
      %v460 = vpop.trf.xlu0
      %v461 = vpop.trf.xlu0
      %v462 = vpop.trf.xlu0
      %v463 = vpop.trf.xlu0
      %v464 = vpop.trf.xlu0
      %v465 = vpop.trf.xlu0
      %v466 = vpop.trf.xlu0
      %v467 = vpop.trf.xlu0
      %v468 = vpop.trf.xlu0
      %v469 = vpop.trf.xlu0
      %v470 = vpop.trf.xlu0
      %v471 = vpop.trf.xlu0
      %v472 = vpop.trf.xlu0
      %473 = vst [vmem:[%s233] sm:$0xff] %v425
      %474 = vst [vmem:[%s233 + $0x8] sm:$0xff] %v457
      %475 = vst [vmem:[%s233 + $0x10] sm:$0xff] %v426
      %476 = vst [vmem:[%s233 + $0x18] sm:$0xff] %v458
      %477 = vst [vmem:[%s233 + $0x20] sm:$0xff] %v427
      %478 = vst [vmem:[%s233 + $0x28] sm:$0xff] %v459
      %479 = vst [vmem:[%s233 + $0x30] sm:$0xff] %v428
      %480 = vst [vmem:[%s233 + $0x38] sm:$0xff] %v460
      %481 = vst [vmem:[%s233 + $0x40] sm:$0xff] %v429
      %482 = vst [vmem:[%s233 + $0x48] sm:$0xff] %v461
      %483 = vst [vmem:[%s233 + $0x50] sm:$0xff] %v430
      %484 = vst [vmem:[%s233 + $0x58] sm:$0xff] %v462
      %485 = vst [vmem:[%s233 + $0x60] sm:$0xff] %v431
      %486 = vst [vmem:[%s233 + $0x68] sm:$0xff] %v463
      %487 = vst [vmem:[%s233 + $0x70] sm:$0xff] %v432
      %488 = vst [vmem:[%s233 + $0x78] sm:$0xff] %v464
      %489 = vst [vmem:[%s233 + $0x80] sm:$0xff] %v433
      %490 = vst [vmem:[%s233 + $0x88] sm:$0xff] %v465
      %491 = vst [vmem:[%s233 + $0x90] sm:$0xff] %v434
      %492 = vst [vmem:[%s233 + $0x98] sm:$0xff] %v466
      %493 = vst [vmem:[%s233 + $0xa0] sm:$0xff] %v435
      %494 = vst [vmem:[%s233 + $0xa8] sm:$0xff] %v467
      %495 = vst [vmem:[%s233 + $0xb0] sm:$0xff] %v436
      %496 = vst [vmem:[%s233 + $0xb8] sm:$0xff] %v468
      %497 = vst [vmem:[%s233 + $0xc0] sm:$0xff] %v437
      %498 = vst [vmem:[%s233 + $0xc8] sm:$0xff] %v469
      %499 = vst [vmem:[%s233 + $0xd0] sm:$0xff] %v438
      %500 = vst [vmem:[%s233 + $0xd8] sm:$0xff] %v470
      %501 = vst [vmem:[%s233 + $0xe0] sm:$0xff] %v439
      %502 = vst [vmem:[%s233 + $0xe8] sm:$0xff] %v471
      %503 = vst [vmem:[%s233 + $0xf0] sm:$0xff] %v440
      %504 = vst [vmem:[%s233 + $0xf8] sm:$0xff] %v472
      %s505 = smul.u32 16, %s19
      %p506 = scmp.lt.s32.totalorder %s18, 1
      %s507 = scalar_select %p506, %s18, 1
      %p508 = scmp.lt.s32.totalorder %s505, 15
      %s509 = scalar_select %p508, %s505, 15
      %s510 = smul.addr %s509, 2
      %s511 = smul.addr %s507, 32
      %s512 = sadd.s32 %s510, %s511
      %s513 = smul.addr %s512, 8
      %s514 = scalar_lea.vmem %s3, %s513
      // Predicated region
      $region33: #{bottleneck_forward.5} parent=31 // pred_check
        %p515 = pneg %p126
      $region34: #{bottleneck_forward.5} parent=31 // pred_check_branch
        %517 = sbr.rel (%p515) target = $region36
      $region35: #{bottleneck_forward.5} parent=31 // pred_region
        %s518 = smul.u32 16, %s19
      $region36: #{bottleneck_forward.5} parent=31 // pred_fallthru
        _
    $region32: #{bottleneck_forward.5} parent=5 // pred_fallthru
      _
    %p519 = scmp.le.s32.totalorder 2, %s9
    // Predicated region
    $region37: #{bottleneck_forward.5} parent=5 // pred_check
      %p520 = pneg %p519
    $region38: #{bottleneck_forward.5} parent=5 // pred_check_branch
      %522 = sbr.rel (%p520) target = $region40
    $region39: #{bottleneck_forward.5} parent=5 // pred_region
      %s523 = ssub.s32 %s9, 2
      // Predicated region
      $region41: #{bottleneck_forward.5} parent=39 // pred_check
        %p524 = pneg %p132
      $region42: #{bottleneck_forward.5} parent=39 // pred_check_branch
        %526 = sbr.rel (%p524) target = $region44
      $region43: #{bottleneck_forward.5} parent=39 // pred_region
        %s527 = smul.u32 16, %s21
        %p528 = scmp.lt.s32.totalorder %s20, 1
        %s529 = scalar_select %p528, %s20, 1
        %p530 = scmp.lt.s32.totalorder %s527, 15
        %s531 = scalar_select %p530, %s527, 15
        %s532 = smul.addr %s531, 2
        %s533 = smul.addr %s529, 32
        %s534 = sadd.s32 %s532, %s533
        %s535 = smul.addr %s534, 8
        %s536 = scalar_lea.vmem %s3, %s535
      $region44: #{bottleneck_forward.5} parent=39 // pred_fallthru
        _
    $region40: #{bottleneck_forward.5} parent=5 // pred_fallthru
      _
  $region6: #{bottleneck_forward.5} parent=0 // loop_footer
    %s13 = sadd.s32 1, %s9
  $region7: #{bottleneck_forward.5} parent=0 // loop_footer_branch
    %8 = sbr.rel target = $region3
  $region8: #{bottleneck_forward.5} parent=0 // loop_exit
    _

// kernel: bottleneck_forward.3
$region0: #{bottleneck_forward.3}
  #allocation0 [shape = 'u32[]', space=smem, size = 0x4, offset = 0x4, fixed_abs, tag = 'smem constant byte address 0x4 - core index']
  #allocation1 [shape = 'u32[144,128]{1,0:T(1,128)}', space=vmem, size = 0x12000, scoped, tag = 'internal scratch']
  #allocation2 [shape = 'bf16[256,1152]{1,0:T(8,128)(2,1)}', space=vmem, size = 0x90000, scoped, tag = 'scratch operand']
  %s0 = inlined_call_operand.vmem [shape: bf16[2,18,18,128], index: 0, kind: input, shape index: {}]
  %s1 = inlined_call_operand.vmem [shape: bf16[1152,128], index: 1, kind: input, shape index: {}]
  %s2 = inlined_call_operand.vmem [shape: bf16[2,256,128], index: 2, kind: output, shape index: {0}]
  %s3 = inlined_call_operand.vmem [shape: f32[2,1,128], index: 3, kind: output, shape index: {1}]
  %s4 = inlined_call_operand.vmem [shape: f32[2,1,128], index: 4, kind: output, shape index: {2}]
  %5 = xla_tuple %s2, %s3, %s4
  %s6 = sld [smem:[#allocation0]]
  $region61: #{bottleneck_forward.3} parent=0
    _
  %s8 = ssub.s32 1, %s6
  %s9 = scalar_select 0, %s8, %s6
  loop: start=0, step=1, limit=4
  $region2: #{bottleneck_forward.3} parent=0 // loop_pre_header
    _
  $region3: #{bottleneck_forward.3} parent=0 // loop_header
    %s11 = sphi 0, %s15
    %p12 = scmp.ge.s32.totalorder %s11, 4
    %s18 = sphi 0, %s30
    %s19 = sphi 0, %s26
    %s20 = sphi 0, %s18
    %s21 = sphi 0, %s19
    %s22 = sphi 0, %s20
    %s23 = sphi 0, %s21
    %s33 = sphi 0, %s35
    %s36 = sphi 0, %s33
    %s37 = sphi 0, %s36
    %s53 = sphi 0, %s37
    %s59 = sphi 0, %s61
    %s62 = sphi 0, %s59
    %s63 = sphi 0, %s62
    %s79 = sphi 0, %s63
    %s87 = sphi 0, %s89
    %s90 = sphi 0, %s87
    %s91 = sphi 0, %s90
    %s107 = sphi 0, %s91
    %s115 = sphi 0, %s117
    %s118 = sphi 0, %s115
    %s119 = sphi 0, %s118
    %s135 = sphi 0, %s119
    %s143 = sphi 0, %s145
    %s146 = sphi 0, %s143
    %s147 = sphi 0, %s146
    %s163 = sphi 0, %s147
  $region4: #{bottleneck_forward.3} parent=0 // loop_header_branch
    %14 = sbr.rel (%p12) target = $region8
  $region5: #{bottleneck_forward.3} parent=0 // loop_body
    %s16 = ssub.s32 %s11, 1
    %s17 = ssub.s32 %s11, 2
    %s24 = sadd.s32 1, %s19
    %p25 = scmp.ge.s32.totalorder %s24, 1
    %s26 = scalar_select %p25, 0, %s24
    %s27 = sadd.s32 1, %s18
    %s28 = scalar_select %p25, %s27, %s18
    %p29 = scmp.ge.s32.totalorder %s28, 2
    %s30 = scalar_select %p29, 0, %s28
    %s31 = ssub.s32 %s18, %s30
    %p32 = scmp.eq.s32.totalorder %s31, 0
    %s34 = sadd.s32 %s33, 1
    %s35 = scalar_select %p32, %s33, %s34
    %p38 = pneg %p32
    %p39 = scmp.eq.s32.totalorder %s11, 1
    %p40 = por %p38, %p39
    %p41 = scmp.ne.s32.totalorder %s33, %s36
    %p42 = scmp.eq.s32.totalorder %s11, 0
    %p43 = por %p41, %p42
    %p44 = scmp.ne.s32.totalorder %s33, %s36
    %p45 = scmp.eq.s32.totalorder %s16, 1
    %p46 = por %p44, %p45
    %p47 = scmp.ne.s32.totalorder %s36, %s37
    %p48 = scmp.eq.s32.totalorder %s16, 0
    %p49 = por %p47, %p48
    %p50 = scmp.ne.s32.totalorder %s36, %s37
    %p51 = scmp.eq.s32.totalorder %s17, 1
    %p52 = por %p50, %p51
    %p54 = scmp.ne.s32.totalorder %s37, %s53
    %p55 = scmp.eq.s32.totalorder %s17, 0
    %p56 = por %p54, %p55
    %s57 = ssub.s32 %s19, %s26
    %p58 = scmp.eq.s32.totalorder %s57, 0
    %s60 = sadd.s32 %s59, 1
    %s61 = scalar_select %p58, %s59, %s60
    %p64 = pneg %p58
    %p65 = scmp.eq.s32.totalorder %s11, 1
    %p66 = por %p64, %p65
    %p67 = scmp.ne.s32.totalorder %s59, %s62
    %p68 = scmp.eq.s32.totalorder %s11, 0
    %p69 = por %p67, %p68
    %p70 = scmp.ne.s32.totalorder %s59, %s62
    %p71 = scmp.eq.s32.totalorder %s16, 1
    %p72 = por %p70, %p71
    %p73 = scmp.ne.s32.totalorder %s62, %s63
    %p74 = scmp.eq.s32.totalorder %s16, 0
    %p75 = por %p73, %p74
    %p76 = scmp.ne.s32.totalorder %s62, %s63
    %p77 = scmp.eq.s32.totalorder %s17, 1
    %p78 = por %p76, %p77
    %p80 = scmp.ne.s32.totalorder %s63, %s79
    %p81 = scmp.eq.s32.totalorder %s17, 0
    %p82 = por %p80, %p81
    %s83 = ssub.s32 %s18, %s30
    %s84 = ssub.s32 %s19, %s26
    %s85 = sor.u32 %s83, %s84
    %p86 = scmp.eq.s32.totalorder %s85, 0
    %s88 = sadd.s32 %s87, 1
    %s89 = scalar_select %p86, %s87, %s88
    %p92 = pneg %p86
    %p93 = scmp.eq.s32.totalorder %s11, 1
    %p94 = por %p92, %p93
    %p95 = scmp.ne.s32.totalorder %s87, %s90
    %p96 = scmp.eq.s32.totalorder %s11, 0
    %p97 = por %p95, %p96
    %p98 = scmp.ne.s32.totalorder %s87, %s90
    %p99 = scmp.eq.s32.totalorder %s16, 1
    %p100 = por %p98, %p99
    %p101 = scmp.ne.s32.totalorder %s90, %s91
    %p102 = scmp.eq.s32.totalorder %s16, 0
    %p103 = por %p101, %p102
    %p104 = scmp.ne.s32.totalorder %s90, %s91
    %p105 = scmp.eq.s32.totalorder %s17, 1
    %p106 = por %p104, %p105
    %p108 = scmp.ne.s32.totalorder %s91, %s107
    %p109 = scmp.eq.s32.totalorder %s17, 0
    %p110 = por %p108, %p109
    %s111 = ssub.s32 %s18, %s30
    %s112 = ssub.s32 %s19, %s26
    %s113 = sor.u32 %s111, %s112
    %p114 = scmp.eq.s32.totalorder %s113, 0
    %s116 = sadd.s32 %s115, 1
    %s117 = scalar_select %p114, %s115, %s116
    %p120 = pneg %p114
    %p121 = scmp.eq.s32.totalorder %s11, 1
    %p122 = por %p120, %p121
    %p123 = scmp.ne.s32.totalorder %s115, %s118
    %p124 = scmp.eq.s32.totalorder %s11, 0
    %p125 = por %p123, %p124
    %p126 = scmp.ne.s32.totalorder %s115, %s118
    %p127 = scmp.eq.s32.totalorder %s16, 1
    %p128 = por %p126, %p127
    %p129 = scmp.ne.s32.totalorder %s118, %s119
    %p130 = scmp.eq.s32.totalorder %s16, 0
    %p131 = por %p129, %p130
    %p132 = scmp.ne.s32.totalorder %s118, %s119
    %p133 = scmp.eq.s32.totalorder %s17, 1
    %p134 = por %p132, %p133
    %p136 = scmp.ne.s32.totalorder %s119, %s135
    %p137 = scmp.eq.s32.totalorder %s17, 0
    %p138 = por %p136, %p137
    %s139 = ssub.s32 %s18, %s30
    %s140 = ssub.s32 %s19, %s26
    %s141 = sor.u32 %s139, %s140
    %p142 = scmp.eq.s32.totalorder %s141, 0
    %s144 = sadd.s32 %s143, 1
    %s145 = scalar_select %p142, %s143, %s144
    %p148 = pneg %p142
    %p149 = scmp.eq.s32.totalorder %s11, 1
    %p150 = por %p148, %p149
    %p151 = scmp.ne.s32.totalorder %s143, %s146
    %p152 = scmp.eq.s32.totalorder %s11, 0
    %p153 = por %p151, %p152
    %p154 = scmp.ne.s32.totalorder %s143, %s146
    %p155 = scmp.eq.s32.totalorder %s16, 1
    %p156 = por %p154, %p155
    %p157 = scmp.ne.s32.totalorder %s146, %s147
    %p158 = scmp.eq.s32.totalorder %s16, 0
    %p159 = por %p157, %p158
    %p160 = scmp.ne.s32.totalorder %s146, %s147
    %p161 = scmp.eq.s32.totalorder %s17, 1
    %p162 = por %p160, %p161
    %p164 = scmp.ne.s32.totalorder %s147, %s163
    %p165 = scmp.eq.s32.totalorder %s17, 0
    %p166 = por %p164, %p165
    %p167 = scmp.le.s32.totalorder 1, %s11
    %p168 = scmp.lt.s32.totalorder %s11, 3
    %p169 = pnand %p167, %p168
    %p170 = pneg %p169
    // Predicated region
    $region9: #{bottleneck_forward.3} parent=5 // pred_check
      _
    $region10: #{bottleneck_forward.3} parent=5 // pred_check_branch
      %172 = sbr.rel (%p169) target = $region12
    $region11: #{bottleneck_forward.3} parent=5 // pred_region
      %s173 = ssub.s32 %s11, 1
      // Predicated region
      $region13: #{bottleneck_forward.3} parent=11 // pred_check
        %p174 = pneg %p75
      $region14: #{bottleneck_forward.3} parent=11 // pred_check_branch
        %176 = sbr.rel (%p174) target = $region16
      $region15: #{bottleneck_forward.3} parent=11 // pred_region
        %p177 = scmp.lt.s32.totalorder %s21, 0
        %s178 = scalar_select %p177, %s21, 0
        %s179 = smul.addr %s178, 4
        %s180 = scalar_lea.vmem %s1, %s179
      $region16: #{bottleneck_forward.3} parent=11 // pred_fallthru
        _
    $region12: #{bottleneck_forward.3} parent=5 // pred_fallthru
      _
    %p181 = scmp.lt.s32.totalorder %s11, 2
    // Predicated region
    $region17: #{bottleneck_forward.3} parent=5 // pred_check
      %p182 = pneg %p181
    $region18: #{bottleneck_forward.3} parent=5 // pred_check_branch
      %184 = sbr.rel (%p182) target = $region20
    $region19: #{bottleneck_forward.3} parent=5 // pred_region
      // Predicated region
      $region21: #{bottleneck_forward.3} parent=19 // pred_check
        %p185 = pneg %p43
      $region22: #{bottleneck_forward.3} parent=19 // pred_check_branch
        %187 = sbr.rel (%p185) target = $region24
      $region23: #{bottleneck_forward.3} parent=19 // pred_region
        %p188 = scmp.lt.s32.totalorder %s18, 1
        %s189 = scalar_select %p188, %s18, 1
        %s190 = smul.addr %s189, 54
        %s191 = smul.addr %s190, 4
        %s192 = scalar_lea.vmem %s0, %s191
      $region24: #{bottleneck_forward.3} parent=19 // pred_fallthru
        _
    $region20: #{bottleneck_forward.3} parent=5 // pred_fallthru
      _
    %p193 = scmp.le.s32.totalorder 1, %s11
    %p194 = scmp.lt.s32.totalorder %s11, 3
    %p195 = pnand %p193, %p194
    %p196 = pneg %p195
    // Predicated region
    $region25: #{bottleneck_forward.3} parent=5 // pred_check
      _
    $region26: #{bottleneck_forward.3} parent=5 // pred_check_branch
      %198 = sbr.rel (%p195) target = $region28
    $region27: #{bottleneck_forward.3} parent=5 // pred_region
      %s199 = ssub.s32 %s11, 1
      %p200 = scmp.lt.s32.totalorder %s20, 1
      %s201 = scalar_select %p200, %s20, 1
      %s202 = smul.addr %s201, 54
      %s203 = smul.addr %s202, 4
      %s204 = scalar_lea.vmem %s0, %s203
      %p205 = pneg %p49
      %p206 = pneg %p46
      %p207 = scmp.lt.s32.totalorder %s21, 0
      %s208 = scalar_select %p207, %s21, 0
      %s209 = smul.addr %s208, 4
      %s210 = scalar_lea.vmem %s1, %s209
      %p211 = pneg %p75
      %p212 = pneg %p72
      %p213 = pneg %p103
      %p214 = pneg %p100
      %p215 = scmp.lt.s32.totalorder %s20, 1
      %s216 = scalar_select %p215, %s20, 1
      %p217 = scmp.lt.s32.totalorder %s21, 0
      %s218 = scalar_select %p217, %s21, 0
      %s219 = smul.addr %s216, 32
      %s220 = sadd.s32 %s218, %s219
      %s221 = smul.addr %s220, 4
      %s222 = scalar_lea.vmem %s2, %s221
      %p223 = pneg %p131
      %p224 = pneg %p128
      %p225 = scmp.lt.s32.totalorder %s20, 1
      %s226 = scalar_select %p225, %s20, 1
      %p227 = scmp.lt.s32.totalorder %s21, 0
      %s228 = scalar_select %p227, %s21, 0
      %s229 = sadd.s32 %s228, %s226
      %s230 = scalar_lea.vmem %s3, %s229
      %p231 = pneg %p159
      %p232 = pneg %p156
      %p233 = scmp.lt.s32.totalorder %s20, 1
      %s234 = scalar_select %p233, %s20, 1
      %p235 = scmp.lt.s32.totalorder %s21, 0
      %s236 = scalar_select %p235, %s21, 0
      %s237 = sadd.s32 %s236, %s234
      %s238 = scalar_lea.vmem %s4, %s237
      %p239 = scmp.lt.s32.totalorder %s20, 1
      %s240 = scalar_select %p239, %s20, 1
      %s241 = smul.addr %s240, 54
      %s242 = smul.addr %s241, 4
      %s243 = scalar_lea.vmem %s0, %s242
      %p244 = scmp.lt.s32.totalorder %s21, 0
      %s245 = scalar_select %p244, %s21, 0
      %s246 = smul.addr %s245, 4
      %s247 = scalar_lea.vmem %s1, %s246
      %p248 = scmp.lt.s32.totalorder %s20, 1
      %s249 = scalar_select %p248, %s20, 1
      %p250 = scmp.lt.s32.totalorder %s21, 0
      %s251 = scalar_select %p250, %s21, 0
      %s252 = smul.addr %s249, 32
      %s253 = sadd.s32 %s251, %s252
      %s254 = smul.addr %s253, 4
      %s255 = scalar_lea.vmem %s2, %s254
      %p256 = scmp.lt.s32.totalorder %s20, 1
      %s257 = scalar_select %p256, %s20, 1
      %p258 = scmp.lt.s32.totalorder %s21, 0
      %s259 = scalar_select %p258, %s21, 0
      %s260 = sadd.s32 %s259, %s257
      %s261 = scalar_lea.vmem %s3, %s260
      %p262 = scmp.lt.s32.totalorder %s20, 1
      %s263 = scalar_select %p262, %s20, 1
      %p264 = scmp.lt.s32.totalorder %s21, 0
      %s265 = scalar_select %p264, %s21, 0
      %s266 = sadd.s32 %s265, %s263
      %s267 = scalar_lea.vmem %s4, %s266
      %p269 = scmp.eq.s32.totalorder %s21, 0
      // Predicated region
      $region29: #{bottleneck_forward.3} parent=27 // pred_check
        %p270 = pneg %p269
      $region30: #{bottleneck_forward.3} parent=27 // pred_check_branch
        %272 = sbr.rel (%p270) target = $region32
      $region31: #{bottleneck_forward.3} parent=27 // pred_region
        %v273 = vld [vmem:[%s243] sm:$0xf]
        %v274 = vld [vmem:[%s243 + $0x4] sm:$0xf]
        %v275 = vld [vmem:[%s243 + $0xc] sm:$0xf]
        %v276 = vld [vmem:[%s243 + $0x10] sm:$0xf]
        %v277 = vld [vmem:[%s243 + $0x18] sm:$0xf]
        %v278 = vld [vmem:[%s243 + $0x1c] sm:$0xf]
        %v279 = vld [vmem:[%s243 + $0x24] sm:$0xf]
        %v280 = vld [vmem:[%s243 + $0x28] sm:$0xf]
        %v281 = vld [vmem:[%s243 + $0x30] sm:$0xf]
        %v282 = vld [vmem:[%s243 + $0x34] sm:$0xf]
        %v283 = vld [vmem:[%s243 + $0x3c] sm:$0xf]
        %v284 = vld [vmem:[%s243 + $0x40] sm:$0xf]
        %v285 = vld [vmem:[%s243 + $0x48] sm:$0xf]
        %v286 = vld [vmem:[%s243 + $0x4c] sm:$0xf]
        %v287 = vld [vmem:[%s243 + $0x54] sm:$0xf]
        %v288 = vld [vmem:[%s243 + $0x58] sm:$0xf]
        %v289 = vld [vmem:[%s243 + $0x60] sm:$0xf]
        %v290 = vld [vmem:[%s243 + $0x64] sm:$0xf]
        %v291 = vld [vmem:[%s243 + $0x6c] sm:$0xf]
        %v292 = vld [vmem:[%s243 + $0x70] sm:$0xf]
        %v293 = vld [vmem:[%s243 + $0x78] sm:$0xf]
        %v294 = vld [vmem:[%s243 + $0x7c] sm:$0xf]
        %v295 = vld [vmem:[%s243 + $0x84] sm:$0xf]
        %v296 = vld [vmem:[%s243 + $0x88] sm:$0xf]
        %v297 = vld [vmem:[%s243 + $0x90] sm:$0xf]
        %v298 = vld [vmem:[%s243 + $0x94] sm:$0xf]
        %v299 = vld [vmem:[%s243 + $0x9c] sm:$0xf]
        %v300 = vld [vmem:[%s243 + $0xa0] sm:$0xf]
        %v301 = vld [vmem:[%s243 + $0xa8] sm:$0xf]
        %v302 = vld [vmem:[%s243 + $0xac] sm:$0xf]
        %v303 = vld [vmem:[%s243 + $0xb4] sm:$0xf]
        %v304 = vld [vmem:[%s243 + $0xb8] sm:$0xf]
        %305 = vst [vmem:[#allocation2] sm:$0xf] %v273
        %306 = vst [vmem:[#allocation2 + $0x24] sm:$0xf] %v274
        %307 = vst [vmem:[#allocation2 + $0x48] sm:$0xf] %v275
        %308 = vst [vmem:[#allocation2 + $0x6c] sm:$0xf] %v276
        %309 = vst [vmem:[#allocation2 + $0x90] sm:$0xf] %v277
        %310 = vst [vmem:[#allocation2 + $0xb4] sm:$0xf] %v278
        %311 = vst [vmem:[#allocation2 + $0xd8] sm:$0xf] %v279
        %312 = vst [vmem:[#allocation2 + $0xfc] sm:$0xf] %v280
        %313 = vst [vmem:[#allocation2 + $0x120] sm:$0xf] %v281
        %314 = vst [vmem:[#allocation2 + $0x144] sm:$0xf] %v282
        %315 = vst [vmem:[#allocation2 + $0x168] sm:$0xf] %v283
        %316 = vst [vmem:[#allocation2 + $0x18c] sm:$0xf] %v284
        %317 = vst [vmem:[#allocation2 + $0x1b0] sm:$0xf] %v285
        %318 = vst [vmem:[#allocation2 + $0x1d4] sm:$0xf] %v286
        %319 = vst [vmem:[#allocation2 + $0x1f8] sm:$0xf] %v287
        %320 = vst [vmem:[#allocation2 + $0x21c] sm:$0xf] %v288
        %321 = vst [vmem:[#allocation2 + $0x240] sm:$0xf] %v289
        %322 = vst [vmem:[#allocation2 + $0x264] sm:$0xf] %v290
        %323 = vst [vmem:[#allocation2 + $0x288] sm:$0xf] %v291
        %324 = vst [vmem:[#allocation2 + $0x2ac] sm:$0xf] %v292
        %325 = vst [vmem:[#allocation2 + $0x2d0] sm:$0xf] %v293
        %326 = vst [vmem:[#allocation2 + $0x2f4] sm:$0xf] %v294
        %327 = vst [vmem:[#allocation2 + $0x318] sm:$0xf] %v295
        %328 = vst [vmem:[#allocation2 + $0x33c] sm:$0xf] %v296
        %329 = vst [vmem:[#allocation2 + $0x360] sm:$0xf] %v297
        %330 = vst [vmem:[#allocation2 + $0x384] sm:$0xf] %v298
        %331 = vst [vmem:[#allocation2 + $0x3a8] sm:$0xf] %v299
        %332 = vst [vmem:[#allocation2 + $0x3cc] sm:$0xf] %v300
        %333 = vst [vmem:[#allocation2 + $0x3f0] sm:$0xf] %v301
        %334 = vst [vmem:[#allocation2 + $0x414] sm:$0xf] %v302
        %335 = vst [vmem:[#allocation2 + $0x438] sm:$0xf] %v303
        %336 = vst [vmem:[#allocation2 + $0x45c] sm:$0xf] %v304
        %v337 = vld [vmem:[%s243] sm:$0xf]
        %v338 = vld [vmem:[%s243 + $0x4] sm:$0xf]
        %v339 = vld [vmem:[%s243 + $0x8] sm:$0x1]
        %v340 = vld [vmem:[%s243 + $0xc] sm:$0xf]
        %v341 = vld [vmem:[%s243 + $0x10] sm:$0xf]
        %v342 = vld [vmem:[%s243 + $0x14] sm:$0x1]
        %v343 = vld [vmem:[%s243 + $0x18] sm:$0xf]
        %v344 = vld [vmem:[%s243 + $0x1c] sm:$0xf]
        %v345 = vld [vmem:[%s243 + $0x20] sm:$0x1]
        %v346 = vld [vmem:[%s243 + $0x24] sm:$0xf]
        %v347 = vld [vmem:[%s243 + $0x28] sm:$0xf]
        %v348 = vld [vmem:[%s243 + $0x2c] sm:$0x1]
        %v349 = vld [vmem:[%s243 + $0x30] sm:$0xf]
        %v350 = vld [vmem:[%s243 + $0x34] sm:$0xf]
        %v351 = vld [vmem:[%s243 + $0x38] sm:$0x1]
        %v352 = vld [vmem:[%s243 + $0x3c] sm:$0xf]
        %v353 = vld [vmem:[%s243 + $0x40] sm:$0xf]
        %v354 = vld [vmem:[%s243 + $0x44] sm:$0x1]
        %v355 = vld [vmem:[%s243 + $0x48] sm:$0xf]
        %v356 = vld [vmem:[%s243 + $0x4c] sm:$0xf]
        %v357 = vld [vmem:[%s243 + $0x50] sm:$0x1]
        %v358 = vld [vmem:[%s243 + $0x54] sm:$0xf]
        %v359 = vld [vmem:[%s243 + $0x58] sm:$0xf]
        %v360 = vld [vmem:[%s243 + $0x5c] sm:$0x1]
        %v361 = vld [vmem:[%s243 + $0x60] sm:$0xf]
        %v362 = vld [vmem:[%s243 + $0x64] sm:$0xf]
        %v363 = vld [vmem:[%s243 + $0x68] sm:$0x1]
        %v364 = vld [vmem:[%s243 + $0x6c] sm:$0xf]
        %v365 = vld [vmem:[%s243 + $0x70] sm:$0xf]
        %v366 = vld [vmem:[%s243 + $0x74] sm:$0x1]
        %v367 = vld [vmem:[%s243 + $0x78] sm:$0xf]
        %v368 = vld [vmem:[%s243 + $0x7c] sm:$0xf]
        %v369 = vld [vmem:[%s243 + $0x80] sm:$0x1]
        %v370 = vld [vmem:[%s243 + $0x84] sm:$0xf]
        %v371 = vld [vmem:[%s243 + $0x88] sm:$0xf]
        %v372 = vld [vmem:[%s243 + $0x8c] sm:$0x1]
        %v373 = vld [vmem:[%s243 + $0x90] sm:$0xf]
        %v374 = vld [vmem:[%s243 + $0x94] sm:$0xf]
        %v375 = vld [vmem:[%s243 + $0x98] sm:$0x1]
        %v376 = vld [vmem:[%s243 + $0x9c] sm:$0xf]
        %v377 = vld [vmem:[%s243 + $0xa0] sm:$0xf]
        %v378 = vld [vmem:[%s243 + $0xa4] sm:$0x1]
        %v379 = vld [vmem:[%s243 + $0xa8] sm:$0xf]
        %v380 = vld [vmem:[%s243 + $0xac] sm:$0xf]
        %v381 = vld [vmem:[%s243 + $0xb0] sm:$0x1]
        %v382 = vld [vmem:[%s243 + $0xb4] sm:$0xf]
        %v383 = vld [vmem:[%s243 + $0xb8] sm:$0xf]
        %v384 = vld [vmem:[%s243 + $0xbc] sm:$0x1]
        %vm385 = vsmask.f32 3328
        %vm386 = vsmask.f32 7440
        %vm387 = vmor %vm385, %vm386
        %v389 = vshrl.u32 %v337, 16
        %v391 = vrot.slane %v389, 4
        %v392 = vshll.u32 %v337, 16
        %v394 = vrot.slane %v392, 5
        %v395 = vor.u32 %v391, %v394
        %v396 = vrot.slane %v395, 4
        %v398 = vshll.u32 %v338, 16
        %v400 = vrot.slane %v398, 5
        %v401 = vsel %vm387, %v396, %v400
        %v402 = vshrl.u32 %v338, 16
        %v404 = vrot.slane %v402, 4
        %v405 = vor.u32 %v404, %v400
        %v406 = vrot.slane %v405, 4
        %v408 = vshll.u32 %v339, 16
        %v410 = vrot.slane %v408, 5
        %v411 = vsel %vm387, %v406, %v410
        %v413 = vshrl.u32 %v340, 16
        %v415 = vrot.slane %v413, 4
        %v416 = vshll.u32 %v340, 16
        %v418 = vrot.slane %v416, 5
        %v419 = vor.u32 %v415, %v418
        %v420 = vrot.slane %v419, 4
        %v422 = vshll.u32 %v341, 16
        %v424 = vrot.slane %v422, 5
        %v425 = vsel %vm387, %v420, %v424
        %v426 = vshrl.u32 %v341, 16
        %v428 = vrot.slane %v426, 4
        %v429 = vor.u32 %v428, %v424
        %v430 = vrot.slane %v429, 4
        %v432 = vshll.u32 %v342, 16
        %v434 = vrot.slane %v432, 5
        %v435 = vsel %vm387, %v430, %v434
        %v437 = vshrl.u32 %v343, 16
        %v439 = vrot.slane %v437, 4
        %v440 = vshll.u32 %v343, 16
        %v442 = vrot.slane %v440, 5
        %v443 = vor.u32 %v439, %v442
        %v444 = vrot.slane %v443, 4
        %v446 = vshll.u32 %v344, 16
        %v448 = vrot.slane %v446, 5
        %v449 = vsel %vm387, %v444, %v448
        %v450 = vshrl.u32 %v344, 16
        %v452 = vrot.slane %v450, 4
        %v453 = vor.u32 %v452, %v448
        %v454 = vrot.slane %v453, 4
        %v456 = vshll.u32 %v345, 16
        %v458 = vrot.slane %v456, 5
        %v459 = vsel %vm387, %v454, %v458
        %v461 = vshrl.u32 %v346, 16
        %v463 = vrot.slane %v461, 4
        %v464 = vshll.u32 %v346, 16
        %v466 = vrot.slane %v464, 5
        %v467 = vor.u32 %v463, %v466
        %v468 = vrot.slane %v467, 4
        %v470 = vshll.u32 %v347, 16
        %v472 = vrot.slane %v470, 5
        %v473 = vsel %vm387, %v468, %v472
        %v474 = vshrl.u32 %v347, 16
        %v476 = vrot.slane %v474, 4
        %v477 = vor.u32 %v476, %v472
        %v478 = vrot.slane %v477, 4
        %v480 = vshll.u32 %v348, 16
        %v482 = vrot.slane %v480, 5
        %v483 = vsel %vm387, %v478, %v482
        %v485 = vshrl.u32 %v349, 16
        %v487 = vrot.slane %v485, 4
        %v488 = vshll.u32 %v349, 16
        %v490 = vrot.slane %v488, 5
        %v491 = vor.u32 %v487, %v490
        %v492 = vrot.slane %v491, 4
        %v494 = vshll.u32 %v350, 16
        %v496 = vrot.slane %v494, 5
        %v497 = vsel %vm387, %v492, %v496
        %v498 = vshrl.u32 %v350, 16
        %v500 = vrot.slane %v498, 4
        %v501 = vor.u32 %v500, %v496
        %v502 = vrot.slane %v501, 4
        %v504 = vshll.u32 %v351, 16
        %v506 = vrot.slane %v504, 5
        %v507 = vsel %vm387, %v502, %v506
        %v509 = vshrl.u32 %v352, 16
        %v511 = vrot.slane %v509, 4
        %v512 = vshll.u32 %v352, 16
        %v514 = vrot.slane %v512, 5
        %v515 = vor.u32 %v511, %v514
        %v516 = vrot.slane %v515, 4
        %v518 = vshll.u32 %v353, 16
        %v520 = vrot.slane %v518, 5
        %v521 = vsel %vm387, %v516, %v520
        %v522 = vshrl.u32 %v353, 16
        %v524 = vrot.slane %v522, 4
        %v525 = vor.u32 %v524, %v520
        %v526 = vrot.slane %v525, 4
        %v528 = vshll.u32 %v354, 16
        %v530 = vrot.slane %v528, 5
        %v531 = vsel %vm387, %v526, %v530
        %v533 = vshrl.u32 %v355, 16
        %v535 = vrot.slane %v533, 4
        %v536 = vshll.u32 %v355, 16
        %v538 = vrot.slane %v536, 5
        %v539 = vor.u32 %v535, %v538
        %v540 = vrot.slane %v539, 4
        %v542 = vshll.u32 %v356, 16
        %v544 = vrot.slane %v542, 5
        %v545 = vsel %vm387, %v540, %v544
        %v546 = vshrl.u32 %v356, 16
        %v548 = vrot.slane %v546, 4
        %v549 = vor.u32 %v548, %v544
        %v550 = vrot.slane %v549, 4
        %v552 = vshll.u32 %v357, 16
        %v554 = vrot.slane %v552, 5
        %v555 = vsel %vm387, %v550, %v554
        %v557 = vshrl.u32 %v358, 16
        %v559 = vrot.slane %v557, 4
        %v560 = vshll.u32 %v358, 16
        %v562 = vrot.slane %v560, 5
        %v563 = vor.u32 %v559, %v562
        %v564 = vrot.slane %v563, 4
        %v566 = vshll.u32 %v359, 16
        %v568 = vrot.slane %v566, 5
        %v569 = vsel %vm387, %v564, %v568
        %v570 = vshrl.u32 %v359, 16
        %v572 = vrot.slane %v570, 4
        %v573 = vor.u32 %v572, %v568
        %v574 = vrot.slane %v573, 4
        %v576 = vshll.u32 %v360, 16
        %v578 = vrot.slane %v576, 5
        %v579 = vsel %vm387, %v574, %v578
        %v581 = vshrl.u32 %v361, 16
        %v583 = vrot.slane %v581, 4
        %v584 = vshll.u32 %v361, 16
        %v586 = vrot.slane %v584, 5
        %v587 = vor.u32 %v583, %v586
        %v588 = vrot.slane %v587, 4
        %v590 = vshll.u32 %v362, 16
        %v592 = vrot.slane %v590, 5
        %v593 = vsel %vm387, %v588, %v592
        %v594 = vshrl.u32 %v362, 16
        %v596 = vrot.slane %v594, 4
        %v597 = vor.u32 %v596, %v592
        %v598 = vrot.slane %v597, 4
        %v600 = vshll.u32 %v363, 16
        %v602 = vrot.slane %v600, 5
        %v603 = vsel %vm387, %v598, %v602
        %v605 = vshrl.u32 %v364, 16
        %v607 = vrot.slane %v605, 4
        %v608 = vshll.u32 %v364, 16
        %v610 = vrot.slane %v608, 5
        %v611 = vor.u32 %v607, %v610
        %v612 = vrot.slane %v611, 4
        %v614 = vshll.u32 %v365, 16
        %v616 = vrot.slane %v614, 5
        %v617 = vsel %vm387, %v612, %v616
        %v618 = vshrl.u32 %v365, 16
        %v620 = vrot.slane %v618, 4
        %v621 = vor.u32 %v620, %v616
        %v622 = vrot.slane %v621, 4
        %v624 = vshll.u32 %v366, 16
        %v626 = vrot.slane %v624, 5
        %v627 = vsel %vm387, %v622, %v626
        %v629 = vshrl.u32 %v367, 16
        %v631 = vrot.slane %v629, 4
        %v632 = vshll.u32 %v367, 16
        %v634 = vrot.slane %v632, 5
        %v635 = vor.u32 %v631, %v634
        %v636 = vrot.slane %v635, 4
        %v638 = vshll.u32 %v368, 16
        %v640 = vrot.slane %v638, 5
        %v641 = vsel %vm387, %v636, %v640
        %v642 = vshrl.u32 %v368, 16
        %v644 = vrot.slane %v642, 4
        %v645 = vor.u32 %v644, %v640
        %v646 = vrot.slane %v645, 4
        %v648 = vshll.u32 %v369, 16
        %v650 = vrot.slane %v648, 5
        %v651 = vsel %vm387, %v646, %v650
        %v653 = vshrl.u32 %v370, 16
        %v655 = vrot.slane %v653, 4
        %v656 = vshll.u32 %v370, 16
        %v658 = vrot.slane %v656, 5
        %v659 = vor.u32 %v655, %v658
        %v660 = vrot.slane %v659, 4
        %v662 = vshll.u32 %v371, 16
        %v664 = vrot.slane %v662, 5
        %v665 = vsel %vm387, %v660, %v664
        %v666 = vshrl.u32 %v371, 16
        %v668 = vrot.slane %v666, 4
        %v669 = vor.u32 %v668, %v664
        %v670 = vrot.slane %v669, 4
        %v672 = vshll.u32 %v372, 16
        %v674 = vrot.slane %v672, 5
        %v675 = vsel %vm387, %v670, %v674
        %v677 = vshrl.u32 %v373, 16
        %v679 = vrot.slane %v677, 4
        %v680 = vshll.u32 %v373, 16
        %v682 = vrot.slane %v680, 5
        %v683 = vor.u32 %v679, %v682
        %v684 = vrot.slane %v683, 4
        %v686 = vshll.u32 %v374, 16
        %v688 = vrot.slane %v686, 5
        %v689 = vsel %vm387, %v684, %v688
        %v690 = vshrl.u32 %v374, 16
        %v692 = vrot.slane %v690, 4
        %v693 = vor.u32 %v692, %v688
        %v694 = vrot.slane %v693, 4
        %v696 = vshll.u32 %v375, 16
        %v698 = vrot.slane %v696, 5
        %v699 = vsel %vm387, %v694, %v698
        %v701 = vshrl.u32 %v376, 16
        %v703 = vrot.slane %v701, 4
        %v704 = vshll.u32 %v376, 16
        %v706 = vrot.slane %v704, 5
        %v707 = vor.u32 %v703, %v706
        %v708 = vrot.slane %v707, 4
        %v710 = vshll.u32 %v377, 16
        %v712 = vrot.slane %v710, 5
        %v713 = vsel %vm387, %v708, %v712
        %v714 = vshrl.u32 %v377, 16
        %v716 = vrot.slane %v714, 4
        %v717 = vor.u32 %v716, %v712
        %v718 = vrot.slane %v717, 4
        %v720 = vshll.u32 %v378, 16
        %v722 = vrot.slane %v720, 5
        %v723 = vsel %vm387, %v718, %v722
        %v725 = vshrl.u32 %v379, 16
        %v727 = vrot.slane %v725, 4
        %v728 = vshll.u32 %v379, 16
        %v730 = vrot.slane %v728, 5
        %v731 = vor.u32 %v727, %v730
        %v732 = vrot.slane %v731, 4
        %v734 = vshll.u32 %v380, 16
        %v736 = vrot.slane %v734, 5
        %v737 = vsel %vm387, %v732, %v736
        %v738 = vshrl.u32 %v380, 16
        %v740 = vrot.slane %v738, 4
        %v741 = vor.u32 %v740, %v736
        %v742 = vrot.slane %v741, 4
        %v744 = vshll.u32 %v381, 16
        %v746 = vrot.slane %v744, 5
        %v747 = vsel %vm387, %v742, %v746
        %v749 = vshrl.u32 %v382, 16
        %v751 = vrot.slane %v749, 4
        %v752 = vshll.u32 %v382, 16
        %v754 = vrot.slane %v752, 5
        %v755 = vor.u32 %v751, %v754
        %v756 = vrot.slane %v755, 4
        %v758 = vshll.u32 %v383, 16
        %v760 = vrot.slane %v758, 5
        %v761 = vsel %vm387, %v756, %v760
        %v762 = vshrl.u32 %v383, 16
        %v764 = vrot.slane %v762, 4
        %v765 = vor.u32 %v764, %v760
        %v766 = vrot.slane %v765, 4
        %v768 = vshll.u32 %v384, 16
        %v770 = vrot.slane %v768, 5
        %v771 = vsel %vm387, %v766, %v770
        %804 = vst [vmem:[#allocation2 + $0x4] sm:$0xf] %v401
        %805 = vst [vmem:[#allocation2 + $0x28] sm:$0xf] %v411
        %806 = vst [vmem:[#allocation2 + $0x4c] sm:$0xf] %v425
        %807 = vst [vmem:[#allocation2 + $0x70] sm:$0xf] %v435
        %808 = vst [vmem:[#allocation2 + $0x94] sm:$0xf] %v449
        %809 = vst [vmem:[#allocation2 + $0xb8] sm:$0xf] %v459
        %810 = vst [vmem:[#allocation2 + $0xdc] sm:$0xf] %v473
        %811 = vst [vmem:[#allocation2 + $0x100] sm:$0xf] %v483
        %812 = vst [vmem:[#allocation2 + $0x124] sm:$0xf] %v497
        %813 = vst [vmem:[#allocation2 + $0x148] sm:$0xf] %v507
        %814 = vst [vmem:[#allocation2 + $0x16c] sm:$0xf] %v521
        %815 = vst [vmem:[#allocation2 + $0x190] sm:$0xf] %v531
        %816 = vst [vmem:[#allocation2 + $0x1b4] sm:$0xf] %v545
        %817 = vst [vmem:[#allocation2 + $0x1d8] sm:$0xf] %v555
        %818 = vst [vmem:[#allocation2 + $0x1fc] sm:$0xf] %v569
        %819 = vst [vmem:[#allocation2 + $0x220] sm:$0xf] %v579
        %820 = vst [vmem:[#allocation2 + $0x244] sm:$0xf] %v593
        %821 = vst [vmem:[#allocation2 + $0x268] sm:$0xf] %v603
        %822 = vst [vmem:[#allocation2 + $0x28c] sm:$0xf] %v617
        %823 = vst [vmem:[#allocation2 + $0x2b0] sm:$0xf] %v627
        %824 = vst [vmem:[#allocation2 + $0x2d4] sm:$0xf] %v641
        %825 = vst [vmem:[#allocation2 + $0x2f8] sm:$0xf] %v651
        %826 = vst [vmem:[#allocation2 + $0x31c] sm:$0xf] %v665
        %827 = vst [vmem:[#allocation2 + $0x340] sm:$0xf] %v675
        %828 = vst [vmem:[#allocation2 + $0x364] sm:$0xf] %v689
        %829 = vst [vmem:[#allocation2 + $0x388] sm:$0xf] %v699
        %830 = vst [vmem:[#allocation2 + $0x3ac] sm:$0xf] %v713
        %831 = vst [vmem:[#allocation2 + $0x3d0] sm:$0xf] %v723
        %832 = vst [vmem:[#allocation2 + $0x3f4] sm:$0xf] %v737
        %833 = vst [vmem:[#allocation2 + $0x418] sm:$0xf] %v747
        %834 = vst [vmem:[#allocation2 + $0x43c] sm:$0xf] %v761
        %835 = vst [vmem:[#allocation2 + $0x460] sm:$0xf] %v771
        %v836 = vld [vmem:[%s243] sm:$0xe]
        %v837 = vld [vmem:[%s243 + $0x4] sm:$0xf]
        %v838 = vld [vmem:[%s243 + $0x8] sm:$0x1]
        %v839 = vld [vmem:[%s243 + $0xc] sm:$0xe]
        %v840 = vld [vmem:[%s243 + $0x10] sm:$0xf]
        %v841 = vld [vmem:[%s243 + $0x14] sm:$0x1]
        %v842 = vld [vmem:[%s243 + $0x18] sm:$0xe]
        %v843 = vld [vmem:[%s243 + $0x1c] sm:$0xf]
        %v844 = vld [vmem:[%s243 + $0x20] sm:$0x1]
        %v845 = vld [vmem:[%s243 + $0x24] sm:$0xe]
        %v846 = vld [vmem:[%s243 + $0x28] sm:$0xf]
        %v847 = vld [vmem:[%s243 + $0x2c] sm:$0x1]
        %v848 = vld [vmem:[%s243 + $0x30] sm:$0xe]
        %v849 = vld [vmem:[%s243 + $0x34] sm:$0xf]
        %v850 = vld [vmem:[%s243 + $0x38] sm:$0x1]
        %v851 = vld [vmem:[%s243 + $0x3c] sm:$0xe]
        %v852 = vld [vmem:[%s243 + $0x40] sm:$0xf]
        %v853 = vld [vmem:[%s243 + $0x44] sm:$0x1]
        %v854 = vld [vmem:[%s243 + $0x48] sm:$0xe]
        %v855 = vld [vmem:[%s243 + $0x4c] sm:$0xf]
        %v856 = vld [vmem:[%s243 + $0x50] sm:$0x1]
        %v857 = vld [vmem:[%s243 + $0x54] sm:$0xe]
        %v858 = vld [vmem:[%s243 + $0x58] sm:$0xf]
        %v859 = vld [vmem:[%s243 + $0x5c] sm:$0x1]
        %v860 = vld [vmem:[%s243 + $0x60] sm:$0xe]
        %v861 = vld [vmem:[%s243 + $0x64] sm:$0xf]
        %v862 = vld [vmem:[%s243 + $0x68] sm:$0x1]
        %v863 = vld [vmem:[%s243 + $0x6c] sm:$0xe]
        %v864 = vld [vmem:[%s243 + $0x70] sm:$0xf]
        %v865 = vld [vmem:[%s243 + $0x74] sm:$0x1]
        %v866 = vld [vmem:[%s243 + $0x78] sm:$0xe]
        %v867 = vld [vmem:[%s243 + $0x7c] sm:$0xf]
        %v868 = vld [vmem:[%s243 + $0x80] sm:$0x1]
        %v869 = vld [vmem:[%s243 + $0x84] sm:$0xe]
        %v870 = vld [vmem:[%s243 + $0x88] sm:$0xf]
        %v871 = vld [vmem:[%s243 + $0x8c] sm:$0x1]
        %v872 = vld [vmem:[%s243 + $0x90] sm:$0xe]
        %v873 = vld [vmem:[%s243 + $0x94] sm:$0xf]
        %v874 = vld [vmem:[%s243 + $0x98] sm:$0x1]
        %v875 = vld [vmem:[%s243 + $0x9c] sm:$0xe]
        %v876 = vld [vmem:[%s243 + $0xa0] sm:$0xf]
        %v877 = vld [vmem:[%s243 + $0xa4] sm:$0x1]
        %v878 = vld [vmem:[%s243 + $0xa8] sm:$0xe]
        %v879 = vld [vmem:[%s243 + $0xac] sm:$0xf]
        %v880 = vld [vmem:[%s243 + $0xb0] sm:$0x1]
        %v881 = vld [vmem:[%s243 + $0xb4] sm:$0xe]
        %v882 = vld [vmem:[%s243 + $0xb8] sm:$0xf]
        %v883 = vld [vmem:[%s243 + $0xbc] sm:$0x1]
        %vm932 = vcmask 1042432
        %vm933 = vcmask 1046532
        %vm934 = vmor %vm932, %vm933
        %v935 = vrot.slane %v836, 5
        %v936 = vrot.slane %v935, 4
        %v937 = vrot.slane %v837, 5
        %v938 = vsel %vm934, %v936, %v937
        %v939 = vrot.slane %v937, 4
        %v940 = vrot.slane %v838, 5
        %v941 = vsel %vm934, %v939, %v940
        %v942 = vrot.slane %v839, 5
        %v943 = vrot.slane %v942, 4
        %v944 = vrot.slane %v840, 5
        %v945 = vsel %vm934, %v943, %v944
        %v946 = vrot.slane %v944, 4
        %v947 = vrot.slane %v841, 5
        %v948 = vsel %vm934, %v946, %v947
        %v949 = vrot.slane %v842, 5
        %v950 = vrot.slane %v949, 4
        %v951 = vrot.slane %v843, 5
        %v952 = vsel %vm934, %v950, %v951
        %v953 = vrot.slane %v951, 4
        %v954 = vrot.slane %v844, 5
        %v955 = vsel %vm934, %v953, %v954
        %v956 = vrot.slane %v845, 5
        %v957 = vrot.slane %v956, 4
        %v958 = vrot.slane %v846, 5
        %v959 = vsel %vm934, %v957, %v958
        %v960 = vrot.slane %v958, 4
        %v961 = vrot.slane %v847, 5
        %v962 = vsel %vm934, %v960, %v961
        %v963 = vrot.slane %v848, 5
        %v964 = vrot.slane %v963, 4
        %v965 = vrot.slane %v849, 5
        %v966 = vsel %vm934, %v964, %v965
        %v967 = vrot.slane %v965, 4
        %v968 = vrot.slane %v850, 5
        %v969 = vsel %vm934, %v967, %v968
        %v970 = vrot.slane %v851, 5
        %v971 = vrot.slane %v970, 4
        %v972 = vrot.slane %v852, 5
        %v973 = vsel %vm934, %v971, %v972
        %v974 = vrot.slane %v972, 4
        %v975 = vrot.slane %v853, 5
        %v976 = vsel %vm934, %v974, %v975
        %v977 = vrot.slane %v854, 5
        %v978 = vrot.slane %v977, 4
        %v979 = vrot.slane %v855, 5
        %v980 = vsel %vm934, %v978, %v979
        %v981 = vrot.slane %v979, 4
        %v982 = vrot.slane %v856, 5
        %v983 = vsel %vm934, %v981, %v982
        %v984 = vrot.slane %v857, 5
        %v985 = vrot.slane %v984, 4
        %v986 = vrot.slane %v858, 5
        %v987 = vsel %vm934, %v985, %v986
        %v988 = vrot.slane %v986, 4
        %v989 = vrot.slane %v859, 5
        %v990 = vsel %vm934, %v988, %v989
        %v991 = vrot.slane %v860, 5
        %v992 = vrot.slane %v991, 4
        %v993 = vrot.slane %v861, 5
        %v994 = vsel %vm934, %v992, %v993
        %v995 = vrot.slane %v993, 4
        %v996 = vrot.slane %v862, 5
        %v997 = vsel %vm934, %v995, %v996
        %v998 = vrot.slane %v863, 5
        %v999 = vrot.slane %v998, 4
        %v1000 = vrot.slane %v864, 5
        %v1001 = vsel %vm934, %v999, %v1000
        %v1002 = vrot.slane %v1000, 4
        %v1003 = vrot.slane %v865, 5
        %v1004 = vsel %vm934, %v1002, %v1003
        %v1005 = vrot.slane %v866, 5
        %v1006 = vrot.slane %v1005, 4
        %v1007 = vrot.slane %v867, 5
        %v1008 = vsel %vm934, %v1006, %v1007
        %v1009 = vrot.slane %v1007, 4
        %v1010 = vrot.slane %v868, 5
        %v1011 = vsel %vm934, %v1009, %v1010
        %v1012 = vrot.slane %v869, 5
        %v1013 = vrot.slane %v1012, 4
        %v1014 = vrot.slane %v870, 5
        %v1015 = vsel %vm934, %v1013, %v1014
        %v1016 = vrot.slane %v1014, 4
        %v1017 = vrot.slane %v871, 5
        %v1018 = vsel %vm934, %v1016, %v1017
        %v1019 = vrot.slane %v872, 5
        %v1020 = vrot.slane %v1019, 4
        %v1021 = vrot.slane %v873, 5
        %v1022 = vsel %vm934, %v1020, %v1021
        %v1023 = vrot.slane %v1021, 4
        %v1024 = vrot.slane %v874, 5
        %v1025 = vsel %vm934, %v1023, %v1024
        %v1026 = vrot.slane %v875, 5
        %v1027 = vrot.slane %v1026, 4
        %v1028 = vrot.slane %v876, 5
        %v1029 = vsel %vm934, %v1027, %v1028
        %v1030 = vrot.slane %v1028, 4
        %v1031 = vrot.slane %v877, 5
        %v1032 = vsel %vm934, %v1030, %v1031
        %v1033 = vrot.slane %v878, 5
        %v1034 = vrot.slane %v1033, 4
        %v1035 = vrot.slane %v879, 5
        %v1036 = vsel %vm934, %v1034, %v1035
        %v1037 = vrot.slane %v1035, 4
        %v1038 = vrot.slane %v880, 5
        %v1039 = vsel %vm934, %v1037, %v1038
        %v1040 = vrot.slane %v881, 5
        %v1041 = vrot.slane %v1040, 4
        %v1042 = vrot.slane %v882, 5
        %v1043 = vsel %vm934, %v1041, %v1042
        %v1044 = vrot.slane %v1042, 4
        %v1045 = vrot.slane %v883, 5
        %v1046 = vsel %vm934, %v1044, %v1045
        %1079 = vst [vmem:[#allocation2 + $0x8] sm:$0xf] %v938
        %1080 = vst [vmem:[#allocation2 + $0x2c] sm:$0xf] %v941
        %1081 = vst [vmem:[#allocation2 + $0x50] sm:$0xf] %v945
        %1082 = vst [vmem:[#allocation2 + $0x74] sm:$0xf] %v948
        %1083 = vst [vmem:[#allocation2 + $0x98] sm:$0xf] %v952
        %1084 = vst [vmem:[#allocation2 + $0xbc] sm:$0xf] %v955
        %1085 = vst [vmem:[#allocation2 + $0xe0] sm:$0xf] %v959
        %1086 = vst [vmem:[#allocation2 + $0x104] sm:$0xf] %v962
        %1087 = vst [vmem:[#allocation2 + $0x128] sm:$0xf] %v966
        %1088 = vst [vmem:[#allocation2 + $0x14c] sm:$0xf] %v969
        %1089 = vst [vmem:[#allocation2 + $0x170] sm:$0xf] %v973
        %1090 = vst [vmem:[#allocation2 + $0x194] sm:$0xf] %v976
        %1091 = vst [vmem:[#allocation2 + $0x1b8] sm:$0xf] %v980
        %1092 = vst [vmem:[#allocation2 + $0x1dc] sm:$0xf] %v983
        %1093 = vst [vmem:[#allocation2 + $0x200] sm:$0xf] %v987
        %1094 = vst [vmem:[#allocation2 + $0x224] sm:$0xf] %v990
        %1095 = vst [vmem:[#allocation2 + $0x248] sm:$0xf] %v994
        %1096 = vst [vmem:[#allocation2 + $0x26c] sm:$0xf] %v997
        %1097 = vst [vmem:[#allocation2 + $0x290] sm:$0xf] %v1001
        %1098 = vst [vmem:[#allocation2 + $0x2b4] sm:$0xf] %v1004
        %1099 = vst [vmem:[#allocation2 + $0x2d8] sm:$0xf] %v1008
        %1100 = vst [vmem:[#allocation2 + $0x2fc] sm:$0xf] %v1011
        %1101 = vst [vmem:[#allocation2 + $0x320] sm:$0xf] %v1015
        %1102 = vst [vmem:[#allocation2 + $0x344] sm:$0xf] %v1018
        %1103 = vst [vmem:[#allocation2 + $0x368] sm:$0xf] %v1022
        %1104 = vst [vmem:[#allocation2 + $0x38c] sm:$0xf] %v1025
        %1105 = vst [vmem:[#allocation2 + $0x3b0] sm:$0xf] %v1029
        %1106 = vst [vmem:[#allocation2 + $0x3d4] sm:$0xf] %v1032
        %1107 = vst [vmem:[#allocation2 + $0x3f8] sm:$0xf] %v1036
        %1108 = vst [vmem:[#allocation2 + $0x41c] sm:$0xf] %v1039
        %1109 = vst [vmem:[#allocation2 + $0x440] sm:$0xf] %v1043
        %1110 = vst [vmem:[#allocation2 + $0x464] sm:$0xf] %v1046
        %s1111 = scalar_lea.vmem %s243, 12
        %v1112 = vld [vmem:[%s1111] sm:$0xf]
        %v1113 = vld [vmem:[%s1111 + $0x4] sm:$0xf]
        %v1114 = vld [vmem:[%s1111 + $0xc] sm:$0xf]
        %v1115 = vld [vmem:[%s1111 + $0x10] sm:$0xf]
        %v1116 = vld [vmem:[%s1111 + $0x18] sm:$0xf]
        %v1117 = vld [vmem:[%s1111 + $0x1c] sm:$0xf]
        %v1118 = vld [vmem:[%s1111 + $0x24] sm:$0xf]
        %v1119 = vld [vmem:[%s1111 + $0x28] sm:$0xf]
        %v1120 = vld [vmem:[%s1111 + $0x30] sm:$0xf]
        %v1121 = vld [vmem:[%s1111 + $0x34] sm:$0xf]
        %v1122 = vld [vmem:[%s1111 + $0x3c] sm:$0xf]
        %v1123 = vld [vmem:[%s1111 + $0x40] sm:$0xf]
        %v1124 = vld [vmem:[%s1111 + $0x48] sm:$0xf]
        %v1125 = vld [vmem:[%s1111 + $0x4c] sm:$0xf]
        %v1126 = vld [vmem:[%s1111 + $0x54] sm:$0xf]
        %v1127 = vld [vmem:[%s1111 + $0x58] sm:$0xf]
        %v1128 = vld [vmem:[%s1111 + $0x60] sm:$0xf]
        %v1129 = vld [vmem:[%s1111 + $0x64] sm:$0xf]
        %v1130 = vld [vmem:[%s1111 + $0x6c] sm:$0xf]
        %v1131 = vld [vmem:[%s1111 + $0x70] sm:$0xf]
        %v1132 = vld [vmem:[%s1111 + $0x78] sm:$0xf]
        %v1133 = vld [vmem:[%s1111 + $0x7c] sm:$0xf]
        %v1134 = vld [vmem:[%s1111 + $0x84] sm:$0xf]
        %v1135 = vld [vmem:[%s1111 + $0x88] sm:$0xf]
        %v1136 = vld [vmem:[%s1111 + $0x90] sm:$0xf]
        %v1137 = vld [vmem:[%s1111 + $0x94] sm:$0xf]
        %v1138 = vld [vmem:[%s1111 + $0x9c] sm:$0xf]
        %v1139 = vld [vmem:[%s1111 + $0xa0] sm:$0xf]
        %v1140 = vld [vmem:[%s1111 + $0xa8] sm:$0xf]
        %v1141 = vld [vmem:[%s1111 + $0xac] sm:$0xf]
        %v1142 = vld [vmem:[%s1111 + $0xb4] sm:$0xf]
        %v1143 = vld [vmem:[%s1111 + $0xb8] sm:$0xf]
        %1144 = vst [vmem:[#allocation2 + $0xc] sm:$0xf] %v1112
        %1145 = vst [vmem:[#allocation2 + $0x30] sm:$0xf] %v1113
        %1146 = vst [vmem:[#allocation2 + $0x54] sm:$0xf] %v1114
        %1147 = vst [vmem:[#allocation2 + $0x78] sm:$0xf] %v1115
        %1148 = vst [vmem:[#allocation2 + $0x9c] sm:$0xf] %v1116
        %1149 = vst [vmem:[#allocation2 + $0xc0] sm:$0xf] %v1117
        %1150 = vst [vmem:[#allocation2 + $0xe4] sm:$0xf] %v1118
        %1151 = vst [vmem:[#allocation2 + $0x108] sm:$0xf] %v1119
        %1152 = vst [vmem:[#allocation2 + $0x12c] sm:$0xf] %v1120
        %1153 = vst [vmem:[#allocation2 + $0x150] sm:$0xf] %v1121
        %1154 = vst [vmem:[#allocation2 + $0x174] sm:$0xf] %v1122
        %1155 = vst [vmem:[#allocation2 + $0x198] sm:$0xf] %v1123
        %1156 = vst [vmem:[#allocation2 + $0x1bc] sm:$0xf] %v1124
        %1157 = vst [vmem:[#allocation2 + $0x1e0] sm:$0xf] %v1125
        %1158 = vst [vmem:[#allocation2 + $0x204] sm:$0xf] %v1126
        %1159 = vst [vmem:[#allocation2 + $0x228] sm:$0xf] %v1127
        %1160 = vst [vmem:[#allocation2 + $0x24c] sm:$0xf] %v1128
        %1161 = vst [vmem:[#allocation2 + $0x270] sm:$0xf] %v1129
        %1162 = vst [vmem:[#allocation2 + $0x294] sm:$0xf] %v1130
        %1163 = vst [vmem:[#allocation2 + $0x2b8] sm:$0xf] %v1131
        %1164 = vst [vmem:[#allocation2 + $0x2dc] sm:$0xf] %v1132
        %1165 = vst [vmem:[#allocation2 + $0x300] sm:$0xf] %v1133
        %1166 = vst [vmem:[#allocation2 + $0x324] sm:$0xf] %v1134
        %1167 = vst [vmem:[#allocation2 + $0x348] sm:$0xf] %v1135
        %1168 = vst [vmem:[#allocation2 + $0x36c] sm:$0xf] %v1136
        %1169 = vst [vmem:[#allocation2 + $0x390] sm:$0xf] %v1137
        %1170 = vst [vmem:[#allocation2 + $0x3b4] sm:$0xf] %v1138
        %1171 = vst [vmem:[#allocation2 + $0x3d8] sm:$0xf] %v1139
        %1172 = vst [vmem:[#allocation2 + $0x3fc] sm:$0xf] %v1140
        %1173 = vst [vmem:[#allocation2 + $0x420] sm:$0xf] %v1141
        %1174 = vst [vmem:[#allocation2 + $0x444] sm:$0xf] %v1142
        %1175 = vst [vmem:[#allocation2 + $0x468] sm:$0xf] %v1143
        %v1176 = vld [vmem:[%s1111] sm:$0xf]
        %v1177 = vld [vmem:[%s1111 + $0x4] sm:$0xf]
        %v1178 = vld [vmem:[%s1111 + $0x8] sm:$0x1]
        %v1179 = vld [vmem:[%s1111 + $0xc] sm:$0xf]
        %v1180 = vld [vmem:[%s1111 + $0x10] sm:$0xf]
        %v1181 = vld [vmem:[%s1111 + $0x14] sm:$0x1]
        %v1182 = vld [vmem:[%s1111 + $0x18] sm:$0xf]
        %v1183 = vld [vmem:[%s1111 + $0x1c] sm:$0xf]
        %v1184 = vld [vmem:[%s1111 + $0x20] sm:$0x1]
        %v1185 = vld [vmem:[%s1111 + $0x24] sm:$0xf]
        %v1186 = vld [vmem:[%s1111 + $0x28] sm:$0xf]
        %v1187 = vld [vmem:[%s1111 + $0x2c] sm:$0x1]
        %v1188 = vld [vmem:[%s1111 + $0x30] sm:$0xf]
        %v1189 = vld [vmem:[%s1111 + $0x34] sm:$0xf]
        %v1190 = vld [vmem:[%s1111 + $0x38] sm:$0x1]
        %v1191 = vld [vmem:[%s1111 + $0x3c] sm:$0xf]
        %v1192 = vld [vmem:[%s1111 + $0x40] sm:$0xf]
        %v1193 = vld [vmem:[%s1111 + $0x44] sm:$0x1]
        %v1194 = vld [vmem:[%s1111 + $0x48] sm:$0xf]
        %v1195 = vld [vmem:[%s1111 + $0x4c] sm:$0xf]
        %v1196 = vld [vmem:[%s1111 + $0x50] sm:$0x1]
        %v1197 = vld [vmem:[%s1111 + $0x54] sm:$0xf]
        %v1198 = vld [vmem:[%s1111 + $0x58] sm:$0xf]
        %v1199 = vld [vmem:[%s1111 + $0x5c] sm:$0x1]
        %v1200 = vld [vmem:[%s1111 + $0x60] sm:$0xf]
        %v1201 = vld [vmem:[%s1111 + $0x64] sm:$0xf]
        %v1202 = vld [vmem:[%s1111 + $0x68] sm:$0x1]
        %v1203 = vld [vmem:[%s1111 + $0x6c] sm:$0xf]
        %v1204 = vld [vmem:[%s1111 + $0x70] sm:$0xf]
        %v1205 = vld [vmem:[%s1111 + $0x74] sm:$0x1]
        %v1206 = vld [vmem:[%s1111 + $0x78] sm:$0xf]
        %v1207 = vld [vmem:[%s1111 + $0x7c] sm:$0xf]
        %v1208 = vld [vmem:[%s1111 + $0x80] sm:$0x1]
        %v1209 = vld [vmem:[%s1111 + $0x84] sm:$0xf]
        %v1210 = vld [vmem:[%s1111 + $0x88] sm:$0xf]
        %v1211 = vld [vmem:[%s1111 + $0x8c] sm:$0x1]
        %v1212 = vld [vmem:[%s1111 + $0x90] sm:$0xf]
        %v1213 = vld [vmem:[%s1111 + $0x94] sm:$0xf]
        %v1214 = vld [vmem:[%s1111 + $0x98] sm:$0x1]
        %v1215 = vld [vmem:[%s1111 + $0x9c] sm:$0xf]
        %v1216 = vld [vmem:[%s1111 + $0xa0] sm:$0xf]
        %v1217 = vld [vmem:[%s1111 + $0xa4] sm:$0x1]
        %v1218 = vld [vmem:[%s1111 + $0xa8] sm:$0xf]
        %v1219 = vld [vmem:[%s1111 + $0xac] sm:$0xf]
        %v1220 = vld [vmem:[%s1111 + $0xb0] sm:$0x1]
        %v1221 = vld [vmem:[%s1111 + $0xb4] sm:$0xf]
        %v1222 = vld [vmem:[%s1111 + $0xb8] sm:$0xf]
        %v1223 = vld [vmem:[%s1111 + $0xbc] sm:$0x1]
        %v1225 = vshrl.u32 %v1176, 16
        %v1227 = vrot.slane %v1225, 4
        %v1228 = vshll.u32 %v1176, 16
        %v1230 = vrot.slane %v1228, 5
        %v1231 = vor.u32 %v1227, %v1230
        %v1232 = vrot.slane %v1231, 4
        %v1234 = vshll.u32 %v1177, 16
        %v1236 = vrot.slane %v1234, 5
        %v1237 = vsel %vm387, %v1232, %v1236
        %v1238 = vshrl.u32 %v1177, 16
        %v1240 = vrot.slane %v1238, 4
        %v1241 = vor.u32 %v1240, %v1236
        %v1242 = vrot.slane %v1241, 4
        %v1244 = vshll.u32 %v1178, 16
        %v1246 = vrot.slane %v1244, 5
        %v1247 = vsel %vm387, %v1242, %v1246
        %v1249 = vshrl.u32 %v1179, 16
        %v1251 = vrot.slane %v1249, 4
        %v1252 = vshll.u32 %v1179, 16
        %v1254 = vrot.slane %v1252, 5
        %v1255 = vor.u32 %v1251, %v1254
        %v1256 = vrot.slane %v1255, 4
        %v1258 = vshll.u32 %v1180, 16
        %v1260 = vrot.slane %v1258, 5
        %v1261 = vsel %vm387, %v1256, %v1260
        %v1262 = vshrl.u32 %v1180, 16
        %v1264 = vrot.slane %v1262, 4
        %v1265 = vor.u32 %v1264, %v1260
        %v1266 = vrot.slane %v1265, 4
        %v1268 = vshll.u32 %v1181, 16
        %v1270 = vrot.slane %v1268, 5
        %v1271 = vsel %vm387, %v1266, %v1270
        %v1273 = vshrl.u32 %v1182, 16
        %v1275 = vrot.slane %v1273, 4
        %v1276 = vshll.u32 %v1182, 16
        %v1278 = vrot.slane %v1276, 5
        %v1279 = vor.u32 %v1275, %v1278
        %v1280 = vrot.slane %v1279, 4
        %v1282 = vshll.u32 %v1183, 16
        %v1284 = vrot.slane %v1282, 5
        %v1285 = vsel %vm387, %v1280, %v1284
        %v1286 = vshrl.u32 %v1183, 16
        %v1288 = vrot.slane %v1286, 4
        %v1289 = vor.u32 %v1288, %v1284
        %v1290 = vrot.slane %v1289, 4
        %v1292 = vshll.u32 %v1184, 16
        %v1294 = vrot.slane %v1292, 5
        %v1295 = vsel %vm387, %v1290, %v1294
        %v1297 = vshrl.u32 %v1185, 16
        %v1299 = vrot.slane %v1297, 4
        %v1300 = vshll.u32 %v1185, 16
        %v1302 = vrot.slane %v1300, 5
        %v1303 = vor.u32 %v1299, %v1302
        %v1304 = vrot.slane %v1303, 4
        %v1306 = vshll.u32 %v1186, 16
        %v1308 = vrot.slane %v1306, 5
        %v1309 = vsel %vm387, %v1304, %v1308
        %v1310 = vshrl.u32 %v1186, 16
        %v1312 = vrot.slane %v1310, 4
        %v1313 = vor.u32 %v1312, %v1308
        %v1314 = vrot.slane %v1313, 4
        %v1316 = vshll.u32 %v1187, 16
        %v1318 = vrot.slane %v1316, 5
        %v1319 = vsel %vm387, %v1314, %v1318
        %v1321 = vshrl.u32 %v1188, 16
        %v1323 = vrot.slane %v1321, 4
        %v1324 = vshll.u32 %v1188, 16
        %v1326 = vrot.slane %v1324, 5
        %v1327 = vor.u32 %v1323, %v1326
        %v1328 = vrot.slane %v1327, 4
        %v1330 = vshll.u32 %v1189, 16
        %v1332 = vrot.slane %v1330, 5
        %v1333 = vsel %vm387, %v1328, %v1332
        %v1334 = vshrl.u32 %v1189, 16
        %v1336 = vrot.slane %v1334, 4
        %v1337 = vor.u32 %v1336, %v1332
        %v1338 = vrot.slane %v1337, 4
        %v1340 = vshll.u32 %v1190, 16
        %v1342 = vrot.slane %v1340, 5
        %v1343 = vsel %vm387, %v1338, %v1342
        %v1345 = vshrl.u32 %v1191, 16
        %v1347 = vrot.slane %v1345, 4
        %v1348 = vshll.u32 %v1191, 16
        %v1350 = vrot.slane %v1348, 5
        %v1351 = vor.u32 %v1347, %v1350
        %v1352 = vrot.slane %v1351, 4
        %v1354 = vshll.u32 %v1192, 16
        %v1356 = vrot.slane %v1354, 5
        %v1357 = vsel %vm387, %v1352, %v1356
        %v1358 = vshrl.u32 %v1192, 16
        %v1360 = vrot.slane %v1358, 4
        %v1361 = vor.u32 %v1360, %v1356
        %v1362 = vrot.slane %v1361, 4
        %v1364 = vshll.u32 %v1193, 16
        %v1366 = vrot.slane %v1364, 5
        %v1367 = vsel %vm387, %v1362, %v1366
        %v1369 = vshrl.u32 %v1194, 16
        %v1371 = vrot.slane %v1369, 4
        %v1372 = vshll.u32 %v1194, 16
        %v1374 = vrot.slane %v1372, 5
        %v1375 = vor.u32 %v1371, %v1374
        %v1376 = vrot.slane %v1375, 4
        %v1378 = vshll.u32 %v1195, 16
        %v1380 = vrot.slane %v1378, 5
        %v1381 = vsel %vm387, %v1376, %v1380
        %v1382 = vshrl.u32 %v1195, 16
        %v1384 = vrot.slane %v1382, 4
        %v1385 = vor.u32 %v1384, %v1380
        %v1386 = vrot.slane %v1385, 4
        %v1388 = vshll.u32 %v1196, 16
        %v1390 = vrot.slane %v1388, 5
        %v1391 = vsel %vm387, %v1386, %v1390
        %v1393 = vshrl.u32 %v1197, 16
        %v1395 = vrot.slane %v1393, 4
        %v1396 = vshll.u32 %v1197, 16
        %v1398 = vrot.slane %v1396, 5
        %v1399 = vor.u32 %v1395, %v1398
        %v1400 = vrot.slane %v1399, 4
        %v1402 = vshll.u32 %v1198, 16
        %v1404 = vrot.slane %v1402, 5
        %v1405 = vsel %vm387, %v1400, %v1404
        %v1406 = vshrl.u32 %v1198, 16
        %v1408 = vrot.slane %v1406, 4
        %v1409 = vor.u32 %v1408, %v1404
        %v1410 = vrot.slane %v1409, 4
        %v1412 = vshll.u32 %v1199, 16
        %v1414 = vrot.slane %v1412, 5
        %v1415 = vsel %vm387, %v1410, %v1414
        %v1417 = vshrl.u32 %v1200, 16
        %v1419 = vrot.slane %v1417, 4
        %v1420 = vshll.u32 %v1200, 16
        %v1422 = vrot.slane %v1420, 5
        %v1423 = vor.u32 %v1419, %v1422
        %v1424 = vrot.slane %v1423, 4
        %v1426 = vshll.u32 %v1201, 16
        %v1428 = vrot.slane %v1426, 5
        %v1429 = vsel %vm387, %v1424, %v1428
        %v1430 = vshrl.u32 %v1201, 16
        %v1432 = vrot.slane %v1430, 4
        %v1433 = vor.u32 %v1432, %v1428
        %v1434 = vrot.slane %v1433, 4
        %v1436 = vshll.u32 %v1202, 16
        %v1438 = vrot.slane %v1436, 5
        %v1439 = vsel %vm387, %v1434, %v1438
        %v1441 = vshrl.u32 %v1203, 16
        %v1443 = vrot.slane %v1441, 4
        %v1444 = vshll.u32 %v1203, 16
        %v1446 = vrot.slane %v1444, 5
        %v1447 = vor.u32 %v1443, %v1446
        %v1448 = vrot.slane %v1447, 4
        %v1450 = vshll.u32 %v1204, 16
        %v1452 = vrot.slane %v1450, 5
        %v1453 = vsel %vm387, %v1448, %v1452
        %v1454 = vshrl.u32 %v1204, 16
        %v1456 = vrot.slane %v1454, 4
        %v1457 = vor.u32 %v1456, %v1452
        %v1458 = vrot.slane %v1457, 4
        %v1460 = vshll.u32 %v1205, 16
        %v1462 = vrot.slane %v1460, 5
        %v1463 = vsel %vm387, %v1458, %v1462
        %v1465 = vshrl.u32 %v1206, 16
        %v1467 = vrot.slane %v1465, 4
        %v1468 = vshll.u32 %v1206, 16
        %v1470 = vrot.slane %v1468, 5
        %v1471 = vor.u32 %v1467, %v1470
        %v1472 = vrot.slane %v1471, 4
        %v1474 = vshll.u32 %v1207, 16
        %v1476 = vrot.slane %v1474, 5
        %v1477 = vsel %vm387, %v1472, %v1476
        %v1478 = vshrl.u32 %v1207, 16
        %v1480 = vrot.slane %v1478, 4
        %v1481 = vor.u32 %v1480, %v1476
        %v1482 = vrot.slane %v1481, 4
        %v1484 = vshll.u32 %v1208, 16
        %v1486 = vrot.slane %v1484, 5
        %v1487 = vsel %vm387, %v1482, %v1486
        %v1489 = vshrl.u32 %v1209, 16
        %v1491 = vrot.slane %v1489, 4
        %v1492 = vshll.u32 %v1209, 16
        %v1494 = vrot.slane %v1492, 5
        %v1495 = vor.u32 %v1491, %v1494
        %v1496 = vrot.slane %v1495, 4
        %v1498 = vshll.u32 %v1210, 16
        %v1500 = vrot.slane %v1498, 5
        %v1501 = vsel %vm387, %v1496, %v1500
        %v1502 = vshrl.u32 %v1210, 16
        %v1504 = vrot.slane %v1502, 4
        %v1505 = vor.u32 %v1504, %v1500
        %v1506 = vrot.slane %v1505, 4
        %v1508 = vshll.u32 %v1211, 16
        %v1510 = vrot.slane %v1508, 5
        %v1511 = vsel %vm387, %v1506, %v1510
        %v1513 = vshrl.u32 %v1212, 16
        %v1515 = vrot.slane %v1513, 4
        %v1516 = vshll.u32 %v1212, 16
        %v1518 = vrot.slane %v1516, 5
        %v1519 = vor.u32 %v1515, %v1518
        %v1520 = vrot.slane %v1519, 4
        %v1522 = vshll.u32 %v1213, 16
        %v1524 = vrot.slane %v1522, 5
        %v1525 = vsel %vm387, %v1520, %v1524
        %v1526 = vshrl.u32 %v1213, 16
        %v1528 = vrot.slane %v1526, 4
        %v1529 = vor.u32 %v1528, %v1524
        %v1530 = vrot.slane %v1529, 4
        %v1532 = vshll.u32 %v1214, 16
        %v1534 = vrot.slane %v1532, 5
        %v1535 = vsel %vm387, %v1530, %v1534
        %v1537 = vshrl.u32 %v1215, 16
        %v1539 = vrot.slane %v1537, 4
        %v1540 = vshll.u32 %v1215, 16
        %v1542 = vrot.slane %v1540, 5
        %v1543 = vor.u32 %v1539, %v1542
        %v1544 = vrot.slane %v1543, 4
        %v1546 = vshll.u32 %v1216, 16
        %v1548 = vrot.slane %v1546, 5
        %v1549 = vsel %vm387, %v1544, %v1548
        %v1550 = vshrl.u32 %v1216, 16
        %v1552 = vrot.slane %v1550, 4
        %v1553 = vor.u32 %v1552, %v1548
        %v1554 = vrot.slane %v1553, 4
        %v1556 = vshll.u32 %v1217, 16
        %v1558 = vrot.slane %v1556, 5
        %v1559 = vsel %vm387, %v1554, %v1558
        %v1561 = vshrl.u32 %v1218, 16
        %v1563 = vrot.slane %v1561, 4
        %v1564 = vshll.u32 %v1218, 16
        %v1566 = vrot.slane %v1564, 5
        %v1567 = vor.u32 %v1563, %v1566
        %v1568 = vrot.slane %v1567, 4
        %v1570 = vshll.u32 %v1219, 16
        %v1572 = vrot.slane %v1570, 5
        %v1573 = vsel %vm387, %v1568, %v1572
        %v1574 = vshrl.u32 %v1219, 16
        %v1576 = vrot.slane %v1574, 4
        %v1577 = vor.u32 %v1576, %v1572
        %v1578 = vrot.slane %v1577, 4
        %v1580 = vshll.u32 %v1220, 16
        %v1582 = vrot.slane %v1580, 5
        %v1583 = vsel %vm387, %v1578, %v1582
        %v1585 = vshrl.u32 %v1221, 16
        %v1587 = vrot.slane %v1585, 4
        %v1588 = vshll.u32 %v1221, 16
        %v1590 = vrot.slane %v1588, 5
        %v1591 = vor.u32 %v1587, %v1590
        %v1592 = vrot.slane %v1591, 4
        %v1594 = vshll.u32 %v1222, 16
        %v1596 = vrot.slane %v1594, 5
        %v1597 = vsel %vm387, %v1592, %v1596
        %v1598 = vshrl.u32 %v1222, 16
        %v1600 = vrot.slane %v1598, 4
        %v1601 = vor.u32 %v1600, %v1596
        %v1602 = vrot.slane %v1601, 4
        %v1604 = vshll.u32 %v1223, 16
        %v1606 = vrot.slane %v1604, 5
        %v1607 = vsel %vm387, %v1602, %v1606
        %1640 = vst [vmem:[#allocation2 + $0x10] sm:$0xf] %v1237
        %1641 = vst [vmem:[#allocation2 + $0x34] sm:$0xf] %v1247
        %1642 = vst [vmem:[#allocation2 + $0x58] sm:$0xf] %v1261
        %1643 = vst [vmem:[#allocation2 + $0x7c] sm:$0xf] %v1271
        %1644 = vst [vmem:[#allocation2 + $0xa0] sm:$0xf] %v1285
        %1645 = vst [vmem:[#allocation2 + $0xc4] sm:$0xf] %v1295
        %1646 = vst [vmem:[#allocation2 + $0xe8] sm:$0xf] %v1309
        %1647 = vst [vmem:[#allocation2 + $0x10c] sm:$0xf] %v1319
        %1648 = vst [vmem:[#allocation2 + $0x130] sm:$0xf] %v1333
        %1649 = vst [vmem:[#allocation2 + $0x154] sm:$0xf] %v1343
        %1650 = vst [vmem:[#allocation2 + $0x178] sm:$0xf] %v1357
        %1651 = vst [vmem:[#allocation2 + $0x19c] sm:$0xf] %v1367
        %1652 = vst [vmem:[#allocation2 + $0x1c0] sm:$0xf] %v1381
        %1653 = vst [vmem:[#allocation2 + $0x1e4] sm:$0xf] %v1391
        %1654 = vst [vmem:[#allocation2 + $0x208] sm:$0xf] %v1405
        %1655 = vst [vmem:[#allocation2 + $0x22c] sm:$0xf] %v1415
        %1656 = vst [vmem:[#allocation2 + $0x250] sm:$0xf] %v1429
        %1657 = vst [vmem:[#allocation2 + $0x274] sm:$0xf] %v1439
        %1658 = vst [vmem:[#allocation2 + $0x298] sm:$0xf] %v1453
        %1659 = vst [vmem:[#allocation2 + $0x2bc] sm:$0xf] %v1463
        %1660 = vst [vmem:[#allocation2 + $0x2e0] sm:$0xf] %v1477
        %1661 = vst [vmem:[#allocation2 + $0x304] sm:$0xf] %v1487
        %1662 = vst [vmem:[#allocation2 + $0x328] sm:$0xf] %v1501
        %1663 = vst [vmem:[#allocation2 + $0x34c] sm:$0xf] %v1511
        %1664 = vst [vmem:[#allocation2 + $0x370] sm:$0xf] %v1525
        %1665 = vst [vmem:[#allocation2 + $0x394] sm:$0xf] %v1535
        %1666 = vst [vmem:[#allocation2 + $0x3b8] sm:$0xf] %v1549
        %1667 = vst [vmem:[#allocation2 + $0x3dc] sm:$0xf] %v1559
        %1668 = vst [vmem:[#allocation2 + $0x400] sm:$0xf] %v1573
        %1669 = vst [vmem:[#allocation2 + $0x424] sm:$0xf] %v1583
        %1670 = vst [vmem:[#allocation2 + $0x448] sm:$0xf] %v1597
        %1671 = vst [vmem:[#allocation2 + $0x46c] sm:$0xf] %v1607
        %v1672 = vld [vmem:[%s1111] sm:$0xe]
        %v1673 = vld [vmem:[%s1111 + $0x4] sm:$0xf]
        %v1674 = vld [vmem:[%s1111 + $0x8] sm:$0x1]
        %v1675 = vld [vmem:[%s1111 + $0xc] sm:$0xe]
        %v1676 = vld [vmem:[%s1111 + $0x10] sm:$0xf]
        %v1677 = vld [vmem:[%s1111 + $0x14] sm:$0x1]
        %v1678 = vld [vmem:[%s1111 + $0x18] sm:$0xe]
        %v1679 = vld [vmem:[%s1111 + $0x1c] sm:$0xf]
        %v1680 = vld [vmem:[%s1111 + $0x20] sm:$0x1]
        %v1681 = vld [vmem:[%s1111 + $0x24] sm:$0xe]
        %v1682 = vld [vmem:[%s1111 + $0x28] sm:$0xf]
        %v1683 = vld [vmem:[%s1111 + $0x2c] sm:$0x1]
        %v1684 = vld [vmem:[%s1111 + $0x30] sm:$0xe]
        %v1685 = vld [vmem:[%s1111 + $0x34] sm:$0xf]
        %v1686 = vld [vmem:[%s1111 + $0x38] sm:$0x1]
        %v1687 = vld [vmem:[%s1111 + $0x3c] sm:$0xe]
        %v1688 = vld [vmem:[%s1111 + $0x40] sm:$0xf]
        %v1689 = vld [vmem:[%s1111 + $0x44] sm:$0x1]
        %v1690 = vld [vmem:[%s1111 + $0x48] sm:$0xe]
        %v1691 = vld [vmem:[%s1111 + $0x4c] sm:$0xf]
        %v1692 = vld [vmem:[%s1111 + $0x50] sm:$0x1]
        %v1693 = vld [vmem:[%s1111 + $0x54] sm:$0xe]
        %v1694 = vld [vmem:[%s1111 + $0x58] sm:$0xf]
        %v1695 = vld [vmem:[%s1111 + $0x5c] sm:$0x1]
        %v1696 = vld [vmem:[%s1111 + $0x60] sm:$0xe]
        %v1697 = vld [vmem:[%s1111 + $0x64] sm:$0xf]
        %v1698 = vld [vmem:[%s1111 + $0x68] sm:$0x1]
        %v1699 = vld [vmem:[%s1111 + $0x6c] sm:$0xe]
        %v1700 = vld [vmem:[%s1111 + $0x70] sm:$0xf]
        %v1701 = vld [vmem:[%s1111 + $0x74] sm:$0x1]
        %v1702 = vld [vmem:[%s1111 + $0x78] sm:$0xe]
        %v1703 = vld [vmem:[%s1111 + $0x7c] sm:$0xf]
        %v1704 = vld [vmem:[%s1111 + $0x80] sm:$0x1]
        %v1705 = vld [vmem:[%s1111 + $0x84] sm:$0xe]
        %v1706 = vld [vmem:[%s1111 + $0x88] sm:$0xf]
        %v1707 = vld [vmem:[%s1111 + $0x8c] sm:$0x1]
        %v1708 = vld [vmem:[%s1111 + $0x90] sm:$0xe]
        %v1709 = vld [vmem:[%s1111 + $0x94] sm:$0xf]
        %v1710 = vld [vmem:[%s1111 + $0x98] sm:$0x1]
        %v1711 = vld [vmem:[%s1111 + $0x9c] sm:$0xe]
        %v1712 = vld [vmem:[%s1111 + $0xa0] sm:$0xf]
        %v1713 = vld [vmem:[%s1111 + $0xa4] sm:$0x1]
        %v1714 = vld [vmem:[%s1111 + $0xa8] sm:$0xe]
        %v1715 = vld [vmem:[%s1111 + $0xac] sm:$0xf]
        %v1716 = vld [vmem:[%s1111 + $0xb0] sm:$0x1]
        %v1717 = vld [vmem:[%s1111 + $0xb4] sm:$0xe]
        %v1718 = vld [vmem:[%s1111 + $0xb8] sm:$0xf]
        %v1719 = vld [vmem:[%s1111 + $0xbc] sm:$0x1]
        %v1768 = vrot.slane %v1672, 5
        %v1769 = vrot.slane %v1768, 4
        %v1770 = vrot.slane %v1673, 5
        %v1771 = vsel %vm934, %v1769, %v1770
        %v1772 = vrot.slane %v1770, 4
        %v1773 = vrot.slane %v1674, 5
        %v1774 = vsel %vm934, %v1772, %v1773
        %v1775 = vrot.slane %v1675, 5
        %v1776 = vrot.slane %v1775, 4
        %v1777 = vrot.slane %v1676, 5
        %v1778 = vsel %vm934, %v1776, %v1777
        %v1779 = vrot.slane %v1777, 4
        %v1780 = vrot.slane %v1677, 5
        %v1781 = vsel %vm934, %v1779, %v1780
        %v1782 = vrot.slane %v1678, 5
        %v1783 = vrot.slane %v1782, 4
        %v1784 = vrot.slane %v1679, 5
        %v1785 = vsel %vm934, %v1783, %v1784
        %v1786 = vrot.slane %v1784, 4
        %v1787 = vrot.slane %v1680, 5
        %v1788 = vsel %vm934, %v1786, %v1787
        %v1789 = vrot.slane %v1681, 5
        %v1790 = vrot.slane %v1789, 4
        %v1791 = vrot.slane %v1682, 5
        %v1792 = vsel %vm934, %v1790, %v1791
        %v1793 = vrot.slane %v1791, 4
        %v1794 = vrot.slane %v1683, 5
        %v1795 = vsel %vm934, %v1793, %v1794
        %v1796 = vrot.slane %v1684, 5
        %v1797 = vrot.slane %v1796, 4
        %v1798 = vrot.slane %v1685, 5
        %v1799 = vsel %vm934, %v1797, %v1798
        %v1800 = vrot.slane %v1798, 4
        %v1801 = vrot.slane %v1686, 5
        %v1802 = vsel %vm934, %v1800, %v1801
        %v1803 = vrot.slane %v1687, 5
        %v1804 = vrot.slane %v1803, 4
        %v1805 = vrot.slane %v1688, 5
        %v1806 = vsel %vm934, %v1804, %v1805
        %v1807 = vrot.slane %v1805, 4
        %v1808 = vrot.slane %v1689, 5
        %v1809 = vsel %vm934, %v1807, %v1808
        %v1810 = vrot.slane %v1690, 5
        %v1811 = vrot.slane %v1810, 4
        %v1812 = vrot.slane %v1691, 5
        %v1813 = vsel %vm934, %v1811, %v1812
        %v1814 = vrot.slane %v1812, 4
        %v1815 = vrot.slane %v1692, 5
        %v1816 = vsel %vm934, %v1814, %v1815
        %v1817 = vrot.slane %v1693, 5
        %v1818 = vrot.slane %v1817, 4
        %v1819 = vrot.slane %v1694, 5
        %v1820 = vsel %vm934, %v1818, %v1819
        %v1821 = vrot.slane %v1819, 4
        %v1822 = vrot.slane %v1695, 5
        %v1823 = vsel %vm934, %v1821, %v1822
        %v1824 = vrot.slane %v1696, 5
        %v1825 = vrot.slane %v1824, 4
        %v1826 = vrot.slane %v1697, 5
        %v1827 = vsel %vm934, %v1825, %v1826
        %v1828 = vrot.slane %v1826, 4
        %v1829 = vrot.slane %v1698, 5
        %v1830 = vsel %vm934, %v1828, %v1829
        %v1831 = vrot.slane %v1699, 5
        %v1832 = vrot.slane %v1831, 4
        %v1833 = vrot.slane %v1700, 5
        %v1834 = vsel %vm934, %v1832, %v1833
        %v1835 = vrot.slane %v1833, 4
        %v1836 = vrot.slane %v1701, 5
        %v1837 = vsel %vm934, %v1835, %v1836
        %v1838 = vrot.slane %v1702, 5
        %v1839 = vrot.slane %v1838, 4
        %v1840 = vrot.slane %v1703, 5
        %v1841 = vsel %vm934, %v1839, %v1840
        %v1842 = vrot.slane %v1840, 4
        %v1843 = vrot.slane %v1704, 5
        %v1844 = vsel %vm934, %v1842, %v1843
        %v1845 = vrot.slane %v1705, 5
        %v1846 = vrot.slane %v1845, 4
        %v1847 = vrot.slane %v1706, 5
        %v1848 = vsel %vm934, %v1846, %v1847
        %v1849 = vrot.slane %v1847, 4
        %v1850 = vrot.slane %v1707, 5
        %v1851 = vsel %vm934, %v1849, %v1850
        %v1852 = vrot.slane %v1708, 5
        %v1853 = vrot.slane %v1852, 4
        %v1854 = vrot.slane %v1709, 5
        %v1855 = vsel %vm934, %v1853, %v1854
        %v1856 = vrot.slane %v1854, 4
        %v1857 = vrot.slane %v1710, 5
        %v1858 = vsel %vm934, %v1856, %v1857
        %v1859 = vrot.slane %v1711, 5
        %v1860 = vrot.slane %v1859, 4
        %v1861 = vrot.slane %v1712, 5
        %v1862 = vsel %vm934, %v1860, %v1861
        %v1863 = vrot.slane %v1861, 4
        %v1864 = vrot.slane %v1713, 5
        %v1865 = vsel %vm934, %v1863, %v1864
        %v1866 = vrot.slane %v1714, 5
        %v1867 = vrot.slane %v1866, 4
        %v1868 = vrot.slane %v1715, 5
        %v1869 = vsel %vm934, %v1867, %v1868
        %v1870 = vrot.slane %v1868, 4
        %v1871 = vrot.slane %v1716, 5
        %v1872 = vsel %vm934, %v1870, %v1871
        %v1873 = vrot.slane %v1717, 5
        %v1874 = vrot.slane %v1873, 4
        %v1875 = vrot.slane %v1718, 5
        %v1876 = vsel %vm934, %v1874, %v1875
        %v1877 = vrot.slane %v1875, 4
        %v1878 = vrot.slane %v1719, 5
        %v1879 = vsel %vm934, %v1877, %v1878
        %1912 = vst [vmem:[#allocation2 + $0x14] sm:$0xf] %v1771
        %1913 = vst [vmem:[#allocation2 + $0x38] sm:$0xf] %v1774
        %1914 = vst [vmem:[#allocation2 + $0x5c] sm:$0xf] %v1778
        %1915 = vst [vmem:[#allocation2 + $0x80] sm:$0xf] %v1781
        %1916 = vst [vmem:[#allocation2 + $0xa4] sm:$0xf] %v1785
        %1917 = vst [vmem:[#allocation2 + $0xc8] sm:$0xf] %v1788
        %1918 = vst [vmem:[#allocation2 + $0xec] sm:$0xf] %v1792
        %1919 = vst [vmem:[#allocation2 + $0x110] sm:$0xf] %v1795
        %1920 = vst [vmem:[#allocation2 + $0x134] sm:$0xf] %v1799
        %1921 = vst [vmem:[#allocation2 + $0x158] sm:$0xf] %v1802
        %1922 = vst [vmem:[#allocation2 + $0x17c] sm:$0xf] %v1806
        %1923 = vst [vmem:[#allocation2 + $0x1a0] sm:$0xf] %v1809
        %1924 = vst [vmem:[#allocation2 + $0x1c4] sm:$0xf] %v1813
        %1925 = vst [vmem:[#allocation2 + $0x1e8] sm:$0xf] %v1816
        %1926 = vst [vmem:[#allocation2 + $0x20c] sm:$0xf] %v1820
        %1927 = vst [vmem:[#allocation2 + $0x230] sm:$0xf] %v1823
        %1928 = vst [vmem:[#allocation2 + $0x254] sm:$0xf] %v1827
        %1929 = vst [vmem:[#allocation2 + $0x278] sm:$0xf] %v1830
        %1930 = vst [vmem:[#allocation2 + $0x29c] sm:$0xf] %v1834
        %1931 = vst [vmem:[#allocation2 + $0x2c0] sm:$0xf] %v1837
        %1932 = vst [vmem:[#allocation2 + $0x2e4] sm:$0xf] %v1841
        %1933 = vst [vmem:[#allocation2 + $0x308] sm:$0xf] %v1844
        %1934 = vst [vmem:[#allocation2 + $0x32c] sm:$0xf] %v1848
        %1935 = vst [vmem:[#allocation2 + $0x350] sm:$0xf] %v1851
        %1936 = vst [vmem:[#allocation2 + $0x374] sm:$0xf] %v1855
        %1937 = vst [vmem:[#allocation2 + $0x398] sm:$0xf] %v1858
        %1938 = vst [vmem:[#allocation2 + $0x3bc] sm:$0xf] %v1862
        %1939 = vst [vmem:[#allocation2 + $0x3e0] sm:$0xf] %v1865
        %1940 = vst [vmem:[#allocation2 + $0x404] sm:$0xf] %v1869
        %1941 = vst [vmem:[#allocation2 + $0x428] sm:$0xf] %v1872
        %1942 = vst [vmem:[#allocation2 + $0x44c] sm:$0xf] %v1876
        %1943 = vst [vmem:[#allocation2 + $0x470] sm:$0xf] %v1879
        %s1944 = scalar_lea.vmem %s243, 24
        %v1945 = vld [vmem:[%s1944] sm:$0xf]
        %v1946 = vld [vmem:[%s1944 + $0x4] sm:$0xf]
        %v1947 = vld [vmem:[%s1944 + $0xc] sm:$0xf]
        %v1948 = vld [vmem:[%s1944 + $0x10] sm:$0xf]
        %v1949 = vld [vmem:[%s1944 + $0x18] sm:$0xf]
        %v1950 = vld [vmem:[%s1944 + $0x1c] sm:$0xf]
        %v1951 = vld [vmem:[%s1944 + $0x24] sm:$0xf]
        %v1952 = vld [vmem:[%s1944 + $0x28] sm:$0xf]
        %v1953 = vld [vmem:[%s1944 + $0x30] sm:$0xf]
        %v1954 = vld [vmem:[%s1944 + $0x34] sm:$0xf]
        %v1955 = vld [vmem:[%s1944 + $0x3c] sm:$0xf]
        %v1956 = vld [vmem:[%s1944 + $0x40] sm:$0xf]
        %v1957 = vld [vmem:[%s1944 + $0x48] sm:$0xf]
        %v1958 = vld [vmem:[%s1944 + $0x4c] sm:$0xf]
        %v1959 = vld [vmem:[%s1944 + $0x54] sm:$0xf]
        %v1960 = vld [vmem:[%s1944 + $0x58] sm:$0xf]
        %v1961 = vld [vmem:[%s1944 + $0x60] sm:$0xf]
        %v1962 = vld [vmem:[%s1944 + $0x64] sm:$0xf]
        %v1963 = vld [vmem:[%s1944 + $0x6c] sm:$0xf]
        %v1964 = vld [vmem:[%s1944 + $0x70] sm:$0xf]
        %v1965 = vld [vmem:[%s1944 + $0x78] sm:$0xf]
        %v1966 = vld [vmem:[%s1944 + $0x7c] sm:$0xf]
        %v1967 = vld [vmem:[%s1944 + $0x84] sm:$0xf]
        %v1968 = vld [vmem:[%s1944 + $0x88] sm:$0xf]
        %v1969 = vld [vmem:[%s1944 + $0x90] sm:$0xf]
        %v1970 = vld [vmem:[%s1944 + $0x94] sm:$0xf]
        %v1971 = vld [vmem:[%s1944 + $0x9c] sm:$0xf]
        %v1972 = vld [vmem:[%s1944 + $0xa0] sm:$0xf]
        %v1973 = vld [vmem:[%s1944 + $0xa8] sm:$0xf]
        %v1974 = vld [vmem:[%s1944 + $0xac] sm:$0xf]
        %v1975 = vld [vmem:[%s1944 + $0xb4] sm:$0xf]
        %v1976 = vld [vmem:[%s1944 + $0xb8] sm:$0xf]
        %1977 = vst [vmem:[#allocation2 + $0x18] sm:$0xf] %v1945
        %1978 = vst [vmem:[#allocation2 + $0x3c] sm:$0xf] %v1946
        %1979 = vst [vmem:[#allocation2 + $0x60] sm:$0xf] %v1947
        %1980 = vst [vmem:[#allocation2 + $0x84] sm:$0xf] %v1948
        %1981 = vst [vmem:[#allocation2 + $0xa8] sm:$0xf] %v1949
        %1982 = vst [vmem:[#allocation2 + $0xcc] sm:$0xf] %v1950
        %1983 = vst [vmem:[#allocation2 + $0xf0] sm:$0xf] %v1951
        %1984 = vst [vmem:[#allocation2 + $0x114] sm:$0xf] %v1952
        %1985 = vst [vmem:[#allocation2 + $0x138] sm:$0xf] %v1953
        %1986 = vst [vmem:[#allocation2 + $0x15c] sm:$0xf] %v1954
        %1987 = vst [vmem:[#allocation2 + $0x180] sm:$0xf] %v1955
        %1988 = vst [vmem:[#allocation2 + $0x1a4] sm:$0xf] %v1956
        %1989 = vst [vmem:[#allocation2 + $0x1c8] sm:$0xf] %v1957
        %1990 = vst [vmem:[#allocation2 + $0x1ec] sm:$0xf] %v1958
        %1991 = vst [vmem:[#allocation2 + $0x210] sm:$0xf] %v1959
        %1992 = vst [vmem:[#allocation2 + $0x234] sm:$0xf] %v1960
        %1993 = vst [vmem:[#allocation2 + $0x258] sm:$0xf] %v1961
        %1994 = vst [vmem:[#allocation2 + $0x27c] sm:$0xf] %v1962
        %1995 = vst [vmem:[#allocation2 + $0x2a0] sm:$0xf] %v1963
        %1996 = vst [vmem:[#allocation2 + $0x2c4] sm:$0xf] %v1964
        %1997 = vst [vmem:[#allocation2 + $0x2e8] sm:$0xf] %v1965
        %1998 = vst [vmem:[#allocation2 + $0x30c] sm:$0xf] %v1966
        %1999 = vst [vmem:[#allocation2 + $0x330] sm:$0xf] %v1967
        %2000 = vst [vmem:[#allocation2 + $0x354] sm:$0xf] %v1968
        %2001 = vst [vmem:[#allocation2 + $0x378] sm:$0xf] %v1969
        %2002 = vst [vmem:[#allocation2 + $0x39c] sm:$0xf] %v1970
        %2003 = vst [vmem:[#allocation2 + $0x3c0] sm:$0xf] %v1971
        %2004 = vst [vmem:[#allocation2 + $0x3e4] sm:$0xf] %v1972
        %2005 = vst [vmem:[#allocation2 + $0x408] sm:$0xf] %v1973
        %2006 = vst [vmem:[#allocation2 + $0x42c] sm:$0xf] %v1974
        %2007 = vst [vmem:[#allocation2 + $0x450] sm:$0xf] %v1975
        %2008 = vst [vmem:[#allocation2 + $0x474] sm:$0xf] %v1976
        %v2009 = vld [vmem:[%s1944] sm:$0xf]
        %v2010 = vld [vmem:[%s1944 + $0x4] sm:$0xf]
        %v2011 = vld [vmem:[%s1944 + $0x8] sm:$0x1]
        %v2012 = vld [vmem:[%s1944 + $0xc] sm:$0xf]
        %v2013 = vld [vmem:[%s1944 + $0x10] sm:$0xf]
        %v2014 = vld [vmem:[%s1944 + $0x14] sm:$0x1]
        %v2015 = vld [vmem:[%s1944 + $0x18] sm:$0xf]
        %v2016 = vld [vmem:[%s1944 + $0x1c] sm:$0xf]
        %v2017 = vld [vmem:[%s1944 + $0x20] sm:$0x1]
        %v2018 = vld [vmem:[%s1944 + $0x24] sm:$0xf]
        %v2019 = vld [vmem:[%s1944 + $0x28] sm:$0xf]
        %v2020 = vld [vmem:[%s1944 + $0x2c] sm:$0x1]
        %v2021 = vld [vmem:[%s1944 + $0x30] sm:$0xf]
        %v2022 = vld [vmem:[%s1944 + $0x34] sm:$0xf]
        %v2023 = vld [vmem:[%s1944 + $0x38] sm:$0x1]
        %v2024 = vld [vmem:[%s1944 + $0x3c] sm:$0xf]
        %v2025 = vld [vmem:[%s1944 + $0x40] sm:$0xf]
        %v2026 = vld [vmem:[%s1944 + $0x44] sm:$0x1]
        %v2027 = vld [vmem:[%s1944 + $0x48] sm:$0xf]
        %v2028 = vld [vmem:[%s1944 + $0x4c] sm:$0xf]
        %v2029 = vld [vmem:[%s1944 + $0x50] sm:$0x1]
        %v2030 = vld [vmem:[%s1944 + $0x54] sm:$0xf]
        %v2031 = vld [vmem:[%s1944 + $0x58] sm:$0xf]
        %v2032 = vld [vmem:[%s1944 + $0x5c] sm:$0x1]
        %v2033 = vld [vmem:[%s1944 + $0x60] sm:$0xf]
        %v2034 = vld [vmem:[%s1944 + $0x64] sm:$0xf]
        %v2035 = vld [vmem:[%s1944 + $0x68] sm:$0x1]
        %v2036 = vld [vmem:[%s1944 + $0x6c] sm:$0xf]
        %v2037 = vld [vmem:[%s1944 + $0x70] sm:$0xf]
        %v2038 = vld [vmem:[%s1944 + $0x74] sm:$0x1]
        %v2039 = vld [vmem:[%s1944 + $0x78] sm:$0xf]
        %v2040 = vld [vmem:[%s1944 + $0x7c] sm:$0xf]
        %v2041 = vld [vmem:[%s1944 + $0x80] sm:$0x1]
        %v2042 = vld [vmem:[%s1944 + $0x84] sm:$0xf]
        %v2043 = vld [vmem:[%s1944 + $0x88] sm:$0xf]
        %v2044 = vld [vmem:[%s1944 + $0x8c] sm:$0x1]
        %v2045 = vld [vmem:[%s1944 + $0x90] sm:$0xf]
        %v2046 = vld [vmem:[%s1944 + $0x94] sm:$0xf]
        %v2047 = vld [vmem:[%s1944 + $0x98] sm:$0x1]
        %v2048 = vld [vmem:[%s1944 + $0x9c] sm:$0xf]
        %v2049 = vld [vmem:[%s1944 + $0xa0] sm:$0xf]
        %v2050 = vld [vmem:[%s1944 + $0xa4] sm:$0x1]
        %v2051 = vld [vmem:[%s1944 + $0xa8] sm:$0xf]
        %v2052 = vld [vmem:[%s1944 + $0xac] sm:$0xf]
        %v2053 = vld [vmem:[%s1944 + $0xb0] sm:$0x1]
        %v2054 = vld [vmem:[%s1944 + $0xb4] sm:$0xf]
        %v2055 = vld [vmem:[%s1944 + $0xb8] sm:$0xf]
        %v2056 = vld [vmem:[%s1944 + $0xbc] sm:$0x1]
        %v2058 = vshrl.u32 %v2009, 16
        %v2060 = vrot.slane %v2058, 4
        %v2061 = vshll.u32 %v2009, 16
        %v2063 = vrot.slane %v2061, 5
        %v2064 = vor.u32 %v2060, %v2063
        %v2065 = vrot.slane %v2064, 4
        %v2067 = vshll.u32 %v2010, 16
        %v2069 = vrot.slane %v2067, 5
        %v2070 = vsel %vm387, %v2065, %v2069
        %v2071 = vshrl.u32 %v2010, 16
        %v2073 = vrot.slane %v2071, 4
        %v2074 = vor.u32 %v2073, %v2069
        %v2075 = vrot.slane %v2074, 4
        %v2077 = vshll.u32 %v2011, 16
        %v2079 = vrot.slane %v2077, 5
        %v2080 = vsel %vm387, %v2075, %v2079
        %v2082 = vshrl.u32 %v2012, 16
        %v2084 = vrot.slane %v2082, 4
        %v2085 = vshll.u32 %v2012, 16
        %v2087 = vrot.slane %v2085, 5
        %v2088 = vor.u32 %v2084, %v2087
        %v2089 = vrot.slane %v2088, 4
        %v2091 = vshll.u32 %v2013, 16
        %v2093 = vrot.slane %v2091, 5
        %v2094 = vsel %vm387, %v2089, %v2093
        %v2095 = vshrl.u32 %v2013, 16
        %v2097 = vrot.slane %v2095, 4
        %v2098 = vor.u32 %v2097, %v2093
        %v2099 = vrot.slane %v2098, 4
        %v2101 = vshll.u32 %v2014, 16
        %v2103 = vrot.slane %v2101, 5
        %v2104 = vsel %vm387, %v2099, %v2103
        %v2106 = vshrl.u32 %v2015, 16
        %v2108 = vrot.slane %v2106, 4
        %v2109 = vshll.u32 %v2015, 16
        %v2111 = vrot.slane %v2109, 5
        %v2112 = vor.u32 %v2108, %v2111
        %v2113 = vrot.slane %v2112, 4
        %v2115 = vshll.u32 %v2016, 16
        %v2117 = vrot.slane %v2115, 5
        %v2118 = vsel %vm387, %v2113, %v2117
        %v2119 = vshrl.u32 %v2016, 16
        %v2121 = vrot.slane %v2119, 4
        %v2122 = vor.u32 %v2121, %v2117
        %v2123 = vrot.slane %v2122, 4
        %v2125 = vshll.u32 %v2017, 16
        %v2127 = vrot.slane %v2125, 5
        %v2128 = vsel %vm387, %v2123, %v2127
        %v2130 = vshrl.u32 %v2018, 16
        %v2132 = vrot.slane %v2130, 4
        %v2133 = vshll.u32 %v2018, 16
        %v2135 = vrot.slane %v2133, 5
        %v2136 = vor.u32 %v2132, %v2135
        %v2137 = vrot.slane %v2136, 4
        %v2139 = vshll.u32 %v2019, 16
        %v2141 = vrot.slane %v2139, 5
        %v2142 = vsel %vm387, %v2137, %v2141
        %v2143 = vshrl.u32 %v2019, 16
        %v2145 = vrot.slane %v2143, 4
        %v2146 = vor.u32 %v2145, %v2141
        %v2147 = vrot.slane %v2146, 4
        %v2149 = vshll.u32 %v2020, 16
        %v2151 = vrot.slane %v2149, 5
        %v2152 = vsel %vm387, %v2147, %v2151
        %v2154 = vshrl.u32 %v2021, 16
        %v2156 = vrot.slane %v2154, 4
        %v2157 = vshll.u32 %v2021, 16
        %v2159 = vrot.slane %v2157, 5
        %v2160 = vor.u32 %v2156, %v2159
        %v2161 = vrot.slane %v2160, 4
        %v2163 = vshll.u32 %v2022, 16
        %v2165 = vrot.slane %v2163, 5
        %v2166 = vsel %vm387, %v2161, %v2165
        %v2167 = vshrl.u32 %v2022, 16
        %v2169 = vrot.slane %v2167, 4
        %v2170 = vor.u32 %v2169, %v2165
        %v2171 = vrot.slane %v2170, 4
        %v2173 = vshll.u32 %v2023, 16
        %v2175 = vrot.slane %v2173, 5
        %v2176 = vsel %vm387, %v2171, %v2175
        %v2178 = vshrl.u32 %v2024, 16
        %v2180 = vrot.slane %v2178, 4
        %v2181 = vshll.u32 %v2024, 16
        %v2183 = vrot.slane %v2181, 5
        %v2184 = vor.u32 %v2180, %v2183
        %v2185 = vrot.slane %v2184, 4
        %v2187 = vshll.u32 %v2025, 16
        %v2189 = vrot.slane %v2187, 5
        %v2190 = vsel %vm387, %v2185, %v2189
        %v2191 = vshrl.u32 %v2025, 16
        %v2193 = vrot.slane %v2191, 4
        %v2194 = vor.u32 %v2193, %v2189
        %v2195 = vrot.slane %v2194, 4
        %v2197 = vshll.u32 %v2026, 16
        %v2199 = vrot.slane %v2197, 5
        %v2200 = vsel %vm387, %v2195, %v2199
        %v2202 = vshrl.u32 %v2027, 16
        %v2204 = vrot.slane %v2202, 4
        %v2205 = vshll.u32 %v2027, 16
        %v2207 = vrot.slane %v2205, 5
        %v2208 = vor.u32 %v2204, %v2207
        %v2209 = vrot.slane %v2208, 4
        %v2211 = vshll.u32 %v2028, 16
        %v2213 = vrot.slane %v2211, 5
        %v2214 = vsel %vm387, %v2209, %v2213
        %v2215 = vshrl.u32 %v2028, 16
        %v2217 = vrot.slane %v2215, 4
        %v2218 = vor.u32 %v2217, %v2213
        %v2219 = vrot.slane %v2218, 4
        %v2221 = vshll.u32 %v2029, 16
        %v2223 = vrot.slane %v2221, 5
        %v2224 = vsel %vm387, %v2219, %v2223
        %v2226 = vshrl.u32 %v2030, 16
        %v2228 = vrot.slane %v2226, 4
        %v2229 = vshll.u32 %v2030, 16
        %v2231 = vrot.slane %v2229, 5
        %v2232 = vor.u32 %v2228, %v2231
        %v2233 = vrot.slane %v2232, 4
        %v2235 = vshll.u32 %v2031, 16
        %v2237 = vrot.slane %v2235, 5
        %v2238 = vsel %vm387, %v2233, %v2237
        %v2239 = vshrl.u32 %v2031, 16
        %v2241 = vrot.slane %v2239, 4
        %v2242 = vor.u32 %v2241, %v2237
        %v2243 = vrot.slane %v2242, 4
        %v2245 = vshll.u32 %v2032, 16
        %v2247 = vrot.slane %v2245, 5
        %v2248 = vsel %vm387, %v2243, %v2247
        %v2250 = vshrl.u32 %v2033, 16
        %v2252 = vrot.slane %v2250, 4
        %v2253 = vshll.u32 %v2033, 16
        %v2255 = vrot.slane %v2253, 5
        %v2256 = vor.u32 %v2252, %v2255
        %v2257 = vrot.slane %v2256, 4
        %v2259 = vshll.u32 %v2034, 16
        %v2261 = vrot.slane %v2259, 5
        %v2262 = vsel %vm387, %v2257, %v2261
        %v2263 = vshrl.u32 %v2034, 16
        %v2265 = vrot.slane %v2263, 4
        %v2266 = vor.u32 %v2265, %v2261
        %v2267 = vrot.slane %v2266, 4
        %v2269 = vshll.u32 %v2035, 16
        %v2271 = vrot.slane %v2269, 5
        %v2272 = vsel %vm387, %v2267, %v2271
        %v2274 = vshrl.u32 %v2036, 16
        %v2276 = vrot.slane %v2274, 4
        %v2277 = vshll.u32 %v2036, 16
        %v2279 = vrot.slane %v2277, 5
        %v2280 = vor.u32 %v2276, %v2279
        %v2281 = vrot.slane %v2280, 4
        %v2283 = vshll.u32 %v2037, 16
        %v2285 = vrot.slane %v2283, 5
        %v2286 = vsel %vm387, %v2281, %v2285
        %v2287 = vshrl.u32 %v2037, 16
        %v2289 = vrot.slane %v2287, 4
        %v2290 = vor.u32 %v2289, %v2285
        %v2291 = vrot.slane %v2290, 4
        %v2293 = vshll.u32 %v2038, 16
        %v2295 = vrot.slane %v2293, 5
        %v2296 = vsel %vm387, %v2291, %v2295
        %v2298 = vshrl.u32 %v2039, 16
        %v2300 = vrot.slane %v2298, 4
        %v2301 = vshll.u32 %v2039, 16
        %v2303 = vrot.slane %v2301, 5
        %v2304 = vor.u32 %v2300, %v2303
        %v2305 = vrot.slane %v2304, 4
        %v2307 = vshll.u32 %v2040, 16
        %v2309 = vrot.slane %v2307, 5
        %v2310 = vsel %vm387, %v2305, %v2309
        %v2311 = vshrl.u32 %v2040, 16
        %v2313 = vrot.slane %v2311, 4
        %v2314 = vor.u32 %v2313, %v2309
        %v2315 = vrot.slane %v2314, 4
        %v2317 = vshll.u32 %v2041, 16
        %v2319 = vrot.slane %v2317, 5
        %v2320 = vsel %vm387, %v2315, %v2319
        %v2322 = vshrl.u32 %v2042, 16
        %v2324 = vrot.slane %v2322, 4
        %v2325 = vshll.u32 %v2042, 16
        %v2327 = vrot.slane %v2325, 5
        %v2328 = vor.u32 %v2324, %v2327
        %v2329 = vrot.slane %v2328, 4
        %v2331 = vshll.u32 %v2043, 16
        %v2333 = vrot.slane %v2331, 5
        %v2334 = vsel %vm387, %v2329, %v2333
        %v2335 = vshrl.u32 %v2043, 16
        %v2337 = vrot.slane %v2335, 4
        %v2338 = vor.u32 %v2337, %v2333
        %v2339 = vrot.slane %v2338, 4
        %v2341 = vshll.u32 %v2044, 16
        %v2343 = vrot.slane %v2341, 5
        %v2344 = vsel %vm387, %v2339, %v2343
        %v2346 = vshrl.u32 %v2045, 16
        %v2348 = vrot.slane %v2346, 4
        %v2349 = vshll.u32 %v2045, 16
        %v2351 = vrot.slane %v2349, 5
        %v2352 = vor.u32 %v2348, %v2351
        %v2353 = vrot.slane %v2352, 4
        %v2355 = vshll.u32 %v2046, 16
        %v2357 = vrot.slane %v2355, 5
        %v2358 = vsel %vm387, %v2353, %v2357
        %v2359 = vshrl.u32 %v2046, 16
        %v2361 = vrot.slane %v2359, 4
        %v2362 = vor.u32 %v2361, %v2357
        %v2363 = vrot.slane %v2362, 4
        %v2365 = vshll.u32 %v2047, 16
        %v2367 = vrot.slane %v2365, 5
        %v2368 = vsel %vm387, %v2363, %v2367
        %v2370 = vshrl.u32 %v2048, 16
        %v2372 = vrot.slane %v2370, 4
        %v2373 = vshll.u32 %v2048, 16
        %v2375 = vrot.slane %v2373, 5
        %v2376 = vor.u32 %v2372, %v2375
        %v2377 = vrot.slane %v2376, 4
        %v2379 = vshll.u32 %v2049, 16
        %v2381 = vrot.slane %v2379, 5
        %v2382 = vsel %vm387, %v2377, %v2381
        %v2383 = vshrl.u32 %v2049, 16
        %v2385 = vrot.slane %v2383, 4
        %v2386 = vor.u32 %v2385, %v2381
        %v2387 = vrot.slane %v2386, 4
        %v2389 = vshll.u32 %v2050, 16
        %v2391 = vrot.slane %v2389, 5
        %v2392 = vsel %vm387, %v2387, %v2391
        %v2394 = vshrl.u32 %v2051, 16
        %v2396 = vrot.slane %v2394, 4
        %v2397 = vshll.u32 %v2051, 16
        %v2399 = vrot.slane %v2397, 5
        %v2400 = vor.u32 %v2396, %v2399
        %v2401 = vrot.slane %v2400, 4
        %v2403 = vshll.u32 %v2052, 16
        %v2405 = vrot.slane %v2403, 5
        %v2406 = vsel %vm387, %v2401, %v2405
        %v2407 = vshrl.u32 %v2052, 16
        %v2409 = vrot.slane %v2407, 4
        %v2410 = vor.u32 %v2409, %v2405
        %v2411 = vrot.slane %v2410, 4
        %v2413 = vshll.u32 %v2053, 16
        %v2415 = vrot.slane %v2413, 5
        %v2416 = vsel %vm387, %v2411, %v2415
        %v2418 = vshrl.u32 %v2054, 16
        %v2420 = vrot.slane %v2418, 4
        %v2421 = vshll.u32 %v2054, 16
        %v2423 = vrot.slane %v2421, 5
        %v2424 = vor.u32 %v2420, %v2423
        %v2425 = vrot.slane %v2424, 4
        %v2427 = vshll.u32 %v2055, 16
        %v2429 = vrot.slane %v2427, 5
        %v2430 = vsel %vm387, %v2425, %v2429
        %v2431 = vshrl.u32 %v2055, 16
        %v2433 = vrot.slane %v2431, 4
        %v2434 = vor.u32 %v2433, %v2429
        %v2435 = vrot.slane %v2434, 4
        %v2437 = vshll.u32 %v2056, 16
        %v2439 = vrot.slane %v2437, 5
        %v2440 = vsel %vm387, %v2435, %v2439
        %2473 = vst [vmem:[#allocation2 + $0x1c] sm:$0xf] %v2070
        %2474 = vst [vmem:[#allocation2 + $0x40] sm:$0xf] %v2080
        %2475 = vst [vmem:[#allocation2 + $0x64] sm:$0xf] %v2094
        %2476 = vst [vmem:[#allocation2 + $0x88] sm:$0xf] %v2104
        %2477 = vst [vmem:[#allocation2 + $0xac] sm:$0xf] %v2118
        %2478 = vst [vmem:[#allocation2 + $0xd0] sm:$0xf] %v2128
        %2479 = vst [vmem:[#allocation2 + $0xf4] sm:$0xf] %v2142
        %2480 = vst [vmem:[#allocation2 + $0x118] sm:$0xf] %v2152
        %2481 = vst [vmem:[#allocation2 + $0x13c] sm:$0xf] %v2166
        %2482 = vst [vmem:[#allocation2 + $0x160] sm:$0xf] %v2176
        %2483 = vst [vmem:[#allocation2 + $0x184] sm:$0xf] %v2190
        %2484 = vst [vmem:[#allocation2 + $0x1a8] sm:$0xf] %v2200
        %2485 = vst [vmem:[#allocation2 + $0x1cc] sm:$0xf] %v2214
        %2486 = vst [vmem:[#allocation2 + $0x1f0] sm:$0xf] %v2224
        %2487 = vst [vmem:[#allocation2 + $0x214] sm:$0xf] %v2238
        %2488 = vst [vmem:[#allocation2 + $0x238] sm:$0xf] %v2248
        %2489 = vst [vmem:[#allocation2 + $0x25c] sm:$0xf] %v2262
        %2490 = vst [vmem:[#allocation2 + $0x280] sm:$0xf] %v2272
        %2491 = vst [vmem:[#allocation2 + $0x2a4] sm:$0xf] %v2286
        %2492 = vst [vmem:[#allocation2 + $0x2c8] sm:$0xf] %v2296
        %2493 = vst [vmem:[#allocation2 + $0x2ec] sm:$0xf] %v2310
        %2494 = vst [vmem:[#allocation2 + $0x310] sm:$0xf] %v2320
        %2495 = vst [vmem:[#allocation2 + $0x334] sm:$0xf] %v2334
        %2496 = vst [vmem:[#allocation2 + $0x358] sm:$0xf] %v2344
        %2497 = vst [vmem:[#allocation2 + $0x37c] sm:$0xf] %v2358
        %2498 = vst [vmem:[#allocation2 + $0x3a0] sm:$0xf] %v2368
        %2499 = vst [vmem:[#allocation2 + $0x3c4] sm:$0xf] %v2382
        %2500 = vst [vmem:[#allocation2 + $0x3e8] sm:$0xf] %v2392
        %2501 = vst [vmem:[#allocation2 + $0x40c] sm:$0xf] %v2406
        %2502 = vst [vmem:[#allocation2 + $0x430] sm:$0xf] %v2416
        %2503 = vst [vmem:[#allocation2 + $0x454] sm:$0xf] %v2430
        %2504 = vst [vmem:[#allocation2 + $0x478] sm:$0xf] %v2440
        %v2505 = vld [vmem:[%s1944] sm:$0xe]
        %v2506 = vld [vmem:[%s1944 + $0x4] sm:$0xf]
        %v2507 = vld [vmem:[%s1944 + $0x8] sm:$0x1]
        %v2508 = vld [vmem:[%s1944 + $0xc] sm:$0xe]
        %v2509 = vld [vmem:[%s1944 + $0x10] sm:$0xf]
        %v2510 = vld [vmem:[%s1944 + $0x14] sm:$0x1]
        %v2511 = vld [vmem:[%s1944 + $0x18] sm:$0xe]
        %v2512 = vld [vmem:[%s1944 + $0x1c] sm:$0xf]
        %v2513 = vld [vmem:[%s1944 + $0x20] sm:$0x1]
        %v2514 = vld [vmem:[%s1944 + $0x24] sm:$0xe]
        %v2515 = vld [vmem:[%s1944 + $0x28] sm:$0xf]
        %v2516 = vld [vmem:[%s1944 + $0x2c] sm:$0x1]
        %v2517 = vld [vmem:[%s1944 + $0x30] sm:$0xe]
        %v2518 = vld [vmem:[%s1944 + $0x34] sm:$0xf]
        %v2519 = vld [vmem:[%s1944 + $0x38] sm:$0x1]
        %v2520 = vld [vmem:[%s1944 + $0x3c] sm:$0xe]
        %v2521 = vld [vmem:[%s1944 + $0x40] sm:$0xf]
        %v2522 = vld [vmem:[%s1944 + $0x44] sm:$0x1]
        %v2523 = vld [vmem:[%s1944 + $0x48] sm:$0xe]
        %v2524 = vld [vmem:[%s1944 + $0x4c] sm:$0xf]
        %v2525 = vld [vmem:[%s1944 + $0x50] sm:$0x1]
        %v2526 = vld [vmem:[%s1944 + $0x54] sm:$0xe]
        %v2527 = vld [vmem:[%s1944 + $0x58] sm:$0xf]
        %v2528 = vld [vmem:[%s1944 + $0x5c] sm:$0x1]
        %v2529 = vld [vmem:[%s1944 + $0x60] sm:$0xe]
        %v2530 = vld [vmem:[%s1944 + $0x64] sm:$0xf]
        %v2531 = vld [vmem:[%s1944 + $0x68] sm:$0x1]
        %v2532 = vld [vmem:[%s1944 + $0x6c] sm:$0xe]
        %v2533 = vld [vmem:[%s1944 + $0x70] sm:$0xf]
        %v2534 = vld [vmem:[%s1944 + $0x74] sm:$0x1]
        %v2535 = vld [vmem:[%s1944 + $0x78] sm:$0xe]
        %v2536 = vld [vmem:[%s1944 + $0x7c] sm:$0xf]
        %v2537 = vld [vmem:[%s1944 + $0x80] sm:$0x1]
        %v2538 = vld [vmem:[%s1944 + $0x84] sm:$0xe]
        %v2539 = vld [vmem:[%s1944 + $0x88] sm:$0xf]
        %v2540 = vld [vmem:[%s1944 + $0x8c] sm:$0x1]
        %v2541 = vld [vmem:[%s1944 + $0x90] sm:$0xe]
        %v2542 = vld [vmem:[%s1944 + $0x94] sm:$0xf]
        %v2543 = vld [vmem:[%s1944 + $0x98] sm:$0x1]
        %v2544 = vld [vmem:[%s1944 + $0x9c] sm:$0xe]
        %v2545 = vld [vmem:[%s1944 + $0xa0] sm:$0xf]
        %v2546 = vld [vmem:[%s1944 + $0xa4] sm:$0x1]
        %v2547 = vld [vmem:[%s1944 + $0xa8] sm:$0xe]
        %v2548 = vld [vmem:[%s1944 + $0xac] sm:$0xf]
        %v2549 = vld [vmem:[%s1944 + $0xb0] sm:$0x1]
        %v2550 = vld [vmem:[%s1944 + $0xb4] sm:$0xe]
        %v2551 = vld [vmem:[%s1944 + $0xb8] sm:$0xf]
        %v2552 = vld [vmem:[%s1944 + $0xbc] sm:$0x1]
        %v2601 = vrot.slane %v2505, 5
        %v2602 = vrot.slane %v2601, 4
        %v2603 = vrot.slane %v2506, 5
        %v2604 = vsel %vm934, %v2602, %v2603
        %v2605 = vrot.slane %v2603, 4
        %v2606 = vrot.slane %v2507, 5
        %v2607 = vsel %vm934, %v2605, %v2606
        %v2608 = vrot.slane %v2508, 5
        %v2609 = vrot.slane %v2608, 4
        %v2610 = vrot.slane %v2509, 5
        %v2611 = vsel %vm934, %v2609, %v2610
        %v2612 = vrot.slane %v2610, 4
        %v2613 = vrot.slane %v2510, 5
        %v2614 = vsel %vm934, %v2612, %v2613
        %v2615 = vrot.slane %v2511, 5
        %v2616 = vrot.slane %v2615, 4
        %v2617 = vrot.slane %v2512, 5
        %v2618 = vsel %vm934, %v2616, %v2617
        %v2619 = vrot.slane %v2617, 4
        %v2620 = vrot.slane %v2513, 5
        %v2621 = vsel %vm934, %v2619, %v2620
        %v2622 = vrot.slane %v2514, 5
        %v2623 = vrot.slane %v2622, 4
        %v2624 = vrot.slane %v2515, 5
        %v2625 = vsel %vm934, %v2623, %v2624
        %v2626 = vrot.slane %v2624, 4
        %v2627 = vrot.slane %v2516, 5
        %v2628 = vsel %vm934, %v2626, %v2627
        %v2629 = vrot.slane %v2517, 5
        %v2630 = vrot.slane %v2629, 4
        %v2631 = vrot.slane %v2518, 5
        %v2632 = vsel %vm934, %v2630, %v2631
        %v2633 = vrot.slane %v2631, 4
        %v2634 = vrot.slane %v2519, 5
        %v2635 = vsel %vm934, %v2633, %v2634
        %v2636 = vrot.slane %v2520, 5
        %v2637 = vrot.slane %v2636, 4
        %v2638 = vrot.slane %v2521, 5
        %v2639 = vsel %vm934, %v2637, %v2638
        %v2640 = vrot.slane %v2638, 4
        %v2641 = vrot.slane %v2522, 5
        %v2642 = vsel %vm934, %v2640, %v2641
        %v2643 = vrot.slane %v2523, 5
        %v2644 = vrot.slane %v2643, 4
        %v2645 = vrot.slane %v2524, 5
        %v2646 = vsel %vm934, %v2644, %v2645
        %v2647 = vrot.slane %v2645, 4
        %v2648 = vrot.slane %v2525, 5
        %v2649 = vsel %vm934, %v2647, %v2648
        %v2650 = vrot.slane %v2526, 5
        %v2651 = vrot.slane %v2650, 4
        %v2652 = vrot.slane %v2527, 5
        %v2653 = vsel %vm934, %v2651, %v2652
        %v2654 = vrot.slane %v2652, 4
        %v2655 = vrot.slane %v2528, 5
        %v2656 = vsel %vm934, %v2654, %v2655
        %v2657 = vrot.slane %v2529, 5
        %v2658 = vrot.slane %v2657, 4
        %v2659 = vrot.slane %v2530, 5
        %v2660 = vsel %vm934, %v2658, %v2659
        %v2661 = vrot.slane %v2659, 4
        %v2662 = vrot.slane %v2531, 5
        %v2663 = vsel %vm934, %v2661, %v2662
        %v2664 = vrot.slane %v2532, 5
        %v2665 = vrot.slane %v2664, 4
        %v2666 = vrot.slane %v2533, 5
        %v2667 = vsel %vm934, %v2665, %v2666
        %v2668 = vrot.slane %v2666, 4
        %v2669 = vrot.slane %v2534, 5
        %v2670 = vsel %vm934, %v2668, %v2669
        %v2671 = vrot.slane %v2535, 5
        %v2672 = vrot.slane %v2671, 4
        %v2673 = vrot.slane %v2536, 5
        %v2674 = vsel %vm934, %v2672, %v2673
        %v2675 = vrot.slane %v2673, 4
        %v2676 = vrot.slane %v2537, 5
        %v2677 = vsel %vm934, %v2675, %v2676
        %v2678 = vrot.slane %v2538, 5
        %v2679 = vrot.slane %v2678, 4
        %v2680 = vrot.slane %v2539, 5
        %v2681 = vsel %vm934, %v2679, %v2680
        %v2682 = vrot.slane %v2680, 4
        %v2683 = vrot.slane %v2540, 5
        %v2684 = vsel %vm934, %v2682, %v2683
        %v2685 = vrot.slane %v2541, 5
        %v2686 = vrot.slane %v2685, 4
        %v2687 = vrot.slane %v2542, 5
        %v2688 = vsel %vm934, %v2686, %v2687
        %v2689 = vrot.slane %v2687, 4
        %v2690 = vrot.slane %v2543, 5
        %v2691 = vsel %vm934, %v2689, %v2690
        %v2692 = vrot.slane %v2544, 5
        %v2693 = vrot.slane %v2692, 4
        %v2694 = vrot.slane %v2545, 5
        %v2695 = vsel %vm934, %v2693, %v2694
        %v2696 = vrot.slane %v2694, 4
        %v2697 = vrot.slane %v2546, 5
        %v2698 = vsel %vm934, %v2696, %v2697
        %v2699 = vrot.slane %v2547, 5
        %v2700 = vrot.slane %v2699, 4
        %v2701 = vrot.slane %v2548, 5
        %v2702 = vsel %vm934, %v2700, %v2701
        %v2703 = vrot.slane %v2701, 4
        %v2704 = vrot.slane %v2549, 5
        %v2705 = vsel %vm934, %v2703, %v2704
        %v2706 = vrot.slane %v2550, 5
        %v2707 = vrot.slane %v2706, 4
        %v2708 = vrot.slane %v2551, 5
        %v2709 = vsel %vm934, %v2707, %v2708
        %v2710 = vrot.slane %v2708, 4
        %v2711 = vrot.slane %v2552, 5
        %v2712 = vsel %vm934, %v2710, %v2711
        %2745 = vst [vmem:[#allocation2 + $0x20] sm:$0xf] %v2604
        %2746 = vst [vmem:[#allocation2 + $0x44] sm:$0xf] %v2607
        %2747 = vst [vmem:[#allocation2 + $0x68] sm:$0xf] %v2611
        %2748 = vst [vmem:[#allocation2 + $0x8c] sm:$0xf] %v2614
        %2749 = vst [vmem:[#allocation2 + $0xb0] sm:$0xf] %v2618
        %2750 = vst [vmem:[#allocation2 + $0xd4] sm:$0xf] %v2621
        %2751 = vst [vmem:[#allocation2 + $0xf8] sm:$0xf] %v2625
        %2752 = vst [vmem:[#allocation2 + $0x11c] sm:$0xf] %v2628
        %2753 = vst [vmem:[#allocation2 + $0x140] sm:$0xf] %v2632
        %2754 = vst [vmem:[#allocation2 + $0x164] sm:$0xf] %v2635
        %2755 = vst [vmem:[#allocation2 + $0x188] sm:$0xf] %v2639
        %2756 = vst [vmem:[#allocation2 + $0x1ac] sm:$0xf] %v2642
        %2757 = vst [vmem:[#allocation2 + $0x1d0] sm:$0xf] %v2646
        %2758 = vst [vmem:[#allocation2 + $0x1f4] sm:$0xf] %v2649
        %2759 = vst [vmem:[#allocation2 + $0x218] sm:$0xf] %v2653
        %2760 = vst [vmem:[#allocation2 + $0x23c] sm:$0xf] %v2656
        %2761 = vst [vmem:[#allocation2 + $0x260] sm:$0xf] %v2660
        %2762 = vst [vmem:[#allocation2 + $0x284] sm:$0xf] %v2663
        %2763 = vst [vmem:[#allocation2 + $0x2a8] sm:$0xf] %v2667
        %2764 = vst [vmem:[#allocation2 + $0x2cc] sm:$0xf] %v2670
        %2765 = vst [vmem:[#allocation2 + $0x2f0] sm:$0xf] %v2674
        %2766 = vst [vmem:[#allocation2 + $0x314] sm:$0xf] %v2677
        %2767 = vst [vmem:[#allocation2 + $0x338] sm:$0xf] %v2681
        %2768 = vst [vmem:[#allocation2 + $0x35c] sm:$0xf] %v2684
        %2769 = vst [vmem:[#allocation2 + $0x380] sm:$0xf] %v2688
        %2770 = vst [vmem:[#allocation2 + $0x3a4] sm:$0xf] %v2691
        %2771 = vst [vmem:[#allocation2 + $0x3c8] sm:$0xf] %v2695
        %2772 = vst [vmem:[#allocation2 + $0x3ec] sm:$0xf] %v2698
        %2773 = vst [vmem:[#allocation2 + $0x410] sm:$0xf] %v2702
        %2774 = vst [vmem:[#allocation2 + $0x434] sm:$0xf] %v2705
        %2775 = vst [vmem:[#allocation2 + $0x458] sm:$0xf] %v2709
        %2776 = vst [vmem:[#allocation2 + $0x47c] sm:$0xf] %v2712
      $region32: #{bottleneck_forward.3} parent=27 // pred_fallthru
        _
      %v2777 = vld [vmem:[#allocation2] sm:$0xff]
      %v2778 = vld [vmem:[#allocation2 + $0x8] sm:$0xff]
      %v2779 = vld [vmem:[#allocation2 + $0x10] sm:$0xff]
      %v2780 = vld [vmem:[#allocation2 + $0x18] sm:$0xff]
      %v2781 = vld [vmem:[#allocation2 + $0x20] sm:$0xf]
      %v2782 = vld [vmem:[#allocation2 + $0x24] sm:$0xff]
      %v2783 = vld [vmem:[#allocation2 + $0x2c] sm:$0xff]
      %v2784 = vld [vmem:[#allocation2 + $0x34] sm:$0xff]
      %v2785 = vld [vmem:[#allocation2 + $0x3c] sm:$0xff]
      %v2786 = vld [vmem:[#allocation2 + $0x44] sm:$0xf]
      %v2787 = vld [vmem:[#allocation2 + $0x48] sm:$0xff]
      %v2788 = vld [vmem:[#allocation2 + $0x50] sm:$0xff]
      %v2789 = vld [vmem:[#allocation2 + $0x58] sm:$0xff]
      %v2790 = vld [vmem:[#allocation2 + $0x60] sm:$0xff]
      %v2791 = vld [vmem:[#allocation2 + $0x68] sm:$0xf]
      %v2792 = vld [vmem:[#allocation2 + $0x6c] sm:$0xff]
      %v2793 = vld [vmem:[#allocation2 + $0x74] sm:$0xff]
      %v2794 = vld [vmem:[#allocation2 + $0x7c] sm:$0xff]
      %v2795 = vld [vmem:[#allocation2 + $0x84] sm:$0xff]
      %v2796 = vld [vmem:[#allocation2 + $0x8c] sm:$0xf]
      %v2797 = vld [vmem:[#allocation2 + $0x90] sm:$0xff]
      %v2798 = vld [vmem:[#allocation2 + $0x98] sm:$0xff]
      %v2799 = vld [vmem:[#allocation2 + $0xa0] sm:$0xff]
      %v2800 = vld [vmem:[#allocation2 + $0xa8] sm:$0xff]
      %v2801 = vld [vmem:[#allocation2 + $0xb0] sm:$0xf]
      %v2802 = vld [vmem:[#allocation2 + $0xb4] sm:$0xff]
      %v2803 = vld [vmem:[#allocation2 + $0xbc] sm:$0xff]
      %v2804 = vld [vmem:[#allocation2 + $0xc4] sm:$0xff]
      %v2805 = vld [vmem:[#allocation2 + $0xcc] sm:$0xff]
      %v2806 = vld [vmem:[#allocation2 + $0xd4] sm:$0xf]
      %v2807 = vld [vmem:[#allocation2 + $0xd8] sm:$0xff]
      %v2808 = vld [vmem:[#allocation2 + $0xe0] sm:$0xff]
      %v2809 = vld [vmem:[#allocation2 + $0xe8] sm:$0xff]
      %v2810 = vld [vmem:[#allocation2 + $0xf0] sm:$0xff]
      %v2811 = vld [vmem:[#allocation2 + $0xf8] sm:$0xf]
      %v2812 = vld [vmem:[#allocation2 + $0xfc] sm:$0xff]
      %v2813 = vld [vmem:[#allocation2 + $0x104] sm:$0xff]
      %v2814 = vld [vmem:[#allocation2 + $0x10c] sm:$0xff]
      %v2815 = vld [vmem:[#allocation2 + $0x114] sm:$0xff]
      %v2816 = vld [vmem:[#allocation2 + $0x11c] sm:$0xf]
      %v2817 = vld [vmem:[#allocation2 + $0x120] sm:$0xff]
      %v2818 = vld [vmem:[#allocation2 + $0x128] sm:$0xff]
      %v2819 = vld [vmem:[#allocation2 + $0x130] sm:$0xff]
      %v2820 = vld [vmem:[#allocation2 + $0x138] sm:$0xff]
      %v2821 = vld [vmem:[#allocation2 + $0x140] sm:$0xf]
      %v2822 = vld [vmem:[#allocation2 + $0x144] sm:$0xff]
      %v2823 = vld [vmem:[#allocation2 + $0x14c] sm:$0xff]
      %v2824 = vld [vmem:[#allocation2 + $0x154] sm:$0xff]
      %v2825 = vld [vmem:[#allocation2 + $0x15c] sm:$0xff]
      %v2826 = vld [vmem:[#allocation2 + $0x164] sm:$0xf]
      %v2827 = vld [vmem:[#allocation2 + $0x168] sm:$0xff]
      %v2828 = vld [vmem:[#allocation2 + $0x170] sm:$0xff]
      %v2829 = vld [vmem:[#allocation2 + $0x178] sm:$0xff]
      %v2830 = vld [vmem:[#allocation2 + $0x180] sm:$0xff]
      %v2831 = vld [vmem:[#allocation2 + $0x188] sm:$0xf]
      %v2832 = vld [vmem:[#allocation2 + $0x18c] sm:$0xff]
      %v2833 = vld [vmem:[#allocation2 + $0x194] sm:$0xff]
      %v2834 = vld [vmem:[#allocation2 + $0x19c] sm:$0xff]
      %v2835 = vld [vmem:[#allocation2 + $0x1a4] sm:$0xff]
      %v2836 = vld [vmem:[#allocation2 + $0x1ac] sm:$0xf]
      %v2837 = vld [vmem:[#allocation2 + $0x1b0] sm:$0xff]
      %v2838 = vld [vmem:[#allocation2 + $0x1b8] sm:$0xff]
      %v2839 = vld [vmem:[#allocation2 + $0x1c0] sm:$0xff]
      %v2840 = vld [vmem:[#allocation2 + $0x1c8] sm:$0xff]
      %v2841 = vld [vmem:[#allocation2 + $0x1d0] sm:$0xf]
      %v2842 = vld [vmem:[#allocation2 + $0x1d4] sm:$0xff]
      %v2843 = vld [vmem:[#allocation2 + $0x1dc] sm:$0xff]
      %v2844 = vld [vmem:[#allocation2 + $0x1e4] sm:$0xff]
      %v2845 = vld [vmem:[#allocation2 + $0x1ec] sm:$0xff]
      %v2846 = vld [vmem:[#allocation2 + $0x1f4] sm:$0xf]
      %v2847 = vld [vmem:[#allocation2 + $0x1f8] sm:$0xff]
      %v2848 = vld [vmem:[#allocation2 + $0x200] sm:$0xff]
      %v2849 = vld [vmem:[#allocation2 + $0x208] sm:$0xff]
      %v2850 = vld [vmem:[#allocation2 + $0x210] sm:$0xff]
      %v2851 = vld [vmem:[#allocation2 + $0x218] sm:$0xf]
      %v2852 = vld [vmem:[#allocation2 + $0x21c] sm:$0xff]
      %v2853 = vld [vmem:[#allocation2 + $0x224] sm:$0xff]
      %v2854 = vld [vmem:[#allocation2 + $0x22c] sm:$0xff]
      %v2855 = vld [vmem:[#allocation2 + $0x234] sm:$0xff]
      %v2856 = vld [vmem:[#allocation2 + $0x23c] sm:$0xf]
      %v2857 = vld [vmem:[#allocation2 + $0x240] sm:$0xff]
      %v2858 = vld [vmem:[#allocation2 + $0x248] sm:$0xff]
      %v2859 = vld [vmem:[#allocation2 + $0x250] sm:$0xff]
      %v2860 = vld [vmem:[#allocation2 + $0x258] sm:$0xff]
      %v2861 = vld [vmem:[#allocation2 + $0x260] sm:$0xf]
      %v2862 = vld [vmem:[#allocation2 + $0x264] sm:$0xff]
      %v2863 = vld [vmem:[#allocation2 + $0x26c] sm:$0xff]
      %v2864 = vld [vmem:[#allocation2 + $0x274] sm:$0xff]
      %v2865 = vld [vmem:[#allocation2 + $0x27c] sm:$0xff]
      %v2866 = vld [vmem:[#allocation2 + $0x284] sm:$0xf]
      %v2867 = vld [vmem:[#allocation2 + $0x288] sm:$0xff]
      %v2868 = vld [vmem:[#allocation2 + $0x290] sm:$0xff]
      %v2869 = vld [vmem:[#allocation2 + $0x298] sm:$0xff]
      %v2870 = vld [vmem:[#allocation2 + $0x2a0] sm:$0xff]
      %v2871 = vld [vmem:[#allocation2 + $0x2a8] sm:$0xf]
      %v2872 = vld [vmem:[#allocation2 + $0x2ac] sm:$0xff]
      %v2873 = vld [vmem:[#allocation2 + $0x2b4] sm:$0xff]
      %v2874 = vld [vmem:[#allocation2 + $0x2bc] sm:$0xff]
      %v2875 = vld [vmem:[#allocation2 + $0x2c4] sm:$0xff]
      %v2876 = vld [vmem:[#allocation2 + $0x2cc] sm:$0xf]
      %v2877 = vld [vmem:[#allocation2 + $0x2d0] sm:$0xff]
      %v2878 = vld [vmem:[#allocation2 + $0x2d8] sm:$0xff]
      %v2879 = vld [vmem:[#allocation2 + $0x2e0] sm:$0xff]
      %v2880 = vld [vmem:[#allocation2 + $0x2e8] sm:$0xff]
      %v2881 = vld [vmem:[#allocation2 + $0x2f0] sm:$0xf]
      %v2882 = vld [vmem:[#allocation2 + $0x2f4] sm:$0xff]
      %v2883 = vld [vmem:[#allocation2 + $0x2fc] sm:$0xff]
      %v2884 = vld [vmem:[#allocation2 + $0x304] sm:$0xff]
      %v2885 = vld [vmem:[#allocation2 + $0x30c] sm:$0xff]
      %v2886 = vld [vmem:[#allocation2 + $0x314] sm:$0xf]
      %v2887 = vld [vmem:[#allocation2 + $0x318] sm:$0xff]
      %v2888 = vld [vmem:[#allocation2 + $0x320] sm:$0xff]
      %v2889 = vld [vmem:[#allocation2 + $0x328] sm:$0xff]
      %v2890 = vld [vmem:[#allocation2 + $0x330] sm:$0xff]
      %v2891 = vld [vmem:[#allocation2 + $0x338] sm:$0xf]
      %v2892 = vld [vmem:[#allocation2 + $0x33c] sm:$0xff]
      %v2893 = vld [vmem:[#allocation2 + $0x344] sm:$0xff]
      %v2894 = vld [vmem:[#allocation2 + $0x34c] sm:$0xff]
      %v2895 = vld [vmem:[#allocation2 + $0x354] sm:$0xff]
      %v2896 = vld [vmem:[#allocation2 + $0x35c] sm:$0xf]
      %v2897 = vld [vmem:[#allocation2 + $0x360] sm:$0xff]
      %v2898 = vld [vmem:[#allocation2 + $0x368] sm:$0xff]
      %v2899 = vld [vmem:[#allocation2 + $0x370] sm:$0xff]
      %v2900 = vld [vmem:[#allocation2 + $0x378] sm:$0xff]
      %v2901 = vld [vmem:[#allocation2 + $0x380] sm:$0xf]
      %v2902 = vld [vmem:[#allocation2 + $0x384] sm:$0xff]
      %v2903 = vld [vmem:[#allocation2 + $0x38c] sm:$0xff]
      %v2904 = vld [vmem:[#allocation2 + $0x394] sm:$0xff]
      %v2905 = vld [vmem:[#allocation2 + $0x39c] sm:$0xff]
      %v2906 = vld [vmem:[#allocation2 + $0x3a4] sm:$0xf]
      %v2907 = vld [vmem:[#allocation2 + $0x3a8] sm:$0xff]
      %v2908 = vld [vmem:[#allocation2 + $0x3b0] sm:$0xff]
      %v2909 = vld [vmem:[#allocation2 + $0x3b8] sm:$0xff]
      %v2910 = vld [vmem:[#allocation2 + $0x3c0] sm:$0xff]
      %v2911 = vld [vmem:[#allocation2 + $0x3c8] sm:$0xf]
      %v2912 = vld [vmem:[#allocation2 + $0x3cc] sm:$0xff]
      %v2913 = vld [vmem:[#allocation2 + $0x3d4] sm:$0xff]
      %v2914 = vld [vmem:[#allocation2 + $0x3dc] sm:$0xff]
      %v2915 = vld [vmem:[#allocation2 + $0x3e4] sm:$0xff]
      %v2916 = vld [vmem:[#allocation2 + $0x3ec] sm:$0xf]
      %v2917 = vld [vmem:[#allocation2 + $0x3f0] sm:$0xff]
      %v2918 = vld [vmem:[#allocation2 + $0x3f8] sm:$0xff]
      %v2919 = vld [vmem:[#allocation2 + $0x400] sm:$0xff]
      %v2920 = vld [vmem:[#allocation2 + $0x408] sm:$0xff]
      %v2921 = vld [vmem:[#allocation2 + $0x410] sm:$0xf]
      %v2922 = vld [vmem:[#allocation2 + $0x414] sm:$0xff]
      %v2923 = vld [vmem:[#allocation2 + $0x41c] sm:$0xff]
      %v2924 = vld [vmem:[#allocation2 + $0x424] sm:$0xff]
      %v2925 = vld [vmem:[#allocation2 + $0x42c] sm:$0xff]
      %v2926 = vld [vmem:[#allocation2 + $0x434] sm:$0xf]
      %v2927 = vld [vmem:[#allocation2 + $0x438] sm:$0xff]
      %v2928 = vld [vmem:[#allocation2 + $0x440] sm:$0xff]
      %v2929 = vld [vmem:[#allocation2 + $0x448] sm:$0xff]
      %v2930 = vld [vmem:[#allocation2 + $0x450] sm:$0xff]
      %v2931 = vld [vmem:[#allocation2 + $0x458] sm:$0xf]
      %v2932 = vld [vmem:[#allocation2 + $0x45c] sm:$0xff]
      %v2933 = vld [vmem:[#allocation2 + $0x464] sm:$0xff]
      %v2934 = vld [vmem:[#allocation2 + $0x46c] sm:$0xff]
      %v2935 = vld [vmem:[#allocation2 + $0x474] sm:$0xff]
      %v2936 = vld [vmem:[#allocation2 + $0x47c] sm:$0xf]
      %v2937 = vld [vmem:[%s247] sm:$0xf]
      %v2938 = vld [vmem:[%s247 + $0x4] sm:$0xf]
      %v2939 = vld [vmem:[%s247 + $0x8] sm:$0xf]
      %v2940 = vld [vmem:[%s247 + $0xc] sm:$0xf]
      %v2941 = vld [vmem:[%s247 + $0x10] sm:$0xf]
      %v2942 = vld [vmem:[%s247 + $0x14] sm:$0xf]
      %v2943 = vld [vmem:[%s247 + $0x18] sm:$0xf]
      %v2944 = vld [vmem:[%s247 + $0x1c] sm:$0xf]
      %v2945 = vld [vmem:[%s247 + $0x20] sm:$0xf]
      %v2946 = vld [vmem:[%s247 + $0x24] sm:$0xf]
      %v2947 = vld [vmem:[%s247 + $0x28] sm:$0xf]
      %v2948 = vld [vmem:[%s247 + $0x2c] sm:$0xf]
      %v2949 = vld [vmem:[%s247 + $0x30] sm:$0xf]
      %v2950 = vld [vmem:[%s247 + $0x34] sm:$0xf]
      %v2951 = vld [vmem:[%s247 + $0x38] sm:$0xf]
      %v2952 = vld [vmem:[%s247 + $0x3c] sm:$0xf]
      %v2953 = vld [vmem:[%s247 + $0x40] sm:$0xf]
      %v2954 = vld [vmem:[%s247 + $0x44] sm:$0xf]
      %v2955 = vld [vmem:[%s247 + $0x48] sm:$0xf]
      %v2956 = vld [vmem:[%s247 + $0x4c] sm:$0xf]
      %v2957 = vld [vmem:[%s247 + $0x50] sm:$0xf]
      %v2958 = vld [vmem:[%s247 + $0x54] sm:$0xf]
      %v2959 = vld [vmem:[%s247 + $0x58] sm:$0xf]
      %v2960 = vld [vmem:[%s247 + $0x5c] sm:$0xf]
      %v2961 = vld [vmem:[%s247 + $0x60] sm:$0xf]
      %v2962 = vld [vmem:[%s247 + $0x64] sm:$0xf]
      %v2963 = vld [vmem:[%s247 + $0x68] sm:$0xf]
      %v2964 = vld [vmem:[%s247 + $0x6c] sm:$0xf]
      %v2965 = vld [vmem:[%s247 + $0x70] sm:$0xf]
      %v2966 = vld [vmem:[%s247 + $0x74] sm:$0xf]
      %v2967 = vld [vmem:[%s247 + $0x78] sm:$0xf]
      %v2968 = vld [vmem:[%s247 + $0x7c] sm:$0xf]
      %v2969 = vld [vmem:[%s247 + $0x80] sm:$0xf]
      %v2970 = vld [vmem:[%s247 + $0x84] sm:$0xf]
      %v2971 = vld [vmem:[%s247 + $0x88] sm:$0xf]
      %v2972 = vld [vmem:[%s247 + $0x8c] sm:$0xf]
      %v2973 = vld [vmem:[%s247 + $0x90] sm:$0xf]
      %v2974 = vld [vmem:[%s247 + $0x94] sm:$0xf]
      %v2975 = vld [vmem:[%s247 + $0x98] sm:$0xf]
      %v2976 = vld [vmem:[%s247 + $0x9c] sm:$0xf]
      %v2977 = vld [vmem:[%s247 + $0xa0] sm:$0xf]
      %v2978 = vld [vmem:[%s247 + $0xa4] sm:$0xf]
      %v2979 = vld [vmem:[%s247 + $0xa8] sm:$0xf]
      %v2980 = vld [vmem:[%s247 + $0xac] sm:$0xf]
      %v2981 = vld [vmem:[%s247 + $0xb0] sm:$0xf]
      %v2982 = vld [vmem:[%s247 + $0xb4] sm:$0xf]
      %v2983 = vld [vmem:[%s247 + $0xb8] sm:$0xf]
      %v2984 = vld [vmem:[%s247 + $0xbc] sm:$0xf]
      %v2985 = vld [vmem:[%s247 + $0xc0] sm:$0xf]
      %v2986 = vld [vmem:[%s247 + $0xc4] sm:$0xf]
      %v2987 = vld [vmem:[%s247 + $0xc8] sm:$0xf]
      %v2988 = vld [vmem:[%s247 + $0xcc] sm:$0xf]
      %v2989 = vld [vmem:[%s247 + $0xd0] sm:$0xf]
      %v2990 = vld [vmem:[%s247 + $0xd4] sm:$0xf]
      %v2991 = vld [vmem:[%s247 + $0xd8] sm:$0xf]
      %v2992 = vld [vmem:[%s247 + $0xdc] sm:$0xf]
      %v2993 = vld [vmem:[%s247 + $0xe0] sm:$0xf]
      %v2994 = vld [vmem:[%s247 + $0xe4] sm:$0xf]
      %v2995 = vld [vmem:[%s247 + $0xe8] sm:$0xf]
      %v2996 = vld [vmem:[%s247 + $0xec] sm:$0xf]
      %v2997 = vld [vmem:[%s247 + $0xf0] sm:$0xf]
      %v2998 = vld [vmem:[%s247 + $0xf4] sm:$0xf]
      %v2999 = vld [vmem:[%s247 + $0xf8] sm:$0xf]
      %v3000 = vld [vmem:[%s247 + $0xfc] sm:$0xf]
      %v3001 = vld [vmem:[%s247 + $0x100] sm:$0xf]
      %v3002 = vld [vmem:[%s247 + $0x104] sm:$0xf]
      %v3003 = vld [vmem:[%s247 + $0x108] sm:$0xf]
      %v3004 = vld [vmem:[%s247 + $0x10c] sm:$0xf]
      %v3005 = vld [vmem:[%s247 + $0x110] sm:$0xf]
      %v3006 = vld [vmem:[%s247 + $0x114] sm:$0xf]
      %v3007 = vld [vmem:[%s247 + $0x118] sm:$0xf]
      %v3008 = vld [vmem:[%s247 + $0x11c] sm:$0xf]
      %v3009 = vld [vmem:[%s247 + $0x120] sm:$0xf]
      %v3010 = vld [vmem:[%s247 + $0x124] sm:$0xf]
      %v3011 = vld [vmem:[%s247 + $0x128] sm:$0xf]
      %v3012 = vld [vmem:[%s247 + $0x12c] sm:$0xf]
      %v3013 = vld [vmem:[%s247 + $0x130] sm:$0xf]
      %v3014 = vld [vmem:[%s247 + $0x134] sm:$0xf]
      %v3015 = vld [vmem:[%s247 + $0x138] sm:$0xf]
      %v3016 = vld [vmem:[%s247 + $0x13c] sm:$0xf]
      %v3017 = vld [vmem:[%s247 + $0x140] sm:$0xf]
      %v3018 = vld [vmem:[%s247 + $0x144] sm:$0xf]
      %v3019 = vld [vmem:[%s247 + $0x148] sm:$0xf]
      %v3020 = vld [vmem:[%s247 + $0x14c] sm:$0xf]
      %v3021 = vld [vmem:[%s247 + $0x150] sm:$0xf]
      %v3022 = vld [vmem:[%s247 + $0x154] sm:$0xf]
      %v3023 = vld [vmem:[%s247 + $0x158] sm:$0xf]
      %v3024 = vld [vmem:[%s247 + $0x15c] sm:$0xf]
      %v3025 = vld [vmem:[%s247 + $0x160] sm:$0xf]
      %v3026 = vld [vmem:[%s247 + $0x164] sm:$0xf]
      %v3027 = vld [vmem:[%s247 + $0x168] sm:$0xf]
      %v3028 = vld [vmem:[%s247 + $0x16c] sm:$0xf]
      %v3029 = vld [vmem:[%s247 + $0x170] sm:$0xf]
      %v3030 = vld [vmem:[%s247 + $0x174] sm:$0xf]
      %v3031 = vld [vmem:[%s247 + $0x178] sm:$0xf]
      %v3032 = vld [vmem:[%s247 + $0x17c] sm:$0xf]
      %v3033 = vld [vmem:[%s247 + $0x180] sm:$0xf]
      %v3034 = vld [vmem:[%s247 + $0x184] sm:$0xf]
      %v3035 = vld [vmem:[%s247 + $0x188] sm:$0xf]
      %v3036 = vld [vmem:[%s247 + $0x18c] sm:$0xf]
      %v3037 = vld [vmem:[%s247 + $0x190] sm:$0xf]
      %v3038 = vld [vmem:[%s247 + $0x194] sm:$0xf]
      %v3039 = vld [vmem:[%s247 + $0x198] sm:$0xf]
      %v3040 = vld [vmem:[%s247 + $0x19c] sm:$0xf]
      %v3041 = vld [vmem:[%s247 + $0x1a0] sm:$0xf]
      %v3042 = vld [vmem:[%s247 + $0x1a4] sm:$0xf]
      %v3043 = vld [vmem:[%s247 + $0x1a8] sm:$0xf]
      %v3044 = vld [vmem:[%s247 + $0x1ac] sm:$0xf]
      %v3045 = vld [vmem:[%s247 + $0x1b0] sm:$0xf]
      %v3046 = vld [vmem:[%s247 + $0x1b4] sm:$0xf]
      %v3047 = vld [vmem:[%s247 + $0x1b8] sm:$0xf]
      %v3048 = vld [vmem:[%s247 + $0x1bc] sm:$0xf]
      %v3049 = vld [vmem:[%s247 + $0x1c0] sm:$0xf]
      %v3050 = vld [vmem:[%s247 + $0x1c4] sm:$0xf]
      %v3051 = vld [vmem:[%s247 + $0x1c8] sm:$0xf]
      %v3052 = vld [vmem:[%s247 + $0x1cc] sm:$0xf]
      %v3053 = vld [vmem:[%s247 + $0x1d0] sm:$0xf]
      %v3054 = vld [vmem:[%s247 + $0x1d4] sm:$0xf]
      %v3055 = vld [vmem:[%s247 + $0x1d8] sm:$0xf]
      %v3056 = vld [vmem:[%s247 + $0x1dc] sm:$0xf]
      %v3057 = vld [vmem:[%s247 + $0x1e0] sm:$0xf]
      %v3058 = vld [vmem:[%s247 + $0x1e4] sm:$0xf]
      %v3059 = vld [vmem:[%s247 + $0x1e8] sm:$0xf]
      %v3060 = vld [vmem:[%s247 + $0x1ec] sm:$0xf]
      %v3061 = vld [vmem:[%s247 + $0x1f0] sm:$0xf]
      %v3062 = vld [vmem:[%s247 + $0x1f4] sm:$0xf]
      %v3063 = vld [vmem:[%s247 + $0x1f8] sm:$0xf]
      %v3064 = vld [vmem:[%s247 + $0x1fc] sm:$0xf]
      %v3065 = vld [vmem:[%s247 + $0x200] sm:$0xf]
      %v3066 = vld [vmem:[%s247 + $0x204] sm:$0xf]
      %v3067 = vld [vmem:[%s247 + $0x208] sm:$0xf]
      %v3068 = vld [vmem:[%s247 + $0x20c] sm:$0xf]
      %v3069 = vld [vmem:[%s247 + $0x210] sm:$0xf]
      %v3070 = vld [vmem:[%s247 + $0x214] sm:$0xf]
      %v3071 = vld [vmem:[%s247 + $0x218] sm:$0xf]
      %v3072 = vld [vmem:[%s247 + $0x21c] sm:$0xf]
      %v3073 = vld [vmem:[%s247 + $0x220] sm:$0xf]
      %v3074 = vld [vmem:[%s247 + $0x224] sm:$0xf]
      %v3075 = vld [vmem:[%s247 + $0x228] sm:$0xf]
      %v3076 = vld [vmem:[%s247 + $0x22c] sm:$0xf]
      %v3077 = vld [vmem:[%s247 + $0x230] sm:$0xf]
      %v3078 = vld [vmem:[%s247 + $0x234] sm:$0xf]
      %v3079 = vld [vmem:[%s247 + $0x238] sm:$0xf]
      %v3080 = vld [vmem:[%s247 + $0x23c] sm:$0xf]
      %v3241 = vunpack.c.l.b16 %v2777
      %v3242 = vunpack.c.h.b16 %v2777
      %v3243 = vunpack.c.l.b16 %v2778
      %v3244 = vunpack.c.h.b16 %v2778
      %v3245 = vunpack.c.l.b16 %v2779
      %v3246 = vunpack.c.h.b16 %v2779
      %v3247 = vunpack.c.l.b16 %v2780
      %v3248 = vunpack.c.h.b16 %v2780
      %v3249 = vunpack.c.l.b16 %v2781
      %v3250 = vunpack.c.l.b16 %v2782
      %v3251 = vunpack.c.h.b16 %v2782
      %v3252 = vunpack.c.l.b16 %v2783
      %v3253 = vunpack.c.h.b16 %v2783
      %v3254 = vunpack.c.l.b16 %v2784
      %v3255 = vunpack.c.h.b16 %v2784
      %v3256 = vunpack.c.l.b16 %v2785
      %v3257 = vunpack.c.h.b16 %v2785
      %v3258 = vunpack.c.l.b16 %v2786
      %v3259 = vunpack.c.l.b16 %v2787
      %v3260 = vunpack.c.h.b16 %v2787
      %v3261 = vunpack.c.l.b16 %v2788
      %v3262 = vunpack.c.h.b16 %v2788
      %v3263 = vunpack.c.l.b16 %v2789
      %v3264 = vunpack.c.h.b16 %v2789
      %v3265 = vunpack.c.l.b16 %v2790
      %v3266 = vunpack.c.h.b16 %v2790
      %v3267 = vunpack.c.l.b16 %v2791
      %v3268 = vunpack.c.l.b16 %v2792
      %v3269 = vunpack.c.h.b16 %v2792
      %v3270 = vunpack.c.l.b16 %v2793
      %v3271 = vunpack.c.h.b16 %v2793
      %v3272 = vunpack.c.l.b16 %v2794
      %v3273 = vunpack.c.h.b16 %v2794
      %v3274 = vunpack.c.l.b16 %v2795
      %v3275 = vunpack.c.h.b16 %v2795
      %v3276 = vunpack.c.l.b16 %v2796
      %v3277 = vunpack.c.l.b16 %v2797
      %v3278 = vunpack.c.h.b16 %v2797
      %v3279 = vunpack.c.l.b16 %v2798
      %v3280 = vunpack.c.h.b16 %v2798
      %v3281 = vunpack.c.l.b16 %v2799
      %v3282 = vunpack.c.h.b16 %v2799
      %v3283 = vunpack.c.l.b16 %v2800
      %v3284 = vunpack.c.h.b16 %v2800
      %v3285 = vunpack.c.l.b16 %v2801
      %v3286 = vunpack.c.l.b16 %v2802
      %v3287 = vunpack.c.h.b16 %v2802
      %v3288 = vunpack.c.l.b16 %v2803
      %v3289 = vunpack.c.h.b16 %v2803
      %v3290 = vunpack.c.l.b16 %v2804
      %v3291 = vunpack.c.h.b16 %v2804
      %v3292 = vunpack.c.l.b16 %v2805
      %v3293 = vunpack.c.h.b16 %v2805
      %v3294 = vunpack.c.l.b16 %v2806
      %v3295 = vunpack.c.l.b16 %v2807
      %v3296 = vunpack.c.h.b16 %v2807
      %v3297 = vunpack.c.l.b16 %v2808
      %v3298 = vunpack.c.h.b16 %v2808
      %v3299 = vunpack.c.l.b16 %v2809
      %v3300 = vunpack.c.h.b16 %v2809
      %v3301 = vunpack.c.l.b16 %v2810
      %v3302 = vunpack.c.h.b16 %v2810
      %v3303 = vunpack.c.l.b16 %v2811
      %v3304 = vunpack.c.l.b16 %v2812
      %v3305 = vunpack.c.h.b16 %v2812
      %v3306 = vunpack.c.l.b16 %v2813
      %v3307 = vunpack.c.h.b16 %v2813
      %v3308 = vunpack.c.l.b16 %v2814
      %v3309 = vunpack.c.h.b16 %v2814
      %v3310 = vunpack.c.l.b16 %v2815
      %v3311 = vunpack.c.h.b16 %v2815
      %v3312 = vunpack.c.l.b16 %v2816
      %v3313 = vunpack.c.l.b16 %v2817
      %v3314 = vunpack.c.h.b16 %v2817
      %v3315 = vunpack.c.l.b16 %v2818
      %v3316 = vunpack.c.h.b16 %v2818
      %v3317 = vunpack.c.l.b16 %v2819
      %v3318 = vunpack.c.h.b16 %v2819
      %v3319 = vunpack.c.l.b16 %v2820
      %v3320 = vunpack.c.h.b16 %v2820
      %v3321 = vunpack.c.l.b16 %v2821
      %v3322 = vunpack.c.l.b16 %v2822
      %v3323 = vunpack.c.h.b16 %v2822
      %v3324 = vunpack.c.l.b16 %v2823
      %v3325 = vunpack.c.h.b16 %v2823
      %v3326 = vunpack.c.l.b16 %v2824
      %v3327 = vunpack.c.h.b16 %v2824
      %v3328 = vunpack.c.l.b16 %v2825
      %v3329 = vunpack.c.h.b16 %v2825
      %v3330 = vunpack.c.l.b16 %v2826
      %v3331 = vunpack.c.l.b16 %v2827
      %v3332 = vunpack.c.h.b16 %v2827
      %v3333 = vunpack.c.l.b16 %v2828
      %v3334 = vunpack.c.h.b16 %v2828
      %v3335 = vunpack.c.l.b16 %v2829
      %v3336 = vunpack.c.h.b16 %v2829
      %v3337 = vunpack.c.l.b16 %v2830
      %v3338 = vunpack.c.h.b16 %v2830
      %v3339 = vunpack.c.l.b16 %v2831
      %v3340 = vunpack.c.l.b16 %v2832
      %v3341 = vunpack.c.h.b16 %v2832
      %v3342 = vunpack.c.l.b16 %v2833
      %v3343 = vunpack.c.h.b16 %v2833
      %v3344 = vunpack.c.l.b16 %v2834
      %v3345 = vunpack.c.h.b16 %v2834
      %v3346 = vunpack.c.l.b16 %v2835
      %v3347 = vunpack.c.h.b16 %v2835
      %v3348 = vunpack.c.l.b16 %v2836
      %v3349 = vunpack.c.l.b16 %v2837
      %v3350 = vunpack.c.h.b16 %v2837
      %v3351 = vunpack.c.l.b16 %v2838
      %v3352 = vunpack.c.h.b16 %v2838
      %v3353 = vunpack.c.l.b16 %v2839
      %v3354 = vunpack.c.h.b16 %v2839
      %v3355 = vunpack.c.l.b16 %v2840
      %v3356 = vunpack.c.h.b16 %v2840
      %v3357 = vunpack.c.l.b16 %v2841
      %v3358 = vunpack.c.l.b16 %v2842
      %v3359 = vunpack.c.h.b16 %v2842
      %v3360 = vunpack.c.l.b16 %v2843
      %v3361 = vunpack.c.h.b16 %v2843
      %v3362 = vunpack.c.l.b16 %v2844
      %v3363 = vunpack.c.h.b16 %v2844
      %v3364 = vunpack.c.l.b16 %v2845
      %v3365 = vunpack.c.h.b16 %v2845
      %v3366 = vunpack.c.l.b16 %v2846
      %v3367 = vunpack.c.l.b16 %v2847
      %v3368 = vunpack.c.h.b16 %v2847
      %v3369 = vunpack.c.l.b16 %v2848
      %v3370 = vunpack.c.h.b16 %v2848
      %v3371 = vunpack.c.l.b16 %v2849
      %v3372 = vunpack.c.h.b16 %v2849
      %v3373 = vunpack.c.l.b16 %v2850
      %v3374 = vunpack.c.h.b16 %v2850
      %v3375 = vunpack.c.l.b16 %v2851
      %v3376 = vunpack.c.l.b16 %v2852
      %v3377 = vunpack.c.h.b16 %v2852
      %v3378 = vunpack.c.l.b16 %v2853
      %v3379 = vunpack.c.h.b16 %v2853
      %v3380 = vunpack.c.l.b16 %v2854
      %v3381 = vunpack.c.h.b16 %v2854
      %v3382 = vunpack.c.l.b16 %v2855
      %v3383 = vunpack.c.h.b16 %v2855
      %v3384 = vunpack.c.l.b16 %v2856
      %v3385 = vunpack.c.l.b16 %v2857
      %v3386 = vunpack.c.h.b16 %v2857
      %v3387 = vunpack.c.l.b16 %v2858
      %v3388 = vunpack.c.h.b16 %v2858
      %v3389 = vunpack.c.l.b16 %v2859
      %v3390 = vunpack.c.h.b16 %v2859
      %v3391 = vunpack.c.l.b16 %v2860
      %v3392 = vunpack.c.h.b16 %v2860
      %v3393 = vunpack.c.l.b16 %v2861
      %v3394 = vunpack.c.l.b16 %v2862
      %v3395 = vunpack.c.h.b16 %v2862
      %v3396 = vunpack.c.l.b16 %v2863
      %v3397 = vunpack.c.h.b16 %v2863
      %v3398 = vunpack.c.l.b16 %v2864
      %v3399 = vunpack.c.h.b16 %v2864
      %v3400 = vunpack.c.l.b16 %v2865
      %v3401 = vunpack.c.h.b16 %v2865
      %v3402 = vunpack.c.l.b16 %v2866
      %v3403 = vunpack.c.l.b16 %v2867
      %v3404 = vunpack.c.h.b16 %v2867
      %v3405 = vunpack.c.l.b16 %v2868
      %v3406 = vunpack.c.h.b16 %v2868
      %v3407 = vunpack.c.l.b16 %v2869
      %v3408 = vunpack.c.h.b16 %v2869
      %v3409 = vunpack.c.l.b16 %v2870
      %v3410 = vunpack.c.h.b16 %v2870
      %v3411 = vunpack.c.l.b16 %v2871
      %v3412 = vunpack.c.l.b16 %v2872
      %v3413 = vunpack.c.h.b16 %v2872
      %v3414 = vunpack.c.l.b16 %v2873
      %v3415 = vunpack.c.h.b16 %v2873
      %v3416 = vunpack.c.l.b16 %v2874
      %v3417 = vunpack.c.h.b16 %v2874
      %v3418 = vunpack.c.l.b16 %v2875
      %v3419 = vunpack.c.h.b16 %v2875
      %v3420 = vunpack.c.l.b16 %v2876
      %v3421 = vunpack.c.l.b16 %v2877
      %v3422 = vunpack.c.h.b16 %v2877
      %v3423 = vunpack.c.l.b16 %v2878
      %v3424 = vunpack.c.h.b16 %v2878
      %v3425 = vunpack.c.l.b16 %v2879
      %v3426 = vunpack.c.h.b16 %v2879
      %v3427 = vunpack.c.l.b16 %v2880
      %v3428 = vunpack.c.h.b16 %v2880
      %v3429 = vunpack.c.l.b16 %v2881
      %v3430 = vunpack.c.l.b16 %v2882
      %v3431 = vunpack.c.h.b16 %v2882
      %v3432 = vunpack.c.l.b16 %v2883
      %v3433 = vunpack.c.h.b16 %v2883
      %v3434 = vunpack.c.l.b16 %v2884
      %v3435 = vunpack.c.h.b16 %v2884
      %v3436 = vunpack.c.l.b16 %v2885
      %v3437 = vunpack.c.h.b16 %v2885
      %v3438 = vunpack.c.l.b16 %v2886
      %v3439 = vunpack.c.l.b16 %v2887
      %v3440 = vunpack.c.h.b16 %v2887
      %v3441 = vunpack.c.l.b16 %v2888
      %v3442 = vunpack.c.h.b16 %v2888
      %v3443 = vunpack.c.l.b16 %v2889
      %v3444 = vunpack.c.h.b16 %v2889
      %v3445 = vunpack.c.l.b16 %v2890
      %v3446 = vunpack.c.h.b16 %v2890
      %v3447 = vunpack.c.l.b16 %v2891
      %v3448 = vunpack.c.l.b16 %v2892
      %v3449 = vunpack.c.h.b16 %v2892
      %v3450 = vunpack.c.l.b16 %v2893
      %v3451 = vunpack.c.h.b16 %v2893
      %v3452 = vunpack.c.l.b16 %v2894
      %v3453 = vunpack.c.h.b16 %v2894
      %v3454 = vunpack.c.l.b16 %v2895
      %v3455 = vunpack.c.h.b16 %v2895
      %v3456 = vunpack.c.l.b16 %v2896
      %v3457 = vunpack.c.l.b16 %v2897
      %v3458 = vunpack.c.h.b16 %v2897
      %v3459 = vunpack.c.l.b16 %v2898
      %v3460 = vunpack.c.h.b16 %v2898
      %v3461 = vunpack.c.l.b16 %v2899
      %v3462 = vunpack.c.h.b16 %v2899
      %v3463 = vunpack.c.l.b16 %v2900
      %v3464 = vunpack.c.h.b16 %v2900
      %v3465 = vunpack.c.l.b16 %v2901
      %v3466 = vunpack.c.l.b16 %v2902
      %v3467 = vunpack.c.h.b16 %v2902
      %v3468 = vunpack.c.l.b16 %v2903
      %v3469 = vunpack.c.h.b16 %v2903
      %v3470 = vunpack.c.l.b16 %v2904
      %v3471 = vunpack.c.h.b16 %v2904
      %v3472 = vunpack.c.l.b16 %v2905
      %v3473 = vunpack.c.h.b16 %v2905
      %v3474 = vunpack.c.l.b16 %v2906
      %v3475 = vunpack.c.l.b16 %v2907
      %v3476 = vunpack.c.h.b16 %v2907
      %v3477 = vunpack.c.l.b16 %v2908
      %v3478 = vunpack.c.h.b16 %v2908
      %v3479 = vunpack.c.l.b16 %v2909
      %v3480 = vunpack.c.h.b16 %v2909
      %v3481 = vunpack.c.l.b16 %v2910
      %v3482 = vunpack.c.h.b16 %v2910
      %v3483 = vunpack.c.l.b16 %v2911
      %v3484 = vunpack.c.l.b16 %v2912
      %v3485 = vunpack.c.h.b16 %v2912
      %v3486 = vunpack.c.l.b16 %v2913
      %v3487 = vunpack.c.h.b16 %v2913
      %v3488 = vunpack.c.l.b16 %v2914
      %v3489 = vunpack.c.h.b16 %v2914
      %v3490 = vunpack.c.l.b16 %v2915
      %v3491 = vunpack.c.h.b16 %v2915
      %v3492 = vunpack.c.l.b16 %v2916
      %v3493 = vunpack.c.l.b16 %v2917
      %v3494 = vunpack.c.h.b16 %v2917
      %v3495 = vunpack.c.l.b16 %v2918
      %v3496 = vunpack.c.h.b16 %v2918
      %v3497 = vunpack.c.l.b16 %v2919
      %v3498 = vunpack.c.h.b16 %v2919
      %v3499 = vunpack.c.l.b16 %v2920
      %v3500 = vunpack.c.h.b16 %v2920
      %v3501 = vunpack.c.l.b16 %v2921
      %v3502 = vunpack.c.l.b16 %v2922
      %v3503 = vunpack.c.h.b16 %v2922
      %v3504 = vunpack.c.l.b16 %v2923
      %v3505 = vunpack.c.h.b16 %v2923
      %v3506 = vunpack.c.l.b16 %v2924
      %v3507 = vunpack.c.h.b16 %v2924
      %v3508 = vunpack.c.l.b16 %v2925
      %v3509 = vunpack.c.h.b16 %v2925
      %v3510 = vunpack.c.l.b16 %v2926
      %v3511 = vunpack.c.l.b16 %v2927
      %v3512 = vunpack.c.h.b16 %v2927
      %v3513 = vunpack.c.l.b16 %v2928
      %v3514 = vunpack.c.h.b16 %v2928
      %v3515 = vunpack.c.l.b16 %v2929
      %v3516 = vunpack.c.h.b16 %v2929
      %v3517 = vunpack.c.l.b16 %v2930
      %v3518 = vunpack.c.h.b16 %v2930
      %v3519 = vunpack.c.l.b16 %v2931
      %v3520 = vunpack.c.l.b16 %v2932
      %v3521 = vunpack.c.h.b16 %v2932
      %v3522 = vunpack.c.l.b16 %v2933
      %v3523 = vunpack.c.h.b16 %v2933
      %v3524 = vunpack.c.l.b16 %v2934
      %v3525 = vunpack.c.h.b16 %v2934
      %v3526 = vunpack.c.l.b16 %v2935
      %v3527 = vunpack.c.h.b16 %v2935
      %v3528 = vunpack.c.l.b16 %v2936
      %v3529 = vpack.c.b16 %v3250, %v3241
      %v3530 = vpack.c.b16 %v3251, %v3242
      %v3531 = vpack.c.b16 %v3252, %v3243
      %v3532 = vpack.c.b16 %v3253, %v3244
      %v3533 = vpack.c.b16 %v3254, %v3245
      %v3534 = vpack.c.b16 %v3255, %v3246
      %v3535 = vpack.c.b16 %v3256, %v3247
      %v3536 = vpack.c.b16 %v3257, %v3248
      %v3537 = vpack.c.b16 %v3258, %v3249
      %v3538 = vpack.c.b16 %v3268, %v3259
      %v3539 = vpack.c.b16 %v3269, %v3260
      %v3540 = vpack.c.b16 %v3270, %v3261
      %v3541 = vpack.c.b16 %v3271, %v3262
      %v3542 = vpack.c.b16 %v3272, %v3263
      %v3543 = vpack.c.b16 %v3273, %v3264
      %v3544 = vpack.c.b16 %v3274, %v3265
      %v3545 = vpack.c.b16 %v3275, %v3266
      %v3546 = vpack.c.b16 %v3276, %v3267
      %v3547 = vpack.c.b16 %v3286, %v3277
      %v3548 = vpack.c.b16 %v3287, %v3278
      %v3549 = vpack.c.b16 %v3288, %v3279
      %v3550 = vpack.c.b16 %v3289, %v3280
      %v3551 = vpack.c.b16 %v3290, %v3281
      %v3552 = vpack.c.b16 %v3291, %v3282
      %v3553 = vpack.c.b16 %v3292, %v3283
      %v3554 = vpack.c.b16 %v3293, %v3284
      %v3555 = vpack.c.b16 %v3294, %v3285
      %v3556 = vpack.c.b16 %v3304, %v3295
      %v3557 = vpack.c.b16 %v3305, %v3296
      %v3558 = vpack.c.b16 %v3306, %v3297
      %v3559 = vpack.c.b16 %v3307, %v3298
      %v3560 = vpack.c.b16 %v3308, %v3299
      %v3561 = vpack.c.b16 %v3309, %v3300
      %v3562 = vpack.c.b16 %v3310, %v3301
      %v3563 = vpack.c.b16 %v3311, %v3302
      %v3564 = vpack.c.b16 %v3312, %v3303
      %v3565 = vpack.c.b16 %v3322, %v3313
      %v3566 = vpack.c.b16 %v3323, %v3314
      %v3567 = vpack.c.b16 %v3324, %v3315
      %v3568 = vpack.c.b16 %v3325, %v3316
      %v3569 = vpack.c.b16 %v3326, %v3317
      %v3570 = vpack.c.b16 %v3327, %v3318
      %v3571 = vpack.c.b16 %v3328, %v3319
      %v3572 = vpack.c.b16 %v3329, %v3320
      %v3573 = vpack.c.b16 %v3330, %v3321
      %v3574 = vpack.c.b16 %v3340, %v3331
      %v3575 = vpack.c.b16 %v3341, %v3332
      %v3576 = vpack.c.b16 %v3342, %v3333
      %v3577 = vpack.c.b16 %v3343, %v3334
      %v3578 = vpack.c.b16 %v3344, %v3335
      %v3579 = vpack.c.b16 %v3345, %v3336
      %v3580 = vpack.c.b16 %v3346, %v3337
      %v3581 = vpack.c.b16 %v3347, %v3338
      %v3582 = vpack.c.b16 %v3348, %v3339
      %v3583 = vpack.c.b16 %v3358, %v3349
      %v3584 = vpack.c.b16 %v3359, %v3350
      %v3585 = vpack.c.b16 %v3360, %v3351
      %v3586 = vpack.c.b16 %v3361, %v3352
      %v3587 = vpack.c.b16 %v3362, %v3353
      %v3588 = vpack.c.b16 %v3363, %v3354
      %v3589 = vpack.c.b16 %v3364, %v3355
      %v3590 = vpack.c.b16 %v3365, %v3356
      %v3591 = vpack.c.b16 %v3366, %v3357
      %v3592 = vpack.c.b16 %v3376, %v3367
      %v3593 = vpack.c.b16 %v3377, %v3368
      %v3594 = vpack.c.b16 %v3378, %v3369
      %v3595 = vpack.c.b16 %v3379, %v3370
      %v3596 = vpack.c.b16 %v3380, %v3371
      %v3597 = vpack.c.b16 %v3381, %v3372
      %v3598 = vpack.c.b16 %v3382, %v3373
      %v3599 = vpack.c.b16 %v3383, %v3374
      %v3600 = vpack.c.b16 %v3384, %v3375
      %v3601 = vpack.c.b16 %v3394, %v3385
      %v3602 = vpack.c.b16 %v3395, %v3386
      %v3603 = vpack.c.b16 %v3396, %v3387
      %v3604 = vpack.c.b16 %v3397, %v3388
      %v3605 = vpack.c.b16 %v3398, %v3389
      %v3606 = vpack.c.b16 %v3399, %v3390
      %v3607 = vpack.c.b16 %v3400, %v3391
      %v3608 = vpack.c.b16 %v3401, %v3392
      %v3609 = vpack.c.b16 %v3402, %v3393
      %v3610 = vpack.c.b16 %v3412, %v3403
      %v3611 = vpack.c.b16 %v3413, %v3404
      %v3612 = vpack.c.b16 %v3414, %v3405
      %v3613 = vpack.c.b16 %v3415, %v3406
      %v3614 = vpack.c.b16 %v3416, %v3407
      %v3615 = vpack.c.b16 %v3417, %v3408
      %v3616 = vpack.c.b16 %v3418, %v3409
      %v3617 = vpack.c.b16 %v3419, %v3410
      %v3618 = vpack.c.b16 %v3420, %v3411
      %v3619 = vpack.c.b16 %v3430, %v3421
      %v3620 = vpack.c.b16 %v3431, %v3422
      %v3621 = vpack.c.b16 %v3432, %v3423
      %v3622 = vpack.c.b16 %v3433, %v3424
      %v3623 = vpack.c.b16 %v3434, %v3425
      %v3624 = vpack.c.b16 %v3435, %v3426
      %v3625 = vpack.c.b16 %v3436, %v3427
      %v3626 = vpack.c.b16 %v3437, %v3428
      %v3627 = vpack.c.b16 %v3438, %v3429
      %v3628 = vpack.c.b16 %v3448, %v3439
      %v3629 = vpack.c.b16 %v3449, %v3440
      %v3630 = vpack.c.b16 %v3450, %v3441
      %v3631 = vpack.c.b16 %v3451, %v3442
      %v3632 = vpack.c.b16 %v3452, %v3443
      %v3633 = vpack.c.b16 %v3453, %v3444
      %v3634 = vpack.c.b16 %v3454, %v3445
      %v3635 = vpack.c.b16 %v3455, %v3446
      %v3636 = vpack.c.b16 %v3456, %v3447
      %v3637 = vpack.c.b16 %v3466, %v3457
      %v3638 = vpack.c.b16 %v3467, %v3458
      %v3639 = vpack.c.b16 %v3468, %v3459
      %v3640 = vpack.c.b16 %v3469, %v3460
      %v3641 = vpack.c.b16 %v3470, %v3461
      %v3642 = vpack.c.b16 %v3471, %v3462
      %v3643 = vpack.c.b16 %v3472, %v3463
      %v3644 = vpack.c.b16 %v3473, %v3464
      %v3645 = vpack.c.b16 %v3474, %v3465
      %v3646 = vpack.c.b16 %v3484, %v3475
      %v3647 = vpack.c.b16 %v3485, %v3476
      %v3648 = vpack.c.b16 %v3486, %v3477
      %v3649 = vpack.c.b16 %v3487, %v3478
      %v3650 = vpack.c.b16 %v3488, %v3479
      %v3651 = vpack.c.b16 %v3489, %v3480
      %v3652 = vpack.c.b16 %v3490, %v3481
      %v3653 = vpack.c.b16 %v3491, %v3482
      %v3654 = vpack.c.b16 %v3492, %v3483
      %v3655 = vpack.c.b16 %v3502, %v3493
      %v3656 = vpack.c.b16 %v3503, %v3494
      %v3657 = vpack.c.b16 %v3504, %v3495
      %v3658 = vpack.c.b16 %v3505, %v3496
      %v3659 = vpack.c.b16 %v3506, %v3497
      %v3660 = vpack.c.b16 %v3507, %v3498
      %v3661 = vpack.c.b16 %v3508, %v3499
      %v3662 = vpack.c.b16 %v3509, %v3500
      %v3663 = vpack.c.b16 %v3510, %v3501
      %v3664 = vpack.c.b16 %v3520, %v3511
      %v3665 = vpack.c.b16 %v3521, %v3512
      %v3666 = vpack.c.b16 %v3522, %v3513
      %v3667 = vpack.c.b16 %v3523, %v3514
      %v3668 = vpack.c.b16 %v3524, %v3515
      %v3669 = vpack.c.b16 %v3525, %v3516
      %v3670 = vpack.c.b16 %v3526, %v3517
      %v3671 = vpack.c.b16 %v3527, %v3518
      %v3672 = vpack.c.b16 %v3528, %v3519
      %v3961 = vunpack.c.l.b16 %v2937
      %v3962 = vunpack.c.l.b16 %v2938
      %v3963 = vunpack.c.l.b16 %v2939
      %v3964 = vunpack.c.l.b16 %v2940
      %v3965 = vunpack.c.l.b16 %v2941
      %v3966 = vunpack.c.l.b16 %v2942
      %v3967 = vunpack.c.l.b16 %v2943
      %v3968 = vunpack.c.l.b16 %v2944
      %v3969 = vunpack.c.l.b16 %v2945
      %v3970 = vunpack.c.l.b16 %v2946
      %v3971 = vunpack.c.l.b16 %v2947
      %v3972 = vunpack.c.l.b16 %v2948
      %v3973 = vunpack.c.l.b16 %v2949
      %v3974 = vunpack.c.l.b16 %v2950
      %v3975 = vunpack.c.l.b16 %v2951
      %v3976 = vunpack.c.l.b16 %v2952
      %v3977 = vunpack.c.l.b16 %v2953
      %v3978 = vunpack.c.l.b16 %v2954
      %v3979 = vunpack.c.l.b16 %v2955
      %v3980 = vunpack.c.l.b16 %v2956
      %v3981 = vunpack.c.l.b16 %v2957
      %v3982 = vunpack.c.l.b16 %v2958
      %v3983 = vunpack.c.l.b16 %v2959
      %v3984 = vunpack.c.l.b16 %v2960
      %v3985 = vunpack.c.l.b16 %v2961
      %v3986 = vunpack.c.l.b16 %v2962
      %v3987 = vunpack.c.l.b16 %v2963
      %v3988 = vunpack.c.l.b16 %v2964
      %v3989 = vunpack.c.l.b16 %v2965
      %v3990 = vunpack.c.l.b16 %v2966
      %v3991 = vunpack.c.l.b16 %v2967
      %v3992 = vunpack.c.l.b16 %v2968
      %v3993 = vunpack.c.l.b16 %v2969
      %v3994 = vunpack.c.l.b16 %v2970
      %v3995 = vunpack.c.l.b16 %v2971
      %v3996 = vunpack.c.l.b16 %v2972
      %v3997 = vunpack.c.l.b16 %v2973
      %v3998 = vunpack.c.l.b16 %v2974
      %v3999 = vunpack.c.l.b16 %v2975
      %v4000 = vunpack.c.l.b16 %v2976
      %v4001 = vunpack.c.l.b16 %v2977
      %v4002 = vunpack.c.l.b16 %v2978
      %v4003 = vunpack.c.l.b16 %v2979
      %v4004 = vunpack.c.l.b16 %v2980
      %v4005 = vunpack.c.l.b16 %v2981
      %v4006 = vunpack.c.l.b16 %v2982
      %v4007 = vunpack.c.l.b16 %v2983
      %v4008 = vunpack.c.l.b16 %v2984
      %v4009 = vunpack.c.l.b16 %v2985
      %v4010 = vunpack.c.l.b16 %v2986
      %v4011 = vunpack.c.l.b16 %v2987
      %v4012 = vunpack.c.l.b16 %v2988
      %v4013 = vunpack.c.l.b16 %v2989
      %v4014 = vunpack.c.l.b16 %v2990
      %v4015 = vunpack.c.l.b16 %v2991
      %v4016 = vunpack.c.l.b16 %v2992
      %v4017 = vunpack.c.l.b16 %v2993
      %v4018 = vunpack.c.l.b16 %v2994
      %v4019 = vunpack.c.l.b16 %v2995
      %v4020 = vunpack.c.l.b16 %v2996
      %v4021 = vunpack.c.l.b16 %v2997
      %v4022 = vunpack.c.l.b16 %v2998
      %v4023 = vunpack.c.l.b16 %v2999
      %v4024 = vunpack.c.l.b16 %v3000
      %v4025 = vunpack.c.l.b16 %v3001
      %v4026 = vunpack.c.l.b16 %v3002
      %v4027 = vunpack.c.l.b16 %v3003
      %v4028 = vunpack.c.l.b16 %v3004
      %v4029 = vunpack.c.l.b16 %v3005
      %v4030 = vunpack.c.l.b16 %v3006
      %v4031 = vunpack.c.l.b16 %v3007
      %v4032 = vunpack.c.l.b16 %v3008
      %v4033 = vunpack.c.l.b16 %v3009
      %v4034 = vunpack.c.l.b16 %v3010
      %v4035 = vunpack.c.l.b16 %v3011
      %v4036 = vunpack.c.l.b16 %v3012
      %v4037 = vunpack.c.l.b16 %v3013
      %v4038 = vunpack.c.l.b16 %v3014
      %v4039 = vunpack.c.l.b16 %v3015
      %v4040 = vunpack.c.l.b16 %v3016
      %v4041 = vunpack.c.l.b16 %v3017
      %v4042 = vunpack.c.l.b16 %v3018
      %v4043 = vunpack.c.l.b16 %v3019
      %v4044 = vunpack.c.l.b16 %v3020
      %v4045 = vunpack.c.l.b16 %v3021
      %v4046 = vunpack.c.l.b16 %v3022
      %v4047 = vunpack.c.l.b16 %v3023
      %v4048 = vunpack.c.l.b16 %v3024
      %v4049 = vunpack.c.l.b16 %v3025
      %v4050 = vunpack.c.l.b16 %v3026
      %v4051 = vunpack.c.l.b16 %v3027
      %v4052 = vunpack.c.l.b16 %v3028
      %v4053 = vunpack.c.l.b16 %v3029
      %v4054 = vunpack.c.l.b16 %v3030
      %v4055 = vunpack.c.l.b16 %v3031
      %v4056 = vunpack.c.l.b16 %v3032
      %v4057 = vunpack.c.l.b16 %v3033
      %v4058 = vunpack.c.l.b16 %v3034
      %v4059 = vunpack.c.l.b16 %v3035
      %v4060 = vunpack.c.l.b16 %v3036
      %v4061 = vunpack.c.l.b16 %v3037
      %v4062 = vunpack.c.l.b16 %v3038
      %v4063 = vunpack.c.l.b16 %v3039
      %v4064 = vunpack.c.l.b16 %v3040
      %v4065 = vunpack.c.l.b16 %v3041
      %v4066 = vunpack.c.l.b16 %v3042
      %v4067 = vunpack.c.l.b16 %v3043
      %v4068 = vunpack.c.l.b16 %v3044
      %v4069 = vunpack.c.l.b16 %v3045
      %v4070 = vunpack.c.l.b16 %v3046
      %v4071 = vunpack.c.l.b16 %v3047
      %v4072 = vunpack.c.l.b16 %v3048
      %v4073 = vunpack.c.l.b16 %v3049
      %v4074 = vunpack.c.l.b16 %v3050
      %v4075 = vunpack.c.l.b16 %v3051
      %v4076 = vunpack.c.l.b16 %v3052
      %v4077 = vunpack.c.l.b16 %v3053
      %v4078 = vunpack.c.l.b16 %v3054
      %v4079 = vunpack.c.l.b16 %v3055
      %v4080 = vunpack.c.l.b16 %v3056
      %v4081 = vunpack.c.l.b16 %v3057
      %v4082 = vunpack.c.l.b16 %v3058
      %v4083 = vunpack.c.l.b16 %v3059
      %v4084 = vunpack.c.l.b16 %v3060
      %v4085 = vunpack.c.l.b16 %v3061
      %v4086 = vunpack.c.l.b16 %v3062
      %v4087 = vunpack.c.l.b16 %v3063
      %v4088 = vunpack.c.l.b16 %v3064
      %v4089 = vunpack.c.l.b16 %v3065
      %v4090 = vunpack.c.l.b16 %v3066
      %v4091 = vunpack.c.l.b16 %v3067
      %v4092 = vunpack.c.l.b16 %v3068
      %v4093 = vunpack.c.l.b16 %v3069
      %v4094 = vunpack.c.l.b16 %v3070
      %v4095 = vunpack.c.l.b16 %v3071
      %v4096 = vunpack.c.l.b16 %v3072
      %v4097 = vunpack.c.l.b16 %v3073
      %v4098 = vunpack.c.l.b16 %v3074
      %v4099 = vunpack.c.l.b16 %v3075
      %v4100 = vunpack.c.l.b16 %v3076
      %v4101 = vunpack.c.l.b16 %v3077
      %v4102 = vunpack.c.l.b16 %v3078
      %v4103 = vunpack.c.l.b16 %v3079
      %v4104 = vunpack.c.l.b16 %v3080
      %v4105 = vpack.c.b16 %v3962, %v3961
      %v4106 = vpack.c.b16 %v3964, %v3963
      %v4107 = vpack.c.b16 %v3966, %v3965
      %v4108 = vpack.c.b16 %v3968, %v3967
      %v4109 = vpack.c.b16 %v3970, %v3969
      %v4110 = vpack.c.b16 %v3972, %v3971
      %v4111 = vpack.c.b16 %v3974, %v3973
      %v4112 = vpack.c.b16 %v3976, %v3975
      %v4113 = vpack.c.b16 %v3978, %v3977
      %v4114 = vpack.c.b16 %v3980, %v3979
      %v4115 = vpack.c.b16 %v3982, %v3981
      %v4116 = vpack.c.b16 %v3984, %v3983
      %v4117 = vpack.c.b16 %v3986, %v3985
      %v4118 = vpack.c.b16 %v3988, %v3987
      %v4119 = vpack.c.b16 %v3990, %v3989
      %v4120 = vpack.c.b16 %v3992, %v3991
      %v4121 = vpack.c.b16 %v3994, %v3993
      %v4122 = vpack.c.b16 %v3996, %v3995
      %v4123 = vpack.c.b16 %v3998, %v3997
      %v4124 = vpack.c.b16 %v4000, %v3999
      %v4125 = vpack.c.b16 %v4002, %v4001
      %v4126 = vpack.c.b16 %v4004, %v4003
      %v4127 = vpack.c.b16 %v4006, %v4005
      %v4128 = vpack.c.b16 %v4008, %v4007
      %v4129 = vpack.c.b16 %v4010, %v4009
      %v4130 = vpack.c.b16 %v4012, %v4011
      %v4131 = vpack.c.b16 %v4014, %v4013
      %v4132 = vpack.c.b16 %v4016, %v4015
      %v4133 = vpack.c.b16 %v4018, %v4017
      %v4134 = vpack.c.b16 %v4020, %v4019
      %v4135 = vpack.c.b16 %v4022, %v4021
      %v4136 = vpack.c.b16 %v4024, %v4023
      %v4137 = vpack.c.b16 %v4026, %v4025
      %v4138 = vpack.c.b16 %v4028, %v4027
      %v4139 = vpack.c.b16 %v4030, %v4029
      %v4140 = vpack.c.b16 %v4032, %v4031
      %v4141 = vpack.c.b16 %v4034, %v4033
      %v4142 = vpack.c.b16 %v4036, %v4035
      %v4143 = vpack.c.b16 %v4038, %v4037
      %v4144 = vpack.c.b16 %v4040, %v4039
      %v4145 = vpack.c.b16 %v4042, %v4041
      %v4146 = vpack.c.b16 %v4044, %v4043
      %v4147 = vpack.c.b16 %v4046, %v4045
      %v4148 = vpack.c.b16 %v4048, %v4047
      %v4149 = vpack.c.b16 %v4050, %v4049
      %v4150 = vpack.c.b16 %v4052, %v4051
      %v4151 = vpack.c.b16 %v4054, %v4053
      %v4152 = vpack.c.b16 %v4056, %v4055
      %v4153 = vpack.c.b16 %v4058, %v4057
      %v4154 = vpack.c.b16 %v4060, %v4059
      %v4155 = vpack.c.b16 %v4062, %v4061
      %v4156 = vpack.c.b16 %v4064, %v4063
      %v4157 = vpack.c.b16 %v4066, %v4065
      %v4158 = vpack.c.b16 %v4068, %v4067
      %v4159 = vpack.c.b16 %v4070, %v4069
      %v4160 = vpack.c.b16 %v4072, %v4071
      %v4161 = vpack.c.b16 %v4074, %v4073
      %v4162 = vpack.c.b16 %v4076, %v4075
      %v4163 = vpack.c.b16 %v4078, %v4077
      %v4164 = vpack.c.b16 %v4080, %v4079
      %v4165 = vpack.c.b16 %v4082, %v4081
      %v4166 = vpack.c.b16 %v4084, %v4083
      %v4167 = vpack.c.b16 %v4086, %v4085
      %v4168 = vpack.c.b16 %v4088, %v4087
      %v4169 = vpack.c.b16 %v4090, %v4089
      %v4170 = vpack.c.b16 %v4092, %v4091
      %v4171 = vpack.c.b16 %v4094, %v4093
      %v4172 = vpack.c.b16 %v4096, %v4095
      %v4173 = vpack.c.b16 %v4098, %v4097
      %v4174 = vpack.c.b16 %v4100, %v4099
      %v4175 = vpack.c.b16 %v4102, %v4101
      %v4176 = vpack.c.b16 %v4104, %v4103
      %4249 = vmatprep.subr.bf16.mxu0 0
      %4250 = vmatpush1.bf16.msra.mxu0 %v4112
      %4251 = vmatprep.subr.bf16.mxu0 0
      %4252 = vmatpush1.bf16.msra.mxu0 %v4111
      %4253 = vmatprep.subr.bf16.mxu0 0
      %4254 = vmatpush1.bf16.msra.mxu0 %v4110
      %4255 = vmatprep.subr.bf16.mxu0 0
      %4256 = vmatpush1.bf16.msra.mxu0 %v4109
      %4257 = vmatprep.subr.bf16.mxu0 0
      %4258 = vmatpush1.bf16.msra.mxu0 %v4108
      %4259 = vmatprep.subr.bf16.mxu0 0
      %4260 = vmatpush1.bf16.msra.mxu0 %v4107
      %4261 = vmatprep.subr.bf16.mxu0 0
      %4262 = vmatpush1.bf16.msra.mxu0 %v4106
      %4263 = vmatprep.subr.bf16.mxu0 0
      %4264 = vmatpush1.bf16.msra.mxu0 %v4105
      %4265 = vmatprep.subr.bf16.mxu0 0
      %4266 = vmatpush2.bf16.msra.mxu0 %v4120
      %4267 = vmatprep.subr.bf16.mxu0 0
      %4268 = vmatpush2.bf16.msra.mxu0 %v4119
      %4269 = vmatprep.subr.bf16.mxu0 0
      %4270 = vmatpush2.bf16.msra.mxu0 %v4118
      %4271 = vmatprep.subr.bf16.mxu0 0
      %4272 = vmatpush2.bf16.msra.mxu0 %v4117
      %4273 = vmatprep.subr.bf16.mxu0 0
      %4274 = vmatpush2.bf16.msra.mxu0 %v4116
      %4275 = vmatprep.subr.bf16.mxu0 0
      %4276 = vmatpush2.bf16.msra.mxu0 %v4115
      %4277 = vmatprep.subr.bf16.mxu0 0
      %4278 = vmatpush2.bf16.msra.mxu0 %v4114
      %4279 = vmatprep.subr.bf16.mxu0 0
      %4280 = vmatpush2.bf16.msra.mxu0 %v4113
      %4281 = vmatprep.mubr.bf16.mxu0 %v3530
      %4282 = vmatmul.mubr.bf16.gmra.mxu0 %v3529
      %v4283 = vpop.f32.mrf.mxu0
      %v4284 = vadd.f32 0.0, %v4283
      %v4285 = vpop.f32.mrf.mxu0
      %v4286 = vpop.f32.mrf.mxu0
      %v4287 = vadd.f32 0.0, %v4286
      %v4288 = vpop.f32.mrf.mxu0
      %4289 = vmatprep.mubr.bf16.mxu0 %v3539
      %4290 = vmatmul.mubr.bf16.gmra.mxu0 %v3538
      %v4291 = vpop.f32.mrf.mxu0
      %v4292 = vadd.f32 0.0, %v4291
      %v4293 = vpop.f32.mrf.mxu0
      %v4294 = vpop.f32.mrf.mxu0
      %v4295 = vadd.f32 0.0, %v4294
      %v4296 = vpop.f32.mrf.mxu0
      %4297 = vmatprep.mubr.bf16.mxu0 %v3548
      %4298 = vmatmul.mubr.bf16.gmra.mxu0 %v3547
      %v4299 = vpop.f32.mrf.mxu0
      %v4300 = vadd.f32 0.0, %v4299
      %v4301 = vpop.f32.mrf.mxu0
      %v4302 = vpop.f32.mrf.mxu0
      %v4303 = vadd.f32 0.0, %v4302
      %v4304 = vpop.f32.mrf.mxu0
      %4305 = vmatprep.mubr.bf16.mxu0 %v3557
      %4306 = vmatmul.mubr.bf16.gmra.mxu0 %v3556
      %v4307 = vpop.f32.mrf.mxu0
      %v4308 = vadd.f32 0.0, %v4307
      %v4309 = vpop.f32.mrf.mxu0
      %v4310 = vpop.f32.mrf.mxu0
      %v4311 = vadd.f32 0.0, %v4310
      %v4312 = vpop.f32.mrf.mxu0
      %4313 = vmatprep.mubr.bf16.mxu0 %v3566
      %4314 = vmatmul.mubr.bf16.gmra.mxu0 %v3565
      %v4315 = vpop.f32.mrf.mxu0
      %v4316 = vadd.f32 0.0, %v4315
      %v4317 = vpop.f32.mrf.mxu0
      %v4318 = vpop.f32.mrf.mxu0
      %v4319 = vadd.f32 0.0, %v4318
      %v4320 = vpop.f32.mrf.mxu0
      %4321 = vmatprep.mubr.bf16.mxu0 %v3575
      %4322 = vmatmul.mubr.bf16.gmra.mxu0 %v3574
      %v4323 = vpop.f32.mrf.mxu0
      %v4324 = vadd.f32 0.0, %v4323
      %v4325 = vpop.f32.mrf.mxu0
      %v4326 = vpop.f32.mrf.mxu0
      %v4327 = vadd.f32 0.0, %v4326
      %v4328 = vpop.f32.mrf.mxu0
      %4329 = vmatprep.mubr.bf16.mxu0 %v3584
      %4330 = vmatmul.mubr.bf16.gmra.mxu0 %v3583
      %v4331 = vpop.f32.mrf.mxu0
      %v4332 = vadd.f32 0.0, %v4331
      %v4333 = vpop.f32.mrf.mxu0
      %v4334 = vpop.f32.mrf.mxu0
      %v4335 = vadd.f32 0.0, %v4334
      %v4336 = vpop.f32.mrf.mxu0
      %4337 = vmatprep.mubr.bf16.mxu0 %v3593
      %4338 = vmatmul.mubr.bf16.gmra.mxu0 %v3592
      %v4339 = vpop.f32.mrf.mxu0
      %v4340 = vadd.f32 0.0, %v4339
      %v4341 = vpop.f32.mrf.mxu0
      %v4342 = vpop.f32.mrf.mxu0
      %v4343 = vadd.f32 0.0, %v4342
      %v4344 = vpop.f32.mrf.mxu0
      %4345 = vmatprep.mubr.bf16.mxu0 %v3602
      %4346 = vmatmul.mubr.bf16.gmra.mxu0 %v3601
      %v4347 = vpop.f32.mrf.mxu0
      %v4348 = vadd.f32 0.0, %v4347
      %v4349 = vpop.f32.mrf.mxu0
      %v4350 = vpop.f32.mrf.mxu0
      %v4351 = vadd.f32 0.0, %v4350
      %v4352 = vpop.f32.mrf.mxu0
      %4353 = vmatprep.mubr.bf16.mxu0 %v3611
      %4354 = vmatmul.mubr.bf16.gmra.mxu0 %v3610
      %v4355 = vpop.f32.mrf.mxu0
      %v4356 = vadd.f32 0.0, %v4355
      %v4357 = vpop.f32.mrf.mxu0
      %v4358 = vpop.f32.mrf.mxu0
      %v4359 = vadd.f32 0.0, %v4358
      %v4360 = vpop.f32.mrf.mxu0
      %4361 = vmatprep.mubr.bf16.mxu0 %v3620
      %4362 = vmatmul.mubr.bf16.gmra.mxu0 %v3619
      %v4363 = vpop.f32.mrf.mxu0
      %v4364 = vadd.f32 0.0, %v4363
      %v4365 = vpop.f32.mrf.mxu0
      %v4366 = vpop.f32.mrf.mxu0
      %v4367 = vadd.f32 0.0, %v4366
      %v4368 = vpop.f32.mrf.mxu0
      %4369 = vmatprep.mubr.bf16.mxu0 %v3629
      %4370 = vmatmul.mubr.bf16.gmra.mxu0 %v3628
      %v4371 = vpop.f32.mrf.mxu0
      %v4372 = vadd.f32 0.0, %v4371
      %v4373 = vpop.f32.mrf.mxu0
      %v4374 = vpop.f32.mrf.mxu0
      %v4375 = vadd.f32 0.0, %v4374
      %v4376 = vpop.f32.mrf.mxu0
      %4377 = vmatprep.mubr.bf16.mxu0 %v3638
      %4378 = vmatmul.mubr.bf16.gmra.mxu0 %v3637
      %v4379 = vpop.f32.mrf.mxu0
      %v4380 = vadd.f32 0.0, %v4379
      %v4381 = vpop.f32.mrf.mxu0
      %v4382 = vpop.f32.mrf.mxu0
      %v4383 = vadd.f32 0.0, %v4382
      %v4384 = vpop.f32.mrf.mxu0
      %4385 = vmatprep.mubr.bf16.mxu0 %v3647
      %4386 = vmatmul.mubr.bf16.gmra.mxu0 %v3646
      %v4387 = vpop.f32.mrf.mxu0
      %v4388 = vadd.f32 0.0, %v4387
      %v4389 = vpop.f32.mrf.mxu0
      %v4390 = vpop.f32.mrf.mxu0
      %v4391 = vadd.f32 0.0, %v4390
      %v4392 = vpop.f32.mrf.mxu0
      %4393 = vmatprep.mubr.bf16.mxu0 %v3656
      %4394 = vmatmul.mubr.bf16.gmra.mxu0 %v3655
      %v4395 = vpop.f32.mrf.mxu0
      %v4396 = vadd.f32 0.0, %v4395
      %v4397 = vpop.f32.mrf.mxu0
      %v4398 = vpop.f32.mrf.mxu0
      %v4399 = vadd.f32 0.0, %v4398
      %v4400 = vpop.f32.mrf.mxu0
      %4401 = vmatprep.mubr.bf16.mxu0 %v3665
      %4402 = vmatmul.mubr.bf16.gmra.mxu0 %v3664
      %v4403 = vpop.f32.mrf.mxu0
      %v4404 = vadd.f32 0.0, %v4403
      %v4405 = vpop.f32.mrf.mxu0
      %v4406 = vpop.f32.mrf.mxu0
      %v4407 = vadd.f32 0.0, %v4406
      %v4408 = vpop.f32.mrf.mxu0
      %4409 = vdwg.mxu0
      %4410 = vmatprep.subr.bf16.mxu0 0
      %4411 = vmatpush1.bf16.msra.mxu0 %v4128
      %4412 = vmatprep.subr.bf16.mxu0 0
      %4413 = vmatpush1.bf16.msra.mxu0 %v4127
      %4414 = vmatprep.subr.bf16.mxu0 0
      %4415 = vmatpush1.bf16.msra.mxu0 %v4126
      %4416 = vmatprep.subr.bf16.mxu0 0
      %4417 = vmatpush1.bf16.msra.mxu0 %v4125
      %4418 = vmatprep.subr.bf16.mxu0 0
      %4419 = vmatpush1.bf16.msra.mxu0 %v4124
      %4420 = vmatprep.subr.bf16.mxu0 0
      %4421 = vmatpush1.bf16.msra.mxu0 %v4123
      %4422 = vmatprep.subr.bf16.mxu0 0
      %4423 = vmatpush1.bf16.msra.mxu0 %v4122
      %4424 = vmatprep.subr.bf16.mxu0 0
      %4425 = vmatpush1.bf16.msra.mxu0 %v4121
      %4426 = vmatprep.subr.bf16.mxu0 0
      %4427 = vmatpush2.bf16.msra.mxu0 %v4136
      %4428 = vmatprep.subr.bf16.mxu0 0
      %4429 = vmatpush2.bf16.msra.mxu0 %v4135
      %4430 = vmatprep.subr.bf16.mxu0 0
      %4431 = vmatpush2.bf16.msra.mxu0 %v4134
      %4432 = vmatprep.subr.bf16.mxu0 0
      %4433 = vmatpush2.bf16.msra.mxu0 %v4133
      %4434 = vmatprep.subr.bf16.mxu0 0
      %4435 = vmatpush2.bf16.msra.mxu0 %v4132
      %4436 = vmatprep.subr.bf16.mxu0 0
      %4437 = vmatpush2.bf16.msra.mxu0 %v4131
      %4438 = vmatprep.subr.bf16.mxu0 0
      %4439 = vmatpush2.bf16.msra.mxu0 %v4130
      %4440 = vmatprep.subr.bf16.mxu0 0
      %4441 = vmatpush2.bf16.msra.mxu0 %v4129
      %4442 = vmatprep.mubr.bf16.mxu0 %v3532
      %4443 = vmatmul.mubr.bf16.gmra.mxu0 %v3531
      %v4444 = vpop.f32.mrf.mxu0
      %v4445 = vadd.f32 %v4284, %v4444
      %v4446 = vpop.f32.mrf.mxu0
      %v4447 = vpop.f32.mrf.mxu0
      %v4448 = vadd.f32 %v4287, %v4447
      %v4449 = vpop.f32.mrf.mxu0
      %4450 = vmatprep.mubr.bf16.mxu0 %v3541
      %4451 = vmatmul.mubr.bf16.gmra.mxu0 %v3540
      %v4452 = vpop.f32.mrf.mxu0
      %v4453 = vadd.f32 %v4292, %v4452
      %v4454 = vpop.f32.mrf.mxu0
      %v4455 = vpop.f32.mrf.mxu0
      %v4456 = vadd.f32 %v4295, %v4455
      %v4457 = vpop.f32.mrf.mxu0
      %4458 = vmatprep.mubr.bf16.mxu0 %v3550
      %4459 = vmatmul.mubr.bf16.gmra.mxu0 %v3549
      %v4460 = vpop.f32.mrf.mxu0
      %v4461 = vadd.f32 %v4300, %v4460
      %v4462 = vpop.f32.mrf.mxu0
      %v4463 = vpop.f32.mrf.mxu0
      %v4464 = vadd.f32 %v4303, %v4463
      %v4465 = vpop.f32.mrf.mxu0
      %4466 = vmatprep.mubr.bf16.mxu0 %v3559
      %4467 = vmatmul.mubr.bf16.gmra.mxu0 %v3558
      %v4468 = vpop.f32.mrf.mxu0
      %v4469 = vadd.f32 %v4308, %v4468
      %v4470 = vpop.f32.mrf.mxu0
      %v4471 = vpop.f32.mrf.mxu0
      %v4472 = vadd.f32 %v4311, %v4471
      %v4473 = vpop.f32.mrf.mxu0
      %4474 = vmatprep.mubr.bf16.mxu0 %v3568
      %4475 = vmatmul.mubr.bf16.gmra.mxu0 %v3567
      %v4476 = vpop.f32.mrf.mxu0
      %v4477 = vadd.f32 %v4316, %v4476
      %v4478 = vpop.f32.mrf.mxu0
      %v4479 = vpop.f32.mrf.mxu0
      %v4480 = vadd.f32 %v4319, %v4479
      %v4481 = vpop.f32.mrf.mxu0
      %4482 = vmatprep.mubr.bf16.mxu0 %v3577
      %4483 = vmatmul.mubr.bf16.gmra.mxu0 %v3576
      %v4484 = vpop.f32.mrf.mxu0
      %v4485 = vadd.f32 %v4324, %v4484
      %v4486 = vpop.f32.mrf.mxu0
      %v4487 = vpop.f32.mrf.mxu0
      %v4488 = vadd.f32 %v4327, %v4487
      %v4489 = vpop.f32.mrf.mxu0
      %4490 = vmatprep.mubr.bf16.mxu0 %v3586
      %4491 = vmatmul.mubr.bf16.gmra.mxu0 %v3585
      %v4492 = vpop.f32.mrf.mxu0
      %v4493 = vadd.f32 %v4332, %v4492
      %v4494 = vpop.f32.mrf.mxu0
      %v4495 = vpop.f32.mrf.mxu0
      %v4496 = vadd.f32 %v4335, %v4495
      %v4497 = vpop.f32.mrf.mxu0
      %4498 = vmatprep.mubr.bf16.mxu0 %v3595
      %4499 = vmatmul.mubr.bf16.gmra.mxu0 %v3594
      %v4500 = vpop.f32.mrf.mxu0
      %v4501 = vadd.f32 %v4340, %v4500
      %v4502 = vpop.f32.mrf.mxu0
      %v4503 = vpop.f32.mrf.mxu0
      %v4504 = vadd.f32 %v4343, %v4503
      %v4505 = vpop.f32.mrf.mxu0
      %4506 = vmatprep.mubr.bf16.mxu0 %v3604
      %4507 = vmatmul.mubr.bf16.gmra.mxu0 %v3603
      %v4508 = vpop.f32.mrf.mxu0
      %v4509 = vadd.f32 %v4348, %v4508
      %v4510 = vpop.f32.mrf.mxu0
      %v4511 = vpop.f32.mrf.mxu0
      %v4512 = vadd.f32 %v4351, %v4511
      %v4513 = vpop.f32.mrf.mxu0
      %4514 = vmatprep.mubr.bf16.mxu0 %v3613
      %4515 = vmatmul.mubr.bf16.gmra.mxu0 %v3612
      %v4516 = vpop.f32.mrf.mxu0
      %v4517 = vadd.f32 %v4356, %v4516
      %v4518 = vpop.f32.mrf.mxu0
      %v4519 = vpop.f32.mrf.mxu0
      %v4520 = vadd.f32 %v4359, %v4519
      %v4521 = vpop.f32.mrf.mxu0
      %4522 = vmatprep.mubr.bf16.mxu0 %v3622
      %4523 = vmatmul.mubr.bf16.gmra.mxu0 %v3621
      %v4524 = vpop.f32.mrf.mxu0
      %v4525 = vadd.f32 %v4364, %v4524
      %v4526 = vpop.f32.mrf.mxu0
      %v4527 = vpop.f32.mrf.mxu0
      %v4528 = vadd.f32 %v4367, %v4527
      %v4529 = vpop.f32.mrf.mxu0
      %4530 = vmatprep.mubr.bf16.mxu0 %v3631
      %4531 = vmatmul.mubr.bf16.gmra.mxu0 %v3630
      %v4532 = vpop.f32.mrf.mxu0
      %v4533 = vadd.f32 %v4372, %v4532
      %v4534 = vpop.f32.mrf.mxu0
      %v4535 = vpop.f32.mrf.mxu0
      %v4536 = vadd.f32 %v4375, %v4535
      %v4537 = vpop.f32.mrf.mxu0
      %4538 = vmatprep.mubr.bf16.mxu0 %v3640
      %4539 = vmatmul.mubr.bf16.gmra.mxu0 %v3639
      %v4540 = vpop.f32.mrf.mxu0
      %v4541 = vadd.f32 %v4380, %v4540
      %v4542 = vpop.f32.mrf.mxu0
      %v4543 = vpop.f32.mrf.mxu0
      %v4544 = vadd.f32 %v4383, %v4543
      %v4545 = vpop.f32.mrf.mxu0
      %4546 = vmatprep.mubr.bf16.mxu0 %v3649
      %4547 = vmatmul.mubr.bf16.gmra.mxu0 %v3648
      %v4548 = vpop.f32.mrf.mxu0
      %v4549 = vadd.f32 %v4388, %v4548
      %v4550 = vpop.f32.mrf.mxu0
      %v4551 = vpop.f32.mrf.mxu0
      %v4552 = vadd.f32 %v4391, %v4551
      %v4553 = vpop.f32.mrf.mxu0
      %4554 = vmatprep.mubr.bf16.mxu0 %v3658
      %4555 = vmatmul.mubr.bf16.gmra.mxu0 %v3657
      %v4556 = vpop.f32.mrf.mxu0
      %v4557 = vadd.f32 %v4396, %v4556
      %v4558 = vpop.f32.mrf.mxu0
      %v4559 = vpop.f32.mrf.mxu0
      %v4560 = vadd.f32 %v4399, %v4559
      %v4561 = vpop.f32.mrf.mxu0
      %4562 = vmatprep.mubr.bf16.mxu0 %v3667
      %4563 = vmatmul.mubr.bf16.gmra.mxu0 %v3666
      %v4564 = vpop.f32.mrf.mxu0
      %v4565 = vadd.f32 %v4404, %v4564
      %v4566 = vpop.f32.mrf.mxu0
      %v4567 = vpop.f32.mrf.mxu0
      %v4568 = vadd.f32 %v4407, %v4567
      %v4569 = vpop.f32.mrf.mxu0
      %4570 = vdwg.mxu0
      %4571 = vmatprep.subr.bf16.mxu0 0
      %4572 = vmatpush1.bf16.msra.mxu0 %v4144
      %4573 = vmatprep.subr.bf16.mxu0 0
      %4574 = vmatpush1.bf16.msra.mxu0 %v4143
      %4575 = vmatprep.subr.bf16.mxu0 0
      %4576 = vmatpush1.bf16.msra.mxu0 %v4142
      %4577 = vmatprep.subr.bf16.mxu0 0
      %4578 = vmatpush1.bf16.msra.mxu0 %v4141
      %4579 = vmatprep.subr.bf16.mxu0 0
      %4580 = vmatpush1.bf16.msra.mxu0 %v4140
      %4581 = vmatprep.subr.bf16.mxu0 0
      %4582 = vmatpush1.bf16.msra.mxu0 %v4139
      %4583 = vmatprep.subr.bf16.mxu0 0
      %4584 = vmatpush1.bf16.msra.mxu0 %v4138
      %4585 = vmatprep.subr.bf16.mxu0 0
      %4586 = vmatpush1.bf16.msra.mxu0 %v4137
      %4587 = vmatprep.subr.bf16.mxu0 0
      %4588 = vmatpush2.bf16.msra.mxu0 %v4152
      %4589 = vmatprep.subr.bf16.mxu0 0
      %4590 = vmatpush2.bf16.msra.mxu0 %v4151
      %4591 = vmatprep.subr.bf16.mxu0 0
      %4592 = vmatpush2.bf16.msra.mxu0 %v4150
      %4593 = vmatprep.subr.bf16.mxu0 0
      %4594 = vmatpush2.bf16.msra.mxu0 %v4149
      %4595 = vmatprep.subr.bf16.mxu0 0
      %4596 = vmatpush2.bf16.msra.mxu0 %v4148
      %4597 = vmatprep.subr.bf16.mxu0 0
      %4598 = vmatpush2.bf16.msra.mxu0 %v4147
      %4599 = vmatprep.subr.bf16.mxu0 0
      %4600 = vmatpush2.bf16.msra.mxu0 %v4146
      %4601 = vmatprep.subr.bf16.mxu0 0
      %4602 = vmatpush2.bf16.msra.mxu0 %v4145
      %4603 = vmatprep.mubr.bf16.mxu0 %v3534
      %4604 = vmatmul.mubr.bf16.gmra.mxu0 %v3533
      %v4605 = vpop.f32.mrf.mxu0
      %v4606 = vadd.f32 %v4445, %v4605
      %v4607 = vpop.f32.mrf.mxu0
      %v4608 = vpop.f32.mrf.mxu0
      %v4609 = vadd.f32 %v4448, %v4608
      %v4610 = vpop.f32.mrf.mxu0
      %4611 = vmatprep.mubr.bf16.mxu0 %v3543
      %4612 = vmatmul.mubr.bf16.gmra.mxu0 %v3542
      %v4613 = vpop.f32.mrf.mxu0
      %v4614 = vadd.f32 %v4453, %v4613
      %v4615 = vpop.f32.mrf.mxu0
      %v4616 = vpop.f32.mrf.mxu0
      %v4617 = vadd.f32 %v4456, %v4616
      %v4618 = vpop.f32.mrf.mxu0
      %4619 = vmatprep.mubr.bf16.mxu0 %v3552
      %4620 = vmatmul.mubr.bf16.gmra.mxu0 %v3551
      %v4621 = vpop.f32.mrf.mxu0
      %v4622 = vadd.f32 %v4461, %v4621
      %v4623 = vpop.f32.mrf.mxu0
      %v4624 = vpop.f32.mrf.mxu0
      %v4625 = vadd.f32 %v4464, %v4624
      %v4626 = vpop.f32.mrf.mxu0
      %4627 = vmatprep.mubr.bf16.mxu0 %v3561
      %4628 = vmatmul.mubr.bf16.gmra.mxu0 %v3560
      %v4629 = vpop.f32.mrf.mxu0
      %v4630 = vadd.f32 %v4469, %v4629
      %v4631 = vpop.f32.mrf.mxu0
      %v4632 = vpop.f32.mrf.mxu0
      %v4633 = vadd.f32 %v4472, %v4632
      %v4634 = vpop.f32.mrf.mxu0
      %4635 = vmatprep.mubr.bf16.mxu0 %v3570
      %4636 = vmatmul.mubr.bf16.gmra.mxu0 %v3569
      %v4637 = vpop.f32.mrf.mxu0
      %v4638 = vadd.f32 %v4477, %v4637
      %v4639 = vpop.f32.mrf.mxu0
      %v4640 = vpop.f32.mrf.mxu0
      %v4641 = vadd.f32 %v4480, %v4640
      %v4642 = vpop.f32.mrf.mxu0
      %4643 = vmatprep.mubr.bf16.mxu0 %v3579
      %4644 = vmatmul.mubr.bf16.gmra.mxu0 %v3578
      %v4645 = vpop.f32.mrf.mxu0
      %v4646 = vadd.f32 %v4485, %v4645
      %v4647 = vpop.f32.mrf.mxu0
      %v4648 = vpop.f32.mrf.mxu0
      %v4649 = vadd.f32 %v4488, %v4648
      %v4650 = vpop.f32.mrf.mxu0
      %4651 = vmatprep.mubr.bf16.mxu0 %v3588
      %4652 = vmatmul.mubr.bf16.gmra.mxu0 %v3587
      %v4653 = vpop.f32.mrf.mxu0
      %v4654 = vadd.f32 %v4493, %v4653
      %v4655 = vpop.f32.mrf.mxu0
      %v4656 = vpop.f32.mrf.mxu0
      %v4657 = vadd.f32 %v4496, %v4656
      %v4658 = vpop.f32.mrf.mxu0
      %4659 = vmatprep.mubr.bf16.mxu0 %v3597
      %4660 = vmatmul.mubr.bf16.gmra.mxu0 %v3596
      %v4661 = vpop.f32.mrf.mxu0
      %v4662 = vadd.f32 %v4501, %v4661
      %v4663 = vpop.f32.mrf.mxu0
      %v4664 = vpop.f32.mrf.mxu0
      %v4665 = vadd.f32 %v4504, %v4664
      %v4666 = vpop.f32.mrf.mxu0
      %4667 = vmatprep.mubr.bf16.mxu0 %v3606
      %4668 = vmatmul.mubr.bf16.gmra.mxu0 %v3605
      %v4669 = vpop.f32.mrf.mxu0
      %v4670 = vadd.f32 %v4509, %v4669
      %v4671 = vpop.f32.mrf.mxu0
      %v4672 = vpop.f32.mrf.mxu0
      %v4673 = vadd.f32 %v4512, %v4672
      %v4674 = vpop.f32.mrf.mxu0
      %4675 = vmatprep.mubr.bf16.mxu0 %v3615
      %4676 = vmatmul.mubr.bf16.gmra.mxu0 %v3614
      %v4677 = vpop.f32.mrf.mxu0
      %v4678 = vadd.f32 %v4517, %v4677
      %v4679 = vpop.f32.mrf.mxu0
      %v4680 = vpop.f32.mrf.mxu0
      %v4681 = vadd.f32 %v4520, %v4680
      %v4682 = vpop.f32.mrf.mxu0
      %4683 = vmatprep.mubr.bf16.mxu0 %v3624
      %4684 = vmatmul.mubr.bf16.gmra.mxu0 %v3623
      %v4685 = vpop.f32.mrf.mxu0
      %v4686 = vadd.f32 %v4525, %v4685
      %v4687 = vpop.f32.mrf.mxu0
      %v4688 = vpop.f32.mrf.mxu0
      %v4689 = vadd.f32 %v4528, %v4688
      %v4690 = vpop.f32.mrf.mxu0
      %4691 = vmatprep.mubr.bf16.mxu0 %v3633
      %4692 = vmatmul.mubr.bf16.gmra.mxu0 %v3632
      %v4693 = vpop.f32.mrf.mxu0
      %v4694 = vadd.f32 %v4533, %v4693
      %v4695 = vpop.f32.mrf.mxu0
      %v4696 = vpop.f32.mrf.mxu0
      %v4697 = vadd.f32 %v4536, %v4696
      %v4698 = vpop.f32.mrf.mxu0
      %4699 = vmatprep.mubr.bf16.mxu0 %v3642
      %4700 = vmatmul.mubr.bf16.gmra.mxu0 %v3641
      %v4701 = vpop.f32.mrf.mxu0
      %v4702 = vadd.f32 %v4541, %v4701
      %v4703 = vpop.f32.mrf.mxu0
      %v4704 = vpop.f32.mrf.mxu0
      %v4705 = vadd.f32 %v4544, %v4704
      %v4706 = vpop.f32.mrf.mxu0
      %4707 = vmatprep.mubr.bf16.mxu0 %v3651
      %4708 = vmatmul.mubr.bf16.gmra.mxu0 %v3650
      %v4709 = vpop.f32.mrf.mxu0
      %v4710 = vadd.f32 %v4549, %v4709
      %v4711 = vpop.f32.mrf.mxu0
      %v4712 = vpop.f32.mrf.mxu0
      %v4713 = vadd.f32 %v4552, %v4712
      %v4714 = vpop.f32.mrf.mxu0
      %4715 = vmatprep.mubr.bf16.mxu0 %v3660
      %4716 = vmatmul.mubr.bf16.gmra.mxu0 %v3659
      %v4717 = vpop.f32.mrf.mxu0
      %v4718 = vadd.f32 %v4557, %v4717
      %v4719 = vpop.f32.mrf.mxu0
      %v4720 = vpop.f32.mrf.mxu0
      %v4721 = vadd.f32 %v4560, %v4720
      %v4722 = vpop.f32.mrf.mxu0
      %4723 = vmatprep.mubr.bf16.mxu0 %v3669
      %4724 = vmatmul.mubr.bf16.gmra.mxu0 %v3668
      %v4725 = vpop.f32.mrf.mxu0
      %v4726 = vadd.f32 %v4565, %v4725
      %v4727 = vpop.f32.mrf.mxu0
      %v4728 = vpop.f32.mrf.mxu0
      %v4729 = vadd.f32 %v4568, %v4728
      %v4730 = vpop.f32.mrf.mxu0
      %4731 = vdwg.mxu0
      %4732 = vmatprep.subr.bf16.mxu0 0
      %4733 = vmatpush1.bf16.msra.mxu0 %v4160
      %4734 = vmatprep.subr.bf16.mxu0 0
      %4735 = vmatpush1.bf16.msra.mxu0 %v4159
      %4736 = vmatprep.subr.bf16.mxu0 0
      %4737 = vmatpush1.bf16.msra.mxu0 %v4158
      %4738 = vmatprep.subr.bf16.mxu0 0
      %4739 = vmatpush1.bf16.msra.mxu0 %v4157
      %4740 = vmatprep.subr.bf16.mxu0 0
      %4741 = vmatpush1.bf16.msra.mxu0 %v4156
      %4742 = vmatprep.subr.bf16.mxu0 0
      %4743 = vmatpush1.bf16.msra.mxu0 %v4155
      %4744 = vmatprep.subr.bf16.mxu0 0
      %4745 = vmatpush1.bf16.msra.mxu0 %v4154
      %4746 = vmatprep.subr.bf16.mxu0 0
      %4747 = vmatpush1.bf16.msra.mxu0 %v4153
      %4748 = vmatprep.subr.bf16.mxu0 0
      %4749 = vmatpush2.bf16.msra.mxu0 %v4168
      %4750 = vmatprep.subr.bf16.mxu0 0
      %4751 = vmatpush2.bf16.msra.mxu0 %v4167
      %4752 = vmatprep.subr.bf16.mxu0 0
      %4753 = vmatpush2.bf16.msra.mxu0 %v4166
      %4754 = vmatprep.subr.bf16.mxu0 0
      %4755 = vmatpush2.bf16.msra.mxu0 %v4165
      %4756 = vmatprep.subr.bf16.mxu0 0
      %4757 = vmatpush2.bf16.msra.mxu0 %v4164
      %4758 = vmatprep.subr.bf16.mxu0 0
      %4759 = vmatpush2.bf16.msra.mxu0 %v4163
      %4760 = vmatprep.subr.bf16.mxu0 0
      %4761 = vmatpush2.bf16.msra.mxu0 %v4162
      %4762 = vmatprep.subr.bf16.mxu0 0
      %4763 = vmatpush2.bf16.msra.mxu0 %v4161
      %4764 = vmatprep.mubr.bf16.mxu0 %v3536
      %4765 = vmatmul.mubr.bf16.gmra.mxu0 %v3535
      %v4766 = vpop.f32.mrf.mxu0
      %v4767 = vadd.f32 %v4606, %v4766
      %v4768 = vpop.f32.mrf.mxu0
      %v4769 = vpop.f32.mrf.mxu0
      %v4770 = vadd.f32 %v4609, %v4769
      %v4771 = vpop.f32.mrf.mxu0
      %4772 = vmatprep.mubr.bf16.mxu0 %v3545
      %4773 = vmatmul.mubr.bf16.gmra.mxu0 %v3544
      %v4774 = vpop.f32.mrf.mxu0
      %v4775 = vadd.f32 %v4614, %v4774
      %v4776 = vpop.f32.mrf.mxu0
      %v4777 = vpop.f32.mrf.mxu0
      %v4778 = vadd.f32 %v4617, %v4777
      %v4779 = vpop.f32.mrf.mxu0
      %4780 = vmatprep.mubr.bf16.mxu0 %v3554
      %4781 = vmatmul.mubr.bf16.gmra.mxu0 %v3553
      %v4782 = vpop.f32.mrf.mxu0
      %v4783 = vadd.f32 %v4622, %v4782
      %v4784 = vpop.f32.mrf.mxu0
      %v4785 = vpop.f32.mrf.mxu0
      %v4786 = vadd.f32 %v4625, %v4785
      %v4787 = vpop.f32.mrf.mxu0
      %4788 = vmatprep.mubr.bf16.mxu0 %v3563
      %4789 = vmatmul.mubr.bf16.gmra.mxu0 %v3562
      %v4790 = vpop.f32.mrf.mxu0
      %v4791 = vadd.f32 %v4630, %v4790
      %v4792 = vpop.f32.mrf.mxu0
      %v4793 = vpop.f32.mrf.mxu0
      %v4794 = vadd.f32 %v4633, %v4793
      %v4795 = vpop.f32.mrf.mxu0
      %4796 = vmatprep.mubr.bf16.mxu0 %v3572
      %4797 = vmatmul.mubr.bf16.gmra.mxu0 %v3571
      %v4798 = vpop.f32.mrf.mxu0
      %v4799 = vadd.f32 %v4638, %v4798
      %v4800 = vpop.f32.mrf.mxu0
      %v4801 = vpop.f32.mrf.mxu0
      %v4802 = vadd.f32 %v4641, %v4801
      %v4803 = vpop.f32.mrf.mxu0
      %4804 = vmatprep.mubr.bf16.mxu0 %v3581
      %4805 = vmatmul.mubr.bf16.gmra.mxu0 %v3580
      %v4806 = vpop.f32.mrf.mxu0
      %v4807 = vadd.f32 %v4646, %v4806
      %v4808 = vpop.f32.mrf.mxu0
      %v4809 = vpop.f32.mrf.mxu0
      %v4810 = vadd.f32 %v4649, %v4809
      %v4811 = vpop.f32.mrf.mxu0
      %4812 = vmatprep.mubr.bf16.mxu0 %v3590
      %4813 = vmatmul.mubr.bf16.gmra.mxu0 %v3589
      %v4814 = vpop.f32.mrf.mxu0
      %v4815 = vadd.f32 %v4654, %v4814
      %v4816 = vpop.f32.mrf.mxu0
      %v4817 = vpop.f32.mrf.mxu0
      %v4818 = vadd.f32 %v4657, %v4817
      %v4819 = vpop.f32.mrf.mxu0
      %4820 = vmatprep.mubr.bf16.mxu0 %v3599
      %4821 = vmatmul.mubr.bf16.gmra.mxu0 %v3598
      %v4822 = vpop.f32.mrf.mxu0
      %v4823 = vadd.f32 %v4662, %v4822
      %v4824 = vpop.f32.mrf.mxu0
      %v4825 = vpop.f32.mrf.mxu0
      %v4826 = vadd.f32 %v4665, %v4825
      %v4827 = vpop.f32.mrf.mxu0
      %4828 = vmatprep.mubr.bf16.mxu0 %v3608
      %4829 = vmatmul.mubr.bf16.gmra.mxu0 %v3607
      %v4830 = vpop.f32.mrf.mxu0
      %v4831 = vadd.f32 %v4670, %v4830
      %v4832 = vpop.f32.mrf.mxu0
      %v4833 = vpop.f32.mrf.mxu0
      %v4834 = vadd.f32 %v4673, %v4833
      %v4835 = vpop.f32.mrf.mxu0
      %4836 = vmatprep.mubr.bf16.mxu0 %v3617
      %4837 = vmatmul.mubr.bf16.gmra.mxu0 %v3616
      %v4838 = vpop.f32.mrf.mxu0
      %v4839 = vadd.f32 %v4678, %v4838
      %v4840 = vpop.f32.mrf.mxu0
      %v4841 = vpop.f32.mrf.mxu0
      %v4842 = vadd.f32 %v4681, %v4841
      %v4843 = vpop.f32.mrf.mxu0
      %4844 = vmatprep.mubr.bf16.mxu0 %v3626
      %4845 = vmatmul.mubr.bf16.gmra.mxu0 %v3625
      %v4846 = vpop.f32.mrf.mxu0
      %v4847 = vadd.f32 %v4686, %v4846
      %v4848 = vpop.f32.mrf.mxu0
      %v4849 = vpop.f32.mrf.mxu0
      %v4850 = vadd.f32 %v4689, %v4849
      %v4851 = vpop.f32.mrf.mxu0
      %4852 = vmatprep.mubr.bf16.mxu0 %v3635
      %4853 = vmatmul.mubr.bf16.gmra.mxu0 %v3634
      %v4854 = vpop.f32.mrf.mxu0
      %v4855 = vadd.f32 %v4694, %v4854
      %v4856 = vpop.f32.mrf.mxu0
      %v4857 = vpop.f32.mrf.mxu0
      %v4858 = vadd.f32 %v4697, %v4857
      %v4859 = vpop.f32.mrf.mxu0
      %4860 = vmatprep.mubr.bf16.mxu0 %v3644
      %4861 = vmatmul.mubr.bf16.gmra.mxu0 %v3643
      %v4862 = vpop.f32.mrf.mxu0
      %v4863 = vadd.f32 %v4702, %v4862
      %v4864 = vpop.f32.mrf.mxu0
      %v4865 = vpop.f32.mrf.mxu0
      %v4866 = vadd.f32 %v4705, %v4865
      %v4867 = vpop.f32.mrf.mxu0
      %4868 = vmatprep.mubr.bf16.mxu0 %v3653
      %4869 = vmatmul.mubr.bf16.gmra.mxu0 %v3652
      %v4870 = vpop.f32.mrf.mxu0
      %v4871 = vadd.f32 %v4710, %v4870
      %v4872 = vpop.f32.mrf.mxu0
      %v4873 = vpop.f32.mrf.mxu0
      %v4874 = vadd.f32 %v4713, %v4873
      %v4875 = vpop.f32.mrf.mxu0
      %4876 = vmatprep.mubr.bf16.mxu0 %v3662
      %4877 = vmatmul.mubr.bf16.gmra.mxu0 %v3661
      %v4878 = vpop.f32.mrf.mxu0
      %v4879 = vadd.f32 %v4718, %v4878
      %v4880 = vpop.f32.mrf.mxu0
      %v4881 = vpop.f32.mrf.mxu0
      %v4882 = vadd.f32 %v4721, %v4881
      %v4883 = vpop.f32.mrf.mxu0
      %4884 = vmatprep.mubr.bf16.mxu0 %v3671
      %4885 = vmatmul.mubr.bf16.gmra.mxu0 %v3670
      %v4886 = vpop.f32.mrf.mxu0
      %v4887 = vadd.f32 %v4726, %v4886
      %v4888 = vpop.f32.mrf.mxu0
      %v4889 = vpop.f32.mrf.mxu0
      %v4890 = vadd.f32 %v4729, %v4889
      %v4891 = vpop.f32.mrf.mxu0
      %4892 = vdwg.mxu0
      %4893 = vmatprep.subr.bf16.mxu0 0
      %4894 = vmatpush1.bf16.msra.mxu0 %v4176
      %4895 = vmatprep.subr.bf16.mxu0 0
      %4896 = vmatpush1.bf16.msra.mxu0 %v4175
      %4897 = vmatprep.subr.bf16.mxu0 0
      %4898 = vmatpush1.bf16.msra.mxu0 %v4174
      %4899 = vmatprep.subr.bf16.mxu0 0
      %4900 = vmatpush1.bf16.msra.mxu0 %v4173
      %4901 = vmatprep.subr.bf16.mxu0 0
      %4902 = vmatpush1.bf16.msra.mxu0 %v4172
      %4903 = vmatprep.subr.bf16.mxu0 0
      %4904 = vmatpush1.bf16.msra.mxu0 %v4171
      %4905 = vmatprep.subr.bf16.mxu0 0
      %4906 = vmatpush1.bf16.msra.mxu0 %v4170
      %4907 = vmatprep.subr.bf16.mxu0 0
      %4908 = vmatpush1.bf16.msra.mxu0 %v4169
      %4909 = vmatprep.subr.bf16.mxu0 0
      %4910 = vmatpush2.bf16.msra.mxu0 0
      %4911 = vmatprep.subr.bf16.mxu0 0
      %4912 = vmatpush2.bf16.msra.mxu0 0
      %4913 = vmatprep.subr.bf16.mxu0 0
      %4914 = vmatpush2.bf16.msra.mxu0 0
      %4915 = vmatprep.subr.bf16.mxu0 0
      %4916 = vmatpush2.bf16.msra.mxu0 0
      %4917 = vmatprep.subr.bf16.mxu0 0
      %4918 = vmatpush2.bf16.msra.mxu0 0
      %4919 = vmatprep.subr.bf16.mxu0 0
      %4920 = vmatpush2.bf16.msra.mxu0 0
      %4921 = vmatprep.subr.bf16.mxu0 0
      %4922 = vmatpush2.bf16.msra.mxu0 0
      %4923 = vmatprep.subr.bf16.mxu0 0
      %4924 = vmatpush2.bf16.msra.mxu0 0
      %4925 = vmatprep.mubr.bf16.mxu0 0
      %4926 = vmatmul.mubr.bf16.gmra.mxu0 %v3537
      %v4927 = vpop.f32.mrf.mxu0
      %v4928 = vadd.f32 %v4767, %v4927
      %v4929 = vpop.f32.mrf.mxu0
      %v4930 = vpop.f32.mrf.mxu0
      %v4931 = vadd.f32 %v4770, %v4930
      %v4932 = vpop.f32.mrf.mxu0
      %4933 = vmatprep.mubr.bf16.mxu0 0
      %4934 = vmatmul.mubr.bf16.gmra.mxu0 %v3546
      %v4935 = vpop.f32.mrf.mxu0
      %v4936 = vadd.f32 %v4775, %v4935
      %v4937 = vpop.f32.mrf.mxu0
      %v4938 = vpop.f32.mrf.mxu0
      %v4939 = vadd.f32 %v4778, %v4938
      %v4940 = vpop.f32.mrf.mxu0
      %4941 = vmatprep.mubr.bf16.mxu0 0
      %4942 = vmatmul.mubr.bf16.gmra.mxu0 %v3555
      %v4943 = vpop.f32.mrf.mxu0
      %v4944 = vadd.f32 %v4783, %v4943
      %v4945 = vpop.f32.mrf.mxu0
      %v4946 = vpop.f32.mrf.mxu0
      %v4947 = vadd.f32 %v4786, %v4946
      %v4948 = vpop.f32.mrf.mxu0
      %4949 = vmatprep.mubr.bf16.mxu0 0
      %4950 = vmatmul.mubr.bf16.gmra.mxu0 %v3564
      %v4951 = vpop.f32.mrf.mxu0
      %v4952 = vadd.f32 %v4791, %v4951
      %v4953 = vpop.f32.mrf.mxu0
      %v4954 = vpop.f32.mrf.mxu0
      %v4955 = vadd.f32 %v4794, %v4954
      %v4956 = vpop.f32.mrf.mxu0
      %4957 = vmatprep.mubr.bf16.mxu0 0
      %4958 = vmatmul.mubr.bf16.gmra.mxu0 %v3573
      %v4959 = vpop.f32.mrf.mxu0
      %v4960 = vadd.f32 %v4799, %v4959
      %v4961 = vpop.f32.mrf.mxu0
      %v4962 = vpop.f32.mrf.mxu0
      %v4963 = vadd.f32 %v4802, %v4962
      %v4964 = vpop.f32.mrf.mxu0
      %4965 = vmatprep.mubr.bf16.mxu0 0
      %4966 = vmatmul.mubr.bf16.gmra.mxu0 %v3582
      %v4967 = vpop.f32.mrf.mxu0
      %v4968 = vadd.f32 %v4807, %v4967
      %v4969 = vpop.f32.mrf.mxu0
      %v4970 = vpop.f32.mrf.mxu0
      %v4971 = vadd.f32 %v4810, %v4970
      %v4972 = vpop.f32.mrf.mxu0
      %4973 = vmatprep.mubr.bf16.mxu0 0
      %4974 = vmatmul.mubr.bf16.gmra.mxu0 %v3591
      %v4975 = vpop.f32.mrf.mxu0
      %v4976 = vadd.f32 %v4815, %v4975
      %v4977 = vpop.f32.mrf.mxu0
      %v4978 = vpop.f32.mrf.mxu0
      %v4979 = vadd.f32 %v4818, %v4978
      %v4980 = vpop.f32.mrf.mxu0
      %4981 = vmatprep.mubr.bf16.mxu0 0
      %4982 = vmatmul.mubr.bf16.gmra.mxu0 %v3600
      %v4983 = vpop.f32.mrf.mxu0
      %v4984 = vadd.f32 %v4823, %v4983
      %v4985 = vpop.f32.mrf.mxu0
      %v4986 = vpop.f32.mrf.mxu0
      %v4987 = vadd.f32 %v4826, %v4986
      %v4988 = vpop.f32.mrf.mxu0
      %4989 = vmatprep.mubr.bf16.mxu0 0
      %4990 = vmatmul.mubr.bf16.gmra.mxu0 %v3609
      %v4991 = vpop.f32.mrf.mxu0
      %v4992 = vadd.f32 %v4831, %v4991
      %v4993 = vpop.f32.mrf.mxu0
      %v4994 = vpop.f32.mrf.mxu0
      %v4995 = vadd.f32 %v4834, %v4994
      %v4996 = vpop.f32.mrf.mxu0
      %4997 = vmatprep.mubr.bf16.mxu0 0
      %4998 = vmatmul.mubr.bf16.gmra.mxu0 %v3618
      %v4999 = vpop.f32.mrf.mxu0
      %v5000 = vadd.f32 %v4839, %v4999
      %v5001 = vpop.f32.mrf.mxu0
      %v5002 = vpop.f32.mrf.mxu0
      %v5003 = vadd.f32 %v4842, %v5002
      %v5004 = vpop.f32.mrf.mxu0
      %5005 = vmatprep.mubr.bf16.mxu0 0
      %5006 = vmatmul.mubr.bf16.gmra.mxu0 %v3627
      %v5007 = vpop.f32.mrf.mxu0
      %v5008 = vadd.f32 %v4847, %v5007
      %v5009 = vpop.f32.mrf.mxu0
      %v5010 = vpop.f32.mrf.mxu0
      %v5011 = vadd.f32 %v4850, %v5010
      %v5012 = vpop.f32.mrf.mxu0
      %5013 = vmatprep.mubr.bf16.mxu0 0
      %5014 = vmatmul.mubr.bf16.gmra.mxu0 %v3636
      %v5015 = vpop.f32.mrf.mxu0
      %v5016 = vadd.f32 %v4855, %v5015
      %v5017 = vpop.f32.mrf.mxu0
      %v5018 = vpop.f32.mrf.mxu0
      %v5019 = vadd.f32 %v4858, %v5018
      %v5020 = vpop.f32.mrf.mxu0
      %5021 = vmatprep.mubr.bf16.mxu0 0
      %5022 = vmatmul.mubr.bf16.gmra.mxu0 %v3645
      %v5023 = vpop.f32.mrf.mxu0
      %v5024 = vadd.f32 %v4863, %v5023
      %v5025 = vpop.f32.mrf.mxu0
      %v5026 = vpop.f32.mrf.mxu0
      %v5027 = vadd.f32 %v4866, %v5026
      %v5028 = vpop.f32.mrf.mxu0
      %5029 = vmatprep.mubr.bf16.mxu0 0
      %5030 = vmatmul.mubr.bf16.gmra.mxu0 %v3654
      %v5031 = vpop.f32.mrf.mxu0
      %v5032 = vadd.f32 %v4871, %v5031
      %v5033 = vpop.f32.mrf.mxu0
      %v5034 = vpop.f32.mrf.mxu0
      %v5035 = vadd.f32 %v4874, %v5034
      %v5036 = vpop.f32.mrf.mxu0
      %5037 = vmatprep.mubr.bf16.mxu0 0
      %5038 = vmatmul.mubr.bf16.gmra.mxu0 %v3663
      %v5039 = vpop.f32.mrf.mxu0
      %v5040 = vadd.f32 %v4879, %v5039
      %v5041 = vpop.f32.mrf.mxu0
      %v5042 = vpop.f32.mrf.mxu0
      %v5043 = vadd.f32 %v4882, %v5042
      %v5044 = vpop.f32.mrf.mxu0
      %5045 = vmatprep.mubr.bf16.mxu0 0
      %5046 = vmatmul.mubr.bf16.gmra.mxu0 %v3672
      %v5047 = vpop.f32.mrf.mxu0
      %v5048 = vadd.f32 %v4887, %v5047
      %v5049 = vpop.f32.mrf.mxu0
      %v5050 = vpop.f32.mrf.mxu0
      %v5051 = vadd.f32 %v4890, %v5050
      %v5052 = vpop.f32.mrf.mxu0
      %5053 = vdwg.mxu0
      %v5054 = vpack.c.bf16 %v4931, %v4928
      %v5055 = vpack.c.bf16 %v4939, %v4936
      %v5056 = vpack.c.bf16 %v4947, %v4944
      %v5057 = vpack.c.bf16 %v4955, %v4952
      %v5058 = vpack.c.bf16 %v4963, %v4960
      %v5059 = vpack.c.bf16 %v4971, %v4968
      %v5060 = vpack.c.bf16 %v4979, %v4976
      %v5061 = vpack.c.bf16 %v4987, %v4984
      %v5062 = vpack.c.bf16 %v4995, %v4992
      %v5063 = vpack.c.bf16 %v5003, %v5000
      %v5064 = vpack.c.bf16 %v5011, %v5008
      %v5065 = vpack.c.bf16 %v5019, %v5016
      %v5066 = vpack.c.bf16 %v5027, %v5024
      %v5067 = vpack.c.bf16 %v5035, %v5032
      %v5068 = vpack.c.bf16 %v5043, %v5040
      %v5069 = vpack.c.bf16 %v5051, %v5048
      %v5086 = vunpack.c.l.b16 %v5054
      %v5087 = vunpack.c.h.b16 %v5054
      %v5088 = vunpack.c.l.b16 %v5055
      %v5089 = vunpack.c.h.b16 %v5055
      %v5090 = vunpack.c.l.b16 %v5056
      %v5091 = vunpack.c.h.b16 %v5056
      %v5092 = vunpack.c.l.b16 %v5057
      %v5093 = vunpack.c.h.b16 %v5057
      %v5094 = vunpack.c.l.b16 %v5058
      %v5095 = vunpack.c.h.b16 %v5058
      %v5096 = vunpack.c.l.b16 %v5059
      %v5097 = vunpack.c.h.b16 %v5059
      %v5098 = vunpack.c.l.b16 %v5060
      %v5099 = vunpack.c.h.b16 %v5060
      %v5100 = vunpack.c.l.b16 %v5061
      %v5101 = vunpack.c.h.b16 %v5061
      %v5102 = vunpack.c.l.b16 %v5062
      %v5103 = vunpack.c.h.b16 %v5062
      %v5104 = vunpack.c.l.b16 %v5063
      %v5105 = vunpack.c.h.b16 %v5063
      %v5106 = vunpack.c.l.b16 %v5064
      %v5107 = vunpack.c.h.b16 %v5064
      %v5108 = vunpack.c.l.b16 %v5065
      %v5109 = vunpack.c.h.b16 %v5065
      %v5110 = vunpack.c.l.b16 %v5066
      %v5111 = vunpack.c.h.b16 %v5066
      %v5112 = vunpack.c.l.b16 %v5067
      %v5113 = vunpack.c.h.b16 %v5067
      %v5114 = vunpack.c.l.b16 %v5068
      %v5115 = vunpack.c.h.b16 %v5068
      %v5116 = vunpack.c.l.b16 %v5069
      %v5117 = vunpack.c.h.b16 %v5069
      %v5118 = vpack.c.b16 %v5086, %v5086
      %v5119 = vpack.c.b16 %v5087, %v5087
      %v5120 = vpack.c.b16 %v5088, %v5088
      %v5121 = vpack.c.b16 %v5089, %v5089
      %v5122 = vpack.c.b16 %v5090, %v5090
      %v5123 = vpack.c.b16 %v5091, %v5091
      %v5124 = vpack.c.b16 %v5092, %v5092
      %v5125 = vpack.c.b16 %v5093, %v5093
      %v5126 = vpack.c.b16 %v5094, %v5094
      %v5127 = vpack.c.b16 %v5095, %v5095
      %v5128 = vpack.c.b16 %v5096, %v5096
      %v5129 = vpack.c.b16 %v5097, %v5097
      %v5130 = vpack.c.b16 %v5098, %v5098
      %v5131 = vpack.c.b16 %v5099, %v5099
      %v5132 = vpack.c.b16 %v5100, %v5100
      %v5133 = vpack.c.b16 %v5101, %v5101
      %v5134 = vpack.c.b16 %v5102, %v5102
      %v5135 = vpack.c.b16 %v5103, %v5103
      %v5136 = vpack.c.b16 %v5104, %v5104
      %v5137 = vpack.c.b16 %v5105, %v5105
      %v5138 = vpack.c.b16 %v5106, %v5106
      %v5139 = vpack.c.b16 %v5107, %v5107
      %v5140 = vpack.c.b16 %v5108, %v5108
      %v5141 = vpack.c.b16 %v5109, %v5109
      %v5142 = vpack.c.b16 %v5110, %v5110
      %v5143 = vpack.c.b16 %v5111, %v5111
      %v5144 = vpack.c.b16 %v5112, %v5112
      %v5145 = vpack.c.b16 %v5113, %v5113
      %v5146 = vpack.c.b16 %v5114, %v5114
      %v5147 = vpack.c.b16 %v5115, %v5115
      %v5148 = vpack.c.b16 %v5116, %v5116
      %v5149 = vpack.c.b16 %v5117, %v5117
      %5182 = vst [vmem:[%s255] sm:$0xf] %v5118
      %5183 = vst [vmem:[%s255 + $0x4] sm:$0xf] %v5119
      %5184 = vst [vmem:[%s255 + $0x8] sm:$0xf] %v5120
      %5185 = vst [vmem:[%s255 + $0xc] sm:$0xf] %v5121
      %5186 = vst [vmem:[%s255 + $0x10] sm:$0xf] %v5122
      %5187 = vst [vmem:[%s255 + $0x14] sm:$0xf] %v5123
      %5188 = vst [vmem:[%s255 + $0x18] sm:$0xf] %v5124
      %5189 = vst [vmem:[%s255 + $0x1c] sm:$0xf] %v5125
      %5190 = vst [vmem:[%s255 + $0x20] sm:$0xf] %v5126
      %5191 = vst [vmem:[%s255 + $0x24] sm:$0xf] %v5127
      %5192 = vst [vmem:[%s255 + $0x28] sm:$0xf] %v5128
      %5193 = vst [vmem:[%s255 + $0x2c] sm:$0xf] %v5129
      %5194 = vst [vmem:[%s255 + $0x30] sm:$0xf] %v5130
      %5195 = vst [vmem:[%s255 + $0x34] sm:$0xf] %v5131
      %5196 = vst [vmem:[%s255 + $0x38] sm:$0xf] %v5132
      %5197 = vst [vmem:[%s255 + $0x3c] sm:$0xf] %v5133
      %5198 = vst [vmem:[%s255 + $0x40] sm:$0xf] %v5134
      %5199 = vst [vmem:[%s255 + $0x44] sm:$0xf] %v5135
      %5200 = vst [vmem:[%s255 + $0x48] sm:$0xf] %v5136
      %5201 = vst [vmem:[%s255 + $0x4c] sm:$0xf] %v5137
      %5202 = vst [vmem:[%s255 + $0x50] sm:$0xf] %v5138
      %5203 = vst [vmem:[%s255 + $0x54] sm:$0xf] %v5139
      %5204 = vst [vmem:[%s255 + $0x58] sm:$0xf] %v5140
      %5205 = vst [vmem:[%s255 + $0x5c] sm:$0xf] %v5141
      %5206 = vst [vmem:[%s255 + $0x60] sm:$0xf] %v5142
      %5207 = vst [vmem:[%s255 + $0x64] sm:$0xf] %v5143
      %5208 = vst [vmem:[%s255 + $0x68] sm:$0xf] %v5144
      %5209 = vst [vmem:[%s255 + $0x6c] sm:$0xf] %v5145
      %5210 = vst [vmem:[%s255 + $0x70] sm:$0xf] %v5146
      %5211 = vst [vmem:[%s255 + $0x74] sm:$0xf] %v5147
      %5212 = vst [vmem:[%s255 + $0x78] sm:$0xf] %v5148
      %5213 = vst [vmem:[%s255 + $0x7c] sm:$0xf] %v5149
      %v5214 = vadd.f32 %v4928, %v4931
      %v5215 = vadd.f32 %v5214, %v4936
      %v5216 = vadd.f32 %v5215, %v4939
      %v5217 = vadd.f32 %v5216, %v4944
      %v5218 = vadd.f32 %v5217, %v4947
      %v5219 = vadd.f32 %v5218, %v4952
      %v5220 = vadd.f32 %v5219, %v4955
      %v5221 = vadd.f32 %v5220, %v4960
      %v5222 = vadd.f32 %v5221, %v4963
      %v5223 = vadd.f32 %v5222, %v4968
      %v5224 = vadd.f32 %v5223, %v4971
      %v5225 = vadd.f32 %v5224, %v4976
      %v5226 = vadd.f32 %v5225, %v4979
      %v5227 = vadd.f32 %v5226, %v4984
      %v5228 = vadd.f32 %v5227, %v4987
      %v5229 = vadd.f32 %v5228, %v4992
      %v5230 = vadd.f32 %v5229, %v4995
      %v5231 = vadd.f32 %v5230, %v5000
      %v5232 = vadd.f32 %v5231, %v5003
      %v5233 = vadd.f32 %v5232, %v5008
      %v5234 = vadd.f32 %v5233, %v5011
      %v5235 = vadd.f32 %v5234, %v5016
      %v5236 = vadd.f32 %v5235, %v5019
      %v5237 = vadd.f32 %v5236, %v5024
      %v5238 = vadd.f32 %v5237, %v5027
      %v5239 = vadd.f32 %v5238, %v5032
      %v5240 = vadd.f32 %v5239, %v5035
      %v5241 = vadd.f32 %v5240, %v5040
      %v5242 = vadd.f32 %v5241, %v5043
      %v5243 = vadd.f32 %v5242, %v5048
      %v5244 = vadd.f32 %v5243, %v5051
      %v5245 = vrot.slane %v5244, 4
      %v5246 = vadd.f32 %v5244, %v5245
      %v5247 = vrot.slane %v5246, 2
      %v5248 = vadd.f32 %v5246, %v5247
      %v5249 = vrot.slane %v5248, 1
      %v5250 = vadd.f32 %v5248, %v5249
      %5251 = vst [vmem:[%s261] sm:$0x1] %v5250
      %v5252 = vmul.f32 %v4928, %v4928
      %v5253 = vmul.f32 %v4931, %v4931
      %v5254 = vmul.f32 %v4936, %v4936
      %v5255 = vmul.f32 %v4939, %v4939
      %v5256 = vmul.f32 %v4944, %v4944
      %v5257 = vmul.f32 %v4947, %v4947
      %v5258 = vmul.f32 %v4952, %v4952
      %v5259 = vmul.f32 %v4955, %v4955
      %v5260 = vmul.f32 %v4960, %v4960
      %v5261 = vmul.f32 %v4963, %v4963
      %v5262 = vmul.f32 %v4968, %v4968
      %v5263 = vmul.f32 %v4971, %v4971
      %v5264 = vmul.f32 %v4976, %v4976
      %v5265 = vmul.f32 %v4979, %v4979
      %v5266 = vmul.f32 %v4984, %v4984
      %v5267 = vmul.f32 %v4987, %v4987
      %v5268 = vmul.f32 %v4992, %v4992
      %v5269 = vmul.f32 %v4995, %v4995
      %v5270 = vmul.f32 %v5000, %v5000
      %v5271 = vmul.f32 %v5003, %v5003
      %v5272 = vmul.f32 %v5008, %v5008
      %v5273 = vmul.f32 %v5011, %v5011
      %v5274 = vmul.f32 %v5016, %v5016
      %v5275 = vmul.f32 %v5019, %v5019
      %v5276 = vmul.f32 %v5024, %v5024
      %v5277 = vmul.f32 %v5027, %v5027
      %v5278 = vmul.f32 %v5032, %v5032
      %v5279 = vmul.f32 %v5035, %v5035
      %v5280 = vmul.f32 %v5040, %v5040
      %v5281 = vmul.f32 %v5043, %v5043
      %v5282 = vmul.f32 %v5048, %v5048
      %v5283 = vmul.f32 %v5051, %v5051
      %v5284 = vadd.f32 %v5252, %v5253
      %v5285 = vadd.f32 %v5284, %v5254
      %v5286 = vadd.f32 %v5285, %v5255
      %v5287 = vadd.f32 %v5286, %v5256
      %v5288 = vadd.f32 %v5287, %v5257
      %v5289 = vadd.f32 %v5288, %v5258
      %v5290 = vadd.f32 %v5289, %v5259
      %v5291 = vadd.f32 %v5290, %v5260
      %v5292 = vadd.f32 %v5291, %v5261
      %v5293 = vadd.f32 %v5292, %v5262
      %v5294 = vadd.f32 %v5293, %v5263
      %v5295 = vadd.f32 %v5294, %v5264
      %v5296 = vadd.f32 %v5295, %v5265
      %v5297 = vadd.f32 %v5296, %v5266
      %v5298 = vadd.f32 %v5297, %v5267
      %v5299 = vadd.f32 %v5298, %v5268
      %v5300 = vadd.f32 %v5299, %v5269
      %v5301 = vadd.f32 %v5300, %v5270
      %v5302 = vadd.f32 %v5301, %v5271
      %v5303 = vadd.f32 %v5302, %v5272
      %v5304 = vadd.f32 %v5303, %v5273
      %v5305 = vadd.f32 %v5304, %v5274
      %v5306 = vadd.f32 %v5305, %v5275
      %v5307 = vadd.f32 %v5306, %v5276
      %v5308 = vadd.f32 %v5307, %v5277
      %v5309 = vadd.f32 %v5308, %v5278
      %v5310 = vadd.f32 %v5309, %v5279
      %v5311 = vadd.f32 %v5310, %v5280
      %v5312 = vadd.f32 %v5311, %v5281
      %v5313 = vadd.f32 %v5312, %v5282
      %v5314 = vadd.f32 %v5313, %v5283
      %v5315 = vrot.slane %v5314, 4
      %v5316 = vadd.f32 %v5314, %v5315
      %v5317 = vrot.slane %v5316, 2
      %v5318 = vadd.f32 %v5316, %v5317
      %v5319 = vrot.slane %v5318, 1
      %v5320 = vadd.f32 %v5318, %v5319
      %5321 = vst [vmem:[%s267] sm:$0x1] %v5320
      %p5322 = scmp.lt.s32.totalorder %s20, 1
      %s5323 = scalar_select %p5322, %s20, 1
      %p5324 = scmp.lt.s32.totalorder %s21, 0
      %s5325 = scalar_select %p5324, %s21, 0
      %s5326 = smul.addr %s5323, 32
      %s5327 = sadd.s32 %s5325, %s5326
      %s5328 = smul.addr %s5327, 4
      %s5329 = scalar_lea.vmem %s2, %s5328
      %p5330 = scmp.lt.s32.totalorder %s20, 1
      %s5331 = scalar_select %p5330, %s20, 1
      %p5332 = scmp.lt.s32.totalorder %s21, 0
      %s5333 = scalar_select %p5332, %s21, 0
      %s5334 = sadd.s32 %s5333, %s5331
      %s5335 = scalar_lea.vmem %s3, %s5334
      %p5336 = scmp.lt.s32.totalorder %s20, 1
      %s5337 = scalar_select %p5336, %s20, 1
      %p5338 = scmp.lt.s32.totalorder %s21, 0
      %s5339 = scalar_select %p5338, %s21, 0
      %s5340 = sadd.s32 %s5339, %s5337
      %s5341 = scalar_lea.vmem %s4, %s5340
      // Predicated region
      $region33: #{bottleneck_forward.3} parent=27 // pred_check
        %p5342 = pneg %p100
      $region34: #{bottleneck_forward.3} parent=27 // pred_check_branch
        %5344 = sbr.rel (%p5342) target = $region36
      $region35: #{bottleneck_forward.3} parent=27 // pred_region
        _
      $region36: #{bottleneck_forward.3} parent=27 // pred_fallthru
        _
      // Predicated region
      $region37: #{bottleneck_forward.3} parent=27 // pred_check
        %p5345 = pneg %p128
      $region38: #{bottleneck_forward.3} parent=27 // pred_check_branch
        %5347 = sbr.rel (%p5345) target = $region40
      $region39: #{bottleneck_forward.3} parent=27 // pred_region
        _
      $region40: #{bottleneck_forward.3} parent=27 // pred_fallthru
        _
      // Predicated region
      $region41: #{bottleneck_forward.3} parent=27 // pred_check
        %p5348 = pneg %p156
      $region42: #{bottleneck_forward.3} parent=27 // pred_check_branch
        %5350 = sbr.rel (%p5348) target = $region44
      $region43: #{bottleneck_forward.3} parent=27 // pred_region
        _
      $region44: #{bottleneck_forward.3} parent=27 // pred_fallthru
        _
    $region28: #{bottleneck_forward.3} parent=5 // pred_fallthru
      _
    %p5351 = scmp.le.s32.totalorder 2, %s11
    // Predicated region
    $region45: #{bottleneck_forward.3} parent=5 // pred_check
      %p5352 = pneg %p5351
    $region46: #{bottleneck_forward.3} parent=5 // pred_check_branch
      %5354 = sbr.rel (%p5352) target = $region48
    $region47: #{bottleneck_forward.3} parent=5 // pred_region
      %s5355 = ssub.s32 %s11, 2
      // Predicated region
      $region49: #{bottleneck_forward.3} parent=47 // pred_check
        %p5356 = pneg %p106
      $region50: #{bottleneck_forward.3} parent=47 // pred_check_branch
        %5358 = sbr.rel (%p5356) target = $region52
      $region51: #{bottleneck_forward.3} parent=47 // pred_region
        %p5359 = scmp.lt.s32.totalorder %s22, 1
        %s5360 = scalar_select %p5359, %s22, 1
        %p5361 = scmp.lt.s32.totalorder %s23, 0
        %s5362 = scalar_select %p5361, %s23, 0
        %s5363 = smul.addr %s5360, 32
        %s5364 = sadd.s32 %s5362, %s5363
        %s5365 = smul.addr %s5364, 4
        %s5366 = scalar_lea.vmem %s2, %s5365
      $region52: #{bottleneck_forward.3} parent=47 // pred_fallthru
        _
      // Predicated region
      $region53: #{bottleneck_forward.3} parent=47 // pred_check
        %p5367 = pneg %p134
      $region54: #{bottleneck_forward.3} parent=47 // pred_check_branch
        %5369 = sbr.rel (%p5367) target = $region56
      $region55: #{bottleneck_forward.3} parent=47 // pred_region
        %p5370 = scmp.lt.s32.totalorder %s22, 1
        %s5371 = scalar_select %p5370, %s22, 1
        %p5372 = scmp.lt.s32.totalorder %s23, 0
        %s5373 = scalar_select %p5372, %s23, 0
        %s5374 = sadd.s32 %s5373, %s5371
        %s5375 = scalar_lea.vmem %s3, %s5374
      $region56: #{bottleneck_forward.3} parent=47 // pred_fallthru
        _
      // Predicated region
      $region57: #{bottleneck_forward.3} parent=47 // pred_check
        %p5376 = pneg %p162
      $region58: #{bottleneck_forward.3} parent=47 // pred_check_branch
        %5378 = sbr.rel (%p5376) target = $region60
      $region59: #{bottleneck_forward.3} parent=47 // pred_region
        %p5379 = scmp.lt.s32.totalorder %s22, 1
        %s5380 = scalar_select %p5379, %s22, 1
        %p5381 = scmp.lt.s32.totalorder %s23, 0
        %s5382 = scalar_select %p5381, %s23, 0
        %s5383 = sadd.s32 %s5382, %s5380
        %s5384 = scalar_lea.vmem %s4, %s5383
      $region60: #{bottleneck_forward.3} parent=47 // pred_fallthru
        _
    $region48: #{bottleneck_forward.3} parent=5 // pred_fallthru
      _
  $region6: #{bottleneck_forward.3} parent=0 // loop_footer
    %s15 = sadd.s32 1, %s11
  $region7: #{bottleneck_forward.3} parent=0 // loop_footer_branch
    %10 = sbr.rel target = $region3
  $region8: #{bottleneck_forward.3} parent=0 // loop_exit
    _

// kernel: bottleneck_forward.4
$region0: #{bottleneck_forward.4}
  #allocation0 [shape = 'u32[]', space=smem, size = 0x4, offset = 0x4, fixed_abs, tag = 'smem constant byte address 0x4 - core index']
  #allocation1 [shape = 'u32[144,128]{1,0:T(1,128)}', space=vmem, size = 0x12000, scoped, tag = 'internal scratch']
  #allocation2 [shape = 'bf16[18,18,128]{2,1,0:T(8,128)(2,1)}', space=vmem, size = 0x1b000, scoped, tag = 'scratch operand']
  #allocation3 [shape = 'bf16[256,1152]{1,0:T(8,128)(2,1)}', space=vmem, size = 0x90000, scoped, tag = 'scratch operand']
  %s0 = inlined_call_operand.vmem [shape: bf16[2,256,128], index: 0, kind: input, shape index: {}]
  %s1 = inlined_call_operand.vmem [shape: f32[1,128], index: 1, kind: input, shape index: {}]
  %s2 = inlined_call_operand.vmem [shape: f32[1,128], index: 2, kind: input, shape index: {}]
  %s3 = inlined_call_operand.vmem [shape: bf16[1152,128], index: 3, kind: input, shape index: {}]
  %s4 = inlined_call_operand.vmem [shape: bf16[2,256,128], index: 4, kind: output, shape index: {0}]
  %s5 = inlined_call_operand.vmem [shape: f32[2,1,128], index: 5, kind: output, shape index: {1}]
  %s6 = inlined_call_operand.vmem [shape: f32[2,1,128], index: 6, kind: output, shape index: {2}]
  %7 = xla_tuple %s4, %s5, %s6
  %s8 = sld [smem:[#allocation0]]
  $region69: #{bottleneck_forward.4} parent=0
    _
  %s10 = ssub.s32 1, %s8
  %s11 = scalar_select 0, %s10, %s8
  loop: start=0, step=1, limit=4
  $region2: #{bottleneck_forward.4} parent=0 // loop_pre_header
    _
  $region3: #{bottleneck_forward.4} parent=0 // loop_header
    %s13 = sphi 0, %s17
    %p14 = scmp.ge.s32.totalorder %s13, 4
    %s20 = sphi 0, %s32
    %s21 = sphi 0, %s28
    %s22 = sphi 0, %s20
    %s23 = sphi 0, %s21
    %s24 = sphi 0, %s22
    %s25 = sphi 0, %s23
    %s35 = sphi 0, %s37
    %s38 = sphi 0, %s35
    %s39 = sphi 0, %s38
    %s55 = sphi 0, %s39
    %s59 = sphi 0, %s59
    %s61 = sphi 0, %s59
    %s62 = sphi 0, %s61
    %s76 = sphi 0, %s62
    %s80 = sphi 0, %s80
    %s82 = sphi 0, %s80
    %s83 = sphi 0, %s82
    %s97 = sphi 0, %s83
    %s103 = sphi 0, %s105
    %s106 = sphi 0, %s103
    %s107 = sphi 0, %s106
    %s123 = sphi 0, %s107
    %s131 = sphi 0, %s133
    %s134 = sphi 0, %s131
    %s135 = sphi 0, %s134
    %s151 = sphi 0, %s135
    %s159 = sphi 0, %s161
    %s162 = sphi 0, %s159
    %s163 = sphi 0, %s162
    %s179 = sphi 0, %s163
    %s187 = sphi 0, %s189
    %s190 = sphi 0, %s187
    %s191 = sphi 0, %s190
    %s207 = sphi 0, %s191
  $region4: #{bottleneck_forward.4} parent=0 // loop_header_branch
    %16 = sbr.rel (%p14) target = $region8
  $region5: #{bottleneck_forward.4} parent=0 // loop_body
    %s18 = ssub.s32 %s13, 1
    %s19 = ssub.s32 %s13, 2
    %s26 = sadd.s32 1, %s21
    %p27 = scmp.ge.s32.totalorder %s26, 1
    %s28 = scalar_select %p27, 0, %s26
    %s29 = sadd.s32 1, %s20
    %s30 = scalar_select %p27, %s29, %s20
    %p31 = scmp.ge.s32.totalorder %s30, 2
    %s32 = scalar_select %p31, 0, %s30
    %s33 = ssub.s32 %s20, %s32
    %p34 = scmp.eq.s32.totalorder %s33, 0
    %s36 = sadd.s32 %s35, 1
    %s37 = scalar_select %p34, %s35, %s36
    %p40 = pneg %p34
    %p41 = scmp.eq.s32.totalorder %s13, 1
    %p42 = por %p40, %p41
    %p43 = scmp.ne.s32.totalorder %s35, %s38
    %p44 = scmp.eq.s32.totalorder %s13, 0
    %p45 = por %p43, %p44
    %p46 = scmp.ne.s32.totalorder %s35, %s38
    %p47 = scmp.eq.s32.totalorder %s18, 1
    %p48 = por %p46, %p47
    %p49 = scmp.ne.s32.totalorder %s38, %s39
    %p50 = scmp.eq.s32.totalorder %s18, 0
    %p51 = por %p49, %p50
    %p52 = scmp.ne.s32.totalorder %s38, %s39
    %p53 = scmp.eq.s32.totalorder %s19, 1
    %p54 = por %p52, %p53
    %p56 = scmp.ne.s32.totalorder %s39, %s55
    %p57 = scmp.eq.s32.totalorder %s19, 0
    %p58 = por %p56, %p57
    %s60 = sadd.s32 %s59, 1
    %p63 = scmp.eq.s32.totalorder %s13, 1
    %p64 = scmp.ne.s32.totalorder %s59, %s61
    %p65 = scmp.eq.s32.totalorder %s13, 0
    %p66 = por %p64, %p65
    %p67 = scmp.ne.s32.totalorder %s59, %s61
    %p68 = scmp.eq.s32.totalorder %s18, 1
    %p69 = por %p67, %p68
    %p70 = scmp.ne.s32.totalorder %s61, %s62
    %p71 = scmp.eq.s32.totalorder %s18, 0
    %p72 = por %p70, %p71
    %p73 = scmp.ne.s32.totalorder %s61, %s62
    %p74 = scmp.eq.s32.totalorder %s19, 1
    %p75 = por %p73, %p74
    %p77 = scmp.ne.s32.totalorder %s62, %s76
    %p78 = scmp.eq.s32.totalorder %s19, 0
    %p79 = por %p77, %p78
    %s81 = sadd.s32 %s80, 1
    %p84 = scmp.eq.s32.totalorder %s13, 1
    %p85 = scmp.ne.s32.totalorder %s80, %s82
    %p86 = scmp.eq.s32.totalorder %s13, 0
    %p87 = por %p85, %p86
    %p88 = scmp.ne.s32.totalorder %s80, %s82
    %p89 = scmp.eq.s32.totalorder %s18, 1
    %p90 = por %p88, %p89
    %p91 = scmp.ne.s32.totalorder %s82, %s83
    %p92 = scmp.eq.s32.totalorder %s18, 0
    %p93 = por %p91, %p92
    %p94 = scmp.ne.s32.totalorder %s82, %s83
    %p95 = scmp.eq.s32.totalorder %s19, 1
    %p96 = por %p94, %p95
    %p98 = scmp.ne.s32.totalorder %s83, %s97
    %p99 = scmp.eq.s32.totalorder %s19, 0
    %p100 = por %p98, %p99
    %s101 = ssub.s32 %s21, %s28
    %p102 = scmp.eq.s32.totalorder %s101, 0
    %s104 = sadd.s32 %s103, 1
    %s105 = scalar_select %p102, %s103, %s104
    %p108 = pneg %p102
    %p109 = scmp.eq.s32.totalorder %s13, 1
    %p110 = por %p108, %p109
    %p111 = scmp.ne.s32.totalorder %s103, %s106
    %p112 = scmp.eq.s32.totalorder %s13, 0
    %p113 = por %p111, %p112
    %p114 = scmp.ne.s32.totalorder %s103, %s106
    %p115 = scmp.eq.s32.totalorder %s18, 1
    %p116 = por %p114, %p115
    %p117 = scmp.ne.s32.totalorder %s106, %s107
    %p118 = scmp.eq.s32.totalorder %s18, 0
    %p119 = por %p117, %p118
    %p120 = scmp.ne.s32.totalorder %s106, %s107
    %p121 = scmp.eq.s32.totalorder %s19, 1
    %p122 = por %p120, %p121
    %p124 = scmp.ne.s32.totalorder %s107, %s123
    %p125 = scmp.eq.s32.totalorder %s19, 0
    %p126 = por %p124, %p125
    %s127 = ssub.s32 %s20, %s32
    %s128 = ssub.s32 %s21, %s28
    %s129 = sor.u32 %s127, %s128
    %p130 = scmp.eq.s32.totalorder %s129, 0
    %s132 = sadd.s32 %s131, 1
    %s133 = scalar_select %p130, %s131, %s132
    %p136 = pneg %p130
    %p137 = scmp.eq.s32.totalorder %s13, 1
    %p138 = por %p136, %p137
    %p139 = scmp.ne.s32.totalorder %s131, %s134
    %p140 = scmp.eq.s32.totalorder %s13, 0
    %p141 = por %p139, %p140
    %p142 = scmp.ne.s32.totalorder %s131, %s134
    %p143 = scmp.eq.s32.totalorder %s18, 1
    %p144 = por %p142, %p143
    %p145 = scmp.ne.s32.totalorder %s134, %s135
    %p146 = scmp.eq.s32.totalorder %s18, 0
    %p147 = por %p145, %p146
    %p148 = scmp.ne.s32.totalorder %s134, %s135
    %p149 = scmp.eq.s32.totalorder %s19, 1
    %p150 = por %p148, %p149
    %p152 = scmp.ne.s32.totalorder %s135, %s151
    %p153 = scmp.eq.s32.totalorder %s19, 0
    %p154 = por %p152, %p153
    %s155 = ssub.s32 %s20, %s32
    %s156 = ssub.s32 %s21, %s28
    %s157 = sor.u32 %s155, %s156
    %p158 = scmp.eq.s32.totalorder %s157, 0
    %s160 = sadd.s32 %s159, 1
    %s161 = scalar_select %p158, %s159, %s160
    %p164 = pneg %p158
    %p165 = scmp.eq.s32.totalorder %s13, 1
    %p166 = por %p164, %p165
    %p167 = scmp.ne.s32.totalorder %s159, %s162
    %p168 = scmp.eq.s32.totalorder %s13, 0
    %p169 = por %p167, %p168
    %p170 = scmp.ne.s32.totalorder %s159, %s162
    %p171 = scmp.eq.s32.totalorder %s18, 1
    %p172 = por %p170, %p171
    %p173 = scmp.ne.s32.totalorder %s162, %s163
    %p174 = scmp.eq.s32.totalorder %s18, 0
    %p175 = por %p173, %p174
    %p176 = scmp.ne.s32.totalorder %s162, %s163
    %p177 = scmp.eq.s32.totalorder %s19, 1
    %p178 = por %p176, %p177
    %p180 = scmp.ne.s32.totalorder %s163, %s179
    %p181 = scmp.eq.s32.totalorder %s19, 0
    %p182 = por %p180, %p181
    %s183 = ssub.s32 %s20, %s32
    %s184 = ssub.s32 %s21, %s28
    %s185 = sor.u32 %s183, %s184
    %p186 = scmp.eq.s32.totalorder %s185, 0
    %s188 = sadd.s32 %s187, 1
    %s189 = scalar_select %p186, %s187, %s188
    %p192 = pneg %p186
    %p193 = scmp.eq.s32.totalorder %s13, 1
    %p194 = por %p192, %p193
    %p195 = scmp.ne.s32.totalorder %s187, %s190
    %p196 = scmp.eq.s32.totalorder %s13, 0
    %p197 = por %p195, %p196
    %p198 = scmp.ne.s32.totalorder %s187, %s190
    %p199 = scmp.eq.s32.totalorder %s18, 1
    %p200 = por %p198, %p199
    %p201 = scmp.ne.s32.totalorder %s190, %s191
    %p202 = scmp.eq.s32.totalorder %s18, 0
    %p203 = por %p201, %p202
    %p204 = scmp.ne.s32.totalorder %s190, %s191
    %p205 = scmp.eq.s32.totalorder %s19, 1
    %p206 = por %p204, %p205
    %p208 = scmp.ne.s32.totalorder %s191, %s207
    %p209 = scmp.eq.s32.totalorder %s19, 0
    %p210 = por %p208, %p209
    %p211 = scmp.le.s32.totalorder 1, %s13
    %p212 = scmp.lt.s32.totalorder %s13, 3
    %p213 = pnand %p211, %p212
    %p214 = pneg %p213
    // Predicated region
    $region9: #{bottleneck_forward.4} parent=5 // pred_check
      _
    $region10: #{bottleneck_forward.4} parent=5 // pred_check_branch
      %216 = sbr.rel (%p213) target = $region12
    $region11: #{bottleneck_forward.4} parent=5 // pred_region
      %s217 = ssub.s32 %s13, 1
      // Predicated region
      $region13: #{bottleneck_forward.4} parent=11 // pred_check
        %p218 = pneg %p72
      $region14: #{bottleneck_forward.4} parent=11 // pred_check_branch
        %220 = sbr.rel (%p218) target = $region16
      $region15: #{bottleneck_forward.4} parent=11 // pred_region
        _
      $region16: #{bottleneck_forward.4} parent=11 // pred_fallthru
        _
      // Predicated region
      $region17: #{bottleneck_forward.4} parent=11 // pred_check
        %p221 = pneg %p93
      $region18: #{bottleneck_forward.4} parent=11 // pred_check_branch
        %223 = sbr.rel (%p221) target = $region20
      $region19: #{bottleneck_forward.4} parent=11 // pred_region
        _
      $region20: #{bottleneck_forward.4} parent=11 // pred_fallthru
        _
      // Predicated region
      $region21: #{bottleneck_forward.4} parent=11 // pred_check
        %p224 = pneg %p119
      $region22: #{bottleneck_forward.4} parent=11 // pred_check_branch
        %226 = sbr.rel (%p224) target = $region24
      $region23: #{bottleneck_forward.4} parent=11 // pred_region
        %p227 = scmp.lt.s32.totalorder %s23, 0
        %s228 = scalar_select %p227, %s23, 0
        %s229 = smul.addr %s228, 4
        %s230 = scalar_lea.vmem %s3, %s229
      $region24: #{bottleneck_forward.4} parent=11 // pred_fallthru
        _
    $region12: #{bottleneck_forward.4} parent=5 // pred_fallthru
      _
    %p231 = scmp.lt.s32.totalorder %s13, 2
    // Predicated region
    $region25: #{bottleneck_forward.4} parent=5 // pred_check
      %p232 = pneg %p231
    $region26: #{bottleneck_forward.4} parent=5 // pred_check_branch
      %234 = sbr.rel (%p232) target = $region28
    $region27: #{bottleneck_forward.4} parent=5 // pred_region
      // Predicated region
      $region29: #{bottleneck_forward.4} parent=27 // pred_check
        %p235 = pneg %p45
      $region30: #{bottleneck_forward.4} parent=27 // pred_check_branch
        %237 = sbr.rel (%p235) target = $region32
      $region31: #{bottleneck_forward.4} parent=27 // pred_region
        %p238 = scmp.lt.s32.totalorder %s20, 1
        %s239 = scalar_select %p238, %s20, 1
        %s240 = smul.addr %s239, 32
        %s241 = smul.addr %s240, 4
        %s242 = scalar_lea.vmem %s0, %s241
      $region32: #{bottleneck_forward.4} parent=27 // pred_fallthru
        _
    $region28: #{bottleneck_forward.4} parent=5 // pred_fallthru
      _
    %p243 = scmp.le.s32.totalorder 1, %s13
    %p244 = scmp.lt.s32.totalorder %s13, 3
    %p245 = pnand %p243, %p244
    %p246 = pneg %p245
    // Predicated region
    $region33: #{bottleneck_forward.4} parent=5 // pred_check
      _
    $region34: #{bottleneck_forward.4} parent=5 // pred_check_branch
      %248 = sbr.rel (%p245) target = $region36
    $region35: #{bottleneck_forward.4} parent=5 // pred_region
      %s249 = ssub.s32 %s13, 1
      %p250 = scmp.lt.s32.totalorder %s22, 1
      %s251 = scalar_select %p250, %s22, 1
      %s252 = smul.addr %s251, 32
      %s253 = smul.addr %s252, 4
      %s254 = scalar_lea.vmem %s0, %s253
      %p255 = pneg %p51
      %p256 = pneg %p48
      %p257 = pneg %p72
      %p258 = pneg %p69
      %p259 = pneg %p93
      %p260 = pneg %p90
      %p261 = scmp.lt.s32.totalorder %s23, 0
      %s262 = scalar_select %p261, %s23, 0
      %s263 = smul.addr %s262, 4
      %s264 = scalar_lea.vmem %s3, %s263
      %p265 = pneg %p119
      %p266 = pneg %p116
      %p267 = pneg %p147
      %p268 = pneg %p144
      %p269 = scmp.lt.s32.totalorder %s22, 1
      %s270 = scalar_select %p269, %s22, 1
      %p271 = scmp.lt.s32.totalorder %s23, 0
      %s272 = scalar_select %p271, %s23, 0
      %s273 = smul.addr %s270, 32
      %s274 = sadd.s32 %s272, %s273
      %s275 = smul.addr %s274, 4
      %s276 = scalar_lea.vmem %s4, %s275
      %p277 = pneg %p175
      %p278 = pneg %p172
      %p279 = scmp.lt.s32.totalorder %s22, 1
      %s280 = scalar_select %p279, %s22, 1
      %p281 = scmp.lt.s32.totalorder %s23, 0
      %s282 = scalar_select %p281, %s23, 0
      %s283 = sadd.s32 %s282, %s280
      %s284 = scalar_lea.vmem %s5, %s283
      %p285 = pneg %p203
      %p286 = pneg %p200
      %p287 = scmp.lt.s32.totalorder %s22, 1
      %s288 = scalar_select %p287, %s22, 1
      %p289 = scmp.lt.s32.totalorder %s23, 0
      %s290 = scalar_select %p289, %s23, 0
      %s291 = sadd.s32 %s290, %s288
      %s292 = scalar_lea.vmem %s6, %s291
      %p293 = scmp.lt.s32.totalorder %s22, 1
      %s294 = scalar_select %p293, %s22, 1
      %s295 = smul.addr %s294, 32
      %s296 = smul.addr %s295, 4
      %s297 = scalar_lea.vmem %s0, %s296
      %p298 = scmp.lt.s32.totalorder %s23, 0
      %s299 = scalar_select %p298, %s23, 0
      %s300 = smul.addr %s299, 4
      %s301 = scalar_lea.vmem %s3, %s300
      %p302 = scmp.lt.s32.totalorder %s22, 1
      %s303 = scalar_select %p302, %s22, 1
      %p304 = scmp.lt.s32.totalorder %s23, 0
      %s305 = scalar_select %p304, %s23, 0
      %s306 = smul.addr %s303, 32
      %s307 = sadd.s32 %s305, %s306
      %s308 = smul.addr %s307, 4
      %s309 = scalar_lea.vmem %s4, %s308
      %p310 = scmp.lt.s32.totalorder %s22, 1
      %s311 = scalar_select %p310, %s22, 1
      %p312 = scmp.lt.s32.totalorder %s23, 0
      %s313 = scalar_select %p312, %s23, 0
      %s314 = sadd.s32 %s313, %s311
      %s315 = scalar_lea.vmem %s5, %s314
      %p316 = scmp.lt.s32.totalorder %s22, 1
      %s317 = scalar_select %p316, %s22, 1
      %p318 = scmp.lt.s32.totalorder %s23, 0
      %s319 = scalar_select %p318, %s23, 0
      %s320 = sadd.s32 %s319, %s317
      %s321 = scalar_lea.vmem %s6, %s320
      %p323 = scmp.eq.s32.totalorder %s23, 0
      // Predicated region
      $region37: #{bottleneck_forward.4} parent=35 // pred_check
        %p324 = pneg %p323
      $region38: #{bottleneck_forward.4} parent=35 // pred_check_branch
        %326 = sbr.rel (%p324) target = $region40
      $region39: #{bottleneck_forward.4} parent=35 // pred_region
        %v327 = vld [vmem:[%s297] sm:$0xf]
        %v328 = vld [vmem:[%s297 + $0x4] sm:$0xf]
        %v329 = vld [vmem:[%s297 + $0x8] sm:$0xf]
        %v330 = vld [vmem:[%s297 + $0xc] sm:$0xf]
        %v331 = vld [vmem:[%s297 + $0x10] sm:$0xf]
        %v332 = vld [vmem:[%s297 + $0x14] sm:$0xf]
        %v333 = vld [vmem:[%s297 + $0x18] sm:$0xf]
        %v334 = vld [vmem:[%s297 + $0x1c] sm:$0xf]
        %v335 = vld [vmem:[%s297 + $0x20] sm:$0xf]
        %v336 = vld [vmem:[%s297 + $0x24] sm:$0xf]
        %v337 = vld [vmem:[%s297 + $0x28] sm:$0xf]
        %v338 = vld [vmem:[%s297 + $0x2c] sm:$0xf]
        %v339 = vld [vmem:[%s297 + $0x30] sm:$0xf]
        %v340 = vld [vmem:[%s297 + $0x34] sm:$0xf]
        %v341 = vld [vmem:[%s297 + $0x38] sm:$0xf]
        %v342 = vld [vmem:[%s297 + $0x3c] sm:$0xf]
        %v343 = vld [vmem:[%s297 + $0x40] sm:$0xf]
        %v344 = vld [vmem:[%s297 + $0x44] sm:$0xf]
        %v345 = vld [vmem:[%s297 + $0x48] sm:$0xf]
        %v346 = vld [vmem:[%s297 + $0x4c] sm:$0xf]
        %v347 = vld [vmem:[%s297 + $0x50] sm:$0xf]
        %v348 = vld [vmem:[%s297 + $0x54] sm:$0xf]
        %v349 = vld [vmem:[%s297 + $0x58] sm:$0xf]
        %v350 = vld [vmem:[%s297 + $0x5c] sm:$0xf]
        %v351 = vld [vmem:[%s297 + $0x60] sm:$0xf]
        %v352 = vld [vmem:[%s297 + $0x64] sm:$0xf]
        %v353 = vld [vmem:[%s297 + $0x68] sm:$0xf]
        %v354 = vld [vmem:[%s297 + $0x6c] sm:$0xf]
        %v355 = vld [vmem:[%s297 + $0x70] sm:$0xf]
        %v356 = vld [vmem:[%s297 + $0x74] sm:$0xf]
        %v357 = vld [vmem:[%s297 + $0x78] sm:$0xf]
        %v358 = vld [vmem:[%s297 + $0x7c] sm:$0xf]
        %v359 = vunpack.c.l.bf16 %v327
        %v360 = vunpack.c.l.bf16 %v328
        %v361 = vunpack.c.l.bf16 %v329
        %v362 = vunpack.c.l.bf16 %v330
        %v363 = vunpack.c.l.bf16 %v331
        %v364 = vunpack.c.l.bf16 %v332
        %v365 = vunpack.c.l.bf16 %v333
        %v366 = vunpack.c.l.bf16 %v334
        %v367 = vunpack.c.l.bf16 %v335
        %v368 = vunpack.c.l.bf16 %v336
        %v369 = vunpack.c.l.bf16 %v337
        %v370 = vunpack.c.l.bf16 %v338
        %v371 = vunpack.c.l.bf16 %v339
        %v372 = vunpack.c.l.bf16 %v340
        %v373 = vunpack.c.l.bf16 %v341
        %v374 = vunpack.c.l.bf16 %v342
        %v375 = vunpack.c.l.bf16 %v343
        %v376 = vunpack.c.l.bf16 %v344
        %v377 = vunpack.c.l.bf16 %v345
        %v378 = vunpack.c.l.bf16 %v346
        %v379 = vunpack.c.l.bf16 %v347
        %v380 = vunpack.c.l.bf16 %v348
        %v381 = vunpack.c.l.bf16 %v349
        %v382 = vunpack.c.l.bf16 %v350
        %v383 = vunpack.c.l.bf16 %v351
        %v384 = vunpack.c.l.bf16 %v352
        %v385 = vunpack.c.l.bf16 %v353
        %v386 = vunpack.c.l.bf16 %v354
        %v387 = vunpack.c.l.bf16 %v355
        %v388 = vunpack.c.l.bf16 %v356
        %v389 = vunpack.c.l.bf16 %v357
        %v390 = vunpack.c.l.bf16 %v358
        %v391 = vld [vmem:[%s1] sm:$0x1]
        %v393 = vlaneseq
        %v394 = vshrl.u32 %v393, 7
        %v395 = vsub.s32 0, %v394
        %v396 = vrot.slane %v391, %v395
        %v398 = vmul.f32 %v359, %v396
        %v399 = vmul.f32 %v360, %v396
        %v400 = vmul.f32 %v361, %v396
        %v401 = vmul.f32 %v362, %v396
        %v402 = vmul.f32 %v363, %v396
        %v403 = vmul.f32 %v364, %v396
        %v404 = vmul.f32 %v365, %v396
        %v405 = vmul.f32 %v366, %v396
        %v406 = vmul.f32 %v367, %v396
        %v407 = vmul.f32 %v368, %v396
        %v408 = vmul.f32 %v369, %v396
        %v409 = vmul.f32 %v370, %v396
        %v410 = vmul.f32 %v371, %v396
        %v411 = vmul.f32 %v372, %v396
        %v412 = vmul.f32 %v373, %v396
        %v413 = vmul.f32 %v374, %v396
        %v414 = vmul.f32 %v375, %v396
        %v415 = vmul.f32 %v376, %v396
        %v416 = vmul.f32 %v377, %v396
        %v417 = vmul.f32 %v378, %v396
        %v418 = vmul.f32 %v379, %v396
        %v419 = vmul.f32 %v380, %v396
        %v420 = vmul.f32 %v381, %v396
        %v421 = vmul.f32 %v382, %v396
        %v422 = vmul.f32 %v383, %v396
        %v423 = vmul.f32 %v384, %v396
        %v424 = vmul.f32 %v385, %v396
        %v425 = vmul.f32 %v386, %v396
        %v426 = vmul.f32 %v387, %v396
        %v427 = vmul.f32 %v388, %v396
        %v428 = vmul.f32 %v389, %v396
        %v429 = vmul.f32 %v390, %v396
        %v430 = vld [vmem:[%s2] sm:$0x1]
        %v432 = vlaneseq
        %v433 = vshrl.u32 %v432, 7
        %v434 = vsub.s32 0, %v433
        %v435 = vrot.slane %v430, %v434
        %v437 = vadd.f32 %v398, %v435
        %v438 = vadd.f32 %v399, %v435
        %v439 = vadd.f32 %v400, %v435
        %v440 = vadd.f32 %v401, %v435
        %v441 = vadd.f32 %v402, %v435
        %v442 = vadd.f32 %v403, %v435
        %v443 = vadd.f32 %v404, %v435
        %v444 = vadd.f32 %v405, %v435
        %v445 = vadd.f32 %v406, %v435
        %v446 = vadd.f32 %v407, %v435
        %v447 = vadd.f32 %v408, %v435
        %v448 = vadd.f32 %v409, %v435
        %v449 = vadd.f32 %v410, %v435
        %v450 = vadd.f32 %v411, %v435
        %v451 = vadd.f32 %v412, %v435
        %v452 = vadd.f32 %v413, %v435
        %v453 = vadd.f32 %v414, %v435
        %v454 = vadd.f32 %v415, %v435
        %v455 = vadd.f32 %v416, %v435
        %v456 = vadd.f32 %v417, %v435
        %v457 = vadd.f32 %v418, %v435
        %v458 = vadd.f32 %v419, %v435
        %v459 = vadd.f32 %v420, %v435
        %v460 = vadd.f32 %v421, %v435
        %v461 = vadd.f32 %v422, %v435
        %v462 = vadd.f32 %v423, %v435
        %v463 = vadd.f32 %v424, %v435
        %v464 = vadd.f32 %v425, %v435
        %v465 = vadd.f32 %v426, %v435
        %v466 = vadd.f32 %v427, %v435
        %v467 = vadd.f32 %v428, %v435
        %v468 = vadd.f32 %v429, %v435
        %v469 = vmax.f32 %v437, 0.0
        %v470 = vmax.f32 %v438, 0.0
        %v471 = vmax.f32 %v439, 0.0
        %v472 = vmax.f32 %v440, 0.0
        %v473 = vmax.f32 %v441, 0.0
        %v474 = vmax.f32 %v442, 0.0
        %v475 = vmax.f32 %v443, 0.0
        %v476 = vmax.f32 %v444, 0.0
        %v477 = vmax.f32 %v445, 0.0
        %v478 = vmax.f32 %v446, 0.0
        %v479 = vmax.f32 %v447, 0.0
        %v480 = vmax.f32 %v448, 0.0
        %v481 = vmax.f32 %v449, 0.0
        %v482 = vmax.f32 %v450, 0.0
        %v483 = vmax.f32 %v451, 0.0
        %v484 = vmax.f32 %v452, 0.0
        %v485 = vmax.f32 %v453, 0.0
        %v486 = vmax.f32 %v454, 0.0
        %v487 = vmax.f32 %v455, 0.0
        %v488 = vmax.f32 %v456, 0.0
        %v489 = vmax.f32 %v457, 0.0
        %v490 = vmax.f32 %v458, 0.0
        %v491 = vmax.f32 %v459, 0.0
        %v492 = vmax.f32 %v460, 0.0
        %v493 = vmax.f32 %v461, 0.0
        %v494 = vmax.f32 %v462, 0.0
        %v495 = vmax.f32 %v463, 0.0
        %v496 = vmax.f32 %v464, 0.0
        %v497 = vmax.f32 %v465, 0.0
        %v498 = vmax.f32 %v466, 0.0
        %v499 = vmax.f32 %v467, 0.0
        %v500 = vmax.f32 %v468, 0.0
        %501 = vst [vmem:[#allocation2] sm:$0xf] 0
        %502 = vst [vmem:[#allocation2 + $0x4] sm:$0xf] 0
        %503 = vst [vmem:[#allocation2 + $0x8] sm:$0x1] 0
        %504 = vst [vmem:[#allocation2 + $0xc] sm:$0xf] 0
        %505 = vst [vmem:[#allocation2 + $0x10] sm:$0xf] 0
        %506 = vst [vmem:[#allocation2 + $0x14] sm:$0x1] 0
        %507 = vst [vmem:[#allocation2 + $0x18] sm:$0xf] 0
        %508 = vst [vmem:[#allocation2 + $0x1c] sm:$0xf] 0
        %509 = vst [vmem:[#allocation2 + $0x20] sm:$0x1] 0
        %510 = vst [vmem:[#allocation2 + $0x24] sm:$0xf] 0
        %511 = vst [vmem:[#allocation2 + $0x28] sm:$0xf] 0
        %512 = vst [vmem:[#allocation2 + $0x2c] sm:$0x1] 0
        %513 = vst [vmem:[#allocation2 + $0x30] sm:$0xf] 0
        %514 = vst [vmem:[#allocation2 + $0x34] sm:$0xf] 0
        %515 = vst [vmem:[#allocation2 + $0x38] sm:$0x1] 0
        %516 = vst [vmem:[#allocation2 + $0x3c] sm:$0xf] 0
        %517 = vst [vmem:[#allocation2 + $0x40] sm:$0xf] 0
        %518 = vst [vmem:[#allocation2 + $0x44] sm:$0x1] 0
        %519 = vst [vmem:[#allocation2 + $0x48] sm:$0xf] 0
        %520 = vst [vmem:[#allocation2 + $0x4c] sm:$0xf] 0
        %521 = vst [vmem:[#allocation2 + $0x50] sm:$0x1] 0
        %522 = vst [vmem:[#allocation2 + $0x54] sm:$0xf] 0
        %523 = vst [vmem:[#allocation2 + $0x58] sm:$0xf] 0
        %524 = vst [vmem:[#allocation2 + $0x5c] sm:$0x1] 0
        %525 = vst [vmem:[#allocation2 + $0x60] sm:$0xf] 0
        %526 = vst [vmem:[#allocation2 + $0x64] sm:$0xf] 0
        %527 = vst [vmem:[#allocation2 + $0x68] sm:$0x1] 0
        %528 = vst [vmem:[#allocation2 + $0x6c] sm:$0xf] 0
        %529 = vst [vmem:[#allocation2 + $0x70] sm:$0xf] 0
        %530 = vst [vmem:[#allocation2 + $0x74] sm:$0x1] 0
        %531 = vst [vmem:[#allocation2 + $0x78] sm:$0xf] 0
        %532 = vst [vmem:[#allocation2 + $0x7c] sm:$0xf] 0
        %533 = vst [vmem:[#allocation2 + $0x80] sm:$0x1] 0
        %534 = vst [vmem:[#allocation2 + $0x84] sm:$0xf] 0
        %535 = vst [vmem:[#allocation2 + $0x88] sm:$0xf] 0
        %536 = vst [vmem:[#allocation2 + $0x8c] sm:$0x1] 0
        %537 = vst [vmem:[#allocation2 + $0x90] sm:$0xf] 0
        %538 = vst [vmem:[#allocation2 + $0x94] sm:$0xf] 0
        %539 = vst [vmem:[#allocation2 + $0x98] sm:$0x1] 0
        %540 = vst [vmem:[#allocation2 + $0x9c] sm:$0xf] 0
        %541 = vst [vmem:[#allocation2 + $0xa0] sm:$0xf] 0
        %542 = vst [vmem:[#allocation2 + $0xa4] sm:$0x1] 0
        %543 = vst [vmem:[#allocation2 + $0xa8] sm:$0xf] 0
        %544 = vst [vmem:[#allocation2 + $0xac] sm:$0xf] 0
        %545 = vst [vmem:[#allocation2 + $0xb0] sm:$0x1] 0
        %546 = vst [vmem:[#allocation2 + $0xb4] sm:$0xf] 0
        %547 = vst [vmem:[#allocation2 + $0xb8] sm:$0xf] 0
        %548 = vst [vmem:[#allocation2 + $0xbc] sm:$0x1] 0
        %549 = vst [vmem:[#allocation2 + $0xc0] sm:$0xf] 0
        %550 = vst [vmem:[#allocation2 + $0xc4] sm:$0xf] 0
        %551 = vst [vmem:[#allocation2 + $0xc8] sm:$0x1] 0
        %552 = vst [vmem:[#allocation2 + $0xcc] sm:$0xf] 0
        %553 = vst [vmem:[#allocation2 + $0xd0] sm:$0xf] 0
        %554 = vst [vmem:[#allocation2 + $0xd4] sm:$0x1] 0
        %v555 = vpack.c.bf16 %v470, %v469
        %v556 = vpack.c.bf16 %v472, %v471
        %v557 = vpack.c.bf16 %v474, %v473
        %v558 = vpack.c.bf16 %v476, %v475
        %v559 = vpack.c.bf16 %v478, %v477
        %v560 = vpack.c.bf16 %v480, %v479
        %v561 = vpack.c.bf16 %v482, %v481
        %v562 = vpack.c.bf16 %v484, %v483
        %v563 = vpack.c.bf16 %v486, %v485
        %v564 = vpack.c.bf16 %v488, %v487
        %v565 = vpack.c.bf16 %v490, %v489
        %v566 = vpack.c.bf16 %v492, %v491
        %v567 = vpack.c.bf16 %v494, %v493
        %v568 = vpack.c.bf16 %v496, %v495
        %v569 = vpack.c.bf16 %v498, %v497
        %v570 = vpack.c.bf16 %v500, %v499
        %v587 = vunpack.c.l.b16 %v555
        %v588 = vunpack.c.h.b16 %v555
        %v589 = vunpack.c.l.b16 %v556
        %v590 = vunpack.c.h.b16 %v556
        %v591 = vunpack.c.l.b16 %v557
        %v592 = vunpack.c.h.b16 %v557
        %v593 = vunpack.c.l.b16 %v558
        %v594 = vunpack.c.h.b16 %v558
        %v595 = vunpack.c.l.b16 %v559
        %v596 = vunpack.c.h.b16 %v559
        %v597 = vunpack.c.l.b16 %v560
        %v598 = vunpack.c.h.b16 %v560
        %v599 = vunpack.c.l.b16 %v561
        %v600 = vunpack.c.h.b16 %v561
        %v601 = vunpack.c.l.b16 %v562
        %v602 = vunpack.c.h.b16 %v562
        %v603 = vunpack.c.l.b16 %v563
        %v604 = vunpack.c.h.b16 %v563
        %v605 = vunpack.c.l.b16 %v564
        %v606 = vunpack.c.h.b16 %v564
        %v607 = vunpack.c.l.b16 %v565
        %v608 = vunpack.c.h.b16 %v565
        %v609 = vunpack.c.l.b16 %v566
        %v610 = vunpack.c.h.b16 %v566
        %v611 = vunpack.c.l.b16 %v567
        %v612 = vunpack.c.h.b16 %v567
        %v613 = vunpack.c.l.b16 %v568
        %v614 = vunpack.c.h.b16 %v568
        %v615 = vunpack.c.l.b16 %v569
        %v616 = vunpack.c.h.b16 %v569
        %v617 = vunpack.c.l.b16 %v570
        %v618 = vunpack.c.h.b16 %v570
        %v619 = vpack.c.b16 %v587, %v587
        %v620 = vpack.c.b16 %v588, %v588
        %v621 = vpack.c.b16 %v589, %v589
        %v622 = vpack.c.b16 %v590, %v590
        %v623 = vpack.c.b16 %v591, %v591
        %v624 = vpack.c.b16 %v592, %v592
        %v625 = vpack.c.b16 %v593, %v593
        %v626 = vpack.c.b16 %v594, %v594
        %v627 = vpack.c.b16 %v595, %v595
        %v628 = vpack.c.b16 %v596, %v596
        %v629 = vpack.c.b16 %v597, %v597
        %v630 = vpack.c.b16 %v598, %v598
        %v631 = vpack.c.b16 %v599, %v599
        %v632 = vpack.c.b16 %v600, %v600
        %v633 = vpack.c.b16 %v601, %v601
        %v634 = vpack.c.b16 %v602, %v602
        %v635 = vpack.c.b16 %v603, %v603
        %v636 = vpack.c.b16 %v604, %v604
        %v637 = vpack.c.b16 %v605, %v605
        %v638 = vpack.c.b16 %v606, %v606
        %v639 = vpack.c.b16 %v607, %v607
        %v640 = vpack.c.b16 %v608, %v608
        %v641 = vpack.c.b16 %v609, %v609
        %v642 = vpack.c.b16 %v610, %v610
        %v643 = vpack.c.b16 %v611, %v611
        %v644 = vpack.c.b16 %v612, %v612
        %v645 = vpack.c.b16 %v613, %v613
        %v646 = vpack.c.b16 %v614, %v614
        %v647 = vpack.c.b16 %v615, %v615
        %v648 = vpack.c.b16 %v616, %v616
        %v649 = vpack.c.b16 %v617, %v617
        %v650 = vpack.c.b16 %v618, %v618
        %vm651 = vsmask.f32 256
        %vm652 = vsmask.f32 4368
        %vm653 = vmor %vm651, %vm652
        %v655 = vshrl.u32 %v619, 16
        %v657 = vrot.slane %v655, 7
        %v658 = vshll.u32 %v619, 16
        %v660 = vor.u32 %v657, %v658
        %v661 = vrot.slane %v657, 4
        %v663 = vshrl.u32 %v620, 16
        %v665 = vrot.slane %v663, 7
        %v666 = vshll.u32 %v620, 16
        %v668 = vor.u32 %v665, %v666
        %v669 = vsel %vm653, %v661, %v668
        %v670 = vrot.slane %v665, 4
        %v672 = vshrl.u32 %v621, 16
        %v674 = vrot.slane %v672, 7
        %v675 = vshll.u32 %v621, 16
        %v677 = vor.u32 %v674, %v675
        %v678 = vrot.slane %v674, 4
        %v680 = vshrl.u32 %v622, 16
        %v682 = vrot.slane %v680, 7
        %v683 = vshll.u32 %v622, 16
        %v685 = vor.u32 %v682, %v683
        %v686 = vsel %vm653, %v678, %v685
        %v687 = vrot.slane %v682, 4
        %v689 = vshrl.u32 %v623, 16
        %v691 = vrot.slane %v689, 7
        %v692 = vshll.u32 %v623, 16
        %v694 = vor.u32 %v691, %v692
        %v695 = vrot.slane %v691, 4
        %v697 = vshrl.u32 %v624, 16
        %v699 = vrot.slane %v697, 7
        %v700 = vshll.u32 %v624, 16
        %v702 = vor.u32 %v699, %v700
        %v703 = vsel %vm653, %v695, %v702
        %v704 = vrot.slane %v699, 4
        %v706 = vshrl.u32 %v625, 16
        %v708 = vrot.slane %v706, 7
        %v709 = vshll.u32 %v625, 16
        %v711 = vor.u32 %v708, %v709
        %v712 = vrot.slane %v708, 4
        %v714 = vshrl.u32 %v626, 16
        %v716 = vrot.slane %v714, 7
        %v717 = vshll.u32 %v626, 16
        %v719 = vor.u32 %v716, %v717
        %v720 = vsel %vm653, %v712, %v719
        %v721 = vrot.slane %v716, 4
        %v723 = vshrl.u32 %v627, 16
        %v725 = vrot.slane %v723, 7
        %v726 = vshll.u32 %v627, 16
        %v728 = vor.u32 %v725, %v726
        %v729 = vrot.slane %v725, 4
        %v731 = vshrl.u32 %v628, 16
        %v733 = vrot.slane %v731, 7
        %v734 = vshll.u32 %v628, 16
        %v736 = vor.u32 %v733, %v734
        %v737 = vsel %vm653, %v729, %v736
        %v738 = vrot.slane %v733, 4
        %v740 = vshrl.u32 %v629, 16
        %v742 = vrot.slane %v740, 7
        %v743 = vshll.u32 %v629, 16
        %v745 = vor.u32 %v742, %v743
        %v746 = vrot.slane %v742, 4
        %v748 = vshrl.u32 %v630, 16
        %v750 = vrot.slane %v748, 7
        %v751 = vshll.u32 %v630, 16
        %v753 = vor.u32 %v750, %v751
        %v754 = vsel %vm653, %v746, %v753
        %v755 = vrot.slane %v750, 4
        %v757 = vshrl.u32 %v631, 16
        %v759 = vrot.slane %v757, 7
        %v760 = vshll.u32 %v631, 16
        %v762 = vor.u32 %v759, %v760
        %v763 = vrot.slane %v759, 4
        %v765 = vshrl.u32 %v632, 16
        %v767 = vrot.slane %v765, 7
        %v768 = vshll.u32 %v632, 16
        %v770 = vor.u32 %v767, %v768
        %v771 = vsel %vm653, %v763, %v770
        %v772 = vrot.slane %v767, 4
        %v774 = vshrl.u32 %v633, 16
        %v776 = vrot.slane %v774, 7
        %v777 = vshll.u32 %v633, 16
        %v779 = vor.u32 %v776, %v777
        %v780 = vrot.slane %v776, 4
        %v782 = vshrl.u32 %v634, 16
        %v784 = vrot.slane %v782, 7
        %v785 = vshll.u32 %v634, 16
        %v787 = vor.u32 %v784, %v785
        %v788 = vsel %vm653, %v780, %v787
        %v789 = vrot.slane %v784, 4
        %v791 = vshrl.u32 %v635, 16
        %v793 = vrot.slane %v791, 7
        %v794 = vshll.u32 %v635, 16
        %v796 = vor.u32 %v793, %v794
        %v797 = vrot.slane %v793, 4
        %v799 = vshrl.u32 %v636, 16
        %v801 = vrot.slane %v799, 7
        %v802 = vshll.u32 %v636, 16
        %v804 = vor.u32 %v801, %v802
        %v805 = vsel %vm653, %v797, %v804
        %v806 = vrot.slane %v801, 4
        %v808 = vshrl.u32 %v637, 16
        %v810 = vrot.slane %v808, 7
        %v811 = vshll.u32 %v637, 16
        %v813 = vor.u32 %v810, %v811
        %v814 = vrot.slane %v810, 4
        %v816 = vshrl.u32 %v638, 16
        %v818 = vrot.slane %v816, 7
        %v819 = vshll.u32 %v638, 16
        %v821 = vor.u32 %v818, %v819
        %v822 = vsel %vm653, %v814, %v821
        %v823 = vrot.slane %v818, 4
        %v825 = vshrl.u32 %v639, 16
        %v827 = vrot.slane %v825, 7
        %v828 = vshll.u32 %v639, 16
        %v830 = vor.u32 %v827, %v828
        %v831 = vrot.slane %v827, 4
        %v833 = vshrl.u32 %v640, 16
        %v835 = vrot.slane %v833, 7
        %v836 = vshll.u32 %v640, 16
        %v838 = vor.u32 %v835, %v836
        %v839 = vsel %vm653, %v831, %v838
        %v840 = vrot.slane %v835, 4
        %v842 = vshrl.u32 %v641, 16
        %v844 = vrot.slane %v842, 7
        %v845 = vshll.u32 %v641, 16
        %v847 = vor.u32 %v844, %v845
        %v848 = vrot.slane %v844, 4
        %v850 = vshrl.u32 %v642, 16
        %v852 = vrot.slane %v850, 7
        %v853 = vshll.u32 %v642, 16
        %v855 = vor.u32 %v852, %v853
        %v856 = vsel %vm653, %v848, %v855
        %v857 = vrot.slane %v852, 4
        %v859 = vshrl.u32 %v643, 16
        %v861 = vrot.slane %v859, 7
        %v862 = vshll.u32 %v643, 16
        %v864 = vor.u32 %v861, %v862
        %v865 = vrot.slane %v861, 4
        %v867 = vshrl.u32 %v644, 16
        %v869 = vrot.slane %v867, 7
        %v870 = vshll.u32 %v644, 16
        %v872 = vor.u32 %v869, %v870
        %v873 = vsel %vm653, %v865, %v872
        %v874 = vrot.slane %v869, 4
        %v876 = vshrl.u32 %v645, 16
        %v878 = vrot.slane %v876, 7
        %v879 = vshll.u32 %v645, 16
        %v881 = vor.u32 %v878, %v879
        %v882 = vrot.slane %v878, 4
        %v884 = vshrl.u32 %v646, 16
        %v886 = vrot.slane %v884, 7
        %v887 = vshll.u32 %v646, 16
        %v889 = vor.u32 %v886, %v887
        %v890 = vsel %vm653, %v882, %v889
        %v891 = vrot.slane %v886, 4
        %v893 = vshrl.u32 %v647, 16
        %v895 = vrot.slane %v893, 7
        %v896 = vshll.u32 %v647, 16
        %v898 = vor.u32 %v895, %v896
        %v899 = vrot.slane %v895, 4
        %v901 = vshrl.u32 %v648, 16
        %v903 = vrot.slane %v901, 7
        %v904 = vshll.u32 %v648, 16
        %v906 = vor.u32 %v903, %v904
        %v907 = vsel %vm653, %v899, %v906
        %v908 = vrot.slane %v903, 4
        %v910 = vshrl.u32 %v649, 16
        %v912 = vrot.slane %v910, 7
        %v913 = vshll.u32 %v649, 16
        %v915 = vor.u32 %v912, %v913
        %v916 = vrot.slane %v912, 4
        %v918 = vshrl.u32 %v650, 16
        %v920 = vrot.slane %v918, 7
        %v921 = vshll.u32 %v650, 16
        %v923 = vor.u32 %v920, %v921
        %v924 = vsel %vm653, %v916, %v923
        %v925 = vrot.slane %v920, 4
        %s974 = scalar_lea.vmem [#allocation2], 12
        %vm975 = vcmask 1043456
        %vm976 = vsmask.f32 7938
        %vm977 = vmand %vm975, %vm976
        %v978 = vld [vmem:[%s974] sm:$0xf]
        %v979 = vsel %vm977, %v660, %v978
        %980 = vst [vmem:[%s974] sm:$0xf] %v979
        %981 = vst [vmem:[%s974 + $0x4] sm:$0xf] %v669
        %vm982 = vcmask 1040384
        %vm983 = vmand %vm982, %vm651
        %v984 = vld [vmem:[%s974 + $0x8] sm:$0x1]
        %v985 = vsel %vm983, %v670, %v984
        %986 = vst [vmem:[%s974 + $0x8] sm:$0x1] %v985
        %v987 = vld [vmem:[%s974 + $0xc] sm:$0xf]
        %v988 = vsel %vm977, %v677, %v987
        %989 = vst [vmem:[%s974 + $0xc] sm:$0xf] %v988
        %990 = vst [vmem:[%s974 + $0x10] sm:$0xf] %v686
        %v991 = vld [vmem:[%s974 + $0x14] sm:$0x1]
        %v992 = vsel %vm983, %v687, %v991
        %993 = vst [vmem:[%s974 + $0x14] sm:$0x1] %v992
        %v994 = vld [vmem:[%s974 + $0x18] sm:$0xf]
        %v995 = vsel %vm977, %v694, %v994
        %996 = vst [vmem:[%s974 + $0x18] sm:$0xf] %v995
        %997 = vst [vmem:[%s974 + $0x1c] sm:$0xf] %v703
        %v998 = vld [vmem:[%s974 + $0x20] sm:$0x1]
        %v999 = vsel %vm983, %v704, %v998
        %1000 = vst [vmem:[%s974 + $0x20] sm:$0x1] %v999
        %v1001 = vld [vmem:[%s974 + $0x24] sm:$0xf]
        %v1002 = vsel %vm977, %v711, %v1001
        %1003 = vst [vmem:[%s974 + $0x24] sm:$0xf] %v1002
        %1004 = vst [vmem:[%s974 + $0x28] sm:$0xf] %v720
        %v1005 = vld [vmem:[%s974 + $0x2c] sm:$0x1]
        %v1006 = vsel %vm983, %v721, %v1005
        %1007 = vst [vmem:[%s974 + $0x2c] sm:$0x1] %v1006
        %v1008 = vld [vmem:[%s974 + $0x30] sm:$0xf]
        %v1009 = vsel %vm977, %v728, %v1008
        %1010 = vst [vmem:[%s974 + $0x30] sm:$0xf] %v1009
        %1011 = vst [vmem:[%s974 + $0x34] sm:$0xf] %v737
        %v1012 = vld [vmem:[%s974 + $0x38] sm:$0x1]
        %v1013 = vsel %vm983, %v738, %v1012
        %1014 = vst [vmem:[%s974 + $0x38] sm:$0x1] %v1013
        %v1015 = vld [vmem:[%s974 + $0x3c] sm:$0xf]
        %v1016 = vsel %vm977, %v745, %v1015
        %1017 = vst [vmem:[%s974 + $0x3c] sm:$0xf] %v1016
        %1018 = vst [vmem:[%s974 + $0x40] sm:$0xf] %v754
        %v1019 = vld [vmem:[%s974 + $0x44] sm:$0x1]
        %v1020 = vsel %vm983, %v755, %v1019
        %1021 = vst [vmem:[%s974 + $0x44] sm:$0x1] %v1020
        %v1022 = vld [vmem:[%s974 + $0x48] sm:$0xf]
        %v1023 = vsel %vm977, %v762, %v1022
        %1024 = vst [vmem:[%s974 + $0x48] sm:$0xf] %v1023
        %1025 = vst [vmem:[%s974 + $0x4c] sm:$0xf] %v771
        %v1026 = vld [vmem:[%s974 + $0x50] sm:$0x1]
        %v1027 = vsel %vm983, %v772, %v1026
        %1028 = vst [vmem:[%s974 + $0x50] sm:$0x1] %v1027
        %v1029 = vld [vmem:[%s974 + $0x54] sm:$0xf]
        %v1030 = vsel %vm977, %v779, %v1029
        %1031 = vst [vmem:[%s974 + $0x54] sm:$0xf] %v1030
        %1032 = vst [vmem:[%s974 + $0x58] sm:$0xf] %v788
        %v1033 = vld [vmem:[%s974 + $0x5c] sm:$0x1]
        %v1034 = vsel %vm983, %v789, %v1033
        %1035 = vst [vmem:[%s974 + $0x5c] sm:$0x1] %v1034
        %v1036 = vld [vmem:[%s974 + $0x60] sm:$0xf]
        %v1037 = vsel %vm977, %v796, %v1036
        %1038 = vst [vmem:[%s974 + $0x60] sm:$0xf] %v1037
        %1039 = vst [vmem:[%s974 + $0x64] sm:$0xf] %v805
        %v1040 = vld [vmem:[%s974 + $0x68] sm:$0x1]
        %v1041 = vsel %vm983, %v806, %v1040
        %1042 = vst [vmem:[%s974 + $0x68] sm:$0x1] %v1041
        %v1043 = vld [vmem:[%s974 + $0x6c] sm:$0xf]
        %v1044 = vsel %vm977, %v813, %v1043
        %1045 = vst [vmem:[%s974 + $0x6c] sm:$0xf] %v1044
        %1046 = vst [vmem:[%s974 + $0x70] sm:$0xf] %v822
        %v1047 = vld [vmem:[%s974 + $0x74] sm:$0x1]
        %v1048 = vsel %vm983, %v823, %v1047
        %1049 = vst [vmem:[%s974 + $0x74] sm:$0x1] %v1048
        %v1050 = vld [vmem:[%s974 + $0x78] sm:$0xf]
        %v1051 = vsel %vm977, %v830, %v1050
        %1052 = vst [vmem:[%s974 + $0x78] sm:$0xf] %v1051
        %1053 = vst [vmem:[%s974 + $0x7c] sm:$0xf] %v839
        %v1054 = vld [vmem:[%s974 + $0x80] sm:$0x1]
        %v1055 = vsel %vm983, %v840, %v1054
        %1056 = vst [vmem:[%s974 + $0x80] sm:$0x1] %v1055
        %v1057 = vld [vmem:[%s974 + $0x84] sm:$0xf]
        %v1058 = vsel %vm977, %v847, %v1057
        %1059 = vst [vmem:[%s974 + $0x84] sm:$0xf] %v1058
        %1060 = vst [vmem:[%s974 + $0x88] sm:$0xf] %v856
        %v1061 = vld [vmem:[%s974 + $0x8c] sm:$0x1]
        %v1062 = vsel %vm983, %v857, %v1061
        %1063 = vst [vmem:[%s974 + $0x8c] sm:$0x1] %v1062
        %v1064 = vld [vmem:[%s974 + $0x90] sm:$0xf]
        %v1065 = vsel %vm977, %v864, %v1064
        %1066 = vst [vmem:[%s974 + $0x90] sm:$0xf] %v1065
        %1067 = vst [vmem:[%s974 + $0x94] sm:$0xf] %v873
        %v1068 = vld [vmem:[%s974 + $0x98] sm:$0x1]
        %v1069 = vsel %vm983, %v874, %v1068
        %1070 = vst [vmem:[%s974 + $0x98] sm:$0x1] %v1069
        %v1071 = vld [vmem:[%s974 + $0x9c] sm:$0xf]
        %v1072 = vsel %vm977, %v881, %v1071
        %1073 = vst [vmem:[%s974 + $0x9c] sm:$0xf] %v1072
        %1074 = vst [vmem:[%s974 + $0xa0] sm:$0xf] %v890
        %v1075 = vld [vmem:[%s974 + $0xa4] sm:$0x1]
        %v1076 = vsel %vm983, %v891, %v1075
        %1077 = vst [vmem:[%s974 + $0xa4] sm:$0x1] %v1076
        %v1078 = vld [vmem:[%s974 + $0xa8] sm:$0xf]
        %v1079 = vsel %vm977, %v898, %v1078
        %1080 = vst [vmem:[%s974 + $0xa8] sm:$0xf] %v1079
        %1081 = vst [vmem:[%s974 + $0xac] sm:$0xf] %v907
        %v1082 = vld [vmem:[%s974 + $0xb0] sm:$0x1]
        %v1083 = vsel %vm983, %v908, %v1082
        %1084 = vst [vmem:[%s974 + $0xb0] sm:$0x1] %v1083
        %v1085 = vld [vmem:[%s974 + $0xb4] sm:$0xf]
        %v1086 = vsel %vm977, %v915, %v1085
        %1087 = vst [vmem:[%s974 + $0xb4] sm:$0xf] %v1086
        %1088 = vst [vmem:[%s974 + $0xb8] sm:$0xf] %v924
        %v1089 = vld [vmem:[%s974 + $0xbc] sm:$0x1]
        %v1090 = vsel %vm983, %v925, %v1089
        %1091 = vst [vmem:[%s974 + $0xbc] sm:$0x1] %v1090
        %v1092 = vld [vmem:[#allocation2] sm:$0xf]
        %v1093 = vld [vmem:[#allocation2 + $0x4] sm:$0xf]
        %v1094 = vld [vmem:[#allocation2 + $0xc] sm:$0xf]
        %v1095 = vld [vmem:[#allocation2 + $0x10] sm:$0xf]
        %v1096 = vld [vmem:[#allocation2 + $0x18] sm:$0xf]
        %v1097 = vld [vmem:[#allocation2 + $0x1c] sm:$0xf]
        %v1098 = vld [vmem:[#allocation2 + $0x24] sm:$0xf]
        %v1099 = vld [vmem:[#allocation2 + $0x28] sm:$0xf]
        %v1100 = vld [vmem:[#allocation2 + $0x30] sm:$0xf]
        %v1101 = vld [vmem:[#allocation2 + $0x34] sm:$0xf]
        %v1102 = vld [vmem:[#allocation2 + $0x3c] sm:$0xf]
        %v1103 = vld [vmem:[#allocation2 + $0x40] sm:$0xf]
        %v1104 = vld [vmem:[#allocation2 + $0x48] sm:$0xf]
        %v1105 = vld [vmem:[#allocation2 + $0x4c] sm:$0xf]
        %v1106 = vld [vmem:[#allocation2 + $0x54] sm:$0xf]
        %v1107 = vld [vmem:[#allocation2 + $0x58] sm:$0xf]
        %v1108 = vld [vmem:[#allocation2 + $0x60] sm:$0xf]
        %v1109 = vld [vmem:[#allocation2 + $0x64] sm:$0xf]
        %v1110 = vld [vmem:[#allocation2 + $0x6c] sm:$0xf]
        %v1111 = vld [vmem:[#allocation2 + $0x70] sm:$0xf]
        %v1112 = vld [vmem:[#allocation2 + $0x78] sm:$0xf]
        %v1113 = vld [vmem:[#allocation2 + $0x7c] sm:$0xf]
        %v1114 = vld [vmem:[#allocation2 + $0x84] sm:$0xf]
        %v1115 = vld [vmem:[#allocation2 + $0x88] sm:$0xf]
        %v1116 = vld [vmem:[#allocation2 + $0x90] sm:$0xf]
        %v1117 = vld [vmem:[#allocation2 + $0x94] sm:$0xf]
        %v1118 = vld [vmem:[#allocation2 + $0x9c] sm:$0xf]
        %v1119 = vld [vmem:[#allocation2 + $0xa0] sm:$0xf]
        %v1120 = vld [vmem:[#allocation2 + $0xa8] sm:$0xf]
        %v1121 = vld [vmem:[#allocation2 + $0xac] sm:$0xf]
        %v1122 = vld [vmem:[#allocation2 + $0xb4] sm:$0xf]
        %v1123 = vld [vmem:[#allocation2 + $0xb8] sm:$0xf]
        %1124 = vst [vmem:[#allocation3] sm:$0xf] %v1092
        %1125 = vst [vmem:[#allocation3 + $0x24] sm:$0xf] %v1093
        %1126 = vst [vmem:[#allocation3 + $0x48] sm:$0xf] %v1094
        %1127 = vst [vmem:[#allocation3 + $0x6c] sm:$0xf] %v1095
        %1128 = vst [vmem:[#allocation3 + $0x90] sm:$0xf] %v1096
        %1129 = vst [vmem:[#allocation3 + $0xb4] sm:$0xf] %v1097
        %1130 = vst [vmem:[#allocation3 + $0xd8] sm:$0xf] %v1098
        %1131 = vst [vmem:[#allocation3 + $0xfc] sm:$0xf] %v1099
        %1132 = vst [vmem:[#allocation3 + $0x120] sm:$0xf] %v1100
        %1133 = vst [vmem:[#allocation3 + $0x144] sm:$0xf] %v1101
        %1134 = vst [vmem:[#allocation3 + $0x168] sm:$0xf] %v1102
        %1135 = vst [vmem:[#allocation3 + $0x18c] sm:$0xf] %v1103
        %1136 = vst [vmem:[#allocation3 + $0x1b0] sm:$0xf] %v1104
        %1137 = vst [vmem:[#allocation3 + $0x1d4] sm:$0xf] %v1105
        %1138 = vst [vmem:[#allocation3 + $0x1f8] sm:$0xf] %v1106
        %1139 = vst [vmem:[#allocation3 + $0x21c] sm:$0xf] %v1107
        %1140 = vst [vmem:[#allocation3 + $0x240] sm:$0xf] %v1108
        %1141 = vst [vmem:[#allocation3 + $0x264] sm:$0xf] %v1109
        %1142 = vst [vmem:[#allocation3 + $0x288] sm:$0xf] %v1110
        %1143 = vst [vmem:[#allocation3 + $0x2ac] sm:$0xf] %v1111
        %1144 = vst [vmem:[#allocation3 + $0x2d0] sm:$0xf] %v1112
        %1145 = vst [vmem:[#allocation3 + $0x2f4] sm:$0xf] %v1113
        %1146 = vst [vmem:[#allocation3 + $0x318] sm:$0xf] %v1114
        %1147 = vst [vmem:[#allocation3 + $0x33c] sm:$0xf] %v1115
        %1148 = vst [vmem:[#allocation3 + $0x360] sm:$0xf] %v1116
        %1149 = vst [vmem:[#allocation3 + $0x384] sm:$0xf] %v1117
        %1150 = vst [vmem:[#allocation3 + $0x3a8] sm:$0xf] %v1118
        %1151 = vst [vmem:[#allocation3 + $0x3cc] sm:$0xf] %v1119
        %1152 = vst [vmem:[#allocation3 + $0x3f0] sm:$0xf] %v1120
        %1153 = vst [vmem:[#allocation3 + $0x414] sm:$0xf] %v1121
        %1154 = vst [vmem:[#allocation3 + $0x438] sm:$0xf] %v1122
        %1155 = vst [vmem:[#allocation3 + $0x45c] sm:$0xf] %v1123
        %v1156 = vld [vmem:[#allocation2] sm:$0xf]
        %v1157 = vld [vmem:[#allocation2 + $0x4] sm:$0xf]
        %v1158 = vld [vmem:[#allocation2 + $0x8] sm:$0x1]
        %v1159 = vld [vmem:[#allocation2 + $0xc] sm:$0xf]
        %v1160 = vld [vmem:[#allocation2 + $0x10] sm:$0xf]
        %v1161 = vld [vmem:[#allocation2 + $0x14] sm:$0x1]
        %v1162 = vld [vmem:[#allocation2 + $0x18] sm:$0xf]
        %v1163 = vld [vmem:[#allocation2 + $0x1c] sm:$0xf]
        %v1164 = vld [vmem:[#allocation2 + $0x20] sm:$0x1]
        %v1165 = vld [vmem:[#allocation2 + $0x24] sm:$0xf]
        %v1166 = vld [vmem:[#allocation2 + $0x28] sm:$0xf]
        %v1167 = vld [vmem:[#allocation2 + $0x2c] sm:$0x1]
        %v1168 = vld [vmem:[#allocation2 + $0x30] sm:$0xf]
        %v1169 = vld [vmem:[#allocation2 + $0x34] sm:$0xf]
        %v1170 = vld [vmem:[#allocation2 + $0x38] sm:$0x1]
        %v1171 = vld [vmem:[#allocation2 + $0x3c] sm:$0xf]
        %v1172 = vld [vmem:[#allocation2 + $0x40] sm:$0xf]
        %v1173 = vld [vmem:[#allocation2 + $0x44] sm:$0x1]
        %v1174 = vld [vmem:[#allocation2 + $0x48] sm:$0xf]
        %v1175 = vld [vmem:[#allocation2 + $0x4c] sm:$0xf]
        %v1176 = vld [vmem:[#allocation2 + $0x50] sm:$0x1]
        %v1177 = vld [vmem:[#allocation2 + $0x54] sm:$0xf]
        %v1178 = vld [vmem:[#allocation2 + $0x58] sm:$0xf]
        %v1179 = vld [vmem:[#allocation2 + $0x5c] sm:$0x1]
        %v1180 = vld [vmem:[#allocation2 + $0x60] sm:$0xf]
        %v1181 = vld [vmem:[#allocation2 + $0x64] sm:$0xf]
        %v1182 = vld [vmem:[#allocation2 + $0x68] sm:$0x1]
        %v1183 = vld [vmem:[#allocation2 + $0x6c] sm:$0xf]
        %v1184 = vld [vmem:[#allocation2 + $0x70] sm:$0xf]
        %v1185 = vld [vmem:[#allocation2 + $0x74] sm:$0x1]
        %v1186 = vld [vmem:[#allocation2 + $0x78] sm:$0xf]
        %v1187 = vld [vmem:[#allocation2 + $0x7c] sm:$0xf]
        %v1188 = vld [vmem:[#allocation2 + $0x80] sm:$0x1]
        %v1189 = vld [vmem:[#allocation2 + $0x84] sm:$0xf]
        %v1190 = vld [vmem:[#allocation2 + $0x88] sm:$0xf]
        %v1191 = vld [vmem:[#allocation2 + $0x8c] sm:$0x1]
        %v1192 = vld [vmem:[#allocation2 + $0x90] sm:$0xf]
        %v1193 = vld [vmem:[#allocation2 + $0x94] sm:$0xf]
        %v1194 = vld [vmem:[#allocation2 + $0x98] sm:$0x1]
        %v1195 = vld [vmem:[#allocation2 + $0x9c] sm:$0xf]
        %v1196 = vld [vmem:[#allocation2 + $0xa0] sm:$0xf]
        %v1197 = vld [vmem:[#allocation2 + $0xa4] sm:$0x1]
        %v1198 = vld [vmem:[#allocation2 + $0xa8] sm:$0xf]
        %v1199 = vld [vmem:[#allocation2 + $0xac] sm:$0xf]
        %v1200 = vld [vmem:[#allocation2 + $0xb0] sm:$0x1]
        %v1201 = vld [vmem:[#allocation2 + $0xb4] sm:$0xf]
        %v1202 = vld [vmem:[#allocation2 + $0xb8] sm:$0xf]
        %v1203 = vld [vmem:[#allocation2 + $0xbc] sm:$0x1]
        %vm1204 = vsmask.f32 3328
        %vm1205 = vsmask.f32 7440
        %vm1206 = vmor %vm1204, %vm1205
        %v1208 = vshrl.u32 %v1156, 16
        %v1210 = vrot.slane %v1208, 4
        %v1211 = vshll.u32 %v1156, 16
        %v1213 = vrot.slane %v1211, 5
        %v1214 = vor.u32 %v1210, %v1213
        %v1215 = vrot.slane %v1214, 4
        %v1217 = vshll.u32 %v1157, 16
        %v1219 = vrot.slane %v1217, 5
        %v1220 = vsel %vm1206, %v1215, %v1219
        %v1221 = vshrl.u32 %v1157, 16
        %v1223 = vrot.slane %v1221, 4
        %v1224 = vor.u32 %v1223, %v1219
        %v1225 = vrot.slane %v1224, 4
        %v1227 = vshll.u32 %v1158, 16
        %v1229 = vrot.slane %v1227, 5
        %v1230 = vsel %vm1206, %v1225, %v1229
        %v1232 = vshrl.u32 %v1159, 16
        %v1234 = vrot.slane %v1232, 4
        %v1235 = vshll.u32 %v1159, 16
        %v1237 = vrot.slane %v1235, 5
        %v1238 = vor.u32 %v1234, %v1237
        %v1239 = vrot.slane %v1238, 4
        %v1241 = vshll.u32 %v1160, 16
        %v1243 = vrot.slane %v1241, 5
        %v1244 = vsel %vm1206, %v1239, %v1243
        %v1245 = vshrl.u32 %v1160, 16
        %v1247 = vrot.slane %v1245, 4
        %v1248 = vor.u32 %v1247, %v1243
        %v1249 = vrot.slane %v1248, 4
        %v1251 = vshll.u32 %v1161, 16
        %v1253 = vrot.slane %v1251, 5
        %v1254 = vsel %vm1206, %v1249, %v1253
        %v1256 = vshrl.u32 %v1162, 16
        %v1258 = vrot.slane %v1256, 4
        %v1259 = vshll.u32 %v1162, 16
        %v1261 = vrot.slane %v1259, 5
        %v1262 = vor.u32 %v1258, %v1261
        %v1263 = vrot.slane %v1262, 4
        %v1265 = vshll.u32 %v1163, 16
        %v1267 = vrot.slane %v1265, 5
        %v1268 = vsel %vm1206, %v1263, %v1267
        %v1269 = vshrl.u32 %v1163, 16
        %v1271 = vrot.slane %v1269, 4
        %v1272 = vor.u32 %v1271, %v1267
        %v1273 = vrot.slane %v1272, 4
        %v1275 = vshll.u32 %v1164, 16
        %v1277 = vrot.slane %v1275, 5
        %v1278 = vsel %vm1206, %v1273, %v1277
        %v1280 = vshrl.u32 %v1165, 16
        %v1282 = vrot.slane %v1280, 4
        %v1283 = vshll.u32 %v1165, 16
        %v1285 = vrot.slane %v1283, 5
        %v1286 = vor.u32 %v1282, %v1285
        %v1287 = vrot.slane %v1286, 4
        %v1289 = vshll.u32 %v1166, 16
        %v1291 = vrot.slane %v1289, 5
        %v1292 = vsel %vm1206, %v1287, %v1291
        %v1293 = vshrl.u32 %v1166, 16
        %v1295 = vrot.slane %v1293, 4
        %v1296 = vor.u32 %v1295, %v1291
        %v1297 = vrot.slane %v1296, 4
        %v1299 = vshll.u32 %v1167, 16
        %v1301 = vrot.slane %v1299, 5
        %v1302 = vsel %vm1206, %v1297, %v1301
        %v1304 = vshrl.u32 %v1168, 16
        %v1306 = vrot.slane %v1304, 4
        %v1307 = vshll.u32 %v1168, 16
        %v1309 = vrot.slane %v1307, 5
        %v1310 = vor.u32 %v1306, %v1309
        %v1311 = vrot.slane %v1310, 4
        %v1313 = vshll.u32 %v1169, 16
        %v1315 = vrot.slane %v1313, 5
        %v1316 = vsel %vm1206, %v1311, %v1315
        %v1317 = vshrl.u32 %v1169, 16
        %v1319 = vrot.slane %v1317, 4
        %v1320 = vor.u32 %v1319, %v1315
        %v1321 = vrot.slane %v1320, 4
        %v1323 = vshll.u32 %v1170, 16
        %v1325 = vrot.slane %v1323, 5
        %v1326 = vsel %vm1206, %v1321, %v1325
        %v1328 = vshrl.u32 %v1171, 16
        %v1330 = vrot.slane %v1328, 4
        %v1331 = vshll.u32 %v1171, 16
        %v1333 = vrot.slane %v1331, 5
        %v1334 = vor.u32 %v1330, %v1333
        %v1335 = vrot.slane %v1334, 4
        %v1337 = vshll.u32 %v1172, 16
        %v1339 = vrot.slane %v1337, 5
        %v1340 = vsel %vm1206, %v1335, %v1339
        %v1341 = vshrl.u32 %v1172, 16
        %v1343 = vrot.slane %v1341, 4
        %v1344 = vor.u32 %v1343, %v1339
        %v1345 = vrot.slane %v1344, 4
        %v1347 = vshll.u32 %v1173, 16
        %v1349 = vrot.slane %v1347, 5
        %v1350 = vsel %vm1206, %v1345, %v1349
        %v1352 = vshrl.u32 %v1174, 16
        %v1354 = vrot.slane %v1352, 4
        %v1355 = vshll.u32 %v1174, 16
        %v1357 = vrot.slane %v1355, 5
        %v1358 = vor.u32 %v1354, %v1357
        %v1359 = vrot.slane %v1358, 4
        %v1361 = vshll.u32 %v1175, 16
        %v1363 = vrot.slane %v1361, 5
        %v1364 = vsel %vm1206, %v1359, %v1363
        %v1365 = vshrl.u32 %v1175, 16
        %v1367 = vrot.slane %v1365, 4
        %v1368 = vor.u32 %v1367, %v1363
        %v1369 = vrot.slane %v1368, 4
        %v1371 = vshll.u32 %v1176, 16
        %v1373 = vrot.slane %v1371, 5
        %v1374 = vsel %vm1206, %v1369, %v1373
        %v1376 = vshrl.u32 %v1177, 16
        %v1378 = vrot.slane %v1376, 4
        %v1379 = vshll.u32 %v1177, 16
        %v1381 = vrot.slane %v1379, 5
        %v1382 = vor.u32 %v1378, %v1381
        %v1383 = vrot.slane %v1382, 4
        %v1385 = vshll.u32 %v1178, 16
        %v1387 = vrot.slane %v1385, 5
        %v1388 = vsel %vm1206, %v1383, %v1387
        %v1389 = vshrl.u32 %v1178, 16
        %v1391 = vrot.slane %v1389, 4
        %v1392 = vor.u32 %v1391, %v1387
        %v1393 = vrot.slane %v1392, 4
        %v1395 = vshll.u32 %v1179, 16
        %v1397 = vrot.slane %v1395, 5
        %v1398 = vsel %vm1206, %v1393, %v1397
        %v1400 = vshrl.u32 %v1180, 16
        %v1402 = vrot.slane %v1400, 4
        %v1403 = vshll.u32 %v1180, 16
        %v1405 = vrot.slane %v1403, 5
        %v1406 = vor.u32 %v1402, %v1405
        %v1407 = vrot.slane %v1406, 4
        %v1409 = vshll.u32 %v1181, 16
        %v1411 = vrot.slane %v1409, 5
        %v1412 = vsel %vm1206, %v1407, %v1411
        %v1413 = vshrl.u32 %v1181, 16
        %v1415 = vrot.slane %v1413, 4
        %v1416 = vor.u32 %v1415, %v1411
        %v1417 = vrot.slane %v1416, 4
        %v1419 = vshll.u32 %v1182, 16
        %v1421 = vrot.slane %v1419, 5
        %v1422 = vsel %vm1206, %v1417, %v1421
        %v1424 = vshrl.u32 %v1183, 16
        %v1426 = vrot.slane %v1424, 4
        %v1427 = vshll.u32 %v1183, 16
        %v1429 = vrot.slane %v1427, 5
        %v1430 = vor.u32 %v1426, %v1429
        %v1431 = vrot.slane %v1430, 4
        %v1433 = vshll.u32 %v1184, 16
        %v1435 = vrot.slane %v1433, 5
        %v1436 = vsel %vm1206, %v1431, %v1435
        %v1437 = vshrl.u32 %v1184, 16
        %v1439 = vrot.slane %v1437, 4
        %v1440 = vor.u32 %v1439, %v1435
        %v1441 = vrot.slane %v1440, 4
        %v1443 = vshll.u32 %v1185, 16
        %v1445 = vrot.slane %v1443, 5
        %v1446 = vsel %vm1206, %v1441, %v1445
        %v1448 = vshrl.u32 %v1186, 16
        %v1450 = vrot.slane %v1448, 4
        %v1451 = vshll.u32 %v1186, 16
        %v1453 = vrot.slane %v1451, 5
        %v1454 = vor.u32 %v1450, %v1453
        %v1455 = vrot.slane %v1454, 4
        %v1457 = vshll.u32 %v1187, 16
        %v1459 = vrot.slane %v1457, 5
        %v1460 = vsel %vm1206, %v1455, %v1459
        %v1461 = vshrl.u32 %v1187, 16
        %v1463 = vrot.slane %v1461, 4
        %v1464 = vor.u32 %v1463, %v1459
        %v1465 = vrot.slane %v1464, 4
        %v1467 = vshll.u32 %v1188, 16
        %v1469 = vrot.slane %v1467, 5
        %v1470 = vsel %vm1206, %v1465, %v1469
        %v1472 = vshrl.u32 %v1189, 16
        %v1474 = vrot.slane %v1472, 4
        %v1475 = vshll.u32 %v1189, 16
        %v1477 = vrot.slane %v1475, 5
        %v1478 = vor.u32 %v1474, %v1477
        %v1479 = vrot.slane %v1478, 4
        %v1481 = vshll.u32 %v1190, 16
        %v1483 = vrot.slane %v1481, 5
        %v1484 = vsel %vm1206, %v1479, %v1483
        %v1485 = vshrl.u32 %v1190, 16
        %v1487 = vrot.slane %v1485, 4
        %v1488 = vor.u32 %v1487, %v1483
        %v1489 = vrot.slane %v1488, 4
        %v1491 = vshll.u32 %v1191, 16
        %v1493 = vrot.slane %v1491, 5
        %v1494 = vsel %vm1206, %v1489, %v1493
        %v1496 = vshrl.u32 %v1192, 16
        %v1498 = vrot.slane %v1496, 4
        %v1499 = vshll.u32 %v1192, 16
        %v1501 = vrot.slane %v1499, 5
        %v1502 = vor.u32 %v1498, %v1501
        %v1503 = vrot.slane %v1502, 4
        %v1505 = vshll.u32 %v1193, 16
        %v1507 = vrot.slane %v1505, 5
        %v1508 = vsel %vm1206, %v1503, %v1507
        %v1509 = vshrl.u32 %v1193, 16
        %v1511 = vrot.slane %v1509, 4
        %v1512 = vor.u32 %v1511, %v1507
        %v1513 = vrot.slane %v1512, 4
        %v1515 = vshll.u32 %v1194, 16
        %v1517 = vrot.slane %v1515, 5
        %v1518 = vsel %vm1206, %v1513, %v1517
        %v1520 = vshrl.u32 %v1195, 16
        %v1522 = vrot.slane %v1520, 4
        %v1523 = vshll.u32 %v1195, 16
        %v1525 = vrot.slane %v1523, 5
        %v1526 = vor.u32 %v1522, %v1525
        %v1527 = vrot.slane %v1526, 4
        %v1529 = vshll.u32 %v1196, 16
        %v1531 = vrot.slane %v1529, 5
        %v1532 = vsel %vm1206, %v1527, %v1531
        %v1533 = vshrl.u32 %v1196, 16
        %v1535 = vrot.slane %v1533, 4
        %v1536 = vor.u32 %v1535, %v1531
        %v1537 = vrot.slane %v1536, 4
        %v1539 = vshll.u32 %v1197, 16
        %v1541 = vrot.slane %v1539, 5
        %v1542 = vsel %vm1206, %v1537, %v1541
        %v1544 = vshrl.u32 %v1198, 16
        %v1546 = vrot.slane %v1544, 4
        %v1547 = vshll.u32 %v1198, 16
        %v1549 = vrot.slane %v1547, 5
        %v1550 = vor.u32 %v1546, %v1549
        %v1551 = vrot.slane %v1550, 4
        %v1553 = vshll.u32 %v1199, 16
        %v1555 = vrot.slane %v1553, 5
        %v1556 = vsel %vm1206, %v1551, %v1555
        %v1557 = vshrl.u32 %v1199, 16
        %v1559 = vrot.slane %v1557, 4
        %v1560 = vor.u32 %v1559, %v1555
        %v1561 = vrot.slane %v1560, 4
        %v1563 = vshll.u32 %v1200, 16
        %v1565 = vrot.slane %v1563, 5
        %v1566 = vsel %vm1206, %v1561, %v1565
        %v1568 = vshrl.u32 %v1201, 16
        %v1570 = vrot.slane %v1568, 4
        %v1571 = vshll.u32 %v1201, 16
        %v1573 = vrot.slane %v1571, 5
        %v1574 = vor.u32 %v1570, %v1573
        %v1575 = vrot.slane %v1574, 4
        %v1577 = vshll.u32 %v1202, 16
        %v1579 = vrot.slane %v1577, 5
        %v1580 = vsel %vm1206, %v1575, %v1579
        %v1581 = vshrl.u32 %v1202, 16
        %v1583 = vrot.slane %v1581, 4
        %v1584 = vor.u32 %v1583, %v1579
        %v1585 = vrot.slane %v1584, 4
        %v1587 = vshll.u32 %v1203, 16
        %v1589 = vrot.slane %v1587, 5
        %v1590 = vsel %vm1206, %v1585, %v1589
        %1623 = vst [vmem:[#allocation3 + $0x4] sm:$0xf] %v1220
        %1624 = vst [vmem:[#allocation3 + $0x28] sm:$0xf] %v1230
        %1625 = vst [vmem:[#allocation3 + $0x4c] sm:$0xf] %v1244
        %1626 = vst [vmem:[#allocation3 + $0x70] sm:$0xf] %v1254
        %1627 = vst [vmem:[#allocation3 + $0x94] sm:$0xf] %v1268
        %1628 = vst [vmem:[#allocation3 + $0xb8] sm:$0xf] %v1278
        %1629 = vst [vmem:[#allocation3 + $0xdc] sm:$0xf] %v1292
        %1630 = vst [vmem:[#allocation3 + $0x100] sm:$0xf] %v1302
        %1631 = vst [vmem:[#allocation3 + $0x124] sm:$0xf] %v1316
        %1632 = vst [vmem:[#allocation3 + $0x148] sm:$0xf] %v1326
        %1633 = vst [vmem:[#allocation3 + $0x16c] sm:$0xf] %v1340
        %1634 = vst [vmem:[#allocation3 + $0x190] sm:$0xf] %v1350
        %1635 = vst [vmem:[#allocation3 + $0x1b4] sm:$0xf] %v1364
        %1636 = vst [vmem:[#allocation3 + $0x1d8] sm:$0xf] %v1374
        %1637 = vst [vmem:[#allocation3 + $0x1fc] sm:$0xf] %v1388
        %1638 = vst [vmem:[#allocation3 + $0x220] sm:$0xf] %v1398
        %1639 = vst [vmem:[#allocation3 + $0x244] sm:$0xf] %v1412
        %1640 = vst [vmem:[#allocation3 + $0x268] sm:$0xf] %v1422
        %1641 = vst [vmem:[#allocation3 + $0x28c] sm:$0xf] %v1436
        %1642 = vst [vmem:[#allocation3 + $0x2b0] sm:$0xf] %v1446
        %1643 = vst [vmem:[#allocation3 + $0x2d4] sm:$0xf] %v1460
        %1644 = vst [vmem:[#allocation3 + $0x2f8] sm:$0xf] %v1470
        %1645 = vst [vmem:[#allocation3 + $0x31c] sm:$0xf] %v1484
        %1646 = vst [vmem:[#allocation3 + $0x340] sm:$0xf] %v1494
        %1647 = vst [vmem:[#allocation3 + $0x364] sm:$0xf] %v1508
        %1648 = vst [vmem:[#allocation3 + $0x388] sm:$0xf] %v1518
        %1649 = vst [vmem:[#allocation3 + $0x3ac] sm:$0xf] %v1532
        %1650 = vst [vmem:[#allocation3 + $0x3d0] sm:$0xf] %v1542
        %1651 = vst [vmem:[#allocation3 + $0x3f4] sm:$0xf] %v1556
        %1652 = vst [vmem:[#allocation3 + $0x418] sm:$0xf] %v1566
        %1653 = vst [vmem:[#allocation3 + $0x43c] sm:$0xf] %v1580
        %1654 = vst [vmem:[#allocation3 + $0x460] sm:$0xf] %v1590
        %v1655 = vld [vmem:[#allocation2] sm:$0xe]
        %v1656 = vld [vmem:[#allocation2 + $0x4] sm:$0xf]
        %v1657 = vld [vmem:[#allocation2 + $0x8] sm:$0x1]
        %v1658 = vld [vmem:[#allocation2 + $0xc] sm:$0xe]
        %v1659 = vld [vmem:[#allocation2 + $0x10] sm:$0xf]
        %v1660 = vld [vmem:[#allocation2 + $0x14] sm:$0x1]
        %v1661 = vld [vmem:[#allocation2 + $0x18] sm:$0xe]
        %v1662 = vld [vmem:[#allocation2 + $0x1c] sm:$0xf]
        %v1663 = vld [vmem:[#allocation2 + $0x20] sm:$0x1]
        %v1664 = vld [vmem:[#allocation2 + $0x24] sm:$0xe]
        %v1665 = vld [vmem:[#allocation2 + $0x28] sm:$0xf]
        %v1666 = vld [vmem:[#allocation2 + $0x2c] sm:$0x1]
        %v1667 = vld [vmem:[#allocation2 + $0x30] sm:$0xe]
        %v1668 = vld [vmem:[#allocation2 + $0x34] sm:$0xf]
        %v1669 = vld [vmem:[#allocation2 + $0x38] sm:$0x1]
        %v1670 = vld [vmem:[#allocation2 + $0x3c] sm:$0xe]
        %v1671 = vld [vmem:[#allocation2 + $0x40] sm:$0xf]
        %v1672 = vld [vmem:[#allocation2 + $0x44] sm:$0x1]
        %v1673 = vld [vmem:[#allocation2 + $0x48] sm:$0xe]
        %v1674 = vld [vmem:[#allocation2 + $0x4c] sm:$0xf]
        %v1675 = vld [vmem:[#allocation2 + $0x50] sm:$0x1]
        %v1676 = vld [vmem:[#allocation2 + $0x54] sm:$0xe]
        %v1677 = vld [vmem:[#allocation2 + $0x58] sm:$0xf]
        %v1678 = vld [vmem:[#allocation2 + $0x5c] sm:$0x1]
        %v1679 = vld [vmem:[#allocation2 + $0x60] sm:$0xe]
        %v1680 = vld [vmem:[#allocation2 + $0x64] sm:$0xf]
        %v1681 = vld [vmem:[#allocation2 + $0x68] sm:$0x1]
        %v1682 = vld [vmem:[#allocation2 + $0x6c] sm:$0xe]
        %v1683 = vld [vmem:[#allocation2 + $0x70] sm:$0xf]
        %v1684 = vld [vmem:[#allocation2 + $0x74] sm:$0x1]
        %v1685 = vld [vmem:[#allocation2 + $0x78] sm:$0xe]
        %v1686 = vld [vmem:[#allocation2 + $0x7c] sm:$0xf]
        %v1687 = vld [vmem:[#allocation2 + $0x80] sm:$0x1]
        %v1688 = vld [vmem:[#allocation2 + $0x84] sm:$0xe]
        %v1689 = vld [vmem:[#allocation2 + $0x88] sm:$0xf]
        %v1690 = vld [vmem:[#allocation2 + $0x8c] sm:$0x1]
        %v1691 = vld [vmem:[#allocation2 + $0x90] sm:$0xe]
        %v1692 = vld [vmem:[#allocation2 + $0x94] sm:$0xf]
        %v1693 = vld [vmem:[#allocation2 + $0x98] sm:$0x1]
        %v1694 = vld [vmem:[#allocation2 + $0x9c] sm:$0xe]
        %v1695 = vld [vmem:[#allocation2 + $0xa0] sm:$0xf]
        %v1696 = vld [vmem:[#allocation2 + $0xa4] sm:$0x1]
        %v1697 = vld [vmem:[#allocation2 + $0xa8] sm:$0xe]
        %v1698 = vld [vmem:[#allocation2 + $0xac] sm:$0xf]
        %v1699 = vld [vmem:[#allocation2 + $0xb0] sm:$0x1]
        %v1700 = vld [vmem:[#allocation2 + $0xb4] sm:$0xe]
        %v1701 = vld [vmem:[#allocation2 + $0xb8] sm:$0xf]
        %v1702 = vld [vmem:[#allocation2 + $0xbc] sm:$0x1]
        %vm1751 = vcmask 1042432
        %vm1752 = vcmask 1046532
        %vm1753 = vmor %vm1751, %vm1752
        %v1754 = vrot.slane %v1655, 5
        %v1755 = vrot.slane %v1754, 4
        %v1756 = vrot.slane %v1656, 5
        %v1757 = vsel %vm1753, %v1755, %v1756
        %v1758 = vrot.slane %v1756, 4
        %v1759 = vrot.slane %v1657, 5
        %v1760 = vsel %vm1753, %v1758, %v1759
        %v1761 = vrot.slane %v1658, 5
        %v1762 = vrot.slane %v1761, 4
        %v1763 = vrot.slane %v1659, 5
        %v1764 = vsel %vm1753, %v1762, %v1763
        %v1765 = vrot.slane %v1763, 4
        %v1766 = vrot.slane %v1660, 5
        %v1767 = vsel %vm1753, %v1765, %v1766
        %v1768 = vrot.slane %v1661, 5
        %v1769 = vrot.slane %v1768, 4
        %v1770 = vrot.slane %v1662, 5
        %v1771 = vsel %vm1753, %v1769, %v1770
        %v1772 = vrot.slane %v1770, 4
        %v1773 = vrot.slane %v1663, 5
        %v1774 = vsel %vm1753, %v1772, %v1773
        %v1775 = vrot.slane %v1664, 5
        %v1776 = vrot.slane %v1775, 4
        %v1777 = vrot.slane %v1665, 5
        %v1778 = vsel %vm1753, %v1776, %v1777
        %v1779 = vrot.slane %v1777, 4
        %v1780 = vrot.slane %v1666, 5
        %v1781 = vsel %vm1753, %v1779, %v1780
        %v1782 = vrot.slane %v1667, 5
        %v1783 = vrot.slane %v1782, 4
        %v1784 = vrot.slane %v1668, 5
        %v1785 = vsel %vm1753, %v1783, %v1784
        %v1786 = vrot.slane %v1784, 4
        %v1787 = vrot.slane %v1669, 5
        %v1788 = vsel %vm1753, %v1786, %v1787
        %v1789 = vrot.slane %v1670, 5
        %v1790 = vrot.slane %v1789, 4
        %v1791 = vrot.slane %v1671, 5
        %v1792 = vsel %vm1753, %v1790, %v1791
        %v1793 = vrot.slane %v1791, 4
        %v1794 = vrot.slane %v1672, 5
        %v1795 = vsel %vm1753, %v1793, %v1794
        %v1796 = vrot.slane %v1673, 5
        %v1797 = vrot.slane %v1796, 4
        %v1798 = vrot.slane %v1674, 5
        %v1799 = vsel %vm1753, %v1797, %v1798
        %v1800 = vrot.slane %v1798, 4
        %v1801 = vrot.slane %v1675, 5
        %v1802 = vsel %vm1753, %v1800, %v1801
        %v1803 = vrot.slane %v1676, 5
        %v1804 = vrot.slane %v1803, 4
        %v1805 = vrot.slane %v1677, 5
        %v1806 = vsel %vm1753, %v1804, %v1805
        %v1807 = vrot.slane %v1805, 4
        %v1808 = vrot.slane %v1678, 5
        %v1809 = vsel %vm1753, %v1807, %v1808
        %v1810 = vrot.slane %v1679, 5
        %v1811 = vrot.slane %v1810, 4
        %v1812 = vrot.slane %v1680, 5
        %v1813 = vsel %vm1753, %v1811, %v1812
        %v1814 = vrot.slane %v1812, 4
        %v1815 = vrot.slane %v1681, 5
        %v1816 = vsel %vm1753, %v1814, %v1815
        %v1817 = vrot.slane %v1682, 5
        %v1818 = vrot.slane %v1817, 4
        %v1819 = vrot.slane %v1683, 5
        %v1820 = vsel %vm1753, %v1818, %v1819
        %v1821 = vrot.slane %v1819, 4
        %v1822 = vrot.slane %v1684, 5
        %v1823 = vsel %vm1753, %v1821, %v1822
        %v1824 = vrot.slane %v1685, 5
        %v1825 = vrot.slane %v1824, 4
        %v1826 = vrot.slane %v1686, 5
        %v1827 = vsel %vm1753, %v1825, %v1826
        %v1828 = vrot.slane %v1826, 4
        %v1829 = vrot.slane %v1687, 5
        %v1830 = vsel %vm1753, %v1828, %v1829
        %v1831 = vrot.slane %v1688, 5
        %v1832 = vrot.slane %v1831, 4
        %v1833 = vrot.slane %v1689, 5
        %v1834 = vsel %vm1753, %v1832, %v1833
        %v1835 = vrot.slane %v1833, 4
        %v1836 = vrot.slane %v1690, 5
        %v1837 = vsel %vm1753, %v1835, %v1836
        %v1838 = vrot.slane %v1691, 5
        %v1839 = vrot.slane %v1838, 4
        %v1840 = vrot.slane %v1692, 5
        %v1841 = vsel %vm1753, %v1839, %v1840
        %v1842 = vrot.slane %v1840, 4
        %v1843 = vrot.slane %v1693, 5
        %v1844 = vsel %vm1753, %v1842, %v1843
        %v1845 = vrot.slane %v1694, 5
        %v1846 = vrot.slane %v1845, 4
        %v1847 = vrot.slane %v1695, 5
        %v1848 = vsel %vm1753, %v1846, %v1847
        %v1849 = vrot.slane %v1847, 4
        %v1850 = vrot.slane %v1696, 5
        %v1851 = vsel %vm1753, %v1849, %v1850
        %v1852 = vrot.slane %v1697, 5
        %v1853 = vrot.slane %v1852, 4
        %v1854 = vrot.slane %v1698, 5
        %v1855 = vsel %vm1753, %v1853, %v1854
        %v1856 = vrot.slane %v1854, 4
        %v1857 = vrot.slane %v1699, 5
        %v1858 = vsel %vm1753, %v1856, %v1857
        %v1859 = vrot.slane %v1700, 5
        %v1860 = vrot.slane %v1859, 4
        %v1861 = vrot.slane %v1701, 5
        %v1862 = vsel %vm1753, %v1860, %v1861
        %v1863 = vrot.slane %v1861, 4
        %v1864 = vrot.slane %v1702, 5
        %v1865 = vsel %vm1753, %v1863, %v1864
        %1898 = vst [vmem:[#allocation3 + $0x8] sm:$0xf] %v1757
        %1899 = vst [vmem:[#allocation3 + $0x2c] sm:$0xf] %v1760
        %1900 = vst [vmem:[#allocation3 + $0x50] sm:$0xf] %v1764
        %1901 = vst [vmem:[#allocation3 + $0x74] sm:$0xf] %v1767
        %1902 = vst [vmem:[#allocation3 + $0x98] sm:$0xf] %v1771
        %1903 = vst [vmem:[#allocation3 + $0xbc] sm:$0xf] %v1774
        %1904 = vst [vmem:[#allocation3 + $0xe0] sm:$0xf] %v1778
        %1905 = vst [vmem:[#allocation3 + $0x104] sm:$0xf] %v1781
        %1906 = vst [vmem:[#allocation3 + $0x128] sm:$0xf] %v1785
        %1907 = vst [vmem:[#allocation3 + $0x14c] sm:$0xf] %v1788
        %1908 = vst [vmem:[#allocation3 + $0x170] sm:$0xf] %v1792
        %1909 = vst [vmem:[#allocation3 + $0x194] sm:$0xf] %v1795
        %1910 = vst [vmem:[#allocation3 + $0x1b8] sm:$0xf] %v1799
        %1911 = vst [vmem:[#allocation3 + $0x1dc] sm:$0xf] %v1802
        %1912 = vst [vmem:[#allocation3 + $0x200] sm:$0xf] %v1806
        %1913 = vst [vmem:[#allocation3 + $0x224] sm:$0xf] %v1809
        %1914 = vst [vmem:[#allocation3 + $0x248] sm:$0xf] %v1813
        %1915 = vst [vmem:[#allocation3 + $0x26c] sm:$0xf] %v1816
        %1916 = vst [vmem:[#allocation3 + $0x290] sm:$0xf] %v1820
        %1917 = vst [vmem:[#allocation3 + $0x2b4] sm:$0xf] %v1823
        %1918 = vst [vmem:[#allocation3 + $0x2d8] sm:$0xf] %v1827
        %1919 = vst [vmem:[#allocation3 + $0x2fc] sm:$0xf] %v1830
        %1920 = vst [vmem:[#allocation3 + $0x320] sm:$0xf] %v1834
        %1921 = vst [vmem:[#allocation3 + $0x344] sm:$0xf] %v1837
        %1922 = vst [vmem:[#allocation3 + $0x368] sm:$0xf] %v1841
        %1923 = vst [vmem:[#allocation3 + $0x38c] sm:$0xf] %v1844
        %1924 = vst [vmem:[#allocation3 + $0x3b0] sm:$0xf] %v1848
        %1925 = vst [vmem:[#allocation3 + $0x3d4] sm:$0xf] %v1851
        %1926 = vst [vmem:[#allocation3 + $0x3f8] sm:$0xf] %v1855
        %1927 = vst [vmem:[#allocation3 + $0x41c] sm:$0xf] %v1858
        %1928 = vst [vmem:[#allocation3 + $0x440] sm:$0xf] %v1862
        %1929 = vst [vmem:[#allocation3 + $0x464] sm:$0xf] %v1865
        %v1930 = vld [vmem:[%s974] sm:$0xf]
        %v1931 = vld [vmem:[%s974 + $0x4] sm:$0xf]
        %v1932 = vld [vmem:[%s974 + $0xc] sm:$0xf]
        %v1933 = vld [vmem:[%s974 + $0x10] sm:$0xf]
        %v1934 = vld [vmem:[%s974 + $0x18] sm:$0xf]
        %v1935 = vld [vmem:[%s974 + $0x1c] sm:$0xf]
        %v1936 = vld [vmem:[%s974 + $0x24] sm:$0xf]
        %v1937 = vld [vmem:[%s974 + $0x28] sm:$0xf]
        %v1938 = vld [vmem:[%s974 + $0x30] sm:$0xf]
        %v1939 = vld [vmem:[%s974 + $0x34] sm:$0xf]
        %v1940 = vld [vmem:[%s974 + $0x3c] sm:$0xf]
        %v1941 = vld [vmem:[%s974 + $0x40] sm:$0xf]
        %v1942 = vld [vmem:[%s974 + $0x48] sm:$0xf]
        %v1943 = vld [vmem:[%s974 + $0x4c] sm:$0xf]
        %v1944 = vld [vmem:[%s974 + $0x54] sm:$0xf]
        %v1945 = vld [vmem:[%s974 + $0x58] sm:$0xf]
        %v1946 = vld [vmem:[%s974 + $0x60] sm:$0xf]
        %v1947 = vld [vmem:[%s974 + $0x64] sm:$0xf]
        %v1948 = vld [vmem:[%s974 + $0x6c] sm:$0xf]
        %v1949 = vld [vmem:[%s974 + $0x70] sm:$0xf]
        %v1950 = vld [vmem:[%s974 + $0x78] sm:$0xf]
        %v1951 = vld [vmem:[%s974 + $0x7c] sm:$0xf]
        %v1952 = vld [vmem:[%s974 + $0x84] sm:$0xf]
        %v1953 = vld [vmem:[%s974 + $0x88] sm:$0xf]
        %v1954 = vld [vmem:[%s974 + $0x90] sm:$0xf]
        %v1955 = vld [vmem:[%s974 + $0x94] sm:$0xf]
        %v1956 = vld [vmem:[%s974 + $0x9c] sm:$0xf]
        %v1957 = vld [vmem:[%s974 + $0xa0] sm:$0xf]
        %v1958 = vld [vmem:[%s974 + $0xa8] sm:$0xf]
        %v1959 = vld [vmem:[%s974 + $0xac] sm:$0xf]
        %v1960 = vld [vmem:[%s974 + $0xb4] sm:$0xf]
        %v1961 = vld [vmem:[%s974 + $0xb8] sm:$0xf]
        %1962 = vst [vmem:[#allocation3 + $0xc] sm:$0xf] %v1930
        %1963 = vst [vmem:[#allocation3 + $0x30] sm:$0xf] %v1931
        %1964 = vst [vmem:[#allocation3 + $0x54] sm:$0xf] %v1932
        %1965 = vst [vmem:[#allocation3 + $0x78] sm:$0xf] %v1933
        %1966 = vst [vmem:[#allocation3 + $0x9c] sm:$0xf] %v1934
        %1967 = vst [vmem:[#allocation3 + $0xc0] sm:$0xf] %v1935
        %1968 = vst [vmem:[#allocation3 + $0xe4] sm:$0xf] %v1936
        %1969 = vst [vmem:[#allocation3 + $0x108] sm:$0xf] %v1937
        %1970 = vst [vmem:[#allocation3 + $0x12c] sm:$0xf] %v1938
        %1971 = vst [vmem:[#allocation3 + $0x150] sm:$0xf] %v1939
        %1972 = vst [vmem:[#allocation3 + $0x174] sm:$0xf] %v1940
        %1973 = vst [vmem:[#allocation3 + $0x198] sm:$0xf] %v1941
        %1974 = vst [vmem:[#allocation3 + $0x1bc] sm:$0xf] %v1942
        %1975 = vst [vmem:[#allocation3 + $0x1e0] sm:$0xf] %v1943
        %1976 = vst [vmem:[#allocation3 + $0x204] sm:$0xf] %v1944
        %1977 = vst [vmem:[#allocation3 + $0x228] sm:$0xf] %v1945
        %1978 = vst [vmem:[#allocation3 + $0x24c] sm:$0xf] %v1946
        %1979 = vst [vmem:[#allocation3 + $0x270] sm:$0xf] %v1947
        %1980 = vst [vmem:[#allocation3 + $0x294] sm:$0xf] %v1948
        %1981 = vst [vmem:[#allocation3 + $0x2b8] sm:$0xf] %v1949
        %1982 = vst [vmem:[#allocation3 + $0x2dc] sm:$0xf] %v1950
        %1983 = vst [vmem:[#allocation3 + $0x300] sm:$0xf] %v1951
        %1984 = vst [vmem:[#allocation3 + $0x324] sm:$0xf] %v1952
        %1985 = vst [vmem:[#allocation3 + $0x348] sm:$0xf] %v1953
        %1986 = vst [vmem:[#allocation3 + $0x36c] sm:$0xf] %v1954
        %1987 = vst [vmem:[#allocation3 + $0x390] sm:$0xf] %v1955
        %1988 = vst [vmem:[#allocation3 + $0x3b4] sm:$0xf] %v1956
        %1989 = vst [vmem:[#allocation3 + $0x3d8] sm:$0xf] %v1957
        %1990 = vst [vmem:[#allocation3 + $0x3fc] sm:$0xf] %v1958
        %1991 = vst [vmem:[#allocation3 + $0x420] sm:$0xf] %v1959
        %1992 = vst [vmem:[#allocation3 + $0x444] sm:$0xf] %v1960
        %1993 = vst [vmem:[#allocation3 + $0x468] sm:$0xf] %v1961
        %v1994 = vld [vmem:[%s974] sm:$0xf]
        %v1995 = vld [vmem:[%s974 + $0x4] sm:$0xf]
        %v1996 = vld [vmem:[%s974 + $0x8] sm:$0x1]
        %v1997 = vld [vmem:[%s974 + $0xc] sm:$0xf]
        %v1998 = vld [vmem:[%s974 + $0x10] sm:$0xf]
        %v1999 = vld [vmem:[%s974 + $0x14] sm:$0x1]
        %v2000 = vld [vmem:[%s974 + $0x18] sm:$0xf]
        %v2001 = vld [vmem:[%s974 + $0x1c] sm:$0xf]
        %v2002 = vld [vmem:[%s974 + $0x20] sm:$0x1]
        %v2003 = vld [vmem:[%s974 + $0x24] sm:$0xf]
        %v2004 = vld [vmem:[%s974 + $0x28] sm:$0xf]
        %v2005 = vld [vmem:[%s974 + $0x2c] sm:$0x1]
        %v2006 = vld [vmem:[%s974 + $0x30] sm:$0xf]
        %v2007 = vld [vmem:[%s974 + $0x34] sm:$0xf]
        %v2008 = vld [vmem:[%s974 + $0x38] sm:$0x1]
        %v2009 = vld [vmem:[%s974 + $0x3c] sm:$0xf]
        %v2010 = vld [vmem:[%s974 + $0x40] sm:$0xf]
        %v2011 = vld [vmem:[%s974 + $0x44] sm:$0x1]
        %v2012 = vld [vmem:[%s974 + $0x48] sm:$0xf]
        %v2013 = vld [vmem:[%s974 + $0x4c] sm:$0xf]
        %v2014 = vld [vmem:[%s974 + $0x50] sm:$0x1]
        %v2015 = vld [vmem:[%s974 + $0x54] sm:$0xf]
        %v2016 = vld [vmem:[%s974 + $0x58] sm:$0xf]
        %v2017 = vld [vmem:[%s974 + $0x5c] sm:$0x1]
        %v2018 = vld [vmem:[%s974 + $0x60] sm:$0xf]
        %v2019 = vld [vmem:[%s974 + $0x64] sm:$0xf]
        %v2020 = vld [vmem:[%s974 + $0x68] sm:$0x1]
        %v2021 = vld [vmem:[%s974 + $0x6c] sm:$0xf]
        %v2022 = vld [vmem:[%s974 + $0x70] sm:$0xf]
        %v2023 = vld [vmem:[%s974 + $0x74] sm:$0x1]
        %v2024 = vld [vmem:[%s974 + $0x78] sm:$0xf]
        %v2025 = vld [vmem:[%s974 + $0x7c] sm:$0xf]
        %v2026 = vld [vmem:[%s974 + $0x80] sm:$0x1]
        %v2027 = vld [vmem:[%s974 + $0x84] sm:$0xf]
        %v2028 = vld [vmem:[%s974 + $0x88] sm:$0xf]
        %v2029 = vld [vmem:[%s974 + $0x8c] sm:$0x1]
        %v2030 = vld [vmem:[%s974 + $0x90] sm:$0xf]
        %v2031 = vld [vmem:[%s974 + $0x94] sm:$0xf]
        %v2032 = vld [vmem:[%s974 + $0x98] sm:$0x1]
        %v2033 = vld [vmem:[%s974 + $0x9c] sm:$0xf]
        %v2034 = vld [vmem:[%s974 + $0xa0] sm:$0xf]
        %v2035 = vld [vmem:[%s974 + $0xa4] sm:$0x1]
        %v2036 = vld [vmem:[%s974 + $0xa8] sm:$0xf]
        %v2037 = vld [vmem:[%s974 + $0xac] sm:$0xf]
        %v2038 = vld [vmem:[%s974 + $0xb0] sm:$0x1]
        %v2039 = vld [vmem:[%s974 + $0xb4] sm:$0xf]
        %v2040 = vld [vmem:[%s974 + $0xb8] sm:$0xf]
        %v2041 = vld [vmem:[%s974 + $0xbc] sm:$0x1]
        %v2043 = vshrl.u32 %v1994, 16
        %v2045 = vrot.slane %v2043, 4
        %v2046 = vshll.u32 %v1994, 16
        %v2048 = vrot.slane %v2046, 5
        %v2049 = vor.u32 %v2045, %v2048
        %v2050 = vrot.slane %v2049, 4
        %v2052 = vshll.u32 %v1995, 16
        %v2054 = vrot.slane %v2052, 5
        %v2055 = vsel %vm1206, %v2050, %v2054
        %v2056 = vshrl.u32 %v1995, 16
        %v2058 = vrot.slane %v2056, 4
        %v2059 = vor.u32 %v2058, %v2054
        %v2060 = vrot.slane %v2059, 4
        %v2062 = vshll.u32 %v1996, 16
        %v2064 = vrot.slane %v2062, 5
        %v2065 = vsel %vm1206, %v2060, %v2064
        %v2067 = vshrl.u32 %v1997, 16
        %v2069 = vrot.slane %v2067, 4
        %v2070 = vshll.u32 %v1997, 16
        %v2072 = vrot.slane %v2070, 5
        %v2073 = vor.u32 %v2069, %v2072
        %v2074 = vrot.slane %v2073, 4
        %v2076 = vshll.u32 %v1998, 16
        %v2078 = vrot.slane %v2076, 5
        %v2079 = vsel %vm1206, %v2074, %v2078
        %v2080 = vshrl.u32 %v1998, 16
        %v2082 = vrot.slane %v2080, 4
        %v2083 = vor.u32 %v2082, %v2078
        %v2084 = vrot.slane %v2083, 4
        %v2086 = vshll.u32 %v1999, 16
        %v2088 = vrot.slane %v2086, 5
        %v2089 = vsel %vm1206, %v2084, %v2088
        %v2091 = vshrl.u32 %v2000, 16
        %v2093 = vrot.slane %v2091, 4
        %v2094 = vshll.u32 %v2000, 16
        %v2096 = vrot.slane %v2094, 5
        %v2097 = vor.u32 %v2093, %v2096
        %v2098 = vrot.slane %v2097, 4
        %v2100 = vshll.u32 %v2001, 16
        %v2102 = vrot.slane %v2100, 5
        %v2103 = vsel %vm1206, %v2098, %v2102
        %v2104 = vshrl.u32 %v2001, 16
        %v2106 = vrot.slane %v2104, 4
        %v2107 = vor.u32 %v2106, %v2102
        %v2108 = vrot.slane %v2107, 4
        %v2110 = vshll.u32 %v2002, 16
        %v2112 = vrot.slane %v2110, 5
        %v2113 = vsel %vm1206, %v2108, %v2112
        %v2115 = vshrl.u32 %v2003, 16
        %v2117 = vrot.slane %v2115, 4
        %v2118 = vshll.u32 %v2003, 16
        %v2120 = vrot.slane %v2118, 5
        %v2121 = vor.u32 %v2117, %v2120
        %v2122 = vrot.slane %v2121, 4
        %v2124 = vshll.u32 %v2004, 16
        %v2126 = vrot.slane %v2124, 5
        %v2127 = vsel %vm1206, %v2122, %v2126
        %v2128 = vshrl.u32 %v2004, 16
        %v2130 = vrot.slane %v2128, 4
        %v2131 = vor.u32 %v2130, %v2126
        %v2132 = vrot.slane %v2131, 4
        %v2134 = vshll.u32 %v2005, 16
        %v2136 = vrot.slane %v2134, 5
        %v2137 = vsel %vm1206, %v2132, %v2136
        %v2139 = vshrl.u32 %v2006, 16
        %v2141 = vrot.slane %v2139, 4
        %v2142 = vshll.u32 %v2006, 16
        %v2144 = vrot.slane %v2142, 5
        %v2145 = vor.u32 %v2141, %v2144
        %v2146 = vrot.slane %v2145, 4
        %v2148 = vshll.u32 %v2007, 16
        %v2150 = vrot.slane %v2148, 5
        %v2151 = vsel %vm1206, %v2146, %v2150
        %v2152 = vshrl.u32 %v2007, 16
        %v2154 = vrot.slane %v2152, 4
        %v2155 = vor.u32 %v2154, %v2150
        %v2156 = vrot.slane %v2155, 4
        %v2158 = vshll.u32 %v2008, 16
        %v2160 = vrot.slane %v2158, 5
        %v2161 = vsel %vm1206, %v2156, %v2160
        %v2163 = vshrl.u32 %v2009, 16
        %v2165 = vrot.slane %v2163, 4
        %v2166 = vshll.u32 %v2009, 16
        %v2168 = vrot.slane %v2166, 5
        %v2169 = vor.u32 %v2165, %v2168
        %v2170 = vrot.slane %v2169, 4
        %v2172 = vshll.u32 %v2010, 16
        %v2174 = vrot.slane %v2172, 5
        %v2175 = vsel %vm1206, %v2170, %v2174
        %v2176 = vshrl.u32 %v2010, 16
        %v2178 = vrot.slane %v2176, 4
        %v2179 = vor.u32 %v2178, %v2174
        %v2180 = vrot.slane %v2179, 4
        %v2182 = vshll.u32 %v2011, 16
        %v2184 = vrot.slane %v2182, 5
        %v2185 = vsel %vm1206, %v2180, %v2184
        %v2187 = vshrl.u32 %v2012, 16
        %v2189 = vrot.slane %v2187, 4
        %v2190 = vshll.u32 %v2012, 16
        %v2192 = vrot.slane %v2190, 5
        %v2193 = vor.u32 %v2189, %v2192
        %v2194 = vrot.slane %v2193, 4
        %v2196 = vshll.u32 %v2013, 16
        %v2198 = vrot.slane %v2196, 5
        %v2199 = vsel %vm1206, %v2194, %v2198
        %v2200 = vshrl.u32 %v2013, 16
        %v2202 = vrot.slane %v2200, 4
        %v2203 = vor.u32 %v2202, %v2198
        %v2204 = vrot.slane %v2203, 4
        %v2206 = vshll.u32 %v2014, 16
        %v2208 = vrot.slane %v2206, 5
        %v2209 = vsel %vm1206, %v2204, %v2208
        %v2211 = vshrl.u32 %v2015, 16
        %v2213 = vrot.slane %v2211, 4
        %v2214 = vshll.u32 %v2015, 16
        %v2216 = vrot.slane %v2214, 5
        %v2217 = vor.u32 %v2213, %v2216
        %v2218 = vrot.slane %v2217, 4
        %v2220 = vshll.u32 %v2016, 16
        %v2222 = vrot.slane %v2220, 5
        %v2223 = vsel %vm1206, %v2218, %v2222
        %v2224 = vshrl.u32 %v2016, 16
        %v2226 = vrot.slane %v2224, 4
        %v2227 = vor.u32 %v2226, %v2222
        %v2228 = vrot.slane %v2227, 4
        %v2230 = vshll.u32 %v2017, 16
        %v2232 = vrot.slane %v2230, 5
        %v2233 = vsel %vm1206, %v2228, %v2232
        %v2235 = vshrl.u32 %v2018, 16
        %v2237 = vrot.slane %v2235, 4
        %v2238 = vshll.u32 %v2018, 16
        %v2240 = vrot.slane %v2238, 5
        %v2241 = vor.u32 %v2237, %v2240
        %v2242 = vrot.slane %v2241, 4
        %v2244 = vshll.u32 %v2019, 16
        %v2246 = vrot.slane %v2244, 5
        %v2247 = vsel %vm1206, %v2242, %v2246
        %v2248 = vshrl.u32 %v2019, 16
        %v2250 = vrot.slane %v2248, 4
        %v2251 = vor.u32 %v2250, %v2246
        %v2252 = vrot.slane %v2251, 4
        %v2254 = vshll.u32 %v2020, 16
        %v2256 = vrot.slane %v2254, 5
        %v2257 = vsel %vm1206, %v2252, %v2256
        %v2259 = vshrl.u32 %v2021, 16
        %v2261 = vrot.slane %v2259, 4
        %v2262 = vshll.u32 %v2021, 16
        %v2264 = vrot.slane %v2262, 5
        %v2265 = vor.u32 %v2261, %v2264
        %v2266 = vrot.slane %v2265, 4
        %v2268 = vshll.u32 %v2022, 16
        %v2270 = vrot.slane %v2268, 5
        %v2271 = vsel %vm1206, %v2266, %v2270
        %v2272 = vshrl.u32 %v2022, 16
        %v2274 = vrot.slane %v2272, 4
        %v2275 = vor.u32 %v2274, %v2270
        %v2276 = vrot.slane %v2275, 4
        %v2278 = vshll.u32 %v2023, 16
        %v2280 = vrot.slane %v2278, 5
        %v2281 = vsel %vm1206, %v2276, %v2280
        %v2283 = vshrl.u32 %v2024, 16
        %v2285 = vrot.slane %v2283, 4
        %v2286 = vshll.u32 %v2024, 16
        %v2288 = vrot.slane %v2286, 5
        %v2289 = vor.u32 %v2285, %v2288
        %v2290 = vrot.slane %v2289, 4
        %v2292 = vshll.u32 %v2025, 16
        %v2294 = vrot.slane %v2292, 5
        %v2295 = vsel %vm1206, %v2290, %v2294
        %v2296 = vshrl.u32 %v2025, 16
        %v2298 = vrot.slane %v2296, 4
        %v2299 = vor.u32 %v2298, %v2294
        %v2300 = vrot.slane %v2299, 4
        %v2302 = vshll.u32 %v2026, 16
        %v2304 = vrot.slane %v2302, 5
        %v2305 = vsel %vm1206, %v2300, %v2304
        %v2307 = vshrl.u32 %v2027, 16
        %v2309 = vrot.slane %v2307, 4
        %v2310 = vshll.u32 %v2027, 16
        %v2312 = vrot.slane %v2310, 5
        %v2313 = vor.u32 %v2309, %v2312
        %v2314 = vrot.slane %v2313, 4
        %v2316 = vshll.u32 %v2028, 16
        %v2318 = vrot.slane %v2316, 5
        %v2319 = vsel %vm1206, %v2314, %v2318
        %v2320 = vshrl.u32 %v2028, 16
        %v2322 = vrot.slane %v2320, 4
        %v2323 = vor.u32 %v2322, %v2318
        %v2324 = vrot.slane %v2323, 4
        %v2326 = vshll.u32 %v2029, 16
        %v2328 = vrot.slane %v2326, 5
        %v2329 = vsel %vm1206, %v2324, %v2328
        %v2331 = vshrl.u32 %v2030, 16
        %v2333 = vrot.slane %v2331, 4
        %v2334 = vshll.u32 %v2030, 16
        %v2336 = vrot.slane %v2334, 5
        %v2337 = vor.u32 %v2333, %v2336
        %v2338 = vrot.slane %v2337, 4
        %v2340 = vshll.u32 %v2031, 16
        %v2342 = vrot.slane %v2340, 5
        %v2343 = vsel %vm1206, %v2338, %v2342
        %v2344 = vshrl.u32 %v2031, 16
        %v2346 = vrot.slane %v2344, 4
        %v2347 = vor.u32 %v2346, %v2342
        %v2348 = vrot.slane %v2347, 4
        %v2350 = vshll.u32 %v2032, 16
        %v2352 = vrot.slane %v2350, 5
        %v2353 = vsel %vm1206, %v2348, %v2352
        %v2355 = vshrl.u32 %v2033, 16
        %v2357 = vrot.slane %v2355, 4
        %v2358 = vshll.u32 %v2033, 16
        %v2360 = vrot.slane %v2358, 5
        %v2361 = vor.u32 %v2357, %v2360
        %v2362 = vrot.slane %v2361, 4
        %v2364 = vshll.u32 %v2034, 16
        %v2366 = vrot.slane %v2364, 5
        %v2367 = vsel %vm1206, %v2362, %v2366
        %v2368 = vshrl.u32 %v2034, 16
        %v2370 = vrot.slane %v2368, 4
        %v2371 = vor.u32 %v2370, %v2366
        %v2372 = vrot.slane %v2371, 4
        %v2374 = vshll.u32 %v2035, 16
        %v2376 = vrot.slane %v2374, 5
        %v2377 = vsel %vm1206, %v2372, %v2376
        %v2379 = vshrl.u32 %v2036, 16
        %v2381 = vrot.slane %v2379, 4
        %v2382 = vshll.u32 %v2036, 16
        %v2384 = vrot.slane %v2382, 5
        %v2385 = vor.u32 %v2381, %v2384
        %v2386 = vrot.slane %v2385, 4
        %v2388 = vshll.u32 %v2037, 16
        %v2390 = vrot.slane %v2388, 5
        %v2391 = vsel %vm1206, %v2386, %v2390
        %v2392 = vshrl.u32 %v2037, 16
        %v2394 = vrot.slane %v2392, 4
        %v2395 = vor.u32 %v2394, %v2390
        %v2396 = vrot.slane %v2395, 4
        %v2398 = vshll.u32 %v2038, 16
        %v2400 = vrot.slane %v2398, 5
        %v2401 = vsel %vm1206, %v2396, %v2400
        %v2403 = vshrl.u32 %v2039, 16
        %v2405 = vrot.slane %v2403, 4
        %v2406 = vshll.u32 %v2039, 16
        %v2408 = vrot.slane %v2406, 5
        %v2409 = vor.u32 %v2405, %v2408
        %v2410 = vrot.slane %v2409, 4
        %v2412 = vshll.u32 %v2040, 16
        %v2414 = vrot.slane %v2412, 5
        %v2415 = vsel %vm1206, %v2410, %v2414
        %v2416 = vshrl.u32 %v2040, 16
        %v2418 = vrot.slane %v2416, 4
        %v2419 = vor.u32 %v2418, %v2414
        %v2420 = vrot.slane %v2419, 4
        %v2422 = vshll.u32 %v2041, 16
        %v2424 = vrot.slane %v2422, 5
        %v2425 = vsel %vm1206, %v2420, %v2424
        %2458 = vst [vmem:[#allocation3 + $0x10] sm:$0xf] %v2055
        %2459 = vst [vmem:[#allocation3 + $0x34] sm:$0xf] %v2065
        %2460 = vst [vmem:[#allocation3 + $0x58] sm:$0xf] %v2079
        %2461 = vst [vmem:[#allocation3 + $0x7c] sm:$0xf] %v2089
        %2462 = vst [vmem:[#allocation3 + $0xa0] sm:$0xf] %v2103
        %2463 = vst [vmem:[#allocation3 + $0xc4] sm:$0xf] %v2113
        %2464 = vst [vmem:[#allocation3 + $0xe8] sm:$0xf] %v2127
        %2465 = vst [vmem:[#allocation3 + $0x10c] sm:$0xf] %v2137
        %2466 = vst [vmem:[#allocation3 + $0x130] sm:$0xf] %v2151
        %2467 = vst [vmem:[#allocation3 + $0x154] sm:$0xf] %v2161
        %2468 = vst [vmem:[#allocation3 + $0x178] sm:$0xf] %v2175
        %2469 = vst [vmem:[#allocation3 + $0x19c] sm:$0xf] %v2185
        %2470 = vst [vmem:[#allocation3 + $0x1c0] sm:$0xf] %v2199
        %2471 = vst [vmem:[#allocation3 + $0x1e4] sm:$0xf] %v2209
        %2472 = vst [vmem:[#allocation3 + $0x208] sm:$0xf] %v2223
        %2473 = vst [vmem:[#allocation3 + $0x22c] sm:$0xf] %v2233
        %2474 = vst [vmem:[#allocation3 + $0x250] sm:$0xf] %v2247
        %2475 = vst [vmem:[#allocation3 + $0x274] sm:$0xf] %v2257
        %2476 = vst [vmem:[#allocation3 + $0x298] sm:$0xf] %v2271
        %2477 = vst [vmem:[#allocation3 + $0x2bc] sm:$0xf] %v2281
        %2478 = vst [vmem:[#allocation3 + $0x2e0] sm:$0xf] %v2295
        %2479 = vst [vmem:[#allocation3 + $0x304] sm:$0xf] %v2305
        %2480 = vst [vmem:[#allocation3 + $0x328] sm:$0xf] %v2319
        %2481 = vst [vmem:[#allocation3 + $0x34c] sm:$0xf] %v2329
        %2482 = vst [vmem:[#allocation3 + $0x370] sm:$0xf] %v2343
        %2483 = vst [vmem:[#allocation3 + $0x394] sm:$0xf] %v2353
        %2484 = vst [vmem:[#allocation3 + $0x3b8] sm:$0xf] %v2367
        %2485 = vst [vmem:[#allocation3 + $0x3dc] sm:$0xf] %v2377
        %2486 = vst [vmem:[#allocation3 + $0x400] sm:$0xf] %v2391
        %2487 = vst [vmem:[#allocation3 + $0x424] sm:$0xf] %v2401
        %2488 = vst [vmem:[#allocation3 + $0x448] sm:$0xf] %v2415
        %2489 = vst [vmem:[#allocation3 + $0x46c] sm:$0xf] %v2425
        %v2490 = vld [vmem:[%s974] sm:$0xe]
        %v2491 = vld [vmem:[%s974 + $0x4] sm:$0xf]
        %v2492 = vld [vmem:[%s974 + $0x8] sm:$0x1]
        %v2493 = vld [vmem:[%s974 + $0xc] sm:$0xe]
        %v2494 = vld [vmem:[%s974 + $0x10] sm:$0xf]
        %v2495 = vld [vmem:[%s974 + $0x14] sm:$0x1]
        %v2496 = vld [vmem:[%s974 + $0x18] sm:$0xe]
        %v2497 = vld [vmem:[%s974 + $0x1c] sm:$0xf]
        %v2498 = vld [vmem:[%s974 + $0x20] sm:$0x1]
        %v2499 = vld [vmem:[%s974 + $0x24] sm:$0xe]
        %v2500 = vld [vmem:[%s974 + $0x28] sm:$0xf]
        %v2501 = vld [vmem:[%s974 + $0x2c] sm:$0x1]
        %v2502 = vld [vmem:[%s974 + $0x30] sm:$0xe]
        %v2503 = vld [vmem:[%s974 + $0x34] sm:$0xf]
        %v2504 = vld [vmem:[%s974 + $0x38] sm:$0x1]
        %v2505 = vld [vmem:[%s974 + $0x3c] sm:$0xe]
        %v2506 = vld [vmem:[%s974 + $0x40] sm:$0xf]
        %v2507 = vld [vmem:[%s974 + $0x44] sm:$0x1]
        %v2508 = vld [vmem:[%s974 + $0x48] sm:$0xe]
        %v2509 = vld [vmem:[%s974 + $0x4c] sm:$0xf]
        %v2510 = vld [vmem:[%s974 + $0x50] sm:$0x1]
        %v2511 = vld [vmem:[%s974 + $0x54] sm:$0xe]
        %v2512 = vld [vmem:[%s974 + $0x58] sm:$0xf]
        %v2513 = vld [vmem:[%s974 + $0x5c] sm:$0x1]
        %v2514 = vld [vmem:[%s974 + $0x60] sm:$0xe]
        %v2515 = vld [vmem:[%s974 + $0x64] sm:$0xf]
        %v2516 = vld [vmem:[%s974 + $0x68] sm:$0x1]
        %v2517 = vld [vmem:[%s974 + $0x6c] sm:$0xe]
        %v2518 = vld [vmem:[%s974 + $0x70] sm:$0xf]
        %v2519 = vld [vmem:[%s974 + $0x74] sm:$0x1]
        %v2520 = vld [vmem:[%s974 + $0x78] sm:$0xe]
        %v2521 = vld [vmem:[%s974 + $0x7c] sm:$0xf]
        %v2522 = vld [vmem:[%s974 + $0x80] sm:$0x1]
        %v2523 = vld [vmem:[%s974 + $0x84] sm:$0xe]
        %v2524 = vld [vmem:[%s974 + $0x88] sm:$0xf]
        %v2525 = vld [vmem:[%s974 + $0x8c] sm:$0x1]
        %v2526 = vld [vmem:[%s974 + $0x90] sm:$0xe]
        %v2527 = vld [vmem:[%s974 + $0x94] sm:$0xf]
        %v2528 = vld [vmem:[%s974 + $0x98] sm:$0x1]
        %v2529 = vld [vmem:[%s974 + $0x9c] sm:$0xe]
        %v2530 = vld [vmem:[%s974 + $0xa0] sm:$0xf]
        %v2531 = vld [vmem:[%s974 + $0xa4] sm:$0x1]
        %v2532 = vld [vmem:[%s974 + $0xa8] sm:$0xe]
        %v2533 = vld [vmem:[%s974 + $0xac] sm:$0xf]
        %v2534 = vld [vmem:[%s974 + $0xb0] sm:$0x1]
        %v2535 = vld [vmem:[%s974 + $0xb4] sm:$0xe]
        %v2536 = vld [vmem:[%s974 + $0xb8] sm:$0xf]
        %v2537 = vld [vmem:[%s974 + $0xbc] sm:$0x1]
        %v2586 = vrot.slane %v2490, 5
        %v2587 = vrot.slane %v2586, 4
        %v2588 = vrot.slane %v2491, 5
        %v2589 = vsel %vm1753, %v2587, %v2588
        %v2590 = vrot.slane %v2588, 4
        %v2591 = vrot.slane %v2492, 5
        %v2592 = vsel %vm1753, %v2590, %v2591
        %v2593 = vrot.slane %v2493, 5
        %v2594 = vrot.slane %v2593, 4
        %v2595 = vrot.slane %v2494, 5
        %v2596 = vsel %vm1753, %v2594, %v2595
        %v2597 = vrot.slane %v2595, 4
        %v2598 = vrot.slane %v2495, 5
        %v2599 = vsel %vm1753, %v2597, %v2598
        %v2600 = vrot.slane %v2496, 5
        %v2601 = vrot.slane %v2600, 4
        %v2602 = vrot.slane %v2497, 5
        %v2603 = vsel %vm1753, %v2601, %v2602
        %v2604 = vrot.slane %v2602, 4
        %v2605 = vrot.slane %v2498, 5
        %v2606 = vsel %vm1753, %v2604, %v2605
        %v2607 = vrot.slane %v2499, 5
        %v2608 = vrot.slane %v2607, 4
        %v2609 = vrot.slane %v2500, 5
        %v2610 = vsel %vm1753, %v2608, %v2609
        %v2611 = vrot.slane %v2609, 4
        %v2612 = vrot.slane %v2501, 5
        %v2613 = vsel %vm1753, %v2611, %v2612
        %v2614 = vrot.slane %v2502, 5
        %v2615 = vrot.slane %v2614, 4
        %v2616 = vrot.slane %v2503, 5
        %v2617 = vsel %vm1753, %v2615, %v2616
        %v2618 = vrot.slane %v2616, 4
        %v2619 = vrot.slane %v2504, 5
        %v2620 = vsel %vm1753, %v2618, %v2619
        %v2621 = vrot.slane %v2505, 5
        %v2622 = vrot.slane %v2621, 4
        %v2623 = vrot.slane %v2506, 5
        %v2624 = vsel %vm1753, %v2622, %v2623
        %v2625 = vrot.slane %v2623, 4
        %v2626 = vrot.slane %v2507, 5
        %v2627 = vsel %vm1753, %v2625, %v2626
        %v2628 = vrot.slane %v2508, 5
        %v2629 = vrot.slane %v2628, 4
        %v2630 = vrot.slane %v2509, 5
        %v2631 = vsel %vm1753, %v2629, %v2630
        %v2632 = vrot.slane %v2630, 4
        %v2633 = vrot.slane %v2510, 5
        %v2634 = vsel %vm1753, %v2632, %v2633
        %v2635 = vrot.slane %v2511, 5
        %v2636 = vrot.slane %v2635, 4
        %v2637 = vrot.slane %v2512, 5
        %v2638 = vsel %vm1753, %v2636, %v2637
        %v2639 = vrot.slane %v2637, 4
        %v2640 = vrot.slane %v2513, 5
        %v2641 = vsel %vm1753, %v2639, %v2640
        %v2642 = vrot.slane %v2514, 5
        %v2643 = vrot.slane %v2642, 4
        %v2644 = vrot.slane %v2515, 5
        %v2645 = vsel %vm1753, %v2643, %v2644
        %v2646 = vrot.slane %v2644, 4
        %v2647 = vrot.slane %v2516, 5
        %v2648 = vsel %vm1753, %v2646, %v2647
        %v2649 = vrot.slane %v2517, 5
        %v2650 = vrot.slane %v2649, 4
        %v2651 = vrot.slane %v2518, 5
        %v2652 = vsel %vm1753, %v2650, %v2651
        %v2653 = vrot.slane %v2651, 4
        %v2654 = vrot.slane %v2519, 5
        %v2655 = vsel %vm1753, %v2653, %v2654
        %v2656 = vrot.slane %v2520, 5
        %v2657 = vrot.slane %v2656, 4
        %v2658 = vrot.slane %v2521, 5
        %v2659 = vsel %vm1753, %v2657, %v2658
        %v2660 = vrot.slane %v2658, 4
        %v2661 = vrot.slane %v2522, 5
        %v2662 = vsel %vm1753, %v2660, %v2661
        %v2663 = vrot.slane %v2523, 5
        %v2664 = vrot.slane %v2663, 4
        %v2665 = vrot.slane %v2524, 5
        %v2666 = vsel %vm1753, %v2664, %v2665
        %v2667 = vrot.slane %v2665, 4
        %v2668 = vrot.slane %v2525, 5
        %v2669 = vsel %vm1753, %v2667, %v2668
        %v2670 = vrot.slane %v2526, 5
        %v2671 = vrot.slane %v2670, 4
        %v2672 = vrot.slane %v2527, 5
        %v2673 = vsel %vm1753, %v2671, %v2672
        %v2674 = vrot.slane %v2672, 4
        %v2675 = vrot.slane %v2528, 5
        %v2676 = vsel %vm1753, %v2674, %v2675
        %v2677 = vrot.slane %v2529, 5
        %v2678 = vrot.slane %v2677, 4
        %v2679 = vrot.slane %v2530, 5
        %v2680 = vsel %vm1753, %v2678, %v2679
        %v2681 = vrot.slane %v2679, 4
        %v2682 = vrot.slane %v2531, 5
        %v2683 = vsel %vm1753, %v2681, %v2682
        %v2684 = vrot.slane %v2532, 5
        %v2685 = vrot.slane %v2684, 4
        %v2686 = vrot.slane %v2533, 5
        %v2687 = vsel %vm1753, %v2685, %v2686
        %v2688 = vrot.slane %v2686, 4
        %v2689 = vrot.slane %v2534, 5
        %v2690 = vsel %vm1753, %v2688, %v2689
        %v2691 = vrot.slane %v2535, 5
        %v2692 = vrot.slane %v2691, 4
        %v2693 = vrot.slane %v2536, 5
        %v2694 = vsel %vm1753, %v2692, %v2693
        %v2695 = vrot.slane %v2693, 4
        %v2696 = vrot.slane %v2537, 5
        %v2697 = vsel %vm1753, %v2695, %v2696
        %2730 = vst [vmem:[#allocation3 + $0x14] sm:$0xf] %v2589
        %2731 = vst [vmem:[#allocation3 + $0x38] sm:$0xf] %v2592
        %2732 = vst [vmem:[#allocation3 + $0x5c] sm:$0xf] %v2596
        %2733 = vst [vmem:[#allocation3 + $0x80] sm:$0xf] %v2599
        %2734 = vst [vmem:[#allocation3 + $0xa4] sm:$0xf] %v2603
        %2735 = vst [vmem:[#allocation3 + $0xc8] sm:$0xf] %v2606
        %2736 = vst [vmem:[#allocation3 + $0xec] sm:$0xf] %v2610
        %2737 = vst [vmem:[#allocation3 + $0x110] sm:$0xf] %v2613
        %2738 = vst [vmem:[#allocation3 + $0x134] sm:$0xf] %v2617
        %2739 = vst [vmem:[#allocation3 + $0x158] sm:$0xf] %v2620
        %2740 = vst [vmem:[#allocation3 + $0x17c] sm:$0xf] %v2624
        %2741 = vst [vmem:[#allocation3 + $0x1a0] sm:$0xf] %v2627
        %2742 = vst [vmem:[#allocation3 + $0x1c4] sm:$0xf] %v2631
        %2743 = vst [vmem:[#allocation3 + $0x1e8] sm:$0xf] %v2634
        %2744 = vst [vmem:[#allocation3 + $0x20c] sm:$0xf] %v2638
        %2745 = vst [vmem:[#allocation3 + $0x230] sm:$0xf] %v2641
        %2746 = vst [vmem:[#allocation3 + $0x254] sm:$0xf] %v2645
        %2747 = vst [vmem:[#allocation3 + $0x278] sm:$0xf] %v2648
        %2748 = vst [vmem:[#allocation3 + $0x29c] sm:$0xf] %v2652
        %2749 = vst [vmem:[#allocation3 + $0x2c0] sm:$0xf] %v2655
        %2750 = vst [vmem:[#allocation3 + $0x2e4] sm:$0xf] %v2659
        %2751 = vst [vmem:[#allocation3 + $0x308] sm:$0xf] %v2662
        %2752 = vst [vmem:[#allocation3 + $0x32c] sm:$0xf] %v2666
        %2753 = vst [vmem:[#allocation3 + $0x350] sm:$0xf] %v2669
        %2754 = vst [vmem:[#allocation3 + $0x374] sm:$0xf] %v2673
        %2755 = vst [vmem:[#allocation3 + $0x398] sm:$0xf] %v2676
        %2756 = vst [vmem:[#allocation3 + $0x3bc] sm:$0xf] %v2680
        %2757 = vst [vmem:[#allocation3 + $0x3e0] sm:$0xf] %v2683
        %2758 = vst [vmem:[#allocation3 + $0x404] sm:$0xf] %v2687
        %2759 = vst [vmem:[#allocation3 + $0x428] sm:$0xf] %v2690
        %2760 = vst [vmem:[#allocation3 + $0x44c] sm:$0xf] %v2694
        %2761 = vst [vmem:[#allocation3 + $0x470] sm:$0xf] %v2697
        %s2762 = scalar_lea.vmem [#allocation2], 24
        %v2763 = vld [vmem:[%s2762] sm:$0xf]
        %v2764 = vld [vmem:[%s2762 + $0x4] sm:$0xf]
        %v2765 = vld [vmem:[%s2762 + $0xc] sm:$0xf]
        %v2766 = vld [vmem:[%s2762 + $0x10] sm:$0xf]
        %v2767 = vld [vmem:[%s2762 + $0x18] sm:$0xf]
        %v2768 = vld [vmem:[%s2762 + $0x1c] sm:$0xf]
        %v2769 = vld [vmem:[%s2762 + $0x24] sm:$0xf]
        %v2770 = vld [vmem:[%s2762 + $0x28] sm:$0xf]
        %v2771 = vld [vmem:[%s2762 + $0x30] sm:$0xf]
        %v2772 = vld [vmem:[%s2762 + $0x34] sm:$0xf]
        %v2773 = vld [vmem:[%s2762 + $0x3c] sm:$0xf]
        %v2774 = vld [vmem:[%s2762 + $0x40] sm:$0xf]
        %v2775 = vld [vmem:[%s2762 + $0x48] sm:$0xf]
        %v2776 = vld [vmem:[%s2762 + $0x4c] sm:$0xf]
        %v2777 = vld [vmem:[%s2762 + $0x54] sm:$0xf]
        %v2778 = vld [vmem:[%s2762 + $0x58] sm:$0xf]
        %v2779 = vld [vmem:[%s2762 + $0x60] sm:$0xf]
        %v2780 = vld [vmem:[%s2762 + $0x64] sm:$0xf]
        %v2781 = vld [vmem:[%s2762 + $0x6c] sm:$0xf]
        %v2782 = vld [vmem:[%s2762 + $0x70] sm:$0xf]
        %v2783 = vld [vmem:[%s2762 + $0x78] sm:$0xf]
        %v2784 = vld [vmem:[%s2762 + $0x7c] sm:$0xf]
        %v2785 = vld [vmem:[%s2762 + $0x84] sm:$0xf]
        %v2786 = vld [vmem:[%s2762 + $0x88] sm:$0xf]
        %v2787 = vld [vmem:[%s2762 + $0x90] sm:$0xf]
        %v2788 = vld [vmem:[%s2762 + $0x94] sm:$0xf]
        %v2789 = vld [vmem:[%s2762 + $0x9c] sm:$0xf]
        %v2790 = vld [vmem:[%s2762 + $0xa0] sm:$0xf]
        %v2791 = vld [vmem:[%s2762 + $0xa8] sm:$0xf]
        %v2792 = vld [vmem:[%s2762 + $0xac] sm:$0xf]
        %v2793 = vld [vmem:[%s2762 + $0xb4] sm:$0xf]
        %v2794 = vld [vmem:[%s2762 + $0xb8] sm:$0xf]
        %2795 = vst [vmem:[#allocation3 + $0x18] sm:$0xf] %v2763
        %2796 = vst [vmem:[#allocation3 + $0x3c] sm:$0xf] %v2764
        %2797 = vst [vmem:[#allocation3 + $0x60] sm:$0xf] %v2765
        %2798 = vst [vmem:[#allocation3 + $0x84] sm:$0xf] %v2766
        %2799 = vst [vmem:[#allocation3 + $0xa8] sm:$0xf] %v2767
        %2800 = vst [vmem:[#allocation3 + $0xcc] sm:$0xf] %v2768
        %2801 = vst [vmem:[#allocation3 + $0xf0] sm:$0xf] %v2769
        %2802 = vst [vmem:[#allocation3 + $0x114] sm:$0xf] %v2770
        %2803 = vst [vmem:[#allocation3 + $0x138] sm:$0xf] %v2771
        %2804 = vst [vmem:[#allocation3 + $0x15c] sm:$0xf] %v2772
        %2805 = vst [vmem:[#allocation3 + $0x180] sm:$0xf] %v2773
        %2806 = vst [vmem:[#allocation3 + $0x1a4] sm:$0xf] %v2774
        %2807 = vst [vmem:[#allocation3 + $0x1c8] sm:$0xf] %v2775
        %2808 = vst [vmem:[#allocation3 + $0x1ec] sm:$0xf] %v2776
        %2809 = vst [vmem:[#allocation3 + $0x210] sm:$0xf] %v2777
        %2810 = vst [vmem:[#allocation3 + $0x234] sm:$0xf] %v2778
        %2811 = vst [vmem:[#allocation3 + $0x258] sm:$0xf] %v2779
        %2812 = vst [vmem:[#allocation3 + $0x27c] sm:$0xf] %v2780
        %2813 = vst [vmem:[#allocation3 + $0x2a0] sm:$0xf] %v2781
        %2814 = vst [vmem:[#allocation3 + $0x2c4] sm:$0xf] %v2782
        %2815 = vst [vmem:[#allocation3 + $0x2e8] sm:$0xf] %v2783
        %2816 = vst [vmem:[#allocation3 + $0x30c] sm:$0xf] %v2784
        %2817 = vst [vmem:[#allocation3 + $0x330] sm:$0xf] %v2785
        %2818 = vst [vmem:[#allocation3 + $0x354] sm:$0xf] %v2786
        %2819 = vst [vmem:[#allocation3 + $0x378] sm:$0xf] %v2787
        %2820 = vst [vmem:[#allocation3 + $0x39c] sm:$0xf] %v2788
        %2821 = vst [vmem:[#allocation3 + $0x3c0] sm:$0xf] %v2789
        %2822 = vst [vmem:[#allocation3 + $0x3e4] sm:$0xf] %v2790
        %2823 = vst [vmem:[#allocation3 + $0x408] sm:$0xf] %v2791
        %2824 = vst [vmem:[#allocation3 + $0x42c] sm:$0xf] %v2792
        %2825 = vst [vmem:[#allocation3 + $0x450] sm:$0xf] %v2793
        %2826 = vst [vmem:[#allocation3 + $0x474] sm:$0xf] %v2794
        %v2827 = vld [vmem:[%s2762] sm:$0xf]
        %v2828 = vld [vmem:[%s2762 + $0x4] sm:$0xf]
        %v2829 = vld [vmem:[%s2762 + $0x8] sm:$0x1]
        %v2830 = vld [vmem:[%s2762 + $0xc] sm:$0xf]
        %v2831 = vld [vmem:[%s2762 + $0x10] sm:$0xf]
        %v2832 = vld [vmem:[%s2762 + $0x14] sm:$0x1]
        %v2833 = vld [vmem:[%s2762 + $0x18] sm:$0xf]
        %v2834 = vld [vmem:[%s2762 + $0x1c] sm:$0xf]
        %v2835 = vld [vmem:[%s2762 + $0x20] sm:$0x1]
        %v2836 = vld [vmem:[%s2762 + $0x24] sm:$0xf]
        %v2837 = vld [vmem:[%s2762 + $0x28] sm:$0xf]
        %v2838 = vld [vmem:[%s2762 + $0x2c] sm:$0x1]
        %v2839 = vld [vmem:[%s2762 + $0x30] sm:$0xf]
        %v2840 = vld [vmem:[%s2762 + $0x34] sm:$0xf]
        %v2841 = vld [vmem:[%s2762 + $0x38] sm:$0x1]
        %v2842 = vld [vmem:[%s2762 + $0x3c] sm:$0xf]
        %v2843 = vld [vmem:[%s2762 + $0x40] sm:$0xf]
        %v2844 = vld [vmem:[%s2762 + $0x44] sm:$0x1]
        %v2845 = vld [vmem:[%s2762 + $0x48] sm:$0xf]
        %v2846 = vld [vmem:[%s2762 + $0x4c] sm:$0xf]
        %v2847 = vld [vmem:[%s2762 + $0x50] sm:$0x1]
        %v2848 = vld [vmem:[%s2762 + $0x54] sm:$0xf]
        %v2849 = vld [vmem:[%s2762 + $0x58] sm:$0xf]
        %v2850 = vld [vmem:[%s2762 + $0x5c] sm:$0x1]
        %v2851 = vld [vmem:[%s2762 + $0x60] sm:$0xf]
        %v2852 = vld [vmem:[%s2762 + $0x64] sm:$0xf]
        %v2853 = vld [vmem:[%s2762 + $0x68] sm:$0x1]
        %v2854 = vld [vmem:[%s2762 + $0x6c] sm:$0xf]
        %v2855 = vld [vmem:[%s2762 + $0x70] sm:$0xf]
        %v2856 = vld [vmem:[%s2762 + $0x74] sm:$0x1]
        %v2857 = vld [vmem:[%s2762 + $0x78] sm:$0xf]
        %v2858 = vld [vmem:[%s2762 + $0x7c] sm:$0xf]
        %v2859 = vld [vmem:[%s2762 + $0x80] sm:$0x1]
        %v2860 = vld [vmem:[%s2762 + $0x84] sm:$0xf]
        %v2861 = vld [vmem:[%s2762 + $0x88] sm:$0xf]
        %v2862 = vld [vmem:[%s2762 + $0x8c] sm:$0x1]
        %v2863 = vld [vmem:[%s2762 + $0x90] sm:$0xf]
        %v2864 = vld [vmem:[%s2762 + $0x94] sm:$0xf]
        %v2865 = vld [vmem:[%s2762 + $0x98] sm:$0x1]
        %v2866 = vld [vmem:[%s2762 + $0x9c] sm:$0xf]
        %v2867 = vld [vmem:[%s2762 + $0xa0] sm:$0xf]
        %v2868 = vld [vmem:[%s2762 + $0xa4] sm:$0x1]
        %v2869 = vld [vmem:[%s2762 + $0xa8] sm:$0xf]
        %v2870 = vld [vmem:[%s2762 + $0xac] sm:$0xf]
        %v2871 = vld [vmem:[%s2762 + $0xb0] sm:$0x1]
        %v2872 = vld [vmem:[%s2762 + $0xb4] sm:$0xf]
        %v2873 = vld [vmem:[%s2762 + $0xb8] sm:$0xf]
        %v2874 = vld [vmem:[%s2762 + $0xbc] sm:$0x1]
        %v2876 = vshrl.u32 %v2827, 16
        %v2878 = vrot.slane %v2876, 4
        %v2879 = vshll.u32 %v2827, 16
        %v2881 = vrot.slane %v2879, 5
        %v2882 = vor.u32 %v2878, %v2881
        %v2883 = vrot.slane %v2882, 4
        %v2885 = vshll.u32 %v2828, 16
        %v2887 = vrot.slane %v2885, 5
        %v2888 = vsel %vm1206, %v2883, %v2887
        %v2889 = vshrl.u32 %v2828, 16
        %v2891 = vrot.slane %v2889, 4
        %v2892 = vor.u32 %v2891, %v2887
        %v2893 = vrot.slane %v2892, 4
        %v2895 = vshll.u32 %v2829, 16
        %v2897 = vrot.slane %v2895, 5
        %v2898 = vsel %vm1206, %v2893, %v2897
        %v2900 = vshrl.u32 %v2830, 16
        %v2902 = vrot.slane %v2900, 4
        %v2903 = vshll.u32 %v2830, 16
        %v2905 = vrot.slane %v2903, 5
        %v2906 = vor.u32 %v2902, %v2905
        %v2907 = vrot.slane %v2906, 4
        %v2909 = vshll.u32 %v2831, 16
        %v2911 = vrot.slane %v2909, 5
        %v2912 = vsel %vm1206, %v2907, %v2911
        %v2913 = vshrl.u32 %v2831, 16
        %v2915 = vrot.slane %v2913, 4
        %v2916 = vor.u32 %v2915, %v2911
        %v2917 = vrot.slane %v2916, 4
        %v2919 = vshll.u32 %v2832, 16
        %v2921 = vrot.slane %v2919, 5
        %v2922 = vsel %vm1206, %v2917, %v2921
        %v2924 = vshrl.u32 %v2833, 16
        %v2926 = vrot.slane %v2924, 4
        %v2927 = vshll.u32 %v2833, 16
        %v2929 = vrot.slane %v2927, 5
        %v2930 = vor.u32 %v2926, %v2929
        %v2931 = vrot.slane %v2930, 4
        %v2933 = vshll.u32 %v2834, 16
        %v2935 = vrot.slane %v2933, 5
        %v2936 = vsel %vm1206, %v2931, %v2935
        %v2937 = vshrl.u32 %v2834, 16
        %v2939 = vrot.slane %v2937, 4
        %v2940 = vor.u32 %v2939, %v2935
        %v2941 = vrot.slane %v2940, 4
        %v2943 = vshll.u32 %v2835, 16
        %v2945 = vrot.slane %v2943, 5
        %v2946 = vsel %vm1206, %v2941, %v2945
        %v2948 = vshrl.u32 %v2836, 16
        %v2950 = vrot.slane %v2948, 4
        %v2951 = vshll.u32 %v2836, 16
        %v2953 = vrot.slane %v2951, 5
        %v2954 = vor.u32 %v2950, %v2953
        %v2955 = vrot.slane %v2954, 4
        %v2957 = vshll.u32 %v2837, 16
        %v2959 = vrot.slane %v2957, 5
        %v2960 = vsel %vm1206, %v2955, %v2959
        %v2961 = vshrl.u32 %v2837, 16
        %v2963 = vrot.slane %v2961, 4
        %v2964 = vor.u32 %v2963, %v2959
        %v2965 = vrot.slane %v2964, 4
        %v2967 = vshll.u32 %v2838, 16
        %v2969 = vrot.slane %v2967, 5
        %v2970 = vsel %vm1206, %v2965, %v2969
        %v2972 = vshrl.u32 %v2839, 16
        %v2974 = vrot.slane %v2972, 4
        %v2975 = vshll.u32 %v2839, 16
        %v2977 = vrot.slane %v2975, 5
        %v2978 = vor.u32 %v2974, %v2977
        %v2979 = vrot.slane %v2978, 4
        %v2981 = vshll.u32 %v2840, 16
        %v2983 = vrot.slane %v2981, 5
        %v2984 = vsel %vm1206, %v2979, %v2983
        %v2985 = vshrl.u32 %v2840, 16
        %v2987 = vrot.slane %v2985, 4
        %v2988 = vor.u32 %v2987, %v2983
        %v2989 = vrot.slane %v2988, 4
        %v2991 = vshll.u32 %v2841, 16
        %v2993 = vrot.slane %v2991, 5
        %v2994 = vsel %vm1206, %v2989, %v2993
        %v2996 = vshrl.u32 %v2842, 16
        %v2998 = vrot.slane %v2996, 4
        %v2999 = vshll.u32 %v2842, 16
        %v3001 = vrot.slane %v2999, 5
        %v3002 = vor.u32 %v2998, %v3001
        %v3003 = vrot.slane %v3002, 4
        %v3005 = vshll.u32 %v2843, 16
        %v3007 = vrot.slane %v3005, 5
        %v3008 = vsel %vm1206, %v3003, %v3007
        %v3009 = vshrl.u32 %v2843, 16
        %v3011 = vrot.slane %v3009, 4
        %v3012 = vor.u32 %v3011, %v3007
        %v3013 = vrot.slane %v3012, 4
        %v3015 = vshll.u32 %v2844, 16
        %v3017 = vrot.slane %v3015, 5
        %v3018 = vsel %vm1206, %v3013, %v3017
        %v3020 = vshrl.u32 %v2845, 16
        %v3022 = vrot.slane %v3020, 4
        %v3023 = vshll.u32 %v2845, 16
        %v3025 = vrot.slane %v3023, 5
        %v3026 = vor.u32 %v3022, %v3025
        %v3027 = vrot.slane %v3026, 4
        %v3029 = vshll.u32 %v2846, 16
        %v3031 = vrot.slane %v3029, 5
        %v3032 = vsel %vm1206, %v3027, %v3031
        %v3033 = vshrl.u32 %v2846, 16
        %v3035 = vrot.slane %v3033, 4
        %v3036 = vor.u32 %v3035, %v3031
        %v3037 = vrot.slane %v3036, 4
        %v3039 = vshll.u32 %v2847, 16
        %v3041 = vrot.slane %v3039, 5
        %v3042 = vsel %vm1206, %v3037, %v3041
        %v3044 = vshrl.u32 %v2848, 16
        %v3046 = vrot.slane %v3044, 4
        %v3047 = vshll.u32 %v2848, 16
        %v3049 = vrot.slane %v3047, 5
        %v3050 = vor.u32 %v3046, %v3049
        %v3051 = vrot.slane %v3050, 4
        %v3053 = vshll.u32 %v2849, 16
        %v3055 = vrot.slane %v3053, 5
        %v3056 = vsel %vm1206, %v3051, %v3055
        %v3057 = vshrl.u32 %v2849, 16
        %v3059 = vrot.slane %v3057, 4
        %v3060 = vor.u32 %v3059, %v3055
        %v3061 = vrot.slane %v3060, 4
        %v3063 = vshll.u32 %v2850, 16
        %v3065 = vrot.slane %v3063, 5
        %v3066 = vsel %vm1206, %v3061, %v3065
        %v3068 = vshrl.u32 %v2851, 16
        %v3070 = vrot.slane %v3068, 4
        %v3071 = vshll.u32 %v2851, 16
        %v3073 = vrot.slane %v3071, 5
        %v3074 = vor.u32 %v3070, %v3073
        %v3075 = vrot.slane %v3074, 4
        %v3077 = vshll.u32 %v2852, 16
        %v3079 = vrot.slane %v3077, 5
        %v3080 = vsel %vm1206, %v3075, %v3079
        %v3081 = vshrl.u32 %v2852, 16
        %v3083 = vrot.slane %v3081, 4
        %v3084 = vor.u32 %v3083, %v3079
        %v3085 = vrot.slane %v3084, 4
        %v3087 = vshll.u32 %v2853, 16
        %v3089 = vrot.slane %v3087, 5
        %v3090 = vsel %vm1206, %v3085, %v3089
        %v3092 = vshrl.u32 %v2854, 16
        %v3094 = vrot.slane %v3092, 4
        %v3095 = vshll.u32 %v2854, 16
        %v3097 = vrot.slane %v3095, 5
        %v3098 = vor.u32 %v3094, %v3097
        %v3099 = vrot.slane %v3098, 4
        %v3101 = vshll.u32 %v2855, 16
        %v3103 = vrot.slane %v3101, 5
        %v3104 = vsel %vm1206, %v3099, %v3103
        %v3105 = vshrl.u32 %v2855, 16
        %v3107 = vrot.slane %v3105, 4
        %v3108 = vor.u32 %v3107, %v3103
        %v3109 = vrot.slane %v3108, 4
        %v3111 = vshll.u32 %v2856, 16
        %v3113 = vrot.slane %v3111, 5
        %v3114 = vsel %vm1206, %v3109, %v3113
        %v3116 = vshrl.u32 %v2857, 16
        %v3118 = vrot.slane %v3116, 4
        %v3119 = vshll.u32 %v2857, 16
        %v3121 = vrot.slane %v3119, 5
        %v3122 = vor.u32 %v3118, %v3121
        %v3123 = vrot.slane %v3122, 4
        %v3125 = vshll.u32 %v2858, 16
        %v3127 = vrot.slane %v3125, 5
        %v3128 = vsel %vm1206, %v3123, %v3127
        %v3129 = vshrl.u32 %v2858, 16
        %v3131 = vrot.slane %v3129, 4
        %v3132 = vor.u32 %v3131, %v3127
        %v3133 = vrot.slane %v3132, 4
        %v3135 = vshll.u32 %v2859, 16
        %v3137 = vrot.slane %v3135, 5
        %v3138 = vsel %vm1206, %v3133, %v3137
        %v3140 = vshrl.u32 %v2860, 16
        %v3142 = vrot.slane %v3140, 4
        %v3143 = vshll.u32 %v2860, 16
        %v3145 = vrot.slane %v3143, 5
        %v3146 = vor.u32 %v3142, %v3145
        %v3147 = vrot.slane %v3146, 4
        %v3149 = vshll.u32 %v2861, 16
        %v3151 = vrot.slane %v3149, 5
        %v3152 = vsel %vm1206, %v3147, %v3151
        %v3153 = vshrl.u32 %v2861, 16
        %v3155 = vrot.slane %v3153, 4
        %v3156 = vor.u32 %v3155, %v3151
        %v3157 = vrot.slane %v3156, 4
        %v3159 = vshll.u32 %v2862, 16
        %v3161 = vrot.slane %v3159, 5
        %v3162 = vsel %vm1206, %v3157, %v3161
        %v3164 = vshrl.u32 %v2863, 16
        %v3166 = vrot.slane %v3164, 4
        %v3167 = vshll.u32 %v2863, 16
        %v3169 = vrot.slane %v3167, 5
        %v3170 = vor.u32 %v3166, %v3169
        %v3171 = vrot.slane %v3170, 4
        %v3173 = vshll.u32 %v2864, 16
        %v3175 = vrot.slane %v3173, 5
        %v3176 = vsel %vm1206, %v3171, %v3175
        %v3177 = vshrl.u32 %v2864, 16
        %v3179 = vrot.slane %v3177, 4
        %v3180 = vor.u32 %v3179, %v3175
        %v3181 = vrot.slane %v3180, 4
        %v3183 = vshll.u32 %v2865, 16
        %v3185 = vrot.slane %v3183, 5
        %v3186 = vsel %vm1206, %v3181, %v3185
        %v3188 = vshrl.u32 %v2866, 16
        %v3190 = vrot.slane %v3188, 4
        %v3191 = vshll.u32 %v2866, 16
        %v3193 = vrot.slane %v3191, 5
        %v3194 = vor.u32 %v3190, %v3193
        %v3195 = vrot.slane %v3194, 4
        %v3197 = vshll.u32 %v2867, 16
        %v3199 = vrot.slane %v3197, 5
        %v3200 = vsel %vm1206, %v3195, %v3199
        %v3201 = vshrl.u32 %v2867, 16
        %v3203 = vrot.slane %v3201, 4
        %v3204 = vor.u32 %v3203, %v3199
        %v3205 = vrot.slane %v3204, 4
        %v3207 = vshll.u32 %v2868, 16
        %v3209 = vrot.slane %v3207, 5
        %v3210 = vsel %vm1206, %v3205, %v3209
        %v3212 = vshrl.u32 %v2869, 16
        %v3214 = vrot.slane %v3212, 4
        %v3215 = vshll.u32 %v2869, 16
        %v3217 = vrot.slane %v3215, 5
        %v3218 = vor.u32 %v3214, %v3217
        %v3219 = vrot.slane %v3218, 4
        %v3221 = vshll.u32 %v2870, 16
        %v3223 = vrot.slane %v3221, 5
        %v3224 = vsel %vm1206, %v3219, %v3223
        %v3225 = vshrl.u32 %v2870, 16
        %v3227 = vrot.slane %v3225, 4
        %v3228 = vor.u32 %v3227, %v3223
        %v3229 = vrot.slane %v3228, 4
        %v3231 = vshll.u32 %v2871, 16
        %v3233 = vrot.slane %v3231, 5
        %v3234 = vsel %vm1206, %v3229, %v3233
        %v3236 = vshrl.u32 %v2872, 16
        %v3238 = vrot.slane %v3236, 4
        %v3239 = vshll.u32 %v2872, 16
        %v3241 = vrot.slane %v3239, 5
        %v3242 = vor.u32 %v3238, %v3241
        %v3243 = vrot.slane %v3242, 4
        %v3245 = vshll.u32 %v2873, 16
        %v3247 = vrot.slane %v3245, 5
        %v3248 = vsel %vm1206, %v3243, %v3247
        %v3249 = vshrl.u32 %v2873, 16
        %v3251 = vrot.slane %v3249, 4
        %v3252 = vor.u32 %v3251, %v3247
        %v3253 = vrot.slane %v3252, 4
        %v3255 = vshll.u32 %v2874, 16
        %v3257 = vrot.slane %v3255, 5
        %v3258 = vsel %vm1206, %v3253, %v3257
        %3291 = vst [vmem:[#allocation3 + $0x1c] sm:$0xf] %v2888
        %3292 = vst [vmem:[#allocation3 + $0x40] sm:$0xf] %v2898
        %3293 = vst [vmem:[#allocation3 + $0x64] sm:$0xf] %v2912
        %3294 = vst [vmem:[#allocation3 + $0x88] sm:$0xf] %v2922
        %3295 = vst [vmem:[#allocation3 + $0xac] sm:$0xf] %v2936
        %3296 = vst [vmem:[#allocation3 + $0xd0] sm:$0xf] %v2946
        %3297 = vst [vmem:[#allocation3 + $0xf4] sm:$0xf] %v2960
        %3298 = vst [vmem:[#allocation3 + $0x118] sm:$0xf] %v2970
        %3299 = vst [vmem:[#allocation3 + $0x13c] sm:$0xf] %v2984
        %3300 = vst [vmem:[#allocation3 + $0x160] sm:$0xf] %v2994
        %3301 = vst [vmem:[#allocation3 + $0x184] sm:$0xf] %v3008
        %3302 = vst [vmem:[#allocation3 + $0x1a8] sm:$0xf] %v3018
        %3303 = vst [vmem:[#allocation3 + $0x1cc] sm:$0xf] %v3032
        %3304 = vst [vmem:[#allocation3 + $0x1f0] sm:$0xf] %v3042
        %3305 = vst [vmem:[#allocation3 + $0x214] sm:$0xf] %v3056
        %3306 = vst [vmem:[#allocation3 + $0x238] sm:$0xf] %v3066
        %3307 = vst [vmem:[#allocation3 + $0x25c] sm:$0xf] %v3080
        %3308 = vst [vmem:[#allocation3 + $0x280] sm:$0xf] %v3090
        %3309 = vst [vmem:[#allocation3 + $0x2a4] sm:$0xf] %v3104
        %3310 = vst [vmem:[#allocation3 + $0x2c8] sm:$0xf] %v3114
        %3311 = vst [vmem:[#allocation3 + $0x2ec] sm:$0xf] %v3128
        %3312 = vst [vmem:[#allocation3 + $0x310] sm:$0xf] %v3138
        %3313 = vst [vmem:[#allocation3 + $0x334] sm:$0xf] %v3152
        %3314 = vst [vmem:[#allocation3 + $0x358] sm:$0xf] %v3162
        %3315 = vst [vmem:[#allocation3 + $0x37c] sm:$0xf] %v3176
        %3316 = vst [vmem:[#allocation3 + $0x3a0] sm:$0xf] %v3186
        %3317 = vst [vmem:[#allocation3 + $0x3c4] sm:$0xf] %v3200
        %3318 = vst [vmem:[#allocation3 + $0x3e8] sm:$0xf] %v3210
        %3319 = vst [vmem:[#allocation3 + $0x40c] sm:$0xf] %v3224
        %3320 = vst [vmem:[#allocation3 + $0x430] sm:$0xf] %v3234
        %3321 = vst [vmem:[#allocation3 + $0x454] sm:$0xf] %v3248
        %3322 = vst [vmem:[#allocation3 + $0x478] sm:$0xf] %v3258
        %v3323 = vld [vmem:[%s2762] sm:$0xe]
        %v3324 = vld [vmem:[%s2762 + $0x4] sm:$0xf]
        %v3325 = vld [vmem:[%s2762 + $0x8] sm:$0x1]
        %v3326 = vld [vmem:[%s2762 + $0xc] sm:$0xe]
        %v3327 = vld [vmem:[%s2762 + $0x10] sm:$0xf]
        %v3328 = vld [vmem:[%s2762 + $0x14] sm:$0x1]
        %v3329 = vld [vmem:[%s2762 + $0x18] sm:$0xe]
        %v3330 = vld [vmem:[%s2762 + $0x1c] sm:$0xf]
        %v3331 = vld [vmem:[%s2762 + $0x20] sm:$0x1]
        %v3332 = vld [vmem:[%s2762 + $0x24] sm:$0xe]
        %v3333 = vld [vmem:[%s2762 + $0x28] sm:$0xf]
        %v3334 = vld [vmem:[%s2762 + $0x2c] sm:$0x1]
        %v3335 = vld [vmem:[%s2762 + $0x30] sm:$0xe]
        %v3336 = vld [vmem:[%s2762 + $0x34] sm:$0xf]
        %v3337 = vld [vmem:[%s2762 + $0x38] sm:$0x1]
        %v3338 = vld [vmem:[%s2762 + $0x3c] sm:$0xe]
        %v3339 = vld [vmem:[%s2762 + $0x40] sm:$0xf]
        %v3340 = vld [vmem:[%s2762 + $0x44] sm:$0x1]
        %v3341 = vld [vmem:[%s2762 + $0x48] sm:$0xe]
        %v3342 = vld [vmem:[%s2762 + $0x4c] sm:$0xf]
        %v3343 = vld [vmem:[%s2762 + $0x50] sm:$0x1]
        %v3344 = vld [vmem:[%s2762 + $0x54] sm:$0xe]
        %v3345 = vld [vmem:[%s2762 + $0x58] sm:$0xf]
        %v3346 = vld [vmem:[%s2762 + $0x5c] sm:$0x1]
        %v3347 = vld [vmem:[%s2762 + $0x60] sm:$0xe]
        %v3348 = vld [vmem:[%s2762 + $0x64] sm:$0xf]
        %v3349 = vld [vmem:[%s2762 + $0x68] sm:$0x1]
        %v3350 = vld [vmem:[%s2762 + $0x6c] sm:$0xe]
        %v3351 = vld [vmem:[%s2762 + $0x70] sm:$0xf]
        %v3352 = vld [vmem:[%s2762 + $0x74] sm:$0x1]
        %v3353 = vld [vmem:[%s2762 + $0x78] sm:$0xe]
        %v3354 = vld [vmem:[%s2762 + $0x7c] sm:$0xf]
        %v3355 = vld [vmem:[%s2762 + $0x80] sm:$0x1]
        %v3356 = vld [vmem:[%s2762 + $0x84] sm:$0xe]
        %v3357 = vld [vmem:[%s2762 + $0x88] sm:$0xf]
        %v3358 = vld [vmem:[%s2762 + $0x8c] sm:$0x1]
        %v3359 = vld [vmem:[%s2762 + $0x90] sm:$0xe]
        %v3360 = vld [vmem:[%s2762 + $0x94] sm:$0xf]
        %v3361 = vld [vmem:[%s2762 + $0x98] sm:$0x1]
        %v3362 = vld [vmem:[%s2762 + $0x9c] sm:$0xe]
        %v3363 = vld [vmem:[%s2762 + $0xa0] sm:$0xf]
        %v3364 = vld [vmem:[%s2762 + $0xa4] sm:$0x1]
        %v3365 = vld [vmem:[%s2762 + $0xa8] sm:$0xe]
        %v3366 = vld [vmem:[%s2762 + $0xac] sm:$0xf]
        %v3367 = vld [vmem:[%s2762 + $0xb0] sm:$0x1]
        %v3368 = vld [vmem:[%s2762 + $0xb4] sm:$0xe]
        %v3369 = vld [vmem:[%s2762 + $0xb8] sm:$0xf]
        %v3370 = vld [vmem:[%s2762 + $0xbc] sm:$0x1]
        %v3419 = vrot.slane %v3323, 5
        %v3420 = vrot.slane %v3419, 4
        %v3421 = vrot.slane %v3324, 5
        %v3422 = vsel %vm1753, %v3420, %v3421
        %v3423 = vrot.slane %v3421, 4
        %v3424 = vrot.slane %v3325, 5
        %v3425 = vsel %vm1753, %v3423, %v3424
        %v3426 = vrot.slane %v3326, 5
        %v3427 = vrot.slane %v3426, 4
        %v3428 = vrot.slane %v3327, 5
        %v3429 = vsel %vm1753, %v3427, %v3428
        %v3430 = vrot.slane %v3428, 4
        %v3431 = vrot.slane %v3328, 5
        %v3432 = vsel %vm1753, %v3430, %v3431
        %v3433 = vrot.slane %v3329, 5
        %v3434 = vrot.slane %v3433, 4
        %v3435 = vrot.slane %v3330, 5
        %v3436 = vsel %vm1753, %v3434, %v3435
        %v3437 = vrot.slane %v3435, 4
        %v3438 = vrot.slane %v3331, 5
        %v3439 = vsel %vm1753, %v3437, %v3438
        %v3440 = vrot.slane %v3332, 5
        %v3441 = vrot.slane %v3440, 4
        %v3442 = vrot.slane %v3333, 5
        %v3443 = vsel %vm1753, %v3441, %v3442
        %v3444 = vrot.slane %v3442, 4
        %v3445 = vrot.slane %v3334, 5
        %v3446 = vsel %vm1753, %v3444, %v3445
        %v3447 = vrot.slane %v3335, 5
        %v3448 = vrot.slane %v3447, 4
        %v3449 = vrot.slane %v3336, 5
        %v3450 = vsel %vm1753, %v3448, %v3449
        %v3451 = vrot.slane %v3449, 4
        %v3452 = vrot.slane %v3337, 5
        %v3453 = vsel %vm1753, %v3451, %v3452
        %v3454 = vrot.slane %v3338, 5
        %v3455 = vrot.slane %v3454, 4
        %v3456 = vrot.slane %v3339, 5
        %v3457 = vsel %vm1753, %v3455, %v3456
        %v3458 = vrot.slane %v3456, 4
        %v3459 = vrot.slane %v3340, 5
        %v3460 = vsel %vm1753, %v3458, %v3459
        %v3461 = vrot.slane %v3341, 5
        %v3462 = vrot.slane %v3461, 4
        %v3463 = vrot.slane %v3342, 5
        %v3464 = vsel %vm1753, %v3462, %v3463
        %v3465 = vrot.slane %v3463, 4
        %v3466 = vrot.slane %v3343, 5
        %v3467 = vsel %vm1753, %v3465, %v3466
        %v3468 = vrot.slane %v3344, 5
        %v3469 = vrot.slane %v3468, 4
        %v3470 = vrot.slane %v3345, 5
        %v3471 = vsel %vm1753, %v3469, %v3470
        %v3472 = vrot.slane %v3470, 4
        %v3473 = vrot.slane %v3346, 5
        %v3474 = vsel %vm1753, %v3472, %v3473
        %v3475 = vrot.slane %v3347, 5
        %v3476 = vrot.slane %v3475, 4
        %v3477 = vrot.slane %v3348, 5
        %v3478 = vsel %vm1753, %v3476, %v3477
        %v3479 = vrot.slane %v3477, 4
        %v3480 = vrot.slane %v3349, 5
        %v3481 = vsel %vm1753, %v3479, %v3480
        %v3482 = vrot.slane %v3350, 5
        %v3483 = vrot.slane %v3482, 4
        %v3484 = vrot.slane %v3351, 5
        %v3485 = vsel %vm1753, %v3483, %v3484
        %v3486 = vrot.slane %v3484, 4
        %v3487 = vrot.slane %v3352, 5
        %v3488 = vsel %vm1753, %v3486, %v3487
        %v3489 = vrot.slane %v3353, 5
        %v3490 = vrot.slane %v3489, 4
        %v3491 = vrot.slane %v3354, 5
        %v3492 = vsel %vm1753, %v3490, %v3491
        %v3493 = vrot.slane %v3491, 4
        %v3494 = vrot.slane %v3355, 5
        %v3495 = vsel %vm1753, %v3493, %v3494
        %v3496 = vrot.slane %v3356, 5
        %v3497 = vrot.slane %v3496, 4
        %v3498 = vrot.slane %v3357, 5
        %v3499 = vsel %vm1753, %v3497, %v3498
        %v3500 = vrot.slane %v3498, 4
        %v3501 = vrot.slane %v3358, 5
        %v3502 = vsel %vm1753, %v3500, %v3501
        %v3503 = vrot.slane %v3359, 5
        %v3504 = vrot.slane %v3503, 4
        %v3505 = vrot.slane %v3360, 5
        %v3506 = vsel %vm1753, %v3504, %v3505
        %v3507 = vrot.slane %v3505, 4
        %v3508 = vrot.slane %v3361, 5
        %v3509 = vsel %vm1753, %v3507, %v3508
        %v3510 = vrot.slane %v3362, 5
        %v3511 = vrot.slane %v3510, 4
        %v3512 = vrot.slane %v3363, 5
        %v3513 = vsel %vm1753, %v3511, %v3512
        %v3514 = vrot.slane %v3512, 4
        %v3515 = vrot.slane %v3364, 5
        %v3516 = vsel %vm1753, %v3514, %v3515
        %v3517 = vrot.slane %v3365, 5
        %v3518 = vrot.slane %v3517, 4
        %v3519 = vrot.slane %v3366, 5
        %v3520 = vsel %vm1753, %v3518, %v3519
        %v3521 = vrot.slane %v3519, 4
        %v3522 = vrot.slane %v3367, 5
        %v3523 = vsel %vm1753, %v3521, %v3522
        %v3524 = vrot.slane %v3368, 5
        %v3525 = vrot.slane %v3524, 4
        %v3526 = vrot.slane %v3369, 5
        %v3527 = vsel %vm1753, %v3525, %v3526
        %v3528 = vrot.slane %v3526, 4
        %v3529 = vrot.slane %v3370, 5
        %v3530 = vsel %vm1753, %v3528, %v3529
        %3563 = vst [vmem:[#allocation3 + $0x20] sm:$0xf] %v3422
        %3564 = vst [vmem:[#allocation3 + $0x44] sm:$0xf] %v3425
        %3565 = vst [vmem:[#allocation3 + $0x68] sm:$0xf] %v3429
        %3566 = vst [vmem:[#allocation3 + $0x8c] sm:$0xf] %v3432
        %3567 = vst [vmem:[#allocation3 + $0xb0] sm:$0xf] %v3436
        %3568 = vst [vmem:[#allocation3 + $0xd4] sm:$0xf] %v3439
        %3569 = vst [vmem:[#allocation3 + $0xf8] sm:$0xf] %v3443
        %3570 = vst [vmem:[#allocation3 + $0x11c] sm:$0xf] %v3446
        %3571 = vst [vmem:[#allocation3 + $0x140] sm:$0xf] %v3450
        %3572 = vst [vmem:[#allocation3 + $0x164] sm:$0xf] %v3453
        %3573 = vst [vmem:[#allocation3 + $0x188] sm:$0xf] %v3457
        %3574 = vst [vmem:[#allocation3 + $0x1ac] sm:$0xf] %v3460
        %3575 = vst [vmem:[#allocation3 + $0x1d0] sm:$0xf] %v3464
        %3576 = vst [vmem:[#allocation3 + $0x1f4] sm:$0xf] %v3467
        %3577 = vst [vmem:[#allocation3 + $0x218] sm:$0xf] %v3471
        %3578 = vst [vmem:[#allocation3 + $0x23c] sm:$0xf] %v3474
        %3579 = vst [vmem:[#allocation3 + $0x260] sm:$0xf] %v3478
        %3580 = vst [vmem:[#allocation3 + $0x284] sm:$0xf] %v3481
        %3581 = vst [vmem:[#allocation3 + $0x2a8] sm:$0xf] %v3485
        %3582 = vst [vmem:[#allocation3 + $0x2cc] sm:$0xf] %v3488
        %3583 = vst [vmem:[#allocation3 + $0x2f0] sm:$0xf] %v3492
        %3584 = vst [vmem:[#allocation3 + $0x314] sm:$0xf] %v3495
        %3585 = vst [vmem:[#allocation3 + $0x338] sm:$0xf] %v3499
        %3586 = vst [vmem:[#allocation3 + $0x35c] sm:$0xf] %v3502
        %3587 = vst [vmem:[#allocation3 + $0x380] sm:$0xf] %v3506
        %3588 = vst [vmem:[#allocation3 + $0x3a4] sm:$0xf] %v3509
        %3589 = vst [vmem:[#allocation3 + $0x3c8] sm:$0xf] %v3513
        %3590 = vst [vmem:[#allocation3 + $0x3ec] sm:$0xf] %v3516
        %3591 = vst [vmem:[#allocation3 + $0x410] sm:$0xf] %v3520
        %3592 = vst [vmem:[#allocation3 + $0x434] sm:$0xf] %v3523
        %3593 = vst [vmem:[#allocation3 + $0x458] sm:$0xf] %v3527
        %3594 = vst [vmem:[#allocation3 + $0x47c] sm:$0xf] %v3530
      $region40: #{bottleneck_forward.4} parent=35 // pred_fallthru
        _
      %v3595 = vld [vmem:[#allocation3] sm:$0xff]
      %v3596 = vld [vmem:[#allocation3 + $0x8] sm:$0xff]
      %v3597 = vld [vmem:[#allocation3 + $0x10] sm:$0xff]
      %v3598 = vld [vmem:[#allocation3 + $0x18] sm:$0xff]
      %v3599 = vld [vmem:[#allocation3 + $0x20] sm:$0xf]
      %v3600 = vld [vmem:[#allocation3 + $0x24] sm:$0xff]
      %v3601 = vld [vmem:[#allocation3 + $0x2c] sm:$0xff]
      %v3602 = vld [vmem:[#allocation3 + $0x34] sm:$0xff]
      %v3603 = vld [vmem:[#allocation3 + $0x3c] sm:$0xff]
      %v3604 = vld [vmem:[#allocation3 + $0x44] sm:$0xf]
      %v3605 = vld [vmem:[#allocation3 + $0x48] sm:$0xff]
      %v3606 = vld [vmem:[#allocation3 + $0x50] sm:$0xff]
      %v3607 = vld [vmem:[#allocation3 + $0x58] sm:$0xff]
      %v3608 = vld [vmem:[#allocation3 + $0x60] sm:$0xff]
      %v3609 = vld [vmem:[#allocation3 + $0x68] sm:$0xf]
      %v3610 = vld [vmem:[#allocation3 + $0x6c] sm:$0xff]
      %v3611 = vld [vmem:[#allocation3 + $0x74] sm:$0xff]
      %v3612 = vld [vmem:[#allocation3 + $0x7c] sm:$0xff]
      %v3613 = vld [vmem:[#allocation3 + $0x84] sm:$0xff]
      %v3614 = vld [vmem:[#allocation3 + $0x8c] sm:$0xf]
      %v3615 = vld [vmem:[#allocation3 + $0x90] sm:$0xff]
      %v3616 = vld [vmem:[#allocation3 + $0x98] sm:$0xff]
      %v3617 = vld [vmem:[#allocation3 + $0xa0] sm:$0xff]
      %v3618 = vld [vmem:[#allocation3 + $0xa8] sm:$0xff]
      %v3619 = vld [vmem:[#allocation3 + $0xb0] sm:$0xf]
      %v3620 = vld [vmem:[#allocation3 + $0xb4] sm:$0xff]
      %v3621 = vld [vmem:[#allocation3 + $0xbc] sm:$0xff]
      %v3622 = vld [vmem:[#allocation3 + $0xc4] sm:$0xff]
      %v3623 = vld [vmem:[#allocation3 + $0xcc] sm:$0xff]
      %v3624 = vld [vmem:[#allocation3 + $0xd4] sm:$0xf]
      %v3625 = vld [vmem:[#allocation3 + $0xd8] sm:$0xff]
      %v3626 = vld [vmem:[#allocation3 + $0xe0] sm:$0xff]
      %v3627 = vld [vmem:[#allocation3 + $0xe8] sm:$0xff]
      %v3628 = vld [vmem:[#allocation3 + $0xf0] sm:$0xff]
      %v3629 = vld [vmem:[#allocation3 + $0xf8] sm:$0xf]
      %v3630 = vld [vmem:[#allocation3 + $0xfc] sm:$0xff]
      %v3631 = vld [vmem:[#allocation3 + $0x104] sm:$0xff]
      %v3632 = vld [vmem:[#allocation3 + $0x10c] sm:$0xff]
      %v3633 = vld [vmem:[#allocation3 + $0x114] sm:$0xff]
      %v3634 = vld [vmem:[#allocation3 + $0x11c] sm:$0xf]
      %v3635 = vld [vmem:[#allocation3 + $0x120] sm:$0xff]
      %v3636 = vld [vmem:[#allocation3 + $0x128] sm:$0xff]
      %v3637 = vld [vmem:[#allocation3 + $0x130] sm:$0xff]
      %v3638 = vld [vmem:[#allocation3 + $0x138] sm:$0xff]
      %v3639 = vld [vmem:[#allocation3 + $0x140] sm:$0xf]
      %v3640 = vld [vmem:[#allocation3 + $0x144] sm:$0xff]
      %v3641 = vld [vmem:[#allocation3 + $0x14c] sm:$0xff]
      %v3642 = vld [vmem:[#allocation3 + $0x154] sm:$0xff]
      %v3643 = vld [vmem:[#allocation3 + $0x15c] sm:$0xff]
      %v3644 = vld [vmem:[#allocation3 + $0x164] sm:$0xf]
      %v3645 = vld [vmem:[#allocation3 + $0x168] sm:$0xff]
      %v3646 = vld [vmem:[#allocation3 + $0x170] sm:$0xff]
      %v3647 = vld [vmem:[#allocation3 + $0x178] sm:$0xff]
      %v3648 = vld [vmem:[#allocation3 + $0x180] sm:$0xff]
      %v3649 = vld [vmem:[#allocation3 + $0x188] sm:$0xf]
      %v3650 = vld [vmem:[#allocation3 + $0x18c] sm:$0xff]
      %v3651 = vld [vmem:[#allocation3 + $0x194] sm:$0xff]
      %v3652 = vld [vmem:[#allocation3 + $0x19c] sm:$0xff]
      %v3653 = vld [vmem:[#allocation3 + $0x1a4] sm:$0xff]
      %v3654 = vld [vmem:[#allocation3 + $0x1ac] sm:$0xf]
      %v3655 = vld [vmem:[#allocation3 + $0x1b0] sm:$0xff]
      %v3656 = vld [vmem:[#allocation3 + $0x1b8] sm:$0xff]
      %v3657 = vld [vmem:[#allocation3 + $0x1c0] sm:$0xff]
      %v3658 = vld [vmem:[#allocation3 + $0x1c8] sm:$0xff]
      %v3659 = vld [vmem:[#allocation3 + $0x1d0] sm:$0xf]
      %v3660 = vld [vmem:[#allocation3 + $0x1d4] sm:$0xff]
      %v3661 = vld [vmem:[#allocation3 + $0x1dc] sm:$0xff]
      %v3662 = vld [vmem:[#allocation3 + $0x1e4] sm:$0xff]
      %v3663 = vld [vmem:[#allocation3 + $0x1ec] sm:$0xff]
      %v3664 = vld [vmem:[#allocation3 + $0x1f4] sm:$0xf]
      %v3665 = vld [vmem:[#allocation3 + $0x1f8] sm:$0xff]
      %v3666 = vld [vmem:[#allocation3 + $0x200] sm:$0xff]
      %v3667 = vld [vmem:[#allocation3 + $0x208] sm:$0xff]
      %v3668 = vld [vmem:[#allocation3 + $0x210] sm:$0xff]
      %v3669 = vld [vmem:[#allocation3 + $0x218] sm:$0xf]
      %v3670 = vld [vmem:[#allocation3 + $0x21c] sm:$0xff]
      %v3671 = vld [vmem:[#allocation3 + $0x224] sm:$0xff]
      %v3672 = vld [vmem:[#allocation3 + $0x22c] sm:$0xff]
      %v3673 = vld [vmem:[#allocation3 + $0x234] sm:$0xff]
      %v3674 = vld [vmem:[#allocation3 + $0x23c] sm:$0xf]
      %v3675 = vld [vmem:[#allocation3 + $0x240] sm:$0xff]
      %v3676 = vld [vmem:[#allocation3 + $0x248] sm:$0xff]
      %v3677 = vld [vmem:[#allocation3 + $0x250] sm:$0xff]
      %v3678 = vld [vmem:[#allocation3 + $0x258] sm:$0xff]
      %v3679 = vld [vmem:[#allocation3 + $0x260] sm:$0xf]
      %v3680 = vld [vmem:[#allocation3 + $0x264] sm:$0xff]
      %v3681 = vld [vmem:[#allocation3 + $0x26c] sm:$0xff]
      %v3682 = vld [vmem:[#allocation3 + $0x274] sm:$0xff]
      %v3683 = vld [vmem:[#allocation3 + $0x27c] sm:$0xff]
      %v3684 = vld [vmem:[#allocation3 + $0x284] sm:$0xf]
      %v3685 = vld [vmem:[#allocation3 + $0x288] sm:$0xff]
      %v3686 = vld [vmem:[#allocation3 + $0x290] sm:$0xff]
      %v3687 = vld [vmem:[#allocation3 + $0x298] sm:$0xff]
      %v3688 = vld [vmem:[#allocation3 + $0x2a0] sm:$0xff]
      %v3689 = vld [vmem:[#allocation3 + $0x2a8] sm:$0xf]
      %v3690 = vld [vmem:[#allocation3 + $0x2ac] sm:$0xff]
      %v3691 = vld [vmem:[#allocation3 + $0x2b4] sm:$0xff]
      %v3692 = vld [vmem:[#allocation3 + $0x2bc] sm:$0xff]
      %v3693 = vld [vmem:[#allocation3 + $0x2c4] sm:$0xff]
      %v3694 = vld [vmem:[#allocation3 + $0x2cc] sm:$0xf]
      %v3695 = vld [vmem:[#allocation3 + $0x2d0] sm:$0xff]
      %v3696 = vld [vmem:[#allocation3 + $0x2d8] sm:$0xff]
      %v3697 = vld [vmem:[#allocation3 + $0x2e0] sm:$0xff]
      %v3698 = vld [vmem:[#allocation3 + $0x2e8] sm:$0xff]
      %v3699 = vld [vmem:[#allocation3 + $0x2f0] sm:$0xf]
      %v3700 = vld [vmem:[#allocation3 + $0x2f4] sm:$0xff]
      %v3701 = vld [vmem:[#allocation3 + $0x2fc] sm:$0xff]
      %v3702 = vld [vmem:[#allocation3 + $0x304] sm:$0xff]
      %v3703 = vld [vmem:[#allocation3 + $0x30c] sm:$0xff]
      %v3704 = vld [vmem:[#allocation3 + $0x314] sm:$0xf]
      %v3705 = vld [vmem:[#allocation3 + $0x318] sm:$0xff]
      %v3706 = vld [vmem:[#allocation3 + $0x320] sm:$0xff]
      %v3707 = vld [vmem:[#allocation3 + $0x328] sm:$0xff]
      %v3708 = vld [vmem:[#allocation3 + $0x330] sm:$0xff]
      %v3709 = vld [vmem:[#allocation3 + $0x338] sm:$0xf]
      %v3710 = vld [vmem:[#allocation3 + $0x33c] sm:$0xff]
      %v3711 = vld [vmem:[#allocation3 + $0x344] sm:$0xff]
      %v3712 = vld [vmem:[#allocation3 + $0x34c] sm:$0xff]
      %v3713 = vld [vmem:[#allocation3 + $0x354] sm:$0xff]
      %v3714 = vld [vmem:[#allocation3 + $0x35c] sm:$0xf]
      %v3715 = vld [vmem:[#allocation3 + $0x360] sm:$0xff]
      %v3716 = vld [vmem:[#allocation3 + $0x368] sm:$0xff]
      %v3717 = vld [vmem:[#allocation3 + $0x370] sm:$0xff]
      %v3718 = vld [vmem:[#allocation3 + $0x378] sm:$0xff]
      %v3719 = vld [vmem:[#allocation3 + $0x380] sm:$0xf]
      %v3720 = vld [vmem:[#allocation3 + $0x384] sm:$0xff]
      %v3721 = vld [vmem:[#allocation3 + $0x38c] sm:$0xff]
      %v3722 = vld [vmem:[#allocation3 + $0x394] sm:$0xff]
      %v3723 = vld [vmem:[#allocation3 + $0x39c] sm:$0xff]
      %v3724 = vld [vmem:[#allocation3 + $0x3a4] sm:$0xf]
      %v3725 = vld [vmem:[#allocation3 + $0x3a8] sm:$0xff]
      %v3726 = vld [vmem:[#allocation3 + $0x3b0] sm:$0xff]
      %v3727 = vld [vmem:[#allocation3 + $0x3b8] sm:$0xff]
      %v3728 = vld [vmem:[#allocation3 + $0x3c0] sm:$0xff]
      %v3729 = vld [vmem:[#allocation3 + $0x3c8] sm:$0xf]
      %v3730 = vld [vmem:[#allocation3 + $0x3cc] sm:$0xff]
      %v3731 = vld [vmem:[#allocation3 + $0x3d4] sm:$0xff]
      %v3732 = vld [vmem:[#allocation3 + $0x3dc] sm:$0xff]
      %v3733 = vld [vmem:[#allocation3 + $0x3e4] sm:$0xff]
      %v3734 = vld [vmem:[#allocation3 + $0x3ec] sm:$0xf]
      %v3735 = vld [vmem:[#allocation3 + $0x3f0] sm:$0xff]
      %v3736 = vld [vmem:[#allocation3 + $0x3f8] sm:$0xff]
      %v3737 = vld [vmem:[#allocation3 + $0x400] sm:$0xff]
      %v3738 = vld [vmem:[#allocation3 + $0x408] sm:$0xff]
      %v3739 = vld [vmem:[#allocation3 + $0x410] sm:$0xf]
      %v3740 = vld [vmem:[#allocation3 + $0x414] sm:$0xff]
      %v3741 = vld [vmem:[#allocation3 + $0x41c] sm:$0xff]
      %v3742 = vld [vmem:[#allocation3 + $0x424] sm:$0xff]
      %v3743 = vld [vmem:[#allocation3 + $0x42c] sm:$0xff]
      %v3744 = vld [vmem:[#allocation3 + $0x434] sm:$0xf]
      %v3745 = vld [vmem:[#allocation3 + $0x438] sm:$0xff]
      %v3746 = vld [vmem:[#allocation3 + $0x440] sm:$0xff]
      %v3747 = vld [vmem:[#allocation3 + $0x448] sm:$0xff]
      %v3748 = vld [vmem:[#allocation3 + $0x450] sm:$0xff]
      %v3749 = vld [vmem:[#allocation3 + $0x458] sm:$0xf]
      %v3750 = vld [vmem:[#allocation3 + $0x45c] sm:$0xff]
      %v3751 = vld [vmem:[#allocation3 + $0x464] sm:$0xff]
      %v3752 = vld [vmem:[#allocation3 + $0x46c] sm:$0xff]
      %v3753 = vld [vmem:[#allocation3 + $0x474] sm:$0xff]
      %v3754 = vld [vmem:[#allocation3 + $0x47c] sm:$0xf]
      %v3755 = vld [vmem:[%s301] sm:$0xf]
      %v3756 = vld [vmem:[%s301 + $0x4] sm:$0xf]
      %v3757 = vld [vmem:[%s301 + $0x8] sm:$0xf]
      %v3758 = vld [vmem:[%s301 + $0xc] sm:$0xf]
      %v3759 = vld [vmem:[%s301 + $0x10] sm:$0xf]
      %v3760 = vld [vmem:[%s301 + $0x14] sm:$0xf]
      %v3761 = vld [vmem:[%s301 + $0x18] sm:$0xf]
      %v3762 = vld [vmem:[%s301 + $0x1c] sm:$0xf]
      %v3763 = vld [vmem:[%s301 + $0x20] sm:$0xf]
      %v3764 = vld [vmem:[%s301 + $0x24] sm:$0xf]
      %v3765 = vld [vmem:[%s301 + $0x28] sm:$0xf]
      %v3766 = vld [vmem:[%s301 + $0x2c] sm:$0xf]
      %v3767 = vld [vmem:[%s301 + $0x30] sm:$0xf]
      %v3768 = vld [vmem:[%s301 + $0x34] sm:$0xf]
      %v3769 = vld [vmem:[%s301 + $0x38] sm:$0xf]
      %v3770 = vld [vmem:[%s301 + $0x3c] sm:$0xf]
      %v3771 = vld [vmem:[%s301 + $0x40] sm:$0xf]
      %v3772 = vld [vmem:[%s301 + $0x44] sm:$0xf]
      %v3773 = vld [vmem:[%s301 + $0x48] sm:$0xf]
      %v3774 = vld [vmem:[%s301 + $0x4c] sm:$0xf]
      %v3775 = vld [vmem:[%s301 + $0x50] sm:$0xf]
      %v3776 = vld [vmem:[%s301 + $0x54] sm:$0xf]
      %v3777 = vld [vmem:[%s301 + $0x58] sm:$0xf]
      %v3778 = vld [vmem:[%s301 + $0x5c] sm:$0xf]
      %v3779 = vld [vmem:[%s301 + $0x60] sm:$0xf]
      %v3780 = vld [vmem:[%s301 + $0x64] sm:$0xf]
      %v3781 = vld [vmem:[%s301 + $0x68] sm:$0xf]
      %v3782 = vld [vmem:[%s301 + $0x6c] sm:$0xf]
      %v3783 = vld [vmem:[%s301 + $0x70] sm:$0xf]
      %v3784 = vld [vmem:[%s301 + $0x74] sm:$0xf]
      %v3785 = vld [vmem:[%s301 + $0x78] sm:$0xf]
      %v3786 = vld [vmem:[%s301 + $0x7c] sm:$0xf]
      %v3787 = vld [vmem:[%s301 + $0x80] sm:$0xf]
      %v3788 = vld [vmem:[%s301 + $0x84] sm:$0xf]
      %v3789 = vld [vmem:[%s301 + $0x88] sm:$0xf]
      %v3790 = vld [vmem:[%s301 + $0x8c] sm:$0xf]
      %v3791 = vld [vmem:[%s301 + $0x90] sm:$0xf]
      %v3792 = vld [vmem:[%s301 + $0x94] sm:$0xf]
      %v3793 = vld [vmem:[%s301 + $0x98] sm:$0xf]
      %v3794 = vld [vmem:[%s301 + $0x9c] sm:$0xf]
      %v3795 = vld [vmem:[%s301 + $0xa0] sm:$0xf]
      %v3796 = vld [vmem:[%s301 + $0xa4] sm:$0xf]
      %v3797 = vld [vmem:[%s301 + $0xa8] sm:$0xf]
      %v3798 = vld [vmem:[%s301 + $0xac] sm:$0xf]
      %v3799 = vld [vmem:[%s301 + $0xb0] sm:$0xf]
      %v3800 = vld [vmem:[%s301 + $0xb4] sm:$0xf]
      %v3801 = vld [vmem:[%s301 + $0xb8] sm:$0xf]
      %v3802 = vld [vmem:[%s301 + $0xbc] sm:$0xf]
      %v3803 = vld [vmem:[%s301 + $0xc0] sm:$0xf]
      %v3804 = vld [vmem:[%s301 + $0xc4] sm:$0xf]
      %v3805 = vld [vmem:[%s301 + $0xc8] sm:$0xf]
      %v3806 = vld [vmem:[%s301 + $0xcc] sm:$0xf]
      %v3807 = vld [vmem:[%s301 + $0xd0] sm:$0xf]
      %v3808 = vld [vmem:[%s301 + $0xd4] sm:$0xf]
      %v3809 = vld [vmem:[%s301 + $0xd8] sm:$0xf]
      %v3810 = vld [vmem:[%s301 + $0xdc] sm:$0xf]
      %v3811 = vld [vmem:[%s301 + $0xe0] sm:$0xf]
      %v3812 = vld [vmem:[%s301 + $0xe4] sm:$0xf]
      %v3813 = vld [vmem:[%s301 + $0xe8] sm:$0xf]
      %v3814 = vld [vmem:[%s301 + $0xec] sm:$0xf]
      %v3815 = vld [vmem:[%s301 + $0xf0] sm:$0xf]
      %v3816 = vld [vmem:[%s301 + $0xf4] sm:$0xf]
      %v3817 = vld [vmem:[%s301 + $0xf8] sm:$0xf]
      %v3818 = vld [vmem:[%s301 + $0xfc] sm:$0xf]
      %v3819 = vld [vmem:[%s301 + $0x100] sm:$0xf]
      %v3820 = vld [vmem:[%s301 + $0x104] sm:$0xf]
      %v3821 = vld [vmem:[%s301 + $0x108] sm:$0xf]
      %v3822 = vld [vmem:[%s301 + $0x10c] sm:$0xf]
      %v3823 = vld [vmem:[%s301 + $0x110] sm:$0xf]
      %v3824 = vld [vmem:[%s301 + $0x114] sm:$0xf]
      %v3825 = vld [vmem:[%s301 + $0x118] sm:$0xf]
      %v3826 = vld [vmem:[%s301 + $0x11c] sm:$0xf]
      %v3827 = vld [vmem:[%s301 + $0x120] sm:$0xf]
      %v3828 = vld [vmem:[%s301 + $0x124] sm:$0xf]
      %v3829 = vld [vmem:[%s301 + $0x128] sm:$0xf]
      %v3830 = vld [vmem:[%s301 + $0x12c] sm:$0xf]
      %v3831 = vld [vmem:[%s301 + $0x130] sm:$0xf]
      %v3832 = vld [vmem:[%s301 + $0x134] sm:$0xf]
      %v3833 = vld [vmem:[%s301 + $0x138] sm:$0xf]
      %v3834 = vld [vmem:[%s301 + $0x13c] sm:$0xf]
      %v3835 = vld [vmem:[%s301 + $0x140] sm:$0xf]
      %v3836 = vld [vmem:[%s301 + $0x144] sm:$0xf]
      %v3837 = vld [vmem:[%s301 + $0x148] sm:$0xf]
      %v3838 = vld [vmem:[%s301 + $0x14c] sm:$0xf]
      %v3839 = vld [vmem:[%s301 + $0x150] sm:$0xf]
      %v3840 = vld [vmem:[%s301 + $0x154] sm:$0xf]
      %v3841 = vld [vmem:[%s301 + $0x158] sm:$0xf]
      %v3842 = vld [vmem:[%s301 + $0x15c] sm:$0xf]
      %v3843 = vld [vmem:[%s301 + $0x160] sm:$0xf]
      %v3844 = vld [vmem:[%s301 + $0x164] sm:$0xf]
      %v3845 = vld [vmem:[%s301 + $0x168] sm:$0xf]
      %v3846 = vld [vmem:[%s301 + $0x16c] sm:$0xf]
      %v3847 = vld [vmem:[%s301 + $0x170] sm:$0xf]
      %v3848 = vld [vmem:[%s301 + $0x174] sm:$0xf]
      %v3849 = vld [vmem:[%s301 + $0x178] sm:$0xf]
      %v3850 = vld [vmem:[%s301 + $0x17c] sm:$0xf]
      %v3851 = vld [vmem:[%s301 + $0x180] sm:$0xf]
      %v3852 = vld [vmem:[%s301 + $0x184] sm:$0xf]
      %v3853 = vld [vmem:[%s301 + $0x188] sm:$0xf]
      %v3854 = vld [vmem:[%s301 + $0x18c] sm:$0xf]
      %v3855 = vld [vmem:[%s301 + $0x190] sm:$0xf]
      %v3856 = vld [vmem:[%s301 + $0x194] sm:$0xf]
      %v3857 = vld [vmem:[%s301 + $0x198] sm:$0xf]
      %v3858 = vld [vmem:[%s301 + $0x19c] sm:$0xf]
      %v3859 = vld [vmem:[%s301 + $0x1a0] sm:$0xf]
      %v3860 = vld [vmem:[%s301 + $0x1a4] sm:$0xf]
      %v3861 = vld [vmem:[%s301 + $0x1a8] sm:$0xf]
      %v3862 = vld [vmem:[%s301 + $0x1ac] sm:$0xf]
      %v3863 = vld [vmem:[%s301 + $0x1b0] sm:$0xf]
      %v3864 = vld [vmem:[%s301 + $0x1b4] sm:$0xf]
      %v3865 = vld [vmem:[%s301 + $0x1b8] sm:$0xf]
      %v3866 = vld [vmem:[%s301 + $0x1bc] sm:$0xf]
      %v3867 = vld [vmem:[%s301 + $0x1c0] sm:$0xf]
      %v3868 = vld [vmem:[%s301 + $0x1c4] sm:$0xf]
      %v3869 = vld [vmem:[%s301 + $0x1c8] sm:$0xf]
      %v3870 = vld [vmem:[%s301 + $0x1cc] sm:$0xf]
      %v3871 = vld [vmem:[%s301 + $0x1d0] sm:$0xf]
      %v3872 = vld [vmem:[%s301 + $0x1d4] sm:$0xf]
      %v3873 = vld [vmem:[%s301 + $0x1d8] sm:$0xf]
      %v3874 = vld [vmem:[%s301 + $0x1dc] sm:$0xf]
      %v3875 = vld [vmem:[%s301 + $0x1e0] sm:$0xf]
      %v3876 = vld [vmem:[%s301 + $0x1e4] sm:$0xf]
      %v3877 = vld [vmem:[%s301 + $0x1e8] sm:$0xf]
      %v3878 = vld [vmem:[%s301 + $0x1ec] sm:$0xf]
      %v3879 = vld [vmem:[%s301 + $0x1f0] sm:$0xf]
      %v3880 = vld [vmem:[%s301 + $0x1f4] sm:$0xf]
      %v3881 = vld [vmem:[%s301 + $0x1f8] sm:$0xf]
      %v3882 = vld [vmem:[%s301 + $0x1fc] sm:$0xf]
      %v3883 = vld [vmem:[%s301 + $0x200] sm:$0xf]
      %v3884 = vld [vmem:[%s301 + $0x204] sm:$0xf]
      %v3885 = vld [vmem:[%s301 + $0x208] sm:$0xf]
      %v3886 = vld [vmem:[%s301 + $0x20c] sm:$0xf]
      %v3887 = vld [vmem:[%s301 + $0x210] sm:$0xf]
      %v3888 = vld [vmem:[%s301 + $0x214] sm:$0xf]
      %v3889 = vld [vmem:[%s301 + $0x218] sm:$0xf]
      %v3890 = vld [vmem:[%s301 + $0x21c] sm:$0xf]
      %v3891 = vld [vmem:[%s301 + $0x220] sm:$0xf]
      %v3892 = vld [vmem:[%s301 + $0x224] sm:$0xf]
      %v3893 = vld [vmem:[%s301 + $0x228] sm:$0xf]
      %v3894 = vld [vmem:[%s301 + $0x22c] sm:$0xf]
      %v3895 = vld [vmem:[%s301 + $0x230] sm:$0xf]
      %v3896 = vld [vmem:[%s301 + $0x234] sm:$0xf]
      %v3897 = vld [vmem:[%s301 + $0x238] sm:$0xf]
      %v3898 = vld [vmem:[%s301 + $0x23c] sm:$0xf]
      %v4059 = vunpack.c.l.b16 %v3595
      %v4060 = vunpack.c.h.b16 %v3595
      %v4061 = vunpack.c.l.b16 %v3596
      %v4062 = vunpack.c.h.b16 %v3596
      %v4063 = vunpack.c.l.b16 %v3597
      %v4064 = vunpack.c.h.b16 %v3597
      %v4065 = vunpack.c.l.b16 %v3598
      %v4066 = vunpack.c.h.b16 %v3598
      %v4067 = vunpack.c.l.b16 %v3599
      %v4068 = vunpack.c.l.b16 %v3600
      %v4069 = vunpack.c.h.b16 %v3600
      %v4070 = vunpack.c.l.b16 %v3601
      %v4071 = vunpack.c.h.b16 %v3601
      %v4072 = vunpack.c.l.b16 %v3602
      %v4073 = vunpack.c.h.b16 %v3602
      %v4074 = vunpack.c.l.b16 %v3603
      %v4075 = vunpack.c.h.b16 %v3603
      %v4076 = vunpack.c.l.b16 %v3604
      %v4077 = vunpack.c.l.b16 %v3605
      %v4078 = vunpack.c.h.b16 %v3605
      %v4079 = vunpack.c.l.b16 %v3606
      %v4080 = vunpack.c.h.b16 %v3606
      %v4081 = vunpack.c.l.b16 %v3607
      %v4082 = vunpack.c.h.b16 %v3607
      %v4083 = vunpack.c.l.b16 %v3608
      %v4084 = vunpack.c.h.b16 %v3608
      %v4085 = vunpack.c.l.b16 %v3609
      %v4086 = vunpack.c.l.b16 %v3610
      %v4087 = vunpack.c.h.b16 %v3610
      %v4088 = vunpack.c.l.b16 %v3611
      %v4089 = vunpack.c.h.b16 %v3611
      %v4090 = vunpack.c.l.b16 %v3612
      %v4091 = vunpack.c.h.b16 %v3612
      %v4092 = vunpack.c.l.b16 %v3613
      %v4093 = vunpack.c.h.b16 %v3613
      %v4094 = vunpack.c.l.b16 %v3614
      %v4095 = vunpack.c.l.b16 %v3615
      %v4096 = vunpack.c.h.b16 %v3615
      %v4097 = vunpack.c.l.b16 %v3616
      %v4098 = vunpack.c.h.b16 %v3616
      %v4099 = vunpack.c.l.b16 %v3617
      %v4100 = vunpack.c.h.b16 %v3617
      %v4101 = vunpack.c.l.b16 %v3618
      %v4102 = vunpack.c.h.b16 %v3618
      %v4103 = vunpack.c.l.b16 %v3619
      %v4104 = vunpack.c.l.b16 %v3620
      %v4105 = vunpack.c.h.b16 %v3620
      %v4106 = vunpack.c.l.b16 %v3621
      %v4107 = vunpack.c.h.b16 %v3621
      %v4108 = vunpack.c.l.b16 %v3622
      %v4109 = vunpack.c.h.b16 %v3622
      %v4110 = vunpack.c.l.b16 %v3623
      %v4111 = vunpack.c.h.b16 %v3623
      %v4112 = vunpack.c.l.b16 %v3624
      %v4113 = vunpack.c.l.b16 %v3625
      %v4114 = vunpack.c.h.b16 %v3625
      %v4115 = vunpack.c.l.b16 %v3626
      %v4116 = vunpack.c.h.b16 %v3626
      %v4117 = vunpack.c.l.b16 %v3627
      %v4118 = vunpack.c.h.b16 %v3627
      %v4119 = vunpack.c.l.b16 %v3628
      %v4120 = vunpack.c.h.b16 %v3628
      %v4121 = vunpack.c.l.b16 %v3629
      %v4122 = vunpack.c.l.b16 %v3630
      %v4123 = vunpack.c.h.b16 %v3630
      %v4124 = vunpack.c.l.b16 %v3631
      %v4125 = vunpack.c.h.b16 %v3631
      %v4126 = vunpack.c.l.b16 %v3632
      %v4127 = vunpack.c.h.b16 %v3632
      %v4128 = vunpack.c.l.b16 %v3633
      %v4129 = vunpack.c.h.b16 %v3633
      %v4130 = vunpack.c.l.b16 %v3634
      %v4131 = vunpack.c.l.b16 %v3635
      %v4132 = vunpack.c.h.b16 %v3635
      %v4133 = vunpack.c.l.b16 %v3636
      %v4134 = vunpack.c.h.b16 %v3636
      %v4135 = vunpack.c.l.b16 %v3637
      %v4136 = vunpack.c.h.b16 %v3637
      %v4137 = vunpack.c.l.b16 %v3638
      %v4138 = vunpack.c.h.b16 %v3638
      %v4139 = vunpack.c.l.b16 %v3639
      %v4140 = vunpack.c.l.b16 %v3640
      %v4141 = vunpack.c.h.b16 %v3640
      %v4142 = vunpack.c.l.b16 %v3641
      %v4143 = vunpack.c.h.b16 %v3641
      %v4144 = vunpack.c.l.b16 %v3642
      %v4145 = vunpack.c.h.b16 %v3642
      %v4146 = vunpack.c.l.b16 %v3643
      %v4147 = vunpack.c.h.b16 %v3643
      %v4148 = vunpack.c.l.b16 %v3644
      %v4149 = vunpack.c.l.b16 %v3645
      %v4150 = vunpack.c.h.b16 %v3645
      %v4151 = vunpack.c.l.b16 %v3646
      %v4152 = vunpack.c.h.b16 %v3646
      %v4153 = vunpack.c.l.b16 %v3647
      %v4154 = vunpack.c.h.b16 %v3647
      %v4155 = vunpack.c.l.b16 %v3648
      %v4156 = vunpack.c.h.b16 %v3648
      %v4157 = vunpack.c.l.b16 %v3649
      %v4158 = vunpack.c.l.b16 %v3650
      %v4159 = vunpack.c.h.b16 %v3650
      %v4160 = vunpack.c.l.b16 %v3651
      %v4161 = vunpack.c.h.b16 %v3651
      %v4162 = vunpack.c.l.b16 %v3652
      %v4163 = vunpack.c.h.b16 %v3652
      %v4164 = vunpack.c.l.b16 %v3653
      %v4165 = vunpack.c.h.b16 %v3653
      %v4166 = vunpack.c.l.b16 %v3654
      %v4167 = vunpack.c.l.b16 %v3655
      %v4168 = vunpack.c.h.b16 %v3655
      %v4169 = vunpack.c.l.b16 %v3656
      %v4170 = vunpack.c.h.b16 %v3656
      %v4171 = vunpack.c.l.b16 %v3657
      %v4172 = vunpack.c.h.b16 %v3657
      %v4173 = vunpack.c.l.b16 %v3658
      %v4174 = vunpack.c.h.b16 %v3658
      %v4175 = vunpack.c.l.b16 %v3659
      %v4176 = vunpack.c.l.b16 %v3660
      %v4177 = vunpack.c.h.b16 %v3660
      %v4178 = vunpack.c.l.b16 %v3661
      %v4179 = vunpack.c.h.b16 %v3661
      %v4180 = vunpack.c.l.b16 %v3662
      %v4181 = vunpack.c.h.b16 %v3662
      %v4182 = vunpack.c.l.b16 %v3663
      %v4183 = vunpack.c.h.b16 %v3663
      %v4184 = vunpack.c.l.b16 %v3664
      %v4185 = vunpack.c.l.b16 %v3665
      %v4186 = vunpack.c.h.b16 %v3665
      %v4187 = vunpack.c.l.b16 %v3666
      %v4188 = vunpack.c.h.b16 %v3666
      %v4189 = vunpack.c.l.b16 %v3667
      %v4190 = vunpack.c.h.b16 %v3667
      %v4191 = vunpack.c.l.b16 %v3668
      %v4192 = vunpack.c.h.b16 %v3668
      %v4193 = vunpack.c.l.b16 %v3669
      %v4194 = vunpack.c.l.b16 %v3670
      %v4195 = vunpack.c.h.b16 %v3670
      %v4196 = vunpack.c.l.b16 %v3671
      %v4197 = vunpack.c.h.b16 %v3671
      %v4198 = vunpack.c.l.b16 %v3672
      %v4199 = vunpack.c.h.b16 %v3672
      %v4200 = vunpack.c.l.b16 %v3673
      %v4201 = vunpack.c.h.b16 %v3673
      %v4202 = vunpack.c.l.b16 %v3674
      %v4203 = vunpack.c.l.b16 %v3675
      %v4204 = vunpack.c.h.b16 %v3675
      %v4205 = vunpack.c.l.b16 %v3676
      %v4206 = vunpack.c.h.b16 %v3676
      %v4207 = vunpack.c.l.b16 %v3677
      %v4208 = vunpack.c.h.b16 %v3677
      %v4209 = vunpack.c.l.b16 %v3678
      %v4210 = vunpack.c.h.b16 %v3678
      %v4211 = vunpack.c.l.b16 %v3679
      %v4212 = vunpack.c.l.b16 %v3680
      %v4213 = vunpack.c.h.b16 %v3680
      %v4214 = vunpack.c.l.b16 %v3681
      %v4215 = vunpack.c.h.b16 %v3681
      %v4216 = vunpack.c.l.b16 %v3682
      %v4217 = vunpack.c.h.b16 %v3682
      %v4218 = vunpack.c.l.b16 %v3683
      %v4219 = vunpack.c.h.b16 %v3683
      %v4220 = vunpack.c.l.b16 %v3684
      %v4221 = vunpack.c.l.b16 %v3685
      %v4222 = vunpack.c.h.b16 %v3685
      %v4223 = vunpack.c.l.b16 %v3686
      %v4224 = vunpack.c.h.b16 %v3686
      %v4225 = vunpack.c.l.b16 %v3687
      %v4226 = vunpack.c.h.b16 %v3687
      %v4227 = vunpack.c.l.b16 %v3688
      %v4228 = vunpack.c.h.b16 %v3688
      %v4229 = vunpack.c.l.b16 %v3689
      %v4230 = vunpack.c.l.b16 %v3690
      %v4231 = vunpack.c.h.b16 %v3690
      %v4232 = vunpack.c.l.b16 %v3691
      %v4233 = vunpack.c.h.b16 %v3691
      %v4234 = vunpack.c.l.b16 %v3692
      %v4235 = vunpack.c.h.b16 %v3692
      %v4236 = vunpack.c.l.b16 %v3693
      %v4237 = vunpack.c.h.b16 %v3693
      %v4238 = vunpack.c.l.b16 %v3694
      %v4239 = vunpack.c.l.b16 %v3695
      %v4240 = vunpack.c.h.b16 %v3695
      %v4241 = vunpack.c.l.b16 %v3696
      %v4242 = vunpack.c.h.b16 %v3696
      %v4243 = vunpack.c.l.b16 %v3697
      %v4244 = vunpack.c.h.b16 %v3697
      %v4245 = vunpack.c.l.b16 %v3698
      %v4246 = vunpack.c.h.b16 %v3698
      %v4247 = vunpack.c.l.b16 %v3699
      %v4248 = vunpack.c.l.b16 %v3700
      %v4249 = vunpack.c.h.b16 %v3700
      %v4250 = vunpack.c.l.b16 %v3701
      %v4251 = vunpack.c.h.b16 %v3701
      %v4252 = vunpack.c.l.b16 %v3702
      %v4253 = vunpack.c.h.b16 %v3702
      %v4254 = vunpack.c.l.b16 %v3703
      %v4255 = vunpack.c.h.b16 %v3703
      %v4256 = vunpack.c.l.b16 %v3704
      %v4257 = vunpack.c.l.b16 %v3705
      %v4258 = vunpack.c.h.b16 %v3705
      %v4259 = vunpack.c.l.b16 %v3706
      %v4260 = vunpack.c.h.b16 %v3706
      %v4261 = vunpack.c.l.b16 %v3707
      %v4262 = vunpack.c.h.b16 %v3707
      %v4263 = vunpack.c.l.b16 %v3708
      %v4264 = vunpack.c.h.b16 %v3708
      %v4265 = vunpack.c.l.b16 %v3709
      %v4266 = vunpack.c.l.b16 %v3710
      %v4267 = vunpack.c.h.b16 %v3710
      %v4268 = vunpack.c.l.b16 %v3711
      %v4269 = vunpack.c.h.b16 %v3711
      %v4270 = vunpack.c.l.b16 %v3712
      %v4271 = vunpack.c.h.b16 %v3712
      %v4272 = vunpack.c.l.b16 %v3713
      %v4273 = vunpack.c.h.b16 %v3713
      %v4274 = vunpack.c.l.b16 %v3714
      %v4275 = vunpack.c.l.b16 %v3715
      %v4276 = vunpack.c.h.b16 %v3715
      %v4277 = vunpack.c.l.b16 %v3716
      %v4278 = vunpack.c.h.b16 %v3716
      %v4279 = vunpack.c.l.b16 %v3717
      %v4280 = vunpack.c.h.b16 %v3717
      %v4281 = vunpack.c.l.b16 %v3718
      %v4282 = vunpack.c.h.b16 %v3718
      %v4283 = vunpack.c.l.b16 %v3719
      %v4284 = vunpack.c.l.b16 %v3720
      %v4285 = vunpack.c.h.b16 %v3720
      %v4286 = vunpack.c.l.b16 %v3721
      %v4287 = vunpack.c.h.b16 %v3721
      %v4288 = vunpack.c.l.b16 %v3722
      %v4289 = vunpack.c.h.b16 %v3722
      %v4290 = vunpack.c.l.b16 %v3723
      %v4291 = vunpack.c.h.b16 %v3723
      %v4292 = vunpack.c.l.b16 %v3724
      %v4293 = vunpack.c.l.b16 %v3725
      %v4294 = vunpack.c.h.b16 %v3725
      %v4295 = vunpack.c.l.b16 %v3726
      %v4296 = vunpack.c.h.b16 %v3726
      %v4297 = vunpack.c.l.b16 %v3727
      %v4298 = vunpack.c.h.b16 %v3727
      %v4299 = vunpack.c.l.b16 %v3728
      %v4300 = vunpack.c.h.b16 %v3728
      %v4301 = vunpack.c.l.b16 %v3729
      %v4302 = vunpack.c.l.b16 %v3730
      %v4303 = vunpack.c.h.b16 %v3730
      %v4304 = vunpack.c.l.b16 %v3731
      %v4305 = vunpack.c.h.b16 %v3731
      %v4306 = vunpack.c.l.b16 %v3732
      %v4307 = vunpack.c.h.b16 %v3732
      %v4308 = vunpack.c.l.b16 %v3733
      %v4309 = vunpack.c.h.b16 %v3733
      %v4310 = vunpack.c.l.b16 %v3734
      %v4311 = vunpack.c.l.b16 %v3735
      %v4312 = vunpack.c.h.b16 %v3735
      %v4313 = vunpack.c.l.b16 %v3736
      %v4314 = vunpack.c.h.b16 %v3736
      %v4315 = vunpack.c.l.b16 %v3737
      %v4316 = vunpack.c.h.b16 %v3737
      %v4317 = vunpack.c.l.b16 %v3738
      %v4318 = vunpack.c.h.b16 %v3738
      %v4319 = vunpack.c.l.b16 %v3739
      %v4320 = vunpack.c.l.b16 %v3740
      %v4321 = vunpack.c.h.b16 %v3740
      %v4322 = vunpack.c.l.b16 %v3741
      %v4323 = vunpack.c.h.b16 %v3741
      %v4324 = vunpack.c.l.b16 %v3742
      %v4325 = vunpack.c.h.b16 %v3742
      %v4326 = vunpack.c.l.b16 %v3743
      %v4327 = vunpack.c.h.b16 %v3743
      %v4328 = vunpack.c.l.b16 %v3744
      %v4329 = vunpack.c.l.b16 %v3745
      %v4330 = vunpack.c.h.b16 %v3745
      %v4331 = vunpack.c.l.b16 %v3746
      %v4332 = vunpack.c.h.b16 %v3746
      %v4333 = vunpack.c.l.b16 %v3747
      %v4334 = vunpack.c.h.b16 %v3747
      %v4335 = vunpack.c.l.b16 %v3748
      %v4336 = vunpack.c.h.b16 %v3748
      %v4337 = vunpack.c.l.b16 %v3749
      %v4338 = vunpack.c.l.b16 %v3750
      %v4339 = vunpack.c.h.b16 %v3750
      %v4340 = vunpack.c.l.b16 %v3751
      %v4341 = vunpack.c.h.b16 %v3751
      %v4342 = vunpack.c.l.b16 %v3752
      %v4343 = vunpack.c.h.b16 %v3752
      %v4344 = vunpack.c.l.b16 %v3753
      %v4345 = vunpack.c.h.b16 %v3753
      %v4346 = vunpack.c.l.b16 %v3754
      %v4347 = vpack.c.b16 %v4068, %v4059
      %v4348 = vpack.c.b16 %v4069, %v4060
      %v4349 = vpack.c.b16 %v4070, %v4061
      %v4350 = vpack.c.b16 %v4071, %v4062
      %v4351 = vpack.c.b16 %v4072, %v4063
      %v4352 = vpack.c.b16 %v4073, %v4064
      %v4353 = vpack.c.b16 %v4074, %v4065
      %v4354 = vpack.c.b16 %v4075, %v4066
      %v4355 = vpack.c.b16 %v4076, %v4067
      %v4356 = vpack.c.b16 %v4086, %v4077
      %v4357 = vpack.c.b16 %v4087, %v4078
      %v4358 = vpack.c.b16 %v4088, %v4079
      %v4359 = vpack.c.b16 %v4089, %v4080
      %v4360 = vpack.c.b16 %v4090, %v4081
      %v4361 = vpack.c.b16 %v4091, %v4082
      %v4362 = vpack.c.b16 %v4092, %v4083
      %v4363 = vpack.c.b16 %v4093, %v4084
      %v4364 = vpack.c.b16 %v4094, %v4085
      %v4365 = vpack.c.b16 %v4104, %v4095
      %v4366 = vpack.c.b16 %v4105, %v4096
      %v4367 = vpack.c.b16 %v4106, %v4097
      %v4368 = vpack.c.b16 %v4107, %v4098
      %v4369 = vpack.c.b16 %v4108, %v4099
      %v4370 = vpack.c.b16 %v4109, %v4100
      %v4371 = vpack.c.b16 %v4110, %v4101
      %v4372 = vpack.c.b16 %v4111, %v4102
      %v4373 = vpack.c.b16 %v4112, %v4103
      %v4374 = vpack.c.b16 %v4122, %v4113
      %v4375 = vpack.c.b16 %v4123, %v4114
      %v4376 = vpack.c.b16 %v4124, %v4115
      %v4377 = vpack.c.b16 %v4125, %v4116
      %v4378 = vpack.c.b16 %v4126, %v4117
      %v4379 = vpack.c.b16 %v4127, %v4118
      %v4380 = vpack.c.b16 %v4128, %v4119
      %v4381 = vpack.c.b16 %v4129, %v4120
      %v4382 = vpack.c.b16 %v4130, %v4121
      %v4383 = vpack.c.b16 %v4140, %v4131
      %v4384 = vpack.c.b16 %v4141, %v4132
      %v4385 = vpack.c.b16 %v4142, %v4133
      %v4386 = vpack.c.b16 %v4143, %v4134
      %v4387 = vpack.c.b16 %v4144, %v4135
      %v4388 = vpack.c.b16 %v4145, %v4136
      %v4389 = vpack.c.b16 %v4146, %v4137
      %v4390 = vpack.c.b16 %v4147, %v4138
      %v4391 = vpack.c.b16 %v4148, %v4139
      %v4392 = vpack.c.b16 %v4158, %v4149
      %v4393 = vpack.c.b16 %v4159, %v4150
      %v4394 = vpack.c.b16 %v4160, %v4151
      %v4395 = vpack.c.b16 %v4161, %v4152
      %v4396 = vpack.c.b16 %v4162, %v4153
      %v4397 = vpack.c.b16 %v4163, %v4154
      %v4398 = vpack.c.b16 %v4164, %v4155
      %v4399 = vpack.c.b16 %v4165, %v4156
      %v4400 = vpack.c.b16 %v4166, %v4157
      %v4401 = vpack.c.b16 %v4176, %v4167
      %v4402 = vpack.c.b16 %v4177, %v4168
      %v4403 = vpack.c.b16 %v4178, %v4169
      %v4404 = vpack.c.b16 %v4179, %v4170
      %v4405 = vpack.c.b16 %v4180, %v4171
      %v4406 = vpack.c.b16 %v4181, %v4172
      %v4407 = vpack.c.b16 %v4182, %v4173
      %v4408 = vpack.c.b16 %v4183, %v4174
      %v4409 = vpack.c.b16 %v4184, %v4175
      %v4410 = vpack.c.b16 %v4194, %v4185
      %v4411 = vpack.c.b16 %v4195, %v4186
      %v4412 = vpack.c.b16 %v4196, %v4187
      %v4413 = vpack.c.b16 %v4197, %v4188
      %v4414 = vpack.c.b16 %v4198, %v4189
      %v4415 = vpack.c.b16 %v4199, %v4190
      %v4416 = vpack.c.b16 %v4200, %v4191
      %v4417 = vpack.c.b16 %v4201, %v4192
      %v4418 = vpack.c.b16 %v4202, %v4193
      %v4419 = vpack.c.b16 %v4212, %v4203
      %v4420 = vpack.c.b16 %v4213, %v4204
      %v4421 = vpack.c.b16 %v4214, %v4205
      %v4422 = vpack.c.b16 %v4215, %v4206
      %v4423 = vpack.c.b16 %v4216, %v4207
      %v4424 = vpack.c.b16 %v4217, %v4208
      %v4425 = vpack.c.b16 %v4218, %v4209
      %v4426 = vpack.c.b16 %v4219, %v4210
      %v4427 = vpack.c.b16 %v4220, %v4211
      %v4428 = vpack.c.b16 %v4230, %v4221
      %v4429 = vpack.c.b16 %v4231, %v4222
      %v4430 = vpack.c.b16 %v4232, %v4223
      %v4431 = vpack.c.b16 %v4233, %v4224
      %v4432 = vpack.c.b16 %v4234, %v4225
      %v4433 = vpack.c.b16 %v4235, %v4226
      %v4434 = vpack.c.b16 %v4236, %v4227
      %v4435 = vpack.c.b16 %v4237, %v4228
      %v4436 = vpack.c.b16 %v4238, %v4229
      %v4437 = vpack.c.b16 %v4248, %v4239
      %v4438 = vpack.c.b16 %v4249, %v4240
      %v4439 = vpack.c.b16 %v4250, %v4241
      %v4440 = vpack.c.b16 %v4251, %v4242
      %v4441 = vpack.c.b16 %v4252, %v4243
      %v4442 = vpack.c.b16 %v4253, %v4244
      %v4443 = vpack.c.b16 %v4254, %v4245
      %v4444 = vpack.c.b16 %v4255, %v4246
      %v4445 = vpack.c.b16 %v4256, %v4247
      %v4446 = vpack.c.b16 %v4266, %v4257
      %v4447 = vpack.c.b16 %v4267, %v4258
      %v4448 = vpack.c.b16 %v4268, %v4259
      %v4449 = vpack.c.b16 %v4269, %v4260
      %v4450 = vpack.c.b16 %v4270, %v4261
      %v4451 = vpack.c.b16 %v4271, %v4262
      %v4452 = vpack.c.b16 %v4272, %v4263
      %v4453 = vpack.c.b16 %v4273, %v4264
      %v4454 = vpack.c.b16 %v4274, %v4265
      %v4455 = vpack.c.b16 %v4284, %v4275
      %v4456 = vpack.c.b16 %v4285, %v4276
      %v4457 = vpack.c.b16 %v4286, %v4277
      %v4458 = vpack.c.b16 %v4287, %v4278
      %v4459 = vpack.c.b16 %v4288, %v4279
      %v4460 = vpack.c.b16 %v4289, %v4280
      %v4461 = vpack.c.b16 %v4290, %v4281
      %v4462 = vpack.c.b16 %v4291, %v4282
      %v4463 = vpack.c.b16 %v4292, %v4283
      %v4464 = vpack.c.b16 %v4302, %v4293
      %v4465 = vpack.c.b16 %v4303, %v4294
      %v4466 = vpack.c.b16 %v4304, %v4295
      %v4467 = vpack.c.b16 %v4305, %v4296
      %v4468 = vpack.c.b16 %v4306, %v4297
      %v4469 = vpack.c.b16 %v4307, %v4298
      %v4470 = vpack.c.b16 %v4308, %v4299
      %v4471 = vpack.c.b16 %v4309, %v4300
      %v4472 = vpack.c.b16 %v4310, %v4301
      %v4473 = vpack.c.b16 %v4320, %v4311
      %v4474 = vpack.c.b16 %v4321, %v4312
      %v4475 = vpack.c.b16 %v4322, %v4313
      %v4476 = vpack.c.b16 %v4323, %v4314
      %v4477 = vpack.c.b16 %v4324, %v4315
      %v4478 = vpack.c.b16 %v4325, %v4316
      %v4479 = vpack.c.b16 %v4326, %v4317
      %v4480 = vpack.c.b16 %v4327, %v4318
      %v4481 = vpack.c.b16 %v4328, %v4319
      %v4482 = vpack.c.b16 %v4338, %v4329
      %v4483 = vpack.c.b16 %v4339, %v4330
      %v4484 = vpack.c.b16 %v4340, %v4331
      %v4485 = vpack.c.b16 %v4341, %v4332
      %v4486 = vpack.c.b16 %v4342, %v4333
      %v4487 = vpack.c.b16 %v4343, %v4334
      %v4488 = vpack.c.b16 %v4344, %v4335
      %v4489 = vpack.c.b16 %v4345, %v4336
      %v4490 = vpack.c.b16 %v4346, %v4337
      %v4779 = vunpack.c.l.b16 %v3755
      %v4780 = vunpack.c.l.b16 %v3756
      %v4781 = vunpack.c.l.b16 %v3757
      %v4782 = vunpack.c.l.b16 %v3758
      %v4783 = vunpack.c.l.b16 %v3759
      %v4784 = vunpack.c.l.b16 %v3760
      %v4785 = vunpack.c.l.b16 %v3761
      %v4786 = vunpack.c.l.b16 %v3762
      %v4787 = vunpack.c.l.b16 %v3763
      %v4788 = vunpack.c.l.b16 %v3764
      %v4789 = vunpack.c.l.b16 %v3765
      %v4790 = vunpack.c.l.b16 %v3766
      %v4791 = vunpack.c.l.b16 %v3767
      %v4792 = vunpack.c.l.b16 %v3768
      %v4793 = vunpack.c.l.b16 %v3769
      %v4794 = vunpack.c.l.b16 %v3770
      %v4795 = vunpack.c.l.b16 %v3771
      %v4796 = vunpack.c.l.b16 %v3772
      %v4797 = vunpack.c.l.b16 %v3773
      %v4798 = vunpack.c.l.b16 %v3774
      %v4799 = vunpack.c.l.b16 %v3775
      %v4800 = vunpack.c.l.b16 %v3776
      %v4801 = vunpack.c.l.b16 %v3777
      %v4802 = vunpack.c.l.b16 %v3778
      %v4803 = vunpack.c.l.b16 %v3779
      %v4804 = vunpack.c.l.b16 %v3780
      %v4805 = vunpack.c.l.b16 %v3781
      %v4806 = vunpack.c.l.b16 %v3782
      %v4807 = vunpack.c.l.b16 %v3783
      %v4808 = vunpack.c.l.b16 %v3784
      %v4809 = vunpack.c.l.b16 %v3785
      %v4810 = vunpack.c.l.b16 %v3786
      %v4811 = vunpack.c.l.b16 %v3787
      %v4812 = vunpack.c.l.b16 %v3788
      %v4813 = vunpack.c.l.b16 %v3789
      %v4814 = vunpack.c.l.b16 %v3790
      %v4815 = vunpack.c.l.b16 %v3791
      %v4816 = vunpack.c.l.b16 %v3792
      %v4817 = vunpack.c.l.b16 %v3793
      %v4818 = vunpack.c.l.b16 %v3794
      %v4819 = vunpack.c.l.b16 %v3795
      %v4820 = vunpack.c.l.b16 %v3796
      %v4821 = vunpack.c.l.b16 %v3797
      %v4822 = vunpack.c.l.b16 %v3798
      %v4823 = vunpack.c.l.b16 %v3799
      %v4824 = vunpack.c.l.b16 %v3800
      %v4825 = vunpack.c.l.b16 %v3801
      %v4826 = vunpack.c.l.b16 %v3802
      %v4827 = vunpack.c.l.b16 %v3803
      %v4828 = vunpack.c.l.b16 %v3804
      %v4829 = vunpack.c.l.b16 %v3805
      %v4830 = vunpack.c.l.b16 %v3806
      %v4831 = vunpack.c.l.b16 %v3807
      %v4832 = vunpack.c.l.b16 %v3808
      %v4833 = vunpack.c.l.b16 %v3809
      %v4834 = vunpack.c.l.b16 %v3810
      %v4835 = vunpack.c.l.b16 %v3811
      %v4836 = vunpack.c.l.b16 %v3812
      %v4837 = vunpack.c.l.b16 %v3813
      %v4838 = vunpack.c.l.b16 %v3814
      %v4839 = vunpack.c.l.b16 %v3815
      %v4840 = vunpack.c.l.b16 %v3816
      %v4841 = vunpack.c.l.b16 %v3817
      %v4842 = vunpack.c.l.b16 %v3818
      %v4843 = vunpack.c.l.b16 %v3819
      %v4844 = vunpack.c.l.b16 %v3820
      %v4845 = vunpack.c.l.b16 %v3821
      %v4846 = vunpack.c.l.b16 %v3822
      %v4847 = vunpack.c.l.b16 %v3823
      %v4848 = vunpack.c.l.b16 %v3824
      %v4849 = vunpack.c.l.b16 %v3825
      %v4850 = vunpack.c.l.b16 %v3826
      %v4851 = vunpack.c.l.b16 %v3827
      %v4852 = vunpack.c.l.b16 %v3828
      %v4853 = vunpack.c.l.b16 %v3829
      %v4854 = vunpack.c.l.b16 %v3830
      %v4855 = vunpack.c.l.b16 %v3831
      %v4856 = vunpack.c.l.b16 %v3832
      %v4857 = vunpack.c.l.b16 %v3833
      %v4858 = vunpack.c.l.b16 %v3834
      %v4859 = vunpack.c.l.b16 %v3835
      %v4860 = vunpack.c.l.b16 %v3836
      %v4861 = vunpack.c.l.b16 %v3837
      %v4862 = vunpack.c.l.b16 %v3838
      %v4863 = vunpack.c.l.b16 %v3839
      %v4864 = vunpack.c.l.b16 %v3840
      %v4865 = vunpack.c.l.b16 %v3841
      %v4866 = vunpack.c.l.b16 %v3842
      %v4867 = vunpack.c.l.b16 %v3843
      %v4868 = vunpack.c.l.b16 %v3844
      %v4869 = vunpack.c.l.b16 %v3845
      %v4870 = vunpack.c.l.b16 %v3846
      %v4871 = vunpack.c.l.b16 %v3847
      %v4872 = vunpack.c.l.b16 %v3848
      %v4873 = vunpack.c.l.b16 %v3849
      %v4874 = vunpack.c.l.b16 %v3850
      %v4875 = vunpack.c.l.b16 %v3851
      %v4876 = vunpack.c.l.b16 %v3852
      %v4877 = vunpack.c.l.b16 %v3853
      %v4878 = vunpack.c.l.b16 %v3854
      %v4879 = vunpack.c.l.b16 %v3855
      %v4880 = vunpack.c.l.b16 %v3856
      %v4881 = vunpack.c.l.b16 %v3857
      %v4882 = vunpack.c.l.b16 %v3858
      %v4883 = vunpack.c.l.b16 %v3859
      %v4884 = vunpack.c.l.b16 %v3860
      %v4885 = vunpack.c.l.b16 %v3861
      %v4886 = vunpack.c.l.b16 %v3862
      %v4887 = vunpack.c.l.b16 %v3863
      %v4888 = vunpack.c.l.b16 %v3864
      %v4889 = vunpack.c.l.b16 %v3865
      %v4890 = vunpack.c.l.b16 %v3866
      %v4891 = vunpack.c.l.b16 %v3867
      %v4892 = vunpack.c.l.b16 %v3868
      %v4893 = vunpack.c.l.b16 %v3869
      %v4894 = vunpack.c.l.b16 %v3870
      %v4895 = vunpack.c.l.b16 %v3871
      %v4896 = vunpack.c.l.b16 %v3872
      %v4897 = vunpack.c.l.b16 %v3873
      %v4898 = vunpack.c.l.b16 %v3874
      %v4899 = vunpack.c.l.b16 %v3875
      %v4900 = vunpack.c.l.b16 %v3876
      %v4901 = vunpack.c.l.b16 %v3877
      %v4902 = vunpack.c.l.b16 %v3878
      %v4903 = vunpack.c.l.b16 %v3879
      %v4904 = vunpack.c.l.b16 %v3880
      %v4905 = vunpack.c.l.b16 %v3881
      %v4906 = vunpack.c.l.b16 %v3882
      %v4907 = vunpack.c.l.b16 %v3883
      %v4908 = vunpack.c.l.b16 %v3884
      %v4909 = vunpack.c.l.b16 %v3885
      %v4910 = vunpack.c.l.b16 %v3886
      %v4911 = vunpack.c.l.b16 %v3887
      %v4912 = vunpack.c.l.b16 %v3888
      %v4913 = vunpack.c.l.b16 %v3889
      %v4914 = vunpack.c.l.b16 %v3890
      %v4915 = vunpack.c.l.b16 %v3891
      %v4916 = vunpack.c.l.b16 %v3892
      %v4917 = vunpack.c.l.b16 %v3893
      %v4918 = vunpack.c.l.b16 %v3894
      %v4919 = vunpack.c.l.b16 %v3895
      %v4920 = vunpack.c.l.b16 %v3896
      %v4921 = vunpack.c.l.b16 %v3897
      %v4922 = vunpack.c.l.b16 %v3898
      %v4923 = vpack.c.b16 %v4780, %v4779
      %v4924 = vpack.c.b16 %v4782, %v4781
      %v4925 = vpack.c.b16 %v4784, %v4783
      %v4926 = vpack.c.b16 %v4786, %v4785
      %v4927 = vpack.c.b16 %v4788, %v4787
      %v4928 = vpack.c.b16 %v4790, %v4789
      %v4929 = vpack.c.b16 %v4792, %v4791
      %v4930 = vpack.c.b16 %v4794, %v4793
      %v4931 = vpack.c.b16 %v4796, %v4795
      %v4932 = vpack.c.b16 %v4798, %v4797
      %v4933 = vpack.c.b16 %v4800, %v4799
      %v4934 = vpack.c.b16 %v4802, %v4801
      %v4935 = vpack.c.b16 %v4804, %v4803
      %v4936 = vpack.c.b16 %v4806, %v4805
      %v4937 = vpack.c.b16 %v4808, %v4807
      %v4938 = vpack.c.b16 %v4810, %v4809
      %v4939 = vpack.c.b16 %v4812, %v4811
      %v4940 = vpack.c.b16 %v4814, %v4813
      %v4941 = vpack.c.b16 %v4816, %v4815
      %v4942 = vpack.c.b16 %v4818, %v4817
      %v4943 = vpack.c.b16 %v4820, %v4819
      %v4944 = vpack.c.b16 %v4822, %v4821
      %v4945 = vpack.c.b16 %v4824, %v4823
      %v4946 = vpack.c.b16 %v4826, %v4825
      %v4947 = vpack.c.b16 %v4828, %v4827
      %v4948 = vpack.c.b16 %v4830, %v4829
      %v4949 = vpack.c.b16 %v4832, %v4831
      %v4950 = vpack.c.b16 %v4834, %v4833
      %v4951 = vpack.c.b16 %v4836, %v4835
      %v4952 = vpack.c.b16 %v4838, %v4837
      %v4953 = vpack.c.b16 %v4840, %v4839
      %v4954 = vpack.c.b16 %v4842, %v4841
      %v4955 = vpack.c.b16 %v4844, %v4843
      %v4956 = vpack.c.b16 %v4846, %v4845
      %v4957 = vpack.c.b16 %v4848, %v4847
      %v4958 = vpack.c.b16 %v4850, %v4849
      %v4959 = vpack.c.b16 %v4852, %v4851
      %v4960 = vpack.c.b16 %v4854, %v4853
      %v4961 = vpack.c.b16 %v4856, %v4855
      %v4962 = vpack.c.b16 %v4858, %v4857
      %v4963 = vpack.c.b16 %v4860, %v4859
      %v4964 = vpack.c.b16 %v4862, %v4861
      %v4965 = vpack.c.b16 %v4864, %v4863
      %v4966 = vpack.c.b16 %v4866, %v4865
      %v4967 = vpack.c.b16 %v4868, %v4867
      %v4968 = vpack.c.b16 %v4870, %v4869
      %v4969 = vpack.c.b16 %v4872, %v4871
      %v4970 = vpack.c.b16 %v4874, %v4873
      %v4971 = vpack.c.b16 %v4876, %v4875
      %v4972 = vpack.c.b16 %v4878, %v4877
      %v4973 = vpack.c.b16 %v4880, %v4879
      %v4974 = vpack.c.b16 %v4882, %v4881
      %v4975 = vpack.c.b16 %v4884, %v4883
      %v4976 = vpack.c.b16 %v4886, %v4885
      %v4977 = vpack.c.b16 %v4888, %v4887
      %v4978 = vpack.c.b16 %v4890, %v4889
      %v4979 = vpack.c.b16 %v4892, %v4891
      %v4980 = vpack.c.b16 %v4894, %v4893
      %v4981 = vpack.c.b16 %v4896, %v4895
      %v4982 = vpack.c.b16 %v4898, %v4897
      %v4983 = vpack.c.b16 %v4900, %v4899
      %v4984 = vpack.c.b16 %v4902, %v4901
      %v4985 = vpack.c.b16 %v4904, %v4903
      %v4986 = vpack.c.b16 %v4906, %v4905
      %v4987 = vpack.c.b16 %v4908, %v4907
      %v4988 = vpack.c.b16 %v4910, %v4909
      %v4989 = vpack.c.b16 %v4912, %v4911
      %v4990 = vpack.c.b16 %v4914, %v4913
      %v4991 = vpack.c.b16 %v4916, %v4915
      %v4992 = vpack.c.b16 %v4918, %v4917
      %v4993 = vpack.c.b16 %v4920, %v4919
      %v4994 = vpack.c.b16 %v4922, %v4921
      %5067 = vmatprep.subr.bf16.mxu0 0
      %5068 = vmatpush1.bf16.msra.mxu0 %v4930
      %5069 = vmatprep.subr.bf16.mxu0 0
      %5070 = vmatpush1.bf16.msra.mxu0 %v4929
      %5071 = vmatprep.subr.bf16.mxu0 0
      %5072 = vmatpush1.bf16.msra.mxu0 %v4928
      %5073 = vmatprep.subr.bf16.mxu0 0
      %5074 = vmatpush1.bf16.msra.mxu0 %v4927
      %5075 = vmatprep.subr.bf16.mxu0 0
      %5076 = vmatpush1.bf16.msra.mxu0 %v4926
      %5077 = vmatprep.subr.bf16.mxu0 0
      %5078 = vmatpush1.bf16.msra.mxu0 %v4925
      %5079 = vmatprep.subr.bf16.mxu0 0
      %5080 = vmatpush1.bf16.msra.mxu0 %v4924
      %5081 = vmatprep.subr.bf16.mxu0 0
      %5082 = vmatpush1.bf16.msra.mxu0 %v4923
      %5083 = vmatprep.subr.bf16.mxu0 0
      %5084 = vmatpush2.bf16.msra.mxu0 %v4938
      %5085 = vmatprep.subr.bf16.mxu0 0
      %5086 = vmatpush2.bf16.msra.mxu0 %v4937
      %5087 = vmatprep.subr.bf16.mxu0 0
      %5088 = vmatpush2.bf16.msra.mxu0 %v4936
      %5089 = vmatprep.subr.bf16.mxu0 0
      %5090 = vmatpush2.bf16.msra.mxu0 %v4935
      %5091 = vmatprep.subr.bf16.mxu0 0
      %5092 = vmatpush2.bf16.msra.mxu0 %v4934
      %5093 = vmatprep.subr.bf16.mxu0 0
      %5094 = vmatpush2.bf16.msra.mxu0 %v4933
      %5095 = vmatprep.subr.bf16.mxu0 0
      %5096 = vmatpush2.bf16.msra.mxu0 %v4932
      %5097 = vmatprep.subr.bf16.mxu0 0
      %5098 = vmatpush2.bf16.msra.mxu0 %v4931
      %5099 = vmatprep.mubr.bf16.mxu0 %v4348
      %5100 = vmatmul.mubr.bf16.gmra.mxu0 %v4347
      %v5101 = vpop.f32.mrf.mxu0
      %v5102 = vadd.f32 0.0, %v5101
      %v5103 = vpop.f32.mrf.mxu0
      %v5104 = vpop.f32.mrf.mxu0
      %v5105 = vadd.f32 0.0, %v5104
      %v5106 = vpop.f32.mrf.mxu0
      %5107 = vmatprep.mubr.bf16.mxu0 %v4357
      %5108 = vmatmul.mubr.bf16.gmra.mxu0 %v4356
      %v5109 = vpop.f32.mrf.mxu0
      %v5110 = vadd.f32 0.0, %v5109
      %v5111 = vpop.f32.mrf.mxu0
      %v5112 = vpop.f32.mrf.mxu0
      %v5113 = vadd.f32 0.0, %v5112
      %v5114 = vpop.f32.mrf.mxu0
      %5115 = vmatprep.mubr.bf16.mxu0 %v4366
      %5116 = vmatmul.mubr.bf16.gmra.mxu0 %v4365
      %v5117 = vpop.f32.mrf.mxu0
      %v5118 = vadd.f32 0.0, %v5117
      %v5119 = vpop.f32.mrf.mxu0
      %v5120 = vpop.f32.mrf.mxu0
      %v5121 = vadd.f32 0.0, %v5120
      %v5122 = vpop.f32.mrf.mxu0
      %5123 = vmatprep.mubr.bf16.mxu0 %v4375
      %5124 = vmatmul.mubr.bf16.gmra.mxu0 %v4374
      %v5125 = vpop.f32.mrf.mxu0
      %v5126 = vadd.f32 0.0, %v5125
      %v5127 = vpop.f32.mrf.mxu0
      %v5128 = vpop.f32.mrf.mxu0
      %v5129 = vadd.f32 0.0, %v5128
      %v5130 = vpop.f32.mrf.mxu0
      %5131 = vmatprep.mubr.bf16.mxu0 %v4384
      %5132 = vmatmul.mubr.bf16.gmra.mxu0 %v4383
      %v5133 = vpop.f32.mrf.mxu0
      %v5134 = vadd.f32 0.0, %v5133
      %v5135 = vpop.f32.mrf.mxu0
      %v5136 = vpop.f32.mrf.mxu0
      %v5137 = vadd.f32 0.0, %v5136
      %v5138 = vpop.f32.mrf.mxu0
      %5139 = vmatprep.mubr.bf16.mxu0 %v4393
      %5140 = vmatmul.mubr.bf16.gmra.mxu0 %v4392
      %v5141 = vpop.f32.mrf.mxu0
      %v5142 = vadd.f32 0.0, %v5141
      %v5143 = vpop.f32.mrf.mxu0
      %v5144 = vpop.f32.mrf.mxu0
      %v5145 = vadd.f32 0.0, %v5144
      %v5146 = vpop.f32.mrf.mxu0
      %5147 = vmatprep.mubr.bf16.mxu0 %v4402
      %5148 = vmatmul.mubr.bf16.gmra.mxu0 %v4401
      %v5149 = vpop.f32.mrf.mxu0
      %v5150 = vadd.f32 0.0, %v5149
      %v5151 = vpop.f32.mrf.mxu0
      %v5152 = vpop.f32.mrf.mxu0
      %v5153 = vadd.f32 0.0, %v5152
      %v5154 = vpop.f32.mrf.mxu0
      %5155 = vmatprep.mubr.bf16.mxu0 %v4411
      %5156 = vmatmul.mubr.bf16.gmra.mxu0 %v4410
      %v5157 = vpop.f32.mrf.mxu0
      %v5158 = vadd.f32 0.0, %v5157
      %v5159 = vpop.f32.mrf.mxu0
      %v5160 = vpop.f32.mrf.mxu0
      %v5161 = vadd.f32 0.0, %v5160
      %v5162 = vpop.f32.mrf.mxu0
      %5163 = vmatprep.mubr.bf16.mxu0 %v4420
      %5164 = vmatmul.mubr.bf16.gmra.mxu0 %v4419
      %v5165 = vpop.f32.mrf.mxu0
      %v5166 = vadd.f32 0.0, %v5165
      %v5167 = vpop.f32.mrf.mxu0
      %v5168 = vpop.f32.mrf.mxu0
      %v5169 = vadd.f32 0.0, %v5168
      %v5170 = vpop.f32.mrf.mxu0
      %5171 = vmatprep.mubr.bf16.mxu0 %v4429
      %5172 = vmatmul.mubr.bf16.gmra.mxu0 %v4428
      %v5173 = vpop.f32.mrf.mxu0
      %v5174 = vadd.f32 0.0, %v5173
      %v5175 = vpop.f32.mrf.mxu0
      %v5176 = vpop.f32.mrf.mxu0
      %v5177 = vadd.f32 0.0, %v5176
      %v5178 = vpop.f32.mrf.mxu0
      %5179 = vmatprep.mubr.bf16.mxu0 %v4438
      %5180 = vmatmul.mubr.bf16.gmra.mxu0 %v4437
      %v5181 = vpop.f32.mrf.mxu0
      %v5182 = vadd.f32 0.0, %v5181
      %v5183 = vpop.f32.mrf.mxu0
      %v5184 = vpop.f32.mrf.mxu0
      %v5185 = vadd.f32 0.0, %v5184
      %v5186 = vpop.f32.mrf.mxu0
      %5187 = vmatprep.mubr.bf16.mxu0 %v4447
      %5188 = vmatmul.mubr.bf16.gmra.mxu0 %v4446
      %v5189 = vpop.f32.mrf.mxu0
      %v5190 = vadd.f32 0.0, %v5189
      %v5191 = vpop.f32.mrf.mxu0
      %v5192 = vpop.f32.mrf.mxu0
      %v5193 = vadd.f32 0.0, %v5192
      %v5194 = vpop.f32.mrf.mxu0
      %5195 = vmatprep.mubr.bf16.mxu0 %v4456
      %5196 = vmatmul.mubr.bf16.gmra.mxu0 %v4455
      %v5197 = vpop.f32.mrf.mxu0
      %v5198 = vadd.f32 0.0, %v5197
      %v5199 = vpop.f32.mrf.mxu0
      %v5200 = vpop.f32.mrf.mxu0
      %v5201 = vadd.f32 0.0, %v5200
      %v5202 = vpop.f32.mrf.mxu0
      %5203 = vmatprep.mubr.bf16.mxu0 %v4465
      %5204 = vmatmul.mubr.bf16.gmra.mxu0 %v4464
      %v5205 = vpop.f32.mrf.mxu0
      %v5206 = vadd.f32 0.0, %v5205
      %v5207 = vpop.f32.mrf.mxu0
      %v5208 = vpop.f32.mrf.mxu0
      %v5209 = vadd.f32 0.0, %v5208
      %v5210 = vpop.f32.mrf.mxu0
      %5211 = vmatprep.mubr.bf16.mxu0 %v4474
      %5212 = vmatmul.mubr.bf16.gmra.mxu0 %v4473
      %v5213 = vpop.f32.mrf.mxu0
      %v5214 = vadd.f32 0.0, %v5213
      %v5215 = vpop.f32.mrf.mxu0
      %v5216 = vpop.f32.mrf.mxu0
      %v5217 = vadd.f32 0.0, %v5216
      %v5218 = vpop.f32.mrf.mxu0
      %5219 = vmatprep.mubr.bf16.mxu0 %v4483
      %5220 = vmatmul.mubr.bf16.gmra.mxu0 %v4482
      %v5221 = vpop.f32.mrf.mxu0
      %v5222 = vadd.f32 0.0, %v5221
      %v5223 = vpop.f32.mrf.mxu0
      %v5224 = vpop.f32.mrf.mxu0
      %v5225 = vadd.f32 0.0, %v5224
      %v5226 = vpop.f32.mrf.mxu0
      %5227 = vdwg.mxu0
      %5228 = vmatprep.subr.bf16.mxu0 0
      %5229 = vmatpush1.bf16.msra.mxu0 %v4946
      %5230 = vmatprep.subr.bf16.mxu0 0
      %5231 = vmatpush1.bf16.msra.mxu0 %v4945
      %5232 = vmatprep.subr.bf16.mxu0 0
      %5233 = vmatpush1.bf16.msra.mxu0 %v4944
      %5234 = vmatprep.subr.bf16.mxu0 0
      %5235 = vmatpush1.bf16.msra.mxu0 %v4943
      %5236 = vmatprep.subr.bf16.mxu0 0
      %5237 = vmatpush1.bf16.msra.mxu0 %v4942
      %5238 = vmatprep.subr.bf16.mxu0 0
      %5239 = vmatpush1.bf16.msra.mxu0 %v4941
      %5240 = vmatprep.subr.bf16.mxu0 0
      %5241 = vmatpush1.bf16.msra.mxu0 %v4940
      %5242 = vmatprep.subr.bf16.mxu0 0
      %5243 = vmatpush1.bf16.msra.mxu0 %v4939
      %5244 = vmatprep.subr.bf16.mxu0 0
      %5245 = vmatpush2.bf16.msra.mxu0 %v4954
      %5246 = vmatprep.subr.bf16.mxu0 0
      %5247 = vmatpush2.bf16.msra.mxu0 %v4953
      %5248 = vmatprep.subr.bf16.mxu0 0
      %5249 = vmatpush2.bf16.msra.mxu0 %v4952
      %5250 = vmatprep.subr.bf16.mxu0 0
      %5251 = vmatpush2.bf16.msra.mxu0 %v4951
      %5252 = vmatprep.subr.bf16.mxu0 0
      %5253 = vmatpush2.bf16.msra.mxu0 %v4950
      %5254 = vmatprep.subr.bf16.mxu0 0
      %5255 = vmatpush2.bf16.msra.mxu0 %v4949
      %5256 = vmatprep.subr.bf16.mxu0 0
      %5257 = vmatpush2.bf16.msra.mxu0 %v4948
      %5258 = vmatprep.subr.bf16.mxu0 0
      %5259 = vmatpush2.bf16.msra.mxu0 %v4947
      %5260 = vmatprep.mubr.bf16.mxu0 %v4350
      %5261 = vmatmul.mubr.bf16.gmra.mxu0 %v4349
      %v5262 = vpop.f32.mrf.mxu0
      %v5263 = vadd.f32 %v5102, %v5262
      %v5264 = vpop.f32.mrf.mxu0
      %v5265 = vpop.f32.mrf.mxu0
      %v5266 = vadd.f32 %v5105, %v5265
      %v5267 = vpop.f32.mrf.mxu0
      %5268 = vmatprep.mubr.bf16.mxu0 %v4359
      %5269 = vmatmul.mubr.bf16.gmra.mxu0 %v4358
      %v5270 = vpop.f32.mrf.mxu0
      %v5271 = vadd.f32 %v5110, %v5270
      %v5272 = vpop.f32.mrf.mxu0
      %v5273 = vpop.f32.mrf.mxu0
      %v5274 = vadd.f32 %v5113, %v5273
      %v5275 = vpop.f32.mrf.mxu0
      %5276 = vmatprep.mubr.bf16.mxu0 %v4368
      %5277 = vmatmul.mubr.bf16.gmra.mxu0 %v4367
      %v5278 = vpop.f32.mrf.mxu0
      %v5279 = vadd.f32 %v5118, %v5278
      %v5280 = vpop.f32.mrf.mxu0
      %v5281 = vpop.f32.mrf.mxu0
      %v5282 = vadd.f32 %v5121, %v5281
      %v5283 = vpop.f32.mrf.mxu0
      %5284 = vmatprep.mubr.bf16.mxu0 %v4377
      %5285 = vmatmul.mubr.bf16.gmra.mxu0 %v4376
      %v5286 = vpop.f32.mrf.mxu0
      %v5287 = vadd.f32 %v5126, %v5286
      %v5288 = vpop.f32.mrf.mxu0
      %v5289 = vpop.f32.mrf.mxu0
      %v5290 = vadd.f32 %v5129, %v5289
      %v5291 = vpop.f32.mrf.mxu0
      %5292 = vmatprep.mubr.bf16.mxu0 %v4386
      %5293 = vmatmul.mubr.bf16.gmra.mxu0 %v4385
      %v5294 = vpop.f32.mrf.mxu0
      %v5295 = vadd.f32 %v5134, %v5294
      %v5296 = vpop.f32.mrf.mxu0
      %v5297 = vpop.f32.mrf.mxu0
      %v5298 = vadd.f32 %v5137, %v5297
      %v5299 = vpop.f32.mrf.mxu0
      %5300 = vmatprep.mubr.bf16.mxu0 %v4395
      %5301 = vmatmul.mubr.bf16.gmra.mxu0 %v4394
      %v5302 = vpop.f32.mrf.mxu0
      %v5303 = vadd.f32 %v5142, %v5302
      %v5304 = vpop.f32.mrf.mxu0
      %v5305 = vpop.f32.mrf.mxu0
      %v5306 = vadd.f32 %v5145, %v5305
      %v5307 = vpop.f32.mrf.mxu0
      %5308 = vmatprep.mubr.bf16.mxu0 %v4404
      %5309 = vmatmul.mubr.bf16.gmra.mxu0 %v4403
      %v5310 = vpop.f32.mrf.mxu0
      %v5311 = vadd.f32 %v5150, %v5310
      %v5312 = vpop.f32.mrf.mxu0
      %v5313 = vpop.f32.mrf.mxu0
      %v5314 = vadd.f32 %v5153, %v5313
      %v5315 = vpop.f32.mrf.mxu0
      %5316 = vmatprep.mubr.bf16.mxu0 %v4413
      %5317 = vmatmul.mubr.bf16.gmra.mxu0 %v4412
      %v5318 = vpop.f32.mrf.mxu0
      %v5319 = vadd.f32 %v5158, %v5318
      %v5320 = vpop.f32.mrf.mxu0
      %v5321 = vpop.f32.mrf.mxu0
      %v5322 = vadd.f32 %v5161, %v5321
      %v5323 = vpop.f32.mrf.mxu0
      %5324 = vmatprep.mubr.bf16.mxu0 %v4422
      %5325 = vmatmul.mubr.bf16.gmra.mxu0 %v4421
      %v5326 = vpop.f32.mrf.mxu0
      %v5327 = vadd.f32 %v5166, %v5326
      %v5328 = vpop.f32.mrf.mxu0
      %v5329 = vpop.f32.mrf.mxu0
      %v5330 = vadd.f32 %v5169, %v5329
      %v5331 = vpop.f32.mrf.mxu0
      %5332 = vmatprep.mubr.bf16.mxu0 %v4431
      %5333 = vmatmul.mubr.bf16.gmra.mxu0 %v4430
      %v5334 = vpop.f32.mrf.mxu0
      %v5335 = vadd.f32 %v5174, %v5334
      %v5336 = vpop.f32.mrf.mxu0
      %v5337 = vpop.f32.mrf.mxu0
      %v5338 = vadd.f32 %v5177, %v5337
      %v5339 = vpop.f32.mrf.mxu0
      %5340 = vmatprep.mubr.bf16.mxu0 %v4440
      %5341 = vmatmul.mubr.bf16.gmra.mxu0 %v4439
      %v5342 = vpop.f32.mrf.mxu0
      %v5343 = vadd.f32 %v5182, %v5342
      %v5344 = vpop.f32.mrf.mxu0
      %v5345 = vpop.f32.mrf.mxu0
      %v5346 = vadd.f32 %v5185, %v5345
      %v5347 = vpop.f32.mrf.mxu0
      %5348 = vmatprep.mubr.bf16.mxu0 %v4449
      %5349 = vmatmul.mubr.bf16.gmra.mxu0 %v4448
      %v5350 = vpop.f32.mrf.mxu0
      %v5351 = vadd.f32 %v5190, %v5350
      %v5352 = vpop.f32.mrf.mxu0
      %v5353 = vpop.f32.mrf.mxu0
      %v5354 = vadd.f32 %v5193, %v5353
      %v5355 = vpop.f32.mrf.mxu0
      %5356 = vmatprep.mubr.bf16.mxu0 %v4458
      %5357 = vmatmul.mubr.bf16.gmra.mxu0 %v4457
      %v5358 = vpop.f32.mrf.mxu0
      %v5359 = vadd.f32 %v5198, %v5358
      %v5360 = vpop.f32.mrf.mxu0
      %v5361 = vpop.f32.mrf.mxu0
      %v5362 = vadd.f32 %v5201, %v5361
      %v5363 = vpop.f32.mrf.mxu0
      %5364 = vmatprep.mubr.bf16.mxu0 %v4467
      %5365 = vmatmul.mubr.bf16.gmra.mxu0 %v4466
      %v5366 = vpop.f32.mrf.mxu0
      %v5367 = vadd.f32 %v5206, %v5366
      %v5368 = vpop.f32.mrf.mxu0
      %v5369 = vpop.f32.mrf.mxu0
      %v5370 = vadd.f32 %v5209, %v5369
      %v5371 = vpop.f32.mrf.mxu0
      %5372 = vmatprep.mubr.bf16.mxu0 %v4476
      %5373 = vmatmul.mubr.bf16.gmra.mxu0 %v4475
      %v5374 = vpop.f32.mrf.mxu0
      %v5375 = vadd.f32 %v5214, %v5374
      %v5376 = vpop.f32.mrf.mxu0
      %v5377 = vpop.f32.mrf.mxu0
      %v5378 = vadd.f32 %v5217, %v5377
      %v5379 = vpop.f32.mrf.mxu0
      %5380 = vmatprep.mubr.bf16.mxu0 %v4485
      %5381 = vmatmul.mubr.bf16.gmra.mxu0 %v4484
      %v5382 = vpop.f32.mrf.mxu0
      %v5383 = vadd.f32 %v5222, %v5382
      %v5384 = vpop.f32.mrf.mxu0
      %v5385 = vpop.f32.mrf.mxu0
      %v5386 = vadd.f32 %v5225, %v5385
      %v5387 = vpop.f32.mrf.mxu0
      %5388 = vdwg.mxu0
      %5389 = vmatprep.subr.bf16.mxu0 0
      %5390 = vmatpush1.bf16.msra.mxu0 %v4962
      %5391 = vmatprep.subr.bf16.mxu0 0
      %5392 = vmatpush1.bf16.msra.mxu0 %v4961
      %5393 = vmatprep.subr.bf16.mxu0 0
      %5394 = vmatpush1.bf16.msra.mxu0 %v4960
      %5395 = vmatprep.subr.bf16.mxu0 0
      %5396 = vmatpush1.bf16.msra.mxu0 %v4959
      %5397 = vmatprep.subr.bf16.mxu0 0
      %5398 = vmatpush1.bf16.msra.mxu0 %v4958
      %5399 = vmatprep.subr.bf16.mxu0 0
      %5400 = vmatpush1.bf16.msra.mxu0 %v4957
      %5401 = vmatprep.subr.bf16.mxu0 0
      %5402 = vmatpush1.bf16.msra.mxu0 %v4956
      %5403 = vmatprep.subr.bf16.mxu0 0
      %5404 = vmatpush1.bf16.msra.mxu0 %v4955
      %5405 = vmatprep.subr.bf16.mxu0 0
      %5406 = vmatpush2.bf16.msra.mxu0 %v4970
      %5407 = vmatprep.subr.bf16.mxu0 0
      %5408 = vmatpush2.bf16.msra.mxu0 %v4969
      %5409 = vmatprep.subr.bf16.mxu0 0
      %5410 = vmatpush2.bf16.msra.mxu0 %v4968
      %5411 = vmatprep.subr.bf16.mxu0 0
      %5412 = vmatpush2.bf16.msra.mxu0 %v4967
      %5413 = vmatprep.subr.bf16.mxu0 0
      %5414 = vmatpush2.bf16.msra.mxu0 %v4966
      %5415 = vmatprep.subr.bf16.mxu0 0
      %5416 = vmatpush2.bf16.msra.mxu0 %v4965
      %5417 = vmatprep.subr.bf16.mxu0 0
      %5418 = vmatpush2.bf16.msra.mxu0 %v4964
      %5419 = vmatprep.subr.bf16.mxu0 0
      %5420 = vmatpush2.bf16.msra.mxu0 %v4963
      %5421 = vmatprep.mubr.bf16.mxu0 %v4352
      %5422 = vmatmul.mubr.bf16.gmra.mxu0 %v4351
      %v5423 = vpop.f32.mrf.mxu0
      %v5424 = vadd.f32 %v5263, %v5423
      %v5425 = vpop.f32.mrf.mxu0
      %v5426 = vpop.f32.mrf.mxu0
      %v5427 = vadd.f32 %v5266, %v5426
      %v5428 = vpop.f32.mrf.mxu0
      %5429 = vmatprep.mubr.bf16.mxu0 %v4361
      %5430 = vmatmul.mubr.bf16.gmra.mxu0 %v4360
      %v5431 = vpop.f32.mrf.mxu0
      %v5432 = vadd.f32 %v5271, %v5431
      %v5433 = vpop.f32.mrf.mxu0
      %v5434 = vpop.f32.mrf.mxu0
      %v5435 = vadd.f32 %v5274, %v5434
      %v5436 = vpop.f32.mrf.mxu0
      %5437 = vmatprep.mubr.bf16.mxu0 %v4370
      %5438 = vmatmul.mubr.bf16.gmra.mxu0 %v4369
      %v5439 = vpop.f32.mrf.mxu0
      %v5440 = vadd.f32 %v5279, %v5439
      %v5441 = vpop.f32.mrf.mxu0
      %v5442 = vpop.f32.mrf.mxu0
      %v5443 = vadd.f32 %v5282, %v5442
      %v5444 = vpop.f32.mrf.mxu0
      %5445 = vmatprep.mubr.bf16.mxu0 %v4379
      %5446 = vmatmul.mubr.bf16.gmra.mxu0 %v4378
      %v5447 = vpop.f32.mrf.mxu0
      %v5448 = vadd.f32 %v5287, %v5447
      %v5449 = vpop.f32.mrf.mxu0
      %v5450 = vpop.f32.mrf.mxu0
      %v5451 = vadd.f32 %v5290, %v5450
      %v5452 = vpop.f32.mrf.mxu0
      %5453 = vmatprep.mubr.bf16.mxu0 %v4388
      %5454 = vmatmul.mubr.bf16.gmra.mxu0 %v4387
      %v5455 = vpop.f32.mrf.mxu0
      %v5456 = vadd.f32 %v5295, %v5455
      %v5457 = vpop.f32.mrf.mxu0
      %v5458 = vpop.f32.mrf.mxu0
      %v5459 = vadd.f32 %v5298, %v5458
      %v5460 = vpop.f32.mrf.mxu0
      %5461 = vmatprep.mubr.bf16.mxu0 %v4397
      %5462 = vmatmul.mubr.bf16.gmra.mxu0 %v4396
      %v5463 = vpop.f32.mrf.mxu0
      %v5464 = vadd.f32 %v5303, %v5463
      %v5465 = vpop.f32.mrf.mxu0
      %v5466 = vpop.f32.mrf.mxu0
      %v5467 = vadd.f32 %v5306, %v5466
      %v5468 = vpop.f32.mrf.mxu0
      %5469 = vmatprep.mubr.bf16.mxu0 %v4406
      %5470 = vmatmul.mubr.bf16.gmra.mxu0 %v4405
      %v5471 = vpop.f32.mrf.mxu0
      %v5472 = vadd.f32 %v5311, %v5471
      %v5473 = vpop.f32.mrf.mxu0
      %v5474 = vpop.f32.mrf.mxu0
      %v5475 = vadd.f32 %v5314, %v5474
      %v5476 = vpop.f32.mrf.mxu0
      %5477 = vmatprep.mubr.bf16.mxu0 %v4415
      %5478 = vmatmul.mubr.bf16.gmra.mxu0 %v4414
      %v5479 = vpop.f32.mrf.mxu0
      %v5480 = vadd.f32 %v5319, %v5479
      %v5481 = vpop.f32.mrf.mxu0
      %v5482 = vpop.f32.mrf.mxu0
      %v5483 = vadd.f32 %v5322, %v5482
      %v5484 = vpop.f32.mrf.mxu0
      %5485 = vmatprep.mubr.bf16.mxu0 %v4424
      %5486 = vmatmul.mubr.bf16.gmra.mxu0 %v4423
      %v5487 = vpop.f32.mrf.mxu0
      %v5488 = vadd.f32 %v5327, %v5487
      %v5489 = vpop.f32.mrf.mxu0
      %v5490 = vpop.f32.mrf.mxu0
      %v5491 = vadd.f32 %v5330, %v5490
      %v5492 = vpop.f32.mrf.mxu0
      %5493 = vmatprep.mubr.bf16.mxu0 %v4433
      %5494 = vmatmul.mubr.bf16.gmra.mxu0 %v4432
      %v5495 = vpop.f32.mrf.mxu0
      %v5496 = vadd.f32 %v5335, %v5495
      %v5497 = vpop.f32.mrf.mxu0
      %v5498 = vpop.f32.mrf.mxu0
      %v5499 = vadd.f32 %v5338, %v5498
      %v5500 = vpop.f32.mrf.mxu0
      %5501 = vmatprep.mubr.bf16.mxu0 %v4442
      %5502 = vmatmul.mubr.bf16.gmra.mxu0 %v4441
      %v5503 = vpop.f32.mrf.mxu0
      %v5504 = vadd.f32 %v5343, %v5503
      %v5505 = vpop.f32.mrf.mxu0
      %v5506 = vpop.f32.mrf.mxu0
      %v5507 = vadd.f32 %v5346, %v5506
      %v5508 = vpop.f32.mrf.mxu0
      %5509 = vmatprep.mubr.bf16.mxu0 %v4451
      %5510 = vmatmul.mubr.bf16.gmra.mxu0 %v4450
      %v5511 = vpop.f32.mrf.mxu0
      %v5512 = vadd.f32 %v5351, %v5511
      %v5513 = vpop.f32.mrf.mxu0
      %v5514 = vpop.f32.mrf.mxu0
      %v5515 = vadd.f32 %v5354, %v5514
      %v5516 = vpop.f32.mrf.mxu0
      %5517 = vmatprep.mubr.bf16.mxu0 %v4460
      %5518 = vmatmul.mubr.bf16.gmra.mxu0 %v4459
      %v5519 = vpop.f32.mrf.mxu0
      %v5520 = vadd.f32 %v5359, %v5519
      %v5521 = vpop.f32.mrf.mxu0
      %v5522 = vpop.f32.mrf.mxu0
      %v5523 = vadd.f32 %v5362, %v5522
      %v5524 = vpop.f32.mrf.mxu0
      %5525 = vmatprep.mubr.bf16.mxu0 %v4469
      %5526 = vmatmul.mubr.bf16.gmra.mxu0 %v4468
      %v5527 = vpop.f32.mrf.mxu0
      %v5528 = vadd.f32 %v5367, %v5527
      %v5529 = vpop.f32.mrf.mxu0
      %v5530 = vpop.f32.mrf.mxu0
      %v5531 = vadd.f32 %v5370, %v5530
      %v5532 = vpop.f32.mrf.mxu0
      %5533 = vmatprep.mubr.bf16.mxu0 %v4478
      %5534 = vmatmul.mubr.bf16.gmra.mxu0 %v4477
      %v5535 = vpop.f32.mrf.mxu0
      %v5536 = vadd.f32 %v5375, %v5535
      %v5537 = vpop.f32.mrf.mxu0
      %v5538 = vpop.f32.mrf.mxu0
      %v5539 = vadd.f32 %v5378, %v5538
      %v5540 = vpop.f32.mrf.mxu0
      %5541 = vmatprep.mubr.bf16.mxu0 %v4487
      %5542 = vmatmul.mubr.bf16.gmra.mxu0 %v4486
      %v5543 = vpop.f32.mrf.mxu0
      %v5544 = vadd.f32 %v5383, %v5543
      %v5545 = vpop.f32.mrf.mxu0
      %v5546 = vpop.f32.mrf.mxu0
      %v5547 = vadd.f32 %v5386, %v5546
      %v5548 = vpop.f32.mrf.mxu0
      %5549 = vdwg.mxu0
      %5550 = vmatprep.subr.bf16.mxu0 0
      %5551 = vmatpush1.bf16.msra.mxu0 %v4978
      %5552 = vmatprep.subr.bf16.mxu0 0
      %5553 = vmatpush1.bf16.msra.mxu0 %v4977
      %5554 = vmatprep.subr.bf16.mxu0 0
      %5555 = vmatpush1.bf16.msra.mxu0 %v4976
      %5556 = vmatprep.subr.bf16.mxu0 0
      %5557 = vmatpush1.bf16.msra.mxu0 %v4975
      %5558 = vmatprep.subr.bf16.mxu0 0
      %5559 = vmatpush1.bf16.msra.mxu0 %v4974
      %5560 = vmatprep.subr.bf16.mxu0 0
      %5561 = vmatpush1.bf16.msra.mxu0 %v4973
      %5562 = vmatprep.subr.bf16.mxu0 0
      %5563 = vmatpush1.bf16.msra.mxu0 %v4972
      %5564 = vmatprep.subr.bf16.mxu0 0
      %5565 = vmatpush1.bf16.msra.mxu0 %v4971
      %5566 = vmatprep.subr.bf16.mxu0 0
      %5567 = vmatpush2.bf16.msra.mxu0 %v4986
      %5568 = vmatprep.subr.bf16.mxu0 0
      %5569 = vmatpush2.bf16.msra.mxu0 %v4985
      %5570 = vmatprep.subr.bf16.mxu0 0
      %5571 = vmatpush2.bf16.msra.mxu0 %v4984
      %5572 = vmatprep.subr.bf16.mxu0 0
      %5573 = vmatpush2.bf16.msra.mxu0 %v4983
      %5574 = vmatprep.subr.bf16.mxu0 0
      %5575 = vmatpush2.bf16.msra.mxu0 %v4982
      %5576 = vmatprep.subr.bf16.mxu0 0
      %5577 = vmatpush2.bf16.msra.mxu0 %v4981
      %5578 = vmatprep.subr.bf16.mxu0 0
      %5579 = vmatpush2.bf16.msra.mxu0 %v4980
      %5580 = vmatprep.subr.bf16.mxu0 0
      %5581 = vmatpush2.bf16.msra.mxu0 %v4979
      %5582 = vmatprep.mubr.bf16.mxu0 %v4354
      %5583 = vmatmul.mubr.bf16.gmra.mxu0 %v4353
      %v5584 = vpop.f32.mrf.mxu0
      %v5585 = vadd.f32 %v5424, %v5584
      %v5586 = vpop.f32.mrf.mxu0
      %v5587 = vpop.f32.mrf.mxu0
      %v5588 = vadd.f32 %v5427, %v5587
      %v5589 = vpop.f32.mrf.mxu0
      %5590 = vmatprep.mubr.bf16.mxu0 %v4363
      %5591 = vmatmul.mubr.bf16.gmra.mxu0 %v4362
      %v5592 = vpop.f32.mrf.mxu0
      %v5593 = vadd.f32 %v5432, %v5592
      %v5594 = vpop.f32.mrf.mxu0
      %v5595 = vpop.f32.mrf.mxu0
      %v5596 = vadd.f32 %v5435, %v5595
      %v5597 = vpop.f32.mrf.mxu0
      %5598 = vmatprep.mubr.bf16.mxu0 %v4372
      %5599 = vmatmul.mubr.bf16.gmra.mxu0 %v4371
      %v5600 = vpop.f32.mrf.mxu0
      %v5601 = vadd.f32 %v5440, %v5600
      %v5602 = vpop.f32.mrf.mxu0
      %v5603 = vpop.f32.mrf.mxu0
      %v5604 = vadd.f32 %v5443, %v5603
      %v5605 = vpop.f32.mrf.mxu0
      %5606 = vmatprep.mubr.bf16.mxu0 %v4381
      %5607 = vmatmul.mubr.bf16.gmra.mxu0 %v4380
      %v5608 = vpop.f32.mrf.mxu0
      %v5609 = vadd.f32 %v5448, %v5608
      %v5610 = vpop.f32.mrf.mxu0
      %v5611 = vpop.f32.mrf.mxu0
      %v5612 = vadd.f32 %v5451, %v5611
      %v5613 = vpop.f32.mrf.mxu0
      %5614 = vmatprep.mubr.bf16.mxu0 %v4390
      %5615 = vmatmul.mubr.bf16.gmra.mxu0 %v4389
      %v5616 = vpop.f32.mrf.mxu0
      %v5617 = vadd.f32 %v5456, %v5616
      %v5618 = vpop.f32.mrf.mxu0
      %v5619 = vpop.f32.mrf.mxu0
      %v5620 = vadd.f32 %v5459, %v5619
      %v5621 = vpop.f32.mrf.mxu0
      %5622 = vmatprep.mubr.bf16.mxu0 %v4399
      %5623 = vmatmul.mubr.bf16.gmra.mxu0 %v4398
      %v5624 = vpop.f32.mrf.mxu0
      %v5625 = vadd.f32 %v5464, %v5624
      %v5626 = vpop.f32.mrf.mxu0
      %v5627 = vpop.f32.mrf.mxu0
      %v5628 = vadd.f32 %v5467, %v5627
      %v5629 = vpop.f32.mrf.mxu0
      %5630 = vmatprep.mubr.bf16.mxu0 %v4408
      %5631 = vmatmul.mubr.bf16.gmra.mxu0 %v4407
      %v5632 = vpop.f32.mrf.mxu0
      %v5633 = vadd.f32 %v5472, %v5632
      %v5634 = vpop.f32.mrf.mxu0
      %v5635 = vpop.f32.mrf.mxu0
      %v5636 = vadd.f32 %v5475, %v5635
      %v5637 = vpop.f32.mrf.mxu0
      %5638 = vmatprep.mubr.bf16.mxu0 %v4417
      %5639 = vmatmul.mubr.bf16.gmra.mxu0 %v4416
      %v5640 = vpop.f32.mrf.mxu0
      %v5641 = vadd.f32 %v5480, %v5640
      %v5642 = vpop.f32.mrf.mxu0
      %v5643 = vpop.f32.mrf.mxu0
      %v5644 = vadd.f32 %v5483, %v5643
      %v5645 = vpop.f32.mrf.mxu0
      %5646 = vmatprep.mubr.bf16.mxu0 %v4426
      %5647 = vmatmul.mubr.bf16.gmra.mxu0 %v4425
      %v5648 = vpop.f32.mrf.mxu0
      %v5649 = vadd.f32 %v5488, %v5648
      %v5650 = vpop.f32.mrf.mxu0
      %v5651 = vpop.f32.mrf.mxu0
      %v5652 = vadd.f32 %v5491, %v5651
      %v5653 = vpop.f32.mrf.mxu0
      %5654 = vmatprep.mubr.bf16.mxu0 %v4435
      %5655 = vmatmul.mubr.bf16.gmra.mxu0 %v4434
      %v5656 = vpop.f32.mrf.mxu0
      %v5657 = vadd.f32 %v5496, %v5656
      %v5658 = vpop.f32.mrf.mxu0
      %v5659 = vpop.f32.mrf.mxu0
      %v5660 = vadd.f32 %v5499, %v5659
      %v5661 = vpop.f32.mrf.mxu0
      %5662 = vmatprep.mubr.bf16.mxu0 %v4444
      %5663 = vmatmul.mubr.bf16.gmra.mxu0 %v4443
      %v5664 = vpop.f32.mrf.mxu0
      %v5665 = vadd.f32 %v5504, %v5664
      %v5666 = vpop.f32.mrf.mxu0
      %v5667 = vpop.f32.mrf.mxu0
      %v5668 = vadd.f32 %v5507, %v5667
      %v5669 = vpop.f32.mrf.mxu0
      %5670 = vmatprep.mubr.bf16.mxu0 %v4453
      %5671 = vmatmul.mubr.bf16.gmra.mxu0 %v4452
      %v5672 = vpop.f32.mrf.mxu0
      %v5673 = vadd.f32 %v5512, %v5672
      %v5674 = vpop.f32.mrf.mxu0
      %v5675 = vpop.f32.mrf.mxu0
      %v5676 = vadd.f32 %v5515, %v5675
      %v5677 = vpop.f32.mrf.mxu0
      %5678 = vmatprep.mubr.bf16.mxu0 %v4462
      %5679 = vmatmul.mubr.bf16.gmra.mxu0 %v4461
      %v5680 = vpop.f32.mrf.mxu0
      %v5681 = vadd.f32 %v5520, %v5680
      %v5682 = vpop.f32.mrf.mxu0
      %v5683 = vpop.f32.mrf.mxu0
      %v5684 = vadd.f32 %v5523, %v5683
      %v5685 = vpop.f32.mrf.mxu0
      %5686 = vmatprep.mubr.bf16.mxu0 %v4471
      %5687 = vmatmul.mubr.bf16.gmra.mxu0 %v4470
      %v5688 = vpop.f32.mrf.mxu0
      %v5689 = vadd.f32 %v5528, %v5688
      %v5690 = vpop.f32.mrf.mxu0
      %v5691 = vpop.f32.mrf.mxu0
      %v5692 = vadd.f32 %v5531, %v5691
      %v5693 = vpop.f32.mrf.mxu0
      %5694 = vmatprep.mubr.bf16.mxu0 %v4480
      %5695 = vmatmul.mubr.bf16.gmra.mxu0 %v4479
      %v5696 = vpop.f32.mrf.mxu0
      %v5697 = vadd.f32 %v5536, %v5696
      %v5698 = vpop.f32.mrf.mxu0
      %v5699 = vpop.f32.mrf.mxu0
      %v5700 = vadd.f32 %v5539, %v5699
      %v5701 = vpop.f32.mrf.mxu0
      %5702 = vmatprep.mubr.bf16.mxu0 %v4489
      %5703 = vmatmul.mubr.bf16.gmra.mxu0 %v4488
      %v5704 = vpop.f32.mrf.mxu0
      %v5705 = vadd.f32 %v5544, %v5704
      %v5706 = vpop.f32.mrf.mxu0
      %v5707 = vpop.f32.mrf.mxu0
      %v5708 = vadd.f32 %v5547, %v5707
      %v5709 = vpop.f32.mrf.mxu0
      %5710 = vdwg.mxu0
      %5711 = vmatprep.subr.bf16.mxu0 0
      %5712 = vmatpush1.bf16.msra.mxu0 %v4994
      %5713 = vmatprep.subr.bf16.mxu0 0
      %5714 = vmatpush1.bf16.msra.mxu0 %v4993
      %5715 = vmatprep.subr.bf16.mxu0 0
      %5716 = vmatpush1.bf16.msra.mxu0 %v4992
      %5717 = vmatprep.subr.bf16.mxu0 0
      %5718 = vmatpush1.bf16.msra.mxu0 %v4991
      %5719 = vmatprep.subr.bf16.mxu0 0
      %5720 = vmatpush1.bf16.msra.mxu0 %v4990
      %5721 = vmatprep.subr.bf16.mxu0 0
      %5722 = vmatpush1.bf16.msra.mxu0 %v4989
      %5723 = vmatprep.subr.bf16.mxu0 0
      %5724 = vmatpush1.bf16.msra.mxu0 %v4988
      %5725 = vmatprep.subr.bf16.mxu0 0
      %5726 = vmatpush1.bf16.msra.mxu0 %v4987
      %5727 = vmatprep.subr.bf16.mxu0 0
      %5728 = vmatpush2.bf16.msra.mxu0 0
      %5729 = vmatprep.subr.bf16.mxu0 0
      %5730 = vmatpush2.bf16.msra.mxu0 0
      %5731 = vmatprep.subr.bf16.mxu0 0
      %5732 = vmatpush2.bf16.msra.mxu0 0
      %5733 = vmatprep.subr.bf16.mxu0 0
      %5734 = vmatpush2.bf16.msra.mxu0 0
      %5735 = vmatprep.subr.bf16.mxu0 0
      %5736 = vmatpush2.bf16.msra.mxu0 0
      %5737 = vmatprep.subr.bf16.mxu0 0
      %5738 = vmatpush2.bf16.msra.mxu0 0
      %5739 = vmatprep.subr.bf16.mxu0 0
      %5740 = vmatpush2.bf16.msra.mxu0 0
      %5741 = vmatprep.subr.bf16.mxu0 0
      %5742 = vmatpush2.bf16.msra.mxu0 0
      %5743 = vmatprep.mubr.bf16.mxu0 0
      %5744 = vmatmul.mubr.bf16.gmra.mxu0 %v4355
      %v5745 = vpop.f32.mrf.mxu0
      %v5746 = vadd.f32 %v5585, %v5745
      %v5747 = vpop.f32.mrf.mxu0
      %v5748 = vpop.f32.mrf.mxu0
      %v5749 = vadd.f32 %v5588, %v5748
      %v5750 = vpop.f32.mrf.mxu0
      %5751 = vmatprep.mubr.bf16.mxu0 0
      %5752 = vmatmul.mubr.bf16.gmra.mxu0 %v4364
      %v5753 = vpop.f32.mrf.mxu0
      %v5754 = vadd.f32 %v5593, %v5753
      %v5755 = vpop.f32.mrf.mxu0
      %v5756 = vpop.f32.mrf.mxu0
      %v5757 = vadd.f32 %v5596, %v5756
      %v5758 = vpop.f32.mrf.mxu0
      %5759 = vmatprep.mubr.bf16.mxu0 0
      %5760 = vmatmul.mubr.bf16.gmra.mxu0 %v4373
      %v5761 = vpop.f32.mrf.mxu0
      %v5762 = vadd.f32 %v5601, %v5761
      %v5763 = vpop.f32.mrf.mxu0
      %v5764 = vpop.f32.mrf.mxu0
      %v5765 = vadd.f32 %v5604, %v5764
      %v5766 = vpop.f32.mrf.mxu0
      %5767 = vmatprep.mubr.bf16.mxu0 0
      %5768 = vmatmul.mubr.bf16.gmra.mxu0 %v4382
      %v5769 = vpop.f32.mrf.mxu0
      %v5770 = vadd.f32 %v5609, %v5769
      %v5771 = vpop.f32.mrf.mxu0
      %v5772 = vpop.f32.mrf.mxu0
      %v5773 = vadd.f32 %v5612, %v5772
      %v5774 = vpop.f32.mrf.mxu0
      %5775 = vmatprep.mubr.bf16.mxu0 0
      %5776 = vmatmul.mubr.bf16.gmra.mxu0 %v4391
      %v5777 = vpop.f32.mrf.mxu0
      %v5778 = vadd.f32 %v5617, %v5777
      %v5779 = vpop.f32.mrf.mxu0
      %v5780 = vpop.f32.mrf.mxu0
      %v5781 = vadd.f32 %v5620, %v5780
      %v5782 = vpop.f32.mrf.mxu0
      %5783 = vmatprep.mubr.bf16.mxu0 0
      %5784 = vmatmul.mubr.bf16.gmra.mxu0 %v4400
      %v5785 = vpop.f32.mrf.mxu0
      %v5786 = vadd.f32 %v5625, %v5785
      %v5787 = vpop.f32.mrf.mxu0
      %v5788 = vpop.f32.mrf.mxu0
      %v5789 = vadd.f32 %v5628, %v5788
      %v5790 = vpop.f32.mrf.mxu0
      %5791 = vmatprep.mubr.bf16.mxu0 0
      %5792 = vmatmul.mubr.bf16.gmra.mxu0 %v4409
      %v5793 = vpop.f32.mrf.mxu0
      %v5794 = vadd.f32 %v5633, %v5793
      %v5795 = vpop.f32.mrf.mxu0
      %v5796 = vpop.f32.mrf.mxu0
      %v5797 = vadd.f32 %v5636, %v5796
      %v5798 = vpop.f32.mrf.mxu0
      %5799 = vmatprep.mubr.bf16.mxu0 0
      %5800 = vmatmul.mubr.bf16.gmra.mxu0 %v4418
      %v5801 = vpop.f32.mrf.mxu0
      %v5802 = vadd.f32 %v5641, %v5801
      %v5803 = vpop.f32.mrf.mxu0
      %v5804 = vpop.f32.mrf.mxu0
      %v5805 = vadd.f32 %v5644, %v5804
      %v5806 = vpop.f32.mrf.mxu0
      %5807 = vmatprep.mubr.bf16.mxu0 0
      %5808 = vmatmul.mubr.bf16.gmra.mxu0 %v4427
      %v5809 = vpop.f32.mrf.mxu0
      %v5810 = vadd.f32 %v5649, %v5809
      %v5811 = vpop.f32.mrf.mxu0
      %v5812 = vpop.f32.mrf.mxu0
      %v5813 = vadd.f32 %v5652, %v5812
      %v5814 = vpop.f32.mrf.mxu0
      %5815 = vmatprep.mubr.bf16.mxu0 0
      %5816 = vmatmul.mubr.bf16.gmra.mxu0 %v4436
      %v5817 = vpop.f32.mrf.mxu0
      %v5818 = vadd.f32 %v5657, %v5817
      %v5819 = vpop.f32.mrf.mxu0
      %v5820 = vpop.f32.mrf.mxu0
      %v5821 = vadd.f32 %v5660, %v5820
      %v5822 = vpop.f32.mrf.mxu0
      %5823 = vmatprep.mubr.bf16.mxu0 0
      %5824 = vmatmul.mubr.bf16.gmra.mxu0 %v4445
      %v5825 = vpop.f32.mrf.mxu0
      %v5826 = vadd.f32 %v5665, %v5825
      %v5827 = vpop.f32.mrf.mxu0
      %v5828 = vpop.f32.mrf.mxu0
      %v5829 = vadd.f32 %v5668, %v5828
      %v5830 = vpop.f32.mrf.mxu0
      %5831 = vmatprep.mubr.bf16.mxu0 0
      %5832 = vmatmul.mubr.bf16.gmra.mxu0 %v4454
      %v5833 = vpop.f32.mrf.mxu0
      %v5834 = vadd.f32 %v5673, %v5833
      %v5835 = vpop.f32.mrf.mxu0
      %v5836 = vpop.f32.mrf.mxu0
      %v5837 = vadd.f32 %v5676, %v5836
      %v5838 = vpop.f32.mrf.mxu0
      %5839 = vmatprep.mubr.bf16.mxu0 0
      %5840 = vmatmul.mubr.bf16.gmra.mxu0 %v4463
      %v5841 = vpop.f32.mrf.mxu0
      %v5842 = vadd.f32 %v5681, %v5841
      %v5843 = vpop.f32.mrf.mxu0
      %v5844 = vpop.f32.mrf.mxu0
      %v5845 = vadd.f32 %v5684, %v5844
      %v5846 = vpop.f32.mrf.mxu0
      %5847 = vmatprep.mubr.bf16.mxu0 0
      %5848 = vmatmul.mubr.bf16.gmra.mxu0 %v4472
      %v5849 = vpop.f32.mrf.mxu0
      %v5850 = vadd.f32 %v5689, %v5849
      %v5851 = vpop.f32.mrf.mxu0
      %v5852 = vpop.f32.mrf.mxu0
      %v5853 = vadd.f32 %v5692, %v5852
      %v5854 = vpop.f32.mrf.mxu0
      %5855 = vmatprep.mubr.bf16.mxu0 0
      %5856 = vmatmul.mubr.bf16.gmra.mxu0 %v4481
      %v5857 = vpop.f32.mrf.mxu0
      %v5858 = vadd.f32 %v5697, %v5857
      %v5859 = vpop.f32.mrf.mxu0
      %v5860 = vpop.f32.mrf.mxu0
      %v5861 = vadd.f32 %v5700, %v5860
      %v5862 = vpop.f32.mrf.mxu0
      %5863 = vmatprep.mubr.bf16.mxu0 0
      %5864 = vmatmul.mubr.bf16.gmra.mxu0 %v4490
      %v5865 = vpop.f32.mrf.mxu0
      %v5866 = vadd.f32 %v5705, %v5865
      %v5867 = vpop.f32.mrf.mxu0
      %v5868 = vpop.f32.mrf.mxu0
      %v5869 = vadd.f32 %v5708, %v5868
      %v5870 = vpop.f32.mrf.mxu0
      %5871 = vdwg.mxu0
      %v5872 = vpack.c.bf16 %v5749, %v5746
      %v5873 = vpack.c.bf16 %v5757, %v5754
      %v5874 = vpack.c.bf16 %v5765, %v5762
      %v5875 = vpack.c.bf16 %v5773, %v5770
      %v5876 = vpack.c.bf16 %v5781, %v5778
      %v5877 = vpack.c.bf16 %v5789, %v5786
      %v5878 = vpack.c.bf16 %v5797, %v5794
      %v5879 = vpack.c.bf16 %v5805, %v5802
      %v5880 = vpack.c.bf16 %v5813, %v5810
      %v5881 = vpack.c.bf16 %v5821, %v5818
      %v5882 = vpack.c.bf16 %v5829, %v5826
      %v5883 = vpack.c.bf16 %v5837, %v5834
      %v5884 = vpack.c.bf16 %v5845, %v5842
      %v5885 = vpack.c.bf16 %v5853, %v5850
      %v5886 = vpack.c.bf16 %v5861, %v5858
      %v5887 = vpack.c.bf16 %v5869, %v5866
      %v5904 = vunpack.c.l.b16 %v5872
      %v5905 = vunpack.c.h.b16 %v5872
      %v5906 = vunpack.c.l.b16 %v5873
      %v5907 = vunpack.c.h.b16 %v5873
      %v5908 = vunpack.c.l.b16 %v5874
      %v5909 = vunpack.c.h.b16 %v5874
      %v5910 = vunpack.c.l.b16 %v5875
      %v5911 = vunpack.c.h.b16 %v5875
      %v5912 = vunpack.c.l.b16 %v5876
      %v5913 = vunpack.c.h.b16 %v5876
      %v5914 = vunpack.c.l.b16 %v5877
      %v5915 = vunpack.c.h.b16 %v5877
      %v5916 = vunpack.c.l.b16 %v5878
      %v5917 = vunpack.c.h.b16 %v5878
      %v5918 = vunpack.c.l.b16 %v5879
      %v5919 = vunpack.c.h.b16 %v5879
      %v5920 = vunpack.c.l.b16 %v5880
      %v5921 = vunpack.c.h.b16 %v5880
      %v5922 = vunpack.c.l.b16 %v5881
      %v5923 = vunpack.c.h.b16 %v5881
      %v5924 = vunpack.c.l.b16 %v5882
      %v5925 = vunpack.c.h.b16 %v5882
      %v5926 = vunpack.c.l.b16 %v5883
      %v5927 = vunpack.c.h.b16 %v5883
      %v5928 = vunpack.c.l.b16 %v5884
      %v5929 = vunpack.c.h.b16 %v5884
      %v5930 = vunpack.c.l.b16 %v5885
      %v5931 = vunpack.c.h.b16 %v5885
      %v5932 = vunpack.c.l.b16 %v5886
      %v5933 = vunpack.c.h.b16 %v5886
      %v5934 = vunpack.c.l.b16 %v5887
      %v5935 = vunpack.c.h.b16 %v5887
      %v5936 = vpack.c.b16 %v5904, %v5904
      %v5937 = vpack.c.b16 %v5905, %v5905
      %v5938 = vpack.c.b16 %v5906, %v5906
      %v5939 = vpack.c.b16 %v5907, %v5907
      %v5940 = vpack.c.b16 %v5908, %v5908
      %v5941 = vpack.c.b16 %v5909, %v5909
      %v5942 = vpack.c.b16 %v5910, %v5910
      %v5943 = vpack.c.b16 %v5911, %v5911
      %v5944 = vpack.c.b16 %v5912, %v5912
      %v5945 = vpack.c.b16 %v5913, %v5913
      %v5946 = vpack.c.b16 %v5914, %v5914
      %v5947 = vpack.c.b16 %v5915, %v5915
      %v5948 = vpack.c.b16 %v5916, %v5916
      %v5949 = vpack.c.b16 %v5917, %v5917
      %v5950 = vpack.c.b16 %v5918, %v5918
      %v5951 = vpack.c.b16 %v5919, %v5919
      %v5952 = vpack.c.b16 %v5920, %v5920
      %v5953 = vpack.c.b16 %v5921, %v5921
      %v5954 = vpack.c.b16 %v5922, %v5922
      %v5955 = vpack.c.b16 %v5923, %v5923
      %v5956 = vpack.c.b16 %v5924, %v5924
      %v5957 = vpack.c.b16 %v5925, %v5925
      %v5958 = vpack.c.b16 %v5926, %v5926
      %v5959 = vpack.c.b16 %v5927, %v5927
      %v5960 = vpack.c.b16 %v5928, %v5928
      %v5961 = vpack.c.b16 %v5929, %v5929
      %v5962 = vpack.c.b16 %v5930, %v5930
      %v5963 = vpack.c.b16 %v5931, %v5931
      %v5964 = vpack.c.b16 %v5932, %v5932
      %v5965 = vpack.c.b16 %v5933, %v5933
      %v5966 = vpack.c.b16 %v5934, %v5934
      %v5967 = vpack.c.b16 %v5935, %v5935
      %6000 = vst [vmem:[%s309] sm:$0xf] %v5936
      %6001 = vst [vmem:[%s309 + $0x4] sm:$0xf] %v5937
      %6002 = vst [vmem:[%s309 + $0x8] sm:$0xf] %v5938
      %6003 = vst [vmem:[%s309 + $0xc] sm:$0xf] %v5939
      %6004 = vst [vmem:[%s309 + $0x10] sm:$0xf] %v5940
      %6005 = vst [vmem:[%s309 + $0x14] sm:$0xf] %v5941
      %6006 = vst [vmem:[%s309 + $0x18] sm:$0xf] %v5942
      %6007 = vst [vmem:[%s309 + $0x1c] sm:$0xf] %v5943
      %6008 = vst [vmem:[%s309 + $0x20] sm:$0xf] %v5944
      %6009 = vst [vmem:[%s309 + $0x24] sm:$0xf] %v5945
      %6010 = vst [vmem:[%s309 + $0x28] sm:$0xf] %v5946
      %6011 = vst [vmem:[%s309 + $0x2c] sm:$0xf] %v5947
      %6012 = vst [vmem:[%s309 + $0x30] sm:$0xf] %v5948
      %6013 = vst [vmem:[%s309 + $0x34] sm:$0xf] %v5949
      %6014 = vst [vmem:[%s309 + $0x38] sm:$0xf] %v5950
      %6015 = vst [vmem:[%s309 + $0x3c] sm:$0xf] %v5951
      %6016 = vst [vmem:[%s309 + $0x40] sm:$0xf] %v5952
      %6017 = vst [vmem:[%s309 + $0x44] sm:$0xf] %v5953
      %6018 = vst [vmem:[%s309 + $0x48] sm:$0xf] %v5954
      %6019 = vst [vmem:[%s309 + $0x4c] sm:$0xf] %v5955
      %6020 = vst [vmem:[%s309 + $0x50] sm:$0xf] %v5956
      %6021 = vst [vmem:[%s309 + $0x54] sm:$0xf] %v5957
      %6022 = vst [vmem:[%s309 + $0x58] sm:$0xf] %v5958
      %6023 = vst [vmem:[%s309 + $0x5c] sm:$0xf] %v5959
      %6024 = vst [vmem:[%s309 + $0x60] sm:$0xf] %v5960
      %6025 = vst [vmem:[%s309 + $0x64] sm:$0xf] %v5961
      %6026 = vst [vmem:[%s309 + $0x68] sm:$0xf] %v5962
      %6027 = vst [vmem:[%s309 + $0x6c] sm:$0xf] %v5963
      %6028 = vst [vmem:[%s309 + $0x70] sm:$0xf] %v5964
      %6029 = vst [vmem:[%s309 + $0x74] sm:$0xf] %v5965
      %6030 = vst [vmem:[%s309 + $0x78] sm:$0xf] %v5966
      %6031 = vst [vmem:[%s309 + $0x7c] sm:$0xf] %v5967
      %v6032 = vadd.f32 %v5746, %v5749
      %v6033 = vadd.f32 %v6032, %v5754
      %v6034 = vadd.f32 %v6033, %v5757
      %v6035 = vadd.f32 %v6034, %v5762
      %v6036 = vadd.f32 %v6035, %v5765
      %v6037 = vadd.f32 %v6036, %v5770
      %v6038 = vadd.f32 %v6037, %v5773
      %v6039 = vadd.f32 %v6038, %v5778
      %v6040 = vadd.f32 %v6039, %v5781
      %v6041 = vadd.f32 %v6040, %v5786
      %v6042 = vadd.f32 %v6041, %v5789
      %v6043 = vadd.f32 %v6042, %v5794
      %v6044 = vadd.f32 %v6043, %v5797
      %v6045 = vadd.f32 %v6044, %v5802
      %v6046 = vadd.f32 %v6045, %v5805
      %v6047 = vadd.f32 %v6046, %v5810
      %v6048 = vadd.f32 %v6047, %v5813
      %v6049 = vadd.f32 %v6048, %v5818
      %v6050 = vadd.f32 %v6049, %v5821
      %v6051 = vadd.f32 %v6050, %v5826
      %v6052 = vadd.f32 %v6051, %v5829
      %v6053 = vadd.f32 %v6052, %v5834
      %v6054 = vadd.f32 %v6053, %v5837
      %v6055 = vadd.f32 %v6054, %v5842
      %v6056 = vadd.f32 %v6055, %v5845
      %v6057 = vadd.f32 %v6056, %v5850
      %v6058 = vadd.f32 %v6057, %v5853
      %v6059 = vadd.f32 %v6058, %v5858
      %v6060 = vadd.f32 %v6059, %v5861
      %v6061 = vadd.f32 %v6060, %v5866
      %v6062 = vadd.f32 %v6061, %v5869
      %v6063 = vrot.slane %v6062, 4
      %v6064 = vadd.f32 %v6062, %v6063
      %v6065 = vrot.slane %v6064, 2
      %v6066 = vadd.f32 %v6064, %v6065
      %v6067 = vrot.slane %v6066, 1
      %v6068 = vadd.f32 %v6066, %v6067
      %6069 = vst [vmem:[%s315] sm:$0x1] %v6068
      %v6070 = vmul.f32 %v5746, %v5746
      %v6071 = vmul.f32 %v5749, %v5749
      %v6072 = vmul.f32 %v5754, %v5754
      %v6073 = vmul.f32 %v5757, %v5757
      %v6074 = vmul.f32 %v5762, %v5762
      %v6075 = vmul.f32 %v5765, %v5765
      %v6076 = vmul.f32 %v5770, %v5770
      %v6077 = vmul.f32 %v5773, %v5773
      %v6078 = vmul.f32 %v5778, %v5778
      %v6079 = vmul.f32 %v5781, %v5781
      %v6080 = vmul.f32 %v5786, %v5786
      %v6081 = vmul.f32 %v5789, %v5789
      %v6082 = vmul.f32 %v5794, %v5794
      %v6083 = vmul.f32 %v5797, %v5797
      %v6084 = vmul.f32 %v5802, %v5802
      %v6085 = vmul.f32 %v5805, %v5805
      %v6086 = vmul.f32 %v5810, %v5810
      %v6087 = vmul.f32 %v5813, %v5813
      %v6088 = vmul.f32 %v5818, %v5818
      %v6089 = vmul.f32 %v5821, %v5821
      %v6090 = vmul.f32 %v5826, %v5826
      %v6091 = vmul.f32 %v5829, %v5829
      %v6092 = vmul.f32 %v5834, %v5834
      %v6093 = vmul.f32 %v5837, %v5837
      %v6094 = vmul.f32 %v5842, %v5842
      %v6095 = vmul.f32 %v5845, %v5845
      %v6096 = vmul.f32 %v5850, %v5850
      %v6097 = vmul.f32 %v5853, %v5853
      %v6098 = vmul.f32 %v5858, %v5858
      %v6099 = vmul.f32 %v5861, %v5861
      %v6100 = vmul.f32 %v5866, %v5866
      %v6101 = vmul.f32 %v5869, %v5869
      %v6102 = vadd.f32 %v6070, %v6071
      %v6103 = vadd.f32 %v6102, %v6072
      %v6104 = vadd.f32 %v6103, %v6073
      %v6105 = vadd.f32 %v6104, %v6074
      %v6106 = vadd.f32 %v6105, %v6075
      %v6107 = vadd.f32 %v6106, %v6076
      %v6108 = vadd.f32 %v6107, %v6077
      %v6109 = vadd.f32 %v6108, %v6078
      %v6110 = vadd.f32 %v6109, %v6079
      %v6111 = vadd.f32 %v6110, %v6080
      %v6112 = vadd.f32 %v6111, %v6081
      %v6113 = vadd.f32 %v6112, %v6082
      %v6114 = vadd.f32 %v6113, %v6083
      %v6115 = vadd.f32 %v6114, %v6084
      %v6116 = vadd.f32 %v6115, %v6085
      %v6117 = vadd.f32 %v6116, %v6086
      %v6118 = vadd.f32 %v6117, %v6087
      %v6119 = vadd.f32 %v6118, %v6088
      %v6120 = vadd.f32 %v6119, %v6089
      %v6121 = vadd.f32 %v6120, %v6090
      %v6122 = vadd.f32 %v6121, %v6091
      %v6123 = vadd.f32 %v6122, %v6092
      %v6124 = vadd.f32 %v6123, %v6093
      %v6125 = vadd.f32 %v6124, %v6094
      %v6126 = vadd.f32 %v6125, %v6095
      %v6127 = vadd.f32 %v6126, %v6096
      %v6128 = vadd.f32 %v6127, %v6097
      %v6129 = vadd.f32 %v6128, %v6098
      %v6130 = vadd.f32 %v6129, %v6099
      %v6131 = vadd.f32 %v6130, %v6100
      %v6132 = vadd.f32 %v6131, %v6101
      %v6133 = vrot.slane %v6132, 4
      %v6134 = vadd.f32 %v6132, %v6133
      %v6135 = vrot.slane %v6134, 2
      %v6136 = vadd.f32 %v6134, %v6135
      %v6137 = vrot.slane %v6136, 1
      %v6138 = vadd.f32 %v6136, %v6137
      %6139 = vst [vmem:[%s321] sm:$0x1] %v6138
      %p6140 = scmp.lt.s32.totalorder %s22, 1
      %s6141 = scalar_select %p6140, %s22, 1
      %p6142 = scmp.lt.s32.totalorder %s23, 0
      %s6143 = scalar_select %p6142, %s23, 0
      %s6144 = smul.addr %s6141, 32
      %s6145 = sadd.s32 %s6143, %s6144
      %s6146 = smul.addr %s6145, 4
      %s6147 = scalar_lea.vmem %s4, %s6146
      %p6148 = scmp.lt.s32.totalorder %s22, 1
      %s6149 = scalar_select %p6148, %s22, 1
      %p6150 = scmp.lt.s32.totalorder %s23, 0
      %s6151 = scalar_select %p6150, %s23, 0
      %s6152 = sadd.s32 %s6151, %s6149
      %s6153 = scalar_lea.vmem %s5, %s6152
      %p6154 = scmp.lt.s32.totalorder %s22, 1
      %s6155 = scalar_select %p6154, %s22, 1
      %p6156 = scmp.lt.s32.totalorder %s23, 0
      %s6157 = scalar_select %p6156, %s23, 0
      %s6158 = sadd.s32 %s6157, %s6155
      %s6159 = scalar_lea.vmem %s6, %s6158
      // Predicated region
      $region41: #{bottleneck_forward.4} parent=35 // pred_check
        %p6160 = pneg %p144
      $region42: #{bottleneck_forward.4} parent=35 // pred_check_branch
        %6162 = sbr.rel (%p6160) target = $region44
      $region43: #{bottleneck_forward.4} parent=35 // pred_region
        _
      $region44: #{bottleneck_forward.4} parent=35 // pred_fallthru
        _
      // Predicated region
      $region45: #{bottleneck_forward.4} parent=35 // pred_check
        %p6163 = pneg %p172
      $region46: #{bottleneck_forward.4} parent=35 // pred_check_branch
        %6165 = sbr.rel (%p6163) target = $region48
      $region47: #{bottleneck_forward.4} parent=35 // pred_region
        _
      $region48: #{bottleneck_forward.4} parent=35 // pred_fallthru
        _
      // Predicated region
      $region49: #{bottleneck_forward.4} parent=35 // pred_check
        %p6166 = pneg %p200
      $region50: #{bottleneck_forward.4} parent=35 // pred_check_branch
        %6168 = sbr.rel (%p6166) target = $region52
      $region51: #{bottleneck_forward.4} parent=35 // pred_region
        _
      $region52: #{bottleneck_forward.4} parent=35 // pred_fallthru
        _
    $region36: #{bottleneck_forward.4} parent=5 // pred_fallthru
      _
    %p6169 = scmp.le.s32.totalorder 2, %s13
    // Predicated region
    $region53: #{bottleneck_forward.4} parent=5 // pred_check
      %p6170 = pneg %p6169
    $region54: #{bottleneck_forward.4} parent=5 // pred_check_branch
      %6172 = sbr.rel (%p6170) target = $region56
    $region55: #{bottleneck_forward.4} parent=5 // pred_region
      %s6173 = ssub.s32 %s13, 2
      // Predicated region
      $region57: #{bottleneck_forward.4} parent=55 // pred_check
        %p6174 = pneg %p150
      $region58: #{bottleneck_forward.4} parent=55 // pred_check_branch
        %6176 = sbr.rel (%p6174) target = $region60
      $region59: #{bottleneck_forward.4} parent=55 // pred_region
        %p6177 = scmp.lt.s32.totalorder %s24, 1
        %s6178 = scalar_select %p6177, %s24, 1
        %p6179 = scmp.lt.s32.totalorder %s25, 0
        %s6180 = scalar_select %p6179, %s25, 0
        %s6181 = smul.addr %s6178, 32
        %s6182 = sadd.s32 %s6180, %s6181
        %s6183 = smul.addr %s6182, 4
        %s6184 = scalar_lea.vmem %s4, %s6183
      $region60: #{bottleneck_forward.4} parent=55 // pred_fallthru
        _
      // Predicated region
      $region61: #{bottleneck_forward.4} parent=55 // pred_check
        %p6185 = pneg %p178
      $region62: #{bottleneck_forward.4} parent=55 // pred_check_branch
        %6187 = sbr.rel (%p6185) target = $region64
      $region63: #{bottleneck_forward.4} parent=55 // pred_region
        %p6188 = scmp.lt.s32.totalorder %s24, 1
        %s6189 = scalar_select %p6188, %s24, 1
        %p6190 = scmp.lt.s32.totalorder %s25, 0
        %s6191 = scalar_select %p6190, %s25, 0
        %s6192 = sadd.s32 %s6191, %s6189
        %s6193 = scalar_lea.vmem %s5, %s6192
      $region64: #{bottleneck_forward.4} parent=55 // pred_fallthru
        _
      // Predicated region
      $region65: #{bottleneck_forward.4} parent=55 // pred_check
        %p6194 = pneg %p206
      $region66: #{bottleneck_forward.4} parent=55 // pred_check_branch
        %6196 = sbr.rel (%p6194) target = $region68
      $region67: #{bottleneck_forward.4} parent=55 // pred_region
        %p6197 = scmp.lt.s32.totalorder %s24, 1
        %s6198 = scalar_select %p6197, %s24, 1
        %p6199 = scmp.lt.s32.totalorder %s25, 0
        %s6200 = scalar_select %p6199, %s25, 0
        %s6201 = sadd.s32 %s6200, %s6198
        %s6202 = scalar_lea.vmem %s6, %s6201
      $region68: #{bottleneck_forward.4} parent=55 // pred_fallthru
        _
    $region56: #{bottleneck_forward.4} parent=5 // pred_fallthru
      _
  $region6: #{bottleneck_forward.4} parent=0 // loop_footer
    %s17 = sadd.s32 1, %s13
  $region7: #{bottleneck_forward.4} parent=0 // loop_footer_branch
    %12 = sbr.rel target = $region3
  $region8: #{bottleneck_forward.4} parent=0 // loop_exit
    _

</llo_original>
